<compile_context>
chip_gen: v5e
topology: v5e:2x2
jax: 0.10.0
libtpu: 0.0.40
codegen_flags: <defaults>
</compile_context>

<pallas_src>
import numpy as np
import jax
import jax.numpy as jnp
from jax import lax
from jax.experimental import pallas as pl
from jax.experimental.pallas import tpu as pltpu

IN_DIM = 6          # x[:, :, :6]
HID_LIN = 12 * 3    # 36
LIN_OUT = 8
GRU_HID = 24
NUM_LAYERS = 3
NUM_CLASSES = 3
IGNORE_INDEX = -1


def _vmem_spec():
    return pl.BlockSpec(memory_space=pltpu.MemorySpace.VMEM)


# ------------------------------ fused kernel -------------------------------

def _make_fused_kernel(B, T):
    H = GRU_HID
    C = NUM_CLASSES
    N = B * T
    n_in = 11 + 8 * NUM_LAYERS

    def kernel(*args):
        (x_ref, tgt_ref, wgt_ref,
         lw0, lb0, lw1, lb1, lw2, lb2,
         fcw_ref, fcb_ref) = args[:11]
        gru_refs = args[11:n_in]
        logits_ref, loss_ref, loss1_ref, loss2_ref = args[n_in:n_in + 4]
        buf_f0, buf_b0, buf_f1, buf_b1 = args[n_in + 4:]
        bufs_f = (buf_f0, buf_f1)
        bufs_b = (buf_b0, buf_b1)

        # ---- linStack: (Linear + ReLU) x 3 ; Dropout(p=0) is identity ----
        # TODO(synk): exact linStack activation not given in source; ReLU assumed.
        h0 = jnp.maximum(
            jnp.dot(x_ref[...], lw0[...], preferred_element_type=jnp.float32) + lb0[...], 0.0)
        h0 = jnp.maximum(
            jnp.dot(h0, lw1[...], preferred_element_type=jnp.float32) + lb1[...], 0.0)
        h0 = jnp.maximum(
            jnp.dot(h0, lw2[...], preferred_element_type=jnp.float32) + lb2[...], 0.0)
        # h0: (B*T, LIN_OUT), rows batch-major (row = b*T + t)

        def gru_gate(gi, h, whh, bhh):
            # PyTorch GRU gate order: r, z, n ; n uses r * (W_hn h + b_hn).
            gh = jnp.dot(h, whh, preferred_element_type=jnp.float32) + bhh
            r = jax.nn.sigmoid(gi[:, 0:H] + gh[:, 0:H])
            z = jax.nn.sigmoid(gi[:, H:2 * H] + gh[:, H:2 * H])
            n = jnp.tanh(gi[:, 2 * H:3 * H] + r * gh[:, 2 * H:3 * H])
            return (1.0 - z) * n + z * h

        # ---- 3 bidirectional GRU layers, fully unrolled over T ----
        for layer in range(NUM_LAYERS):
            base = 8 * layer
            wih_f = gru_refs[base + 0][...]
            whh_f = gru_refs[base + 1][...]
            bih_f = gru_refs[base + 2][...]
            bhh_f = gru_refs[base + 3][...]
            wih_b = gru_refs[base + 4][...]
            whh_b = gru_refs[base + 5][...]
            bih_b = gru_refs[base + 6][...]
            bhh_b = gru_refs[base + 7][...]

            # Hoisted input-to-hidden projections (one big matmul per direction).
            if layer == 0:
                gi_f = jnp.dot(h0, wih_f, preferred_element_type=jnp.float32) + bih_f
                gi_b = jnp.dot(h0, wih_b, preferred_element_type=jnp.float32) + bih_b
            else:
                src = (layer - 1) % 2
                pf = bufs_f[src][...].reshape(N, H)
                pb = bufs_b[src][...].reshape(N, H)
                gi_f = (jnp.dot(pf, wih_f[0:H, :], preferred_element_type=jnp.float32)
                        + jnp.dot(pb, wih_f[H:2 * H, :], preferred_element_type=jnp.float32)
                        + bih_f)
                gi_b = (jnp.dot(pf, wih_b[0:H, :], preferred_element_type=jnp.float32)
                        + jnp.dot(pb, wih_b[H:2 * H, :], preferred_element_type=jnp.float32)
                        + bih_b)

            gi_f3 = gi_f.reshape(B, T, 3 * H)
            gi_b3 = gi_b.reshape(B, T, 3 * H)

            dst = layer % 2
            bf, bb = bufs_f[dst], bufs_b[dst]

            h_f = jnp.zeros((B, H), jnp.float32)
            h_b = jnp.zeros((B, H), jnp.float32)
            for s in range(T):                      # fully unrolled, both chains interleaved
                tb = T - 1 - s
                h_f = gru_gate(gi_f3[:, s, :], h_f, whh_f, bhh_f)
                h_b = gru_gate(gi_b3[:, tb, :], h_b, whh_b, bhh_b)
                bf[:, s:s + 1, :] = h_f[:, None, :]
                bb[:, tb:tb + 1, :] = h_b[:, None, :]

        # ---- fc(+1e-5) on the last layer's [fwd | bwd] output (split-weight form) ----
        last = (NUM_LAYERS - 1) % 2
        hf2 = bufs_f[last][...].reshape(N, H)
        hb2 = bufs_b[last][...].reshape(N, H)
        fcw = fcw_ref[...]
        logits = (jnp.dot(hf2, fcw[0:H, :], preferred_element_type=jnp.float32)
                  + jnp.dot(hb2, fcw[H:2 * H, :], preferred_element_type=jnp.float32)
                  + fcb_ref[...] + 1e-05)
        logits_ref[...] = logits.astype(logits_ref.dtype)

        # ---- loss_giw, fused ----
        # TODO(synk): exact loss_giw definition not provided with the module; implemented as
        # weighted cross-entropy (PyTorch semantics, ignore_index=-1) + generalized soft-dice.
        tgt = tgt_ref[...]                                        # (N, 1) int32
        cls = lax.broadcasted_iota(jnp.int32, (N, C), 1)
        valid = (tgt != IGNORE_INDEX).astype(jnp.float32)         # (N, 1)
        onehot = (tgt == cls).astype(jnp.float32) * valid         # (N, C)

        m = jnp.max(logits, axis=1, keepdims=True)
        e = jnp.exp(logits - m)
        se = jnp.sum(e, axis=1, keepdims=True)
        logp = (logits - m) - jnp.log(se)                         # (N, C)
        probs = e / se                                            # (N, C)

        wrow = wgt_ref[...]                                       # (1, C)
        nll = -jnp.sum(logp * onehot, axis=1, keepdims=True)      # (N, 1)
        w_n = jnp.sum(onehot * wrow, axis=1, keepdims=True)       # (N, 1)
        num1 = jnp.sum(w_n * nll, axis=0, keepdims=True)          # (1, 1)
        den1 = jnp.sum(w_n, axis=0, keepdims=True)                # (1, 1)
        loss1 = num1 / jnp.maximum(den1, 1e-12)

        probs_v = probs * valid
        inter = jnp.sum(probs_v * onehot, axis=0, keepdims=True)  # (1, C)
        denom = (jnp.sum(probs_v, axis=0, keepdims=True)
                 + jnp.sum(onehot, axis=0, keepdims=True))        # (1, C)
        dice = (2.0 * inter + 1e-6) / (denom + 1e-6)
        loss2 = 1.0 - jnp.mean(dice, axis=1, keepdims=True)       # (1, 1)

        loss_ref[...] = loss1 + loss2
        loss1_ref[...] = loss1
        loss2_ref[...] = loss2

    return kernel


# ------------------------------ JAX wrapper ---------------------------------

def model_8_forward(params, x, target, weight):
    B, T, _ = x.shape
    # Free (bitcast) reshapes only — batch-major row ordering row = b*T + t.
    x2d = x[:, :, :IN_DIM].astype(jnp.float32).reshape(B * T, IN_DIM)
    tgt2d = target.astype(jnp.int32).reshape(B * T, 1)
    wgt2d = weight.astype(jnp.float32).reshape(1, NUM_CLASSES)

    inputs = [x2d, tgt2d, wgt2d,
              params["lin_w0"], params["lin_b0"],
              params["lin_w1"], params["lin_b1"],
              params["lin_w2"], params["lin_b2"],
              params["fc_w"], params["fc_b"]]
    for lp in params["gru"]:
        inputs += [lp["wih_f"], lp["whh_f"], lp["bih_f"], lp["bhh_f"],
                   lp["wih_b"], lp["whh_b"], lp["bih_b"], lp["bhh_b"]]

    out_shapes = (
        jax.ShapeDtypeStruct((B * T, NUM_CLASSES), jnp.float32),
        jax.ShapeDtypeStruct((1, 1), jnp.float32),
        jax.ShapeDtypeStruct((1, 1), jnp.float32),
        jax.ShapeDtypeStruct((1, 1), jnp.float32),
    )
    scratch = [pltpu.VMEM((B, T, GRU_HID), jnp.float32) for _ in range(4)]

    logits2d, loss, loss1, loss2 = pl.pallas_call(
        _make_fused_kernel(B, T),
        out_shape=out_shapes,
        in_specs=[_vmem_spec()] * len(inputs),
        out_specs=tuple(_vmem_spec() for _ in range(4)),
        scratch_shapes=scratch,
    )(*inputs)

    logits = logits2d.reshape(B, T, NUM_CLASSES)
    return logits, loss[0, 0], loss1[0, 0], loss2[0, 0]


# ------------------------- deterministic parameters ------------------------

def init_params(key):
    def u(k, shape, scale=0.1):
        return jax.random.uniform(k, shape, jnp.float32, -scale, scale)

    keys = iter(jax.random.split(key, 64))
    params = {
        "lin_w0": u(next(keys), (IN_DIM, HID_LIN)),  "lin_b0": u(next(keys), (1, HID_LIN)),
        "lin_w1": u(next(keys), (HID_LIN, HID_LIN)), "lin_b1": u(next(keys), (1, HID_LIN)),
        "lin_w2": u(next(keys), (HID_LIN, LIN_OUT)), "lin_b2": u(next(keys), (1, LIN_OUT)),
        "fc_w":   u(next(keys), (2 * GRU_HID, NUM_CLASSES)),
        "fc_b":   u(next(keys), (1, NUM_CLASSES)),
        "gru":    [],
    }
    for layer in range(NUM_LAYERS):
        in_sz = LIN_OUT if layer == 0 else 2 * GRU_HID
        lp = {}
        for d in ("f", "b"):  # forward / backward directions
            lp["wih_" + d] = u(next(keys), (in_sz, 3 * GRU_HID))
            lp["whh_" + d] = u(next(keys), (GRU_HID, 3 * GRU_HID))
            lp["bih_" + d] = u(next(keys), (1, 3 * GRU_HID))
            lp["bhh_" + d] = u(next(keys), (1, 3 * GRU_HID))
        params["gru"].append(lp)
    return params


if __name__ == "__main__":
    key = jax.random.PRNGKey(0)
    kp, kx, kt, kw = jax.random.split(key, 4)
    params = init_params(kp)

    B, T, F = 2, 8, 7  # forward slices x[:, :, :6], so give it F > 6
    x = jax.random.normal(kx, (B, T, F), jnp.float32)
    target = jax.random.randint(kt, (B, T), -1, NUM_CLASSES)        # -1 == ignore_index
    weight = jax.random.uniform(kw, (NUM_CLASSES,), jnp.float32, 0.5, 1.5)

    # NaN / Inf input asserts (host side, mirrors the torch asserts).
    for name, arr in (("x", x), ("target", target), ("weight", weight)):
        a = np.asarray(arr, dtype=np.float64)
        assert not (np.isnan(a).any() or np.isinf(a).any()), f"NaN or Inf found in {name}"

    fwd = jax.jit(model_8_forward)
    logits, loss, loss1, loss2 = fwd(params, x, target, weight)
    jax.block_until_ready((logits, loss, loss1, loss2))

    assert logits.shape == (B, T, NUM_CLASSES)
    assert loss.shape == () and loss1.shape == () and loss2.shape == ()
    print("KERNEL_OK")
</pallas_src>

<mosaic_0001>
module attributes {stable_mosaic.version = 11 : i64} {
  func.func @kernel(%arg0: memref<16x6xf32, #tpu.memory_space<vmem>>, %arg1: memref<16x1xi32, #tpu.memory_space<vmem>>, %arg2: memref<1x3xf32, #tpu.memory_space<vmem>>, %arg3: memref<6x36xf32, #tpu.memory_space<vmem>>, %arg4: memref<1x36xf32, #tpu.memory_space<vmem>>, %arg5: memref<36x36xf32, #tpu.memory_space<vmem>>, %arg6: memref<1x36xf32, #tpu.memory_space<vmem>>, %arg7: memref<36x8xf32, #tpu.memory_space<vmem>>, %arg8: memref<1x8xf32, #tpu.memory_space<vmem>>, %arg9: memref<48x3xf32, #tpu.memory_space<vmem>>, %arg10: memref<1x3xf32, #tpu.memory_space<vmem>>, %arg11: memref<8x72xf32, #tpu.memory_space<vmem>>, %arg12: memref<24x72xf32, #tpu.memory_space<vmem>>, %arg13: memref<1x72xf32, #tpu.memory_space<vmem>>, %arg14: memref<1x72xf32, #tpu.memory_space<vmem>>, %arg15: memref<8x72xf32, #tpu.memory_space<vmem>>, %arg16: memref<24x72xf32, #tpu.memory_space<vmem>>, %arg17: memref<1x72xf32, #tpu.memory_space<vmem>>, %arg18: memref<1x72xf32, #tpu.memory_space<vmem>>, %arg19: memref<48x72xf32, #tpu.memory_space<vmem>>, %arg20: memref<24x72xf32, #tpu.memory_space<vmem>>, %arg21: memref<1x72xf32, #tpu.memory_space<vmem>>, %arg22: memref<1x72xf32, #tpu.memory_space<vmem>>, %arg23: memref<48x72xf32, #tpu.memory_space<vmem>>, %arg24: memref<24x72xf32, #tpu.memory_space<vmem>>, %arg25: memref<1x72xf32, #tpu.memory_space<vmem>>, %arg26: memref<1x72xf32, #tpu.memory_space<vmem>>, %arg27: memref<48x72xf32, #tpu.memory_space<vmem>>, %arg28: memref<24x72xf32, #tpu.memory_space<vmem>>, %arg29: memref<1x72xf32, #tpu.memory_space<vmem>>, %arg30: memref<1x72xf32, #tpu.memory_space<vmem>>, %arg31: memref<48x72xf32, #tpu.memory_space<vmem>>, %arg32: memref<24x72xf32, #tpu.memory_space<vmem>>, %arg33: memref<1x72xf32, #tpu.memory_space<vmem>>, %arg34: memref<1x72xf32, #tpu.memory_space<vmem>>, %arg35: memref<16x3xf32, #tpu.memory_space<vmem>>, %arg36: memref<1x1xf32, #tpu.memory_space<vmem>>, %arg37: memref<1x1xf32, #tpu.memory_space<vmem>>, %arg38: memref<1x1xf32, #tpu.memory_space<vmem>>, %arg39: memref<2x8x24xf32, #tpu.memory_space<vmem>>, %arg40: memref<2x8x24xf32, #tpu.memory_space<vmem>>, %arg41: memref<2x8x24xf32, #tpu.memory_space<vmem>>, %arg42: memref<2x8x24xf32, #tpu.memory_space<vmem>>) attributes {dimension_semantics = [], scalar_prefetch = 0 : i64, scratch_operands = 4 : i64, tpu.core_type = #tpu.core_type<tc>} {
    %c0 = arith.constant 0 : index
    %c0_0 = arith.constant 0 : index
    %0 = vector.load %arg0[%c0, %c0_0] : memref<16x6xf32, #tpu.memory_space<vmem>>, vector<16x6xf32>
    %c0_1 = arith.constant 0 : index
    %c0_2 = arith.constant 0 : index
    %1 = vector.load %arg3[%c0_1, %c0_2] : memref<6x36xf32, #tpu.memory_space<vmem>>, vector<6x36xf32>
    %cst = arith.constant dense<0.000000e+00> : vector<16x36xf32>
    %2 = tpu.matmul %0, %1, %cst {dimension_numbers = #tpu.dot_dimension_numbers<[1], [0], [0], [1], [0, 0, 1, 1], [], []>} : vector<16x6xf32>, vector<6x36xf32>, vector<16x36xf32> -> vector<16x36xf32>
    %c0_3 = arith.constant 0 : index
    %c0_4 = arith.constant 0 : index
    %3 = vector.load %arg4[%c0_3, %c0_4] : memref<1x36xf32, #tpu.memory_space<vmem>>, vector<1x36xf32>
    %4 = vector.broadcast %3 : vector<1x36xf32> to vector<16x36xf32>
    %5 = arith.addf %2, %4 : vector<16x36xf32>
    %cst_5 = arith.constant 0.000000e+00 : f32
    %6 = vector.broadcast %cst_5 : f32 to vector<16x36xf32>
    %7 = arith.maximumf %5, %6 : vector<16x36xf32>
    %c0_6 = arith.constant 0 : index
    %c0_7 = arith.constant 0 : index
    %8 = vector.load %arg5[%c0_6, %c0_7] : memref<36x36xf32, #tpu.memory_space<vmem>>, vector<36x36xf32>
    %cst_8 = arith.constant dense<0.000000e+00> : vector<16x36xf32>
    %9 = tpu.matmul %7, %8, %cst_8 {dimension_numbers = #tpu.dot_dimension_numbers<[1], [0], [0], [1], [0, 0, 1, 1], [], []>} : vector<16x36xf32>, vector<36x36xf32>, vector<16x36xf32> -> vector<16x36xf32>
    %c0_9 = arith.constant 0 : index
    %c0_10 = arith.constant 0 : index
    %10 = vector.load %arg6[%c0_9, %c0_10] : memref<1x36xf32, #tpu.memory_space<vmem>>, vector<1x36xf32>
    %11 = vector.broadcast %10 : vector<1x36xf32> to vector<16x36xf32>
    %12 = arith.addf %9, %11 : vector<16x36xf32>
    %cst_11 = arith.constant 0.000000e+00 : f32
    %13 = vector.broadcast %cst_11 : f32 to vector<16x36xf32>
    %14 = arith.maximumf %12, %13 : vector<16x36xf32>
    %c0_12 = arith.constant 0 : index
    %c0_13 = arith.constant 0 : index
    %15 = vector.load %arg7[%c0_12, %c0_13] : memref<36x8xf32, #tpu.memory_space<vmem>>, vector<36x8xf32>
    %cst_14 = arith.constant dense<0.000000e+00> : vector<16x8xf32>
    %16 = tpu.matmul %14, %15, %cst_14 {dimension_numbers = #tpu.dot_dimension_numbers<[1], [0], [0], [1], [0, 0, 1, 1], [], []>} : vector<16x36xf32>, vector<36x8xf32>, vector<16x8xf32> -> vector<16x8xf32>
    %c0_15 = arith.constant 0 : index
    %c0_16 = arith.constant 0 : index
    %17 = vector.load %arg8[%c0_15, %c0_16] : memref<1x8xf32, #tpu.memory_space<vmem>>, vector<1x8xf32>
    %18 = vector.broadcast %17 : vector<1x8xf32> to vector<16x8xf32>
    %19 = arith.addf %16, %18 : vector<16x8xf32>
    %cst_17 = arith.constant 0.000000e+00 : f32
    %20 = vector.broadcast %cst_17 : f32 to vector<16x8xf32>
    %21 = arith.maximumf %19, %20 : vector<16x8xf32>
    %c0_18 = arith.constant 0 : index
    %c0_19 = arith.constant 0 : index
    %22 = vector.load %arg11[%c0_18, %c0_19] : memref<8x72xf32, #tpu.memory_space<vmem>>, vector<8x72xf32>
    %c0_20 = arith.constant 0 : index
    %c0_21 = arith.constant 0 : index
    %23 = vector.load %arg12[%c0_20, %c0_21] : memref<24x72xf32, #tpu.memory_space<vmem>>, vector<24x72xf32>
    %c0_22 = arith.constant 0 : index
    %c0_23 = arith.constant 0 : index
    %24 = vector.load %arg13[%c0_22, %c0_23] : memref<1x72xf32, #tpu.memory_space<vmem>>, vector<1x72xf32>
    %c0_24 = arith.constant 0 : index
    %c0_25 = arith.constant 0 : index
    %25 = vector.load %arg14[%c0_24, %c0_25] : memref<1x72xf32, #tpu.memory_space<vmem>>, vector<1x72xf32>
    %c0_26 = arith.constant 0 : index
    %c0_27 = arith.constant 0 : index
    %26 = vector.load %arg15[%c0_26, %c0_27] : memref<8x72xf32, #tpu.memory_space<vmem>>, vector<8x72xf32>
    %c0_28 = arith.constant 0 : index
    %c0_29 = arith.constant 0 : index
    %27 = vector.load %arg16[%c0_28, %c0_29] : memref<24x72xf32, #tpu.memory_space<vmem>>, vector<24x72xf32>
    %c0_30 = arith.constant 0 : index
    %c0_31 = arith.constant 0 : index
    %28 = vector.load %arg17[%c0_30, %c0_31] : memref<1x72xf32, #tpu.memory_space<vmem>>, vector<1x72xf32>
    %c0_32 = arith.constant 0 : index
    %c0_33 = arith.constant 0 : index
    %29 = vector.load %arg18[%c0_32, %c0_33] : memref<1x72xf32, #tpu.memory_space<vmem>>, vector<1x72xf32>
    %cst_34 = arith.constant dense<0.000000e+00> : vector<16x72xf32>
    %30 = tpu.matmul %21, %22, %cst_34 {dimension_numbers = #tpu.dot_dimension_numbers<[1], [0], [0], [1], [0, 0, 1, 1], [], []>} : vector<16x8xf32>, vector<8x72xf32>, vector<16x72xf32> -> vector<16x72xf32>
    %31 = vector.broadcast %24 : vector<1x72xf32> to vector<16x72xf32>
    %32 = arith.addf %30, %31 : vector<16x72xf32>
    %cst_35 = arith.constant dense<0.000000e+00> : vector<16x72xf32>
    %33 = tpu.matmul %21, %26, %cst_35 {dimension_numbers = #tpu.dot_dimension_numbers<[1], [0], [0], [1], [0, 0, 1, 1], [], []>} : vector<16x8xf32>, vector<8x72xf32>, vector<16x72xf32> -> vector<16x72xf32>
    %34 = vector.broadcast %28 : vector<1x72xf32> to vector<16x72xf32>
    %35 = arith.addf %33, %34 : vector<16x72xf32>
    %36 = vector.shape_cast %32 : vector<16x72xf32> to vector<2x8x72xf32>
    %37 = vector.shape_cast %35 : vector<16x72xf32> to vector<2x8x72xf32>
    %cst_36 = arith.constant 0.000000e+00 : f32
    %38 = vector.broadcast %cst_36 : f32 to vector<2x24xf32>
    %cst_37 = arith.constant 0.000000e+00 : f32
    %39 = vector.broadcast %cst_37 : f32 to vector<2x24xf32>
    %40 = vector.extract_strided_slice %36 {offsets = [0, 0, 0], sizes = [2, 1, 72], strides = [1, 1, 1]} : vector<2x8x72xf32> to vector<2x1x72xf32>
    %41 = vector.shape_cast %40 : vector<2x1x72xf32> to vector<2x72xf32>
    %cst_38 = arith.constant dense<0.000000e+00> : vector<2x72xf32>
    %42 = tpu.matmul %38, %23, %cst_38 {dimension_numbers = #tpu.dot_dimension_numbers<[1], [0], [0], [1], [0, 0, 1, 1], [], []>} : vector<2x24xf32>, vector<24x72xf32>, vector<2x72xf32> -> vector<2x72xf32>
    %43 = vector.broadcast %25 : vector<1x72xf32> to vector<2x72xf32>
    %44 = arith.addf %42, %43 : vector<2x72xf32>
    %45 = vector.extract_strided_slice %41 {offsets = [0, 0], sizes = [2, 24], strides = [1, 1]} : vector<2x72xf32> to vector<2x24xf32>
    %46 = vector.extract_strided_slice %44 {offsets = [0, 0], sizes = [2, 24], strides = [1, 1]} : vector<2x72xf32> to vector<2x24xf32>
    %47 = arith.addf %45, %46 : vector<2x24xf32>
    %48 = arith.negf %47 : vector<2x24xf32>
    %49 = math.exp %48 : vector<2x24xf32>
    %cst_39 = arith.constant 1.000000e+00 : f32
    %50 = vector.broadcast %cst_39 : f32 to vector<2x24xf32>
    %51 = arith.addf %50, %49 : vector<2x24xf32>
    %52 = arith.divf %50, %51 : vector<2x24xf32>
    %53 = vector.extract_strided_slice %41 {offsets = [0, 24], sizes = [2, 24], strides = [1, 1]} : vector<2x72xf32> to vector<2x24xf32>
    %54 = vector.extract_strided_slice %44 {offsets = [0, 24], sizes = [2, 24], strides = [1, 1]} : vector<2x72xf32> to vector<2x24xf32>
    %55 = arith.addf %53, %54 : vector<2x24xf32>
    %56 = arith.negf %55 : vector<2x24xf32>
    %57 = math.exp %56 : vector<2x24xf32>
    %cst_40 = arith.constant 1.000000e+00 : f32
    %58 = vector.broadcast %cst_40 : f32 to vector<2x24xf32>
    %59 = arith.addf %58, %57 : vector<2x24xf32>
    %60 = arith.divf %58, %59 : vector<2x24xf32>
    %61 = vector.extract_strided_slice %41 {offsets = [0, 48], sizes = [2, 24], strides = [1, 1]} : vector<2x72xf32> to vector<2x24xf32>
    %62 = vector.extract_strided_slice %44 {offsets = [0, 48], sizes = [2, 24], strides = [1, 1]} : vector<2x72xf32> to vector<2x24xf32>
    %63 = arith.mulf %52, %62 : vector<2x24xf32>
    %64 = arith.addf %61, %63 : vector<2x24xf32>
    %65 = math.tanh %64 : vector<2x24xf32>
    %cst_41 = arith.constant 1.000000e+00 : f32
    %66 = vector.broadcast %cst_41 : f32 to vector<2x24xf32>
    %67 = arith.subf %66, %60 : vector<2x24xf32>
    %68 = arith.mulf %67, %65 : vector<2x24xf32>
    %69 = arith.mulf %60, %38 : vector<2x24xf32>
    %70 = arith.addf %68, %69 : vector<2x24xf32>
    %71 = vector.extract_strided_slice %37 {offsets = [0, 7, 0], sizes = [2, 1, 72], strides = [1, 1, 1]} : vector<2x8x72xf32> to vector<2x1x72xf32>
    %72 = vector.shape_cast %71 : vector<2x1x72xf32> to vector<2x72xf32>
    %cst_42 = arith.constant dense<0.000000e+00> : vector<2x72xf32>
    %73 = tpu.matmul %39, %27, %cst_42 {dimension_numbers = #tpu.dot_dimension_numbers<[1], [0], [0], [1], [0, 0, 1, 1], [], []>} : vector<2x24xf32>, vector<24x72xf32>, vector<2x72xf32> -> vector<2x72xf32>
    %74 = vector.broadcast %29 : vector<1x72xf32> to vector<2x72xf32>
    %75 = arith.addf %73, %74 : vector<2x72xf32>
    %76 = vector.extract_strided_slice %72 {offsets = [0, 0], sizes = [2, 24], strides = [1, 1]} : vector<2x72xf32> to vector<2x24xf32>
    %77 = vector.extract_strided_slice %75 {offsets = [0, 0], sizes = [2, 24], strides = [1, 1]} : vector<2x72xf32> to vector<2x24xf32>
    %78 = arith.addf %76, %77 : vector<2x24xf32>
    %79 = arith.negf %78 : vector<2x24xf32>
    %80 = math.exp %79 : vector<2x24xf32>
    %cst_43 = arith.constant 1.000000e+00 : f32
    %81 = vector.broadcast %cst_43 : f32 to vector<2x24xf32>
    %82 = arith.addf %81, %80 : vector<2x24xf32>
    %83 = arith.divf %81, %82 : vector<2x24xf32>
    %84 = vector.extract_strided_slice %72 {offsets = [0, 24], sizes = [2, 24], strides = [1, 1]} : vector<2x72xf32> to vector<2x24xf32>
    %85 = vector.extract_strided_slice %75 {offsets = [0, 24], sizes = [2, 24], strides = [1, 1]} : vector<2x72xf32> to vector<2x24xf32>
    %86 = arith.addf %84, %85 : vector<2x24xf32>
    %87 = arith.negf %86 : vector<2x24xf32>
    %88 = math.exp %87 : vector<2x24xf32>
    %cst_44 = arith.constant 1.000000e+00 : f32
    %89 = vector.broadcast %cst_44 : f32 to vector<2x24xf32>
    %90 = arith.addf %89, %88 : vector<2x24xf32>
    %91 = arith.divf %89, %90 : vector<2x24xf32>
    %92 = vector.extract_strided_slice %72 {offsets = [0, 48], sizes = [2, 24], strides = [1, 1]} : vector<2x72xf32> to vector<2x24xf32>
    %93 = vector.extract_strided_slice %75 {offsets = [0, 48], sizes = [2, 24], strides = [1, 1]} : vector<2x72xf32> to vector<2x24xf32>
    %94 = arith.mulf %83, %93 : vector<2x24xf32>
    %95 = arith.addf %92, %94 : vector<2x24xf32>
    %96 = math.tanh %95 : vector<2x24xf32>
    %cst_45 = arith.constant 1.000000e+00 : f32
    %97 = vector.broadcast %cst_45 : f32 to vector<2x24xf32>
    %98 = arith.subf %97, %91 : vector<2x24xf32>
    %99 = arith.mulf %98, %96 : vector<2x24xf32>
    %100 = arith.mulf %91, %39 : vector<2x24xf32>
    %101 = arith.addf %99, %100 : vector<2x24xf32>
    %102 = vector.shape_cast %70 : vector<2x24xf32> to vector<2x1x24xf32>
    %c0_46 = arith.constant 0 : index
    %c0_47 = arith.constant 0 : index
    %c0_48 = arith.constant 0 : index
    %103 = vector.load %arg39[%c0_46, %c0_47, %c0_48] : memref<2x8x24xf32, #tpu.memory_space<vmem>>, vector<2x1x24xf32>
    tpu.vector_store %arg39[%c0_46, %c0_47, %c0_48], %102 {strides = array<i32>} : memref<2x8x24xf32, #tpu.memory_space<vmem>>, vector<2x1x24xf32>,
    %104 = vector.shape_cast %101 : vector<2x24xf32> to vector<2x1x24xf32>
    %c0_49 = arith.constant 0 : index
    %c7 = arith.constant 7 : index
    %c0_50 = arith.constant 0 : index
    %105 = vector.load %arg40[%c0_49, %c7, %c0_50] : memref<2x8x24xf32, #tpu.memory_space<vmem>>, vector<2x1x24xf32>
    tpu.vector_store %arg40[%c0_49, %c7, %c0_50], %104 {strides = array<i32>} : memref<2x8x24xf32, #tpu.memory_space<vmem>>, vector<2x1x24xf32>,
    %106 = vector.extract_strided_slice %36 {offsets = [0, 1, 0], sizes = [2, 1, 72], strides = [1, 1, 1]} : vector<2x8x72xf32> to vector<2x1x72xf32>
    %107 = vector.shape_cast %106 : vector<2x1x72xf32> to vector<2x72xf32>
    %cst_51 = arith.constant dense<0.000000e+00> : vector<2x72xf32>
    %108 = tpu.matmul %70, %23, %cst_51 {dimension_numbers = #tpu.dot_dimension_numbers<[1], [0], [0], [1], [0, 0, 1, 1], [], []>} : vector<2x24xf32>, vector<24x72xf32>, vector<2x72xf32> -> vector<2x72xf32>
    %109 = vector.broadcast %25 : vector<1x72xf32> to vector<2x72xf32>
    %110 = arith.addf %108, %109 : vector<2x72xf32>
    %111 = vector.extract_strided_slice %107 {offsets = [0, 0], sizes = [2, 24], strides = [1, 1]} : vector<2x72xf32> to vector<2x24xf32>
    %112 = vector.extract_strided_slice %110 {offsets = [0, 0], sizes = [2, 24], strides = [1, 1]} : vector<2x72xf32> to vector<2x24xf32>
    %113 = arith.addf %111, %112 : vector<2x24xf32>
    %114 = arith.negf %113 : vector<2x24xf32>
    %115 = math.exp %114 : vector<2x24xf32>
    %cst_52 = arith.constant 1.000000e+00 : f32
    %116 = vector.broadcast %cst_52 : f32 to vector<2x24xf32>
    %117 = arith.addf %116, %115 : vector<2x24xf32>
    %118 = arith.divf %116, %117 : vector<2x24xf32>
    %119 = vector.extract_strided_slice %107 {offsets = [0, 24], sizes = [2, 24], strides = [1, 1]} : vector<2x72xf32> to vector<2x24xf32>
    %120 = vector.extract_strided_slice %110 {offsets = [0, 24], sizes = [2, 24], strides = [1, 1]} : vector<2x72xf32> to vector<2x24xf32>
    %121 = arith.addf %119, %120 : vector<2x24xf32>
    %122 = arith.negf %121 : vector<2x24xf32>
    %123 = math.exp %122 : vector<2x24xf32>
    %cst_53 = arith.constant 1.000000e+00 : f32
    %124 = vector.broadcast %cst_53 : f32 to vector<2x24xf32>
    %125 = arith.addf %124, %123 : vector<2x24xf32>
    %126 = arith.divf %124, %125 : vector<2x24xf32>
    %127 = vector.extract_strided_slice %107 {offsets = [0, 48], sizes = [2, 24], strides = [1, 1]} : vector<2x72xf32> to vector<2x24xf32>
    %128 = vector.extract_strided_slice %110 {offsets = [0, 48], sizes = [2, 24], strides = [1, 1]} : vector<2x72xf32> to vector<2x24xf32>
    %129 = arith.mulf %118, %128 : vector<2x24xf32>
    %130 = arith.addf %127, %129 : vector<2x24xf32>
    %131 = math.tanh %130 : vector<2x24xf32>
    %cst_54 = arith.constant 1.000000e+00 : f32
    %132 = vector.broadcast %cst_54 : f32 to vector<2x24xf32>
    %133 = arith.subf %132, %126 : vector<2x24xf32>
    %134 = arith.mulf %133, %131 : vector<2x24xf32>
    %135 = arith.mulf %126, %70 : vector<2x24xf32>
    %136 = arith.addf %134, %135 : vector<2x24xf32>
    %137 = vector.extract_strided_slice %37 {offsets = [0, 6, 0], sizes = [2, 1, 72], strides = [1, 1, 1]} : vector<2x8x72xf32> to vector<2x1x72xf32>
    %138 = vector.shape_cast %137 : vector<2x1x72xf32> to vector<2x72xf32>
    %cst_55 = arith.constant dense<0.000000e+00> : vector<2x72xf32>
    %139 = tpu.matmul %101, %27, %cst_55 {dimension_numbers = #tpu.dot_dimension_numbers<[1], [0], [0], [1], [0, 0, 1, 1], [], []>} : vector<2x24xf32>, vector<24x72xf32>, vector<2x72xf32> -> vector<2x72xf32>
    %140 = vector.broadcast %29 : vector<1x72xf32> to vector<2x72xf32>
    %141 = arith.addf %139, %140 : vector<2x72xf32>
    %142 = vector.extract_strided_slice %138 {offsets = [0, 0], sizes = [2, 24], strides = [1, 1]} : vector<2x72xf32> to vector<2x24xf32>
    %143 = vector.extract_strided_slice %141 {offsets = [0, 0], sizes = [2, 24], strides = [1, 1]} : vector<2x72xf32> to vector<2x24xf32>
    %144 = arith.addf %142, %143 : vector<2x24xf32>
    %145 = arith.negf %144 : vector<2x24xf32>
    %146 = math.exp %145 : vector<2x24xf32>
    %cst_56 = arith.constant 1.000000e+00 : f32
    %147 = vector.broadcast %cst_56 : f32 to vector<2x24xf32>
    %148 = arith.addf %147, %146 : vector<2x24xf32>
    %149 = arith.divf %147, %148 : vector<2x24xf32>
    %150 = vector.extract_strided_slice %138 {offsets = [0, 24], sizes = [2, 24], strides = [1, 1]} : vector<2x72xf32> to vector<2x24xf32>
    %151 = vector.extract_strided_slice %141 {offsets = [0, 24], sizes = [2, 24], strides = [1, 1]} : vector<2x72xf32> to vector<2x24xf32>
    %152 = arith.addf %150, %151 : vector<2x24xf32>
    %153 = arith.negf %152 : vector<2x24xf32>
    %154 = math.exp %153 : vector<2x24xf32>
    %cst_57 = arith.constant 1.000000e+00 : f32
    %155 = vector.broadcast %cst_57 : f32 to vector<2x24xf32>
    %156 = arith.addf %155, %154 : vector<2x24xf32>
    %157 = arith.divf %155, %156 : vector<2x24xf32>
    %158 = vector.extract_strided_slice %138 {offsets = [0, 48], sizes = [2, 24], strides = [1, 1]} : vector<2x72xf32> to vector<2x24xf32>
    %159 = vector.extract_strided_slice %141 {offsets = [0, 48], sizes = [2, 24], strides = [1, 1]} : vector<2x72xf32> to vector<2x24xf32>
    %160 = arith.mulf %149, %159 : vector<2x24xf32>
    %161 = arith.addf %158, %160 : vector<2x24xf32>
    %162 = math.tanh %161 : vector<2x24xf32>
    %cst_58 = arith.constant 1.000000e+00 : f32
    %163 = vector.broadcast %cst_58 : f32 to vector<2x24xf32>
    %164 = arith.subf %163, %157 : vector<2x24xf32>
    %165 = arith.mulf %164, %162 : vector<2x24xf32>
    %166 = arith.mulf %157, %101 : vector<2x24xf32>
    %167 = arith.addf %165, %166 : vector<2x24xf32>
    %168 = vector.shape_cast %136 : vector<2x24xf32> to vector<2x1x24xf32>
    %c0_59 = arith.constant 0 : index
    %c1 = arith.constant 1 : index
    %c0_60 = arith.constant 0 : index
    %169 = vector.load %arg39[%c0_59, %c1, %c0_60] : memref<2x8x24xf32, #tpu.memory_space<vmem>>, vector<2x1x24xf32>
    tpu.vector_store %arg39[%c0_59, %c1, %c0_60], %168 {strides = array<i32>} : memref<2x8x24xf32, #tpu.memory_space<vmem>>, vector<2x1x24xf32>,
    %170 = vector.shape_cast %167 : vector<2x24xf32> to vector<2x1x24xf32>
    %c0_61 = arith.constant 0 : index
    %c6 = arith.constant 6 : index
    %c0_62 = arith.constant 0 : index
    %171 = vector.load %arg40[%c0_61, %c6, %c0_62] : memref<2x8x24xf32, #tpu.memory_space<vmem>>, vector<2x1x24xf32>
    tpu.vector_store %arg40[%c0_61, %c6, %c0_62], %170 {strides = array<i32>} : memref<2x8x24xf32, #tpu.memory_space<vmem>>, vector<2x1x24xf32>,
    %172 = vector.extract_strided_slice %36 {offsets = [0, 2, 0], sizes = [2, 1, 72], strides = [1, 1, 1]} : vector<2x8x72xf32> to vector<2x1x72xf32>
    %173 = vector.shape_cast %172 : vector<2x1x72xf32> to vector<2x72xf32>
    %cst_63 = arith.constant dense<0.000000e+00> : vector<2x72xf32>
    %174 = tpu.matmul %136, %23, %cst_63 {dimension_numbers = #tpu.dot_dimension_numbers<[1], [0], [0], [1], [0, 0, 1, 1], [], []>} : vector<2x24xf32>, vector<24x72xf32>, vector<2x72xf32> -> vector<2x72xf32>
    %175 = vector.broadcast %25 : vector<1x72xf32> to vector<2x72xf32>
    %176 = arith.addf %174, %175 : vector<2x72xf32>
    %177 = vector.extract_strided_slice %173 {offsets = [0, 0], sizes = [2, 24], strides = [1, 1]} : vector<2x72xf32> to vector<2x24xf32>
    %178 = vector.extract_strided_slice %176 {offsets = [0, 0], sizes = [2, 24], strides = [1, 1]} : vector<2x72xf32> to vector<2x24xf32>
    %179 = arith.addf %177, %178 : vector<2x24xf32>
    %180 = arith.negf %179 : vector<2x24xf32>
    %181 = math.exp %180 : vector<2x24xf32>
    %cst_64 = arith.constant 1.000000e+00 : f32
    %182 = vector.broadcast %cst_64 : f32 to vector<2x24xf32>
    %183 = arith.addf %182, %181 : vector<2x24xf32>
    %184 = arith.divf %182, %183 : vector<2x24xf32>
    %185 = vector.extract_strided_slice %173 {offsets = [0, 24], sizes = [2, 24], strides = [1, 1]} : vector<2x72xf32> to vector<2x24xf32>
    %186 = vector.extract_strided_slice %176 {offsets = [0, 24], sizes = [2, 24], strides = [1, 1]} : vector<2x72xf32> to vector<2x24xf32>
    %187 = arith.addf %185, %186 : vector<2x24xf32>
    %188 = arith.negf %187 : vector<2x24xf32>
    %189 = math.exp %188 : vector<2x24xf32>
    %cst_65 = arith.constant 1.000000e+00 : f32
    %190 = vector.broadcast %cst_65 : f32 to vector<2x24xf32>
    %191 = arith.addf %190, %189 : vector<2x24xf32>
    %192 = arith.divf %190, %191 : vector<2x24xf32>
    %193 = vector.extract_strided_slice %173 {offsets = [0, 48], sizes = [2, 24], strides = [1, 1]} : vector<2x72xf32> to vector<2x24xf32>
    %194 = vector.extract_strided_slice %176 {offsets = [0, 48], sizes = [2, 24], strides = [1, 1]} : vector<2x72xf32> to vector<2x24xf32>
    %195 = arith.mulf %184, %194 : vector<2x24xf32>
    %196 = arith.addf %193, %195 : vector<2x24xf32>
    %197 = math.tanh %196 : vector<2x24xf32>
    %cst_66 = arith.constant 1.000000e+00 : f32
    %198 = vector.broadcast %cst_66 : f32 to vector<2x24xf32>
    %199 = arith.subf %198, %192 : vector<2x24xf32>
    %200 = arith.mulf %199, %197 : vector<2x24xf32>
    %201 = arith.mulf %192, %136 : vector<2x24xf32>
    %202 = arith.addf %200, %201 : vector<2x24xf32>
    %203 = vector.extract_strided_slice %37 {offsets = [0, 5, 0], sizes = [2, 1, 72], strides = [1, 1, 1]} : vector<2x8x72xf32> to vector<2x1x72xf32>
    %204 = vector.shape_cast %203 : vector<2x1x72xf32> to vector<2x72xf32>
    %cst_67 = arith.constant dense<0.000000e+00> : vector<2x72xf32>
    %205 = tpu.matmul %167, %27, %cst_67 {dimension_numbers = #tpu.dot_dimension_numbers<[1], [0], [0], [1], [0, 0, 1, 1], [], []>} : vector<2x24xf32>, vector<24x72xf32>, vector<2x72xf32> -> vector<2x72xf32>
    %206 = vector.broadcast %29 : vector<1x72xf32> to vector<2x72xf32>
    %207 = arith.addf %205, %206 : vector<2x72xf32>
    %208 = vector.extract_strided_slice %204 {offsets = [0, 0], sizes = [2, 24], strides = [1, 1]} : vector<2x72xf32> to vector<2x24xf32>
    %209 = vector.extract_strided_slice %207 {offsets = [0, 0], sizes = [2, 24], strides = [1, 1]} : vector<2x72xf32> to vector<2x24xf32>
    %210 = arith.addf %208, %209 : vector<2x24xf32>
    %211 = arith.negf %210 : vector<2x24xf32>
    %212 = math.exp %211 : vector<2x24xf32>
    %cst_68 = arith.constant 1.000000e+00 : f32
    %213 = vector.broadcast %cst_68 : f32 to vector<2x24xf32>
    %214 = arith.addf %213, %212 : vector<2x24xf32>
    %215 = arith.divf %213, %214 : vector<2x24xf32>
    %216 = vector.extract_strided_slice %204 {offsets = [0, 24], sizes = [2, 24], strides = [1, 1]} : vector<2x72xf32> to vector<2x24xf32>
    %217 = vector.extract_strided_slice %207 {offsets = [0, 24], sizes = [2, 24], strides = [1, 1]} : vector<2x72xf32> to vector<2x24xf32>
    %218 = arith.addf %216, %217 : vector<2x24xf32>
    %219 = arith.negf %218 : vector<2x24xf32>
    %220 = math.exp %219 : vector<2x24xf32>
    %cst_69 = arith.constant 1.000000e+00 : f32
    %221 = vector.broadcast %cst_69 : f32 to vector<2x24xf32>
    %222 = arith.addf %221, %220 : vector<2x24xf32>
    %223 = arith.divf %221, %222 : vector<2x24xf32>
    %224 = vector.extract_strided_slice %204 {offsets = [0, 48], sizes = [2, 24], strides = [1, 1]} : vector<2x72xf32> to vector<2x24xf32>
    %225 = vector.extract_strided_slice %207 {offsets = [0, 48], sizes = [2, 24], strides = [1, 1]} : vector<2x72xf32> to vector<2x24xf32>
    %226 = arith.mulf %215, %225 : vector<2x24xf32>
    %227 = arith.addf %224, %226 : vector<2x24xf32>
    %228 = math.tanh %227 : vector<2x24xf32>
    %cst_70 = arith.constant 1.000000e+00 : f32
    %229 = vector.broadcast %cst_70 : f32 to vector<2x24xf32>
    %230 = arith.subf %229, %223 : vector<2x24xf32>
    %231 = arith.mulf %230, %228 : vector<2x24xf32>
    %232 = arith.mulf %223, %167 : vector<2x24xf32>
    %233 = arith.addf %231, %232 : vector<2x24xf32>
    %234 = vector.shape_cast %202 : vector<2x24xf32> to vector<2x1x24xf32>
    %c0_71 = arith.constant 0 : index
    %c2 = arith.constant 2 : index
    %c0_72 = arith.constant 0 : index
    %235 = vector.load %arg39[%c0_71, %c2, %c0_72] : memref<2x8x24xf32, #tpu.memory_space<vmem>>, vector<2x1x24xf32>
    tpu.vector_store %arg39[%c0_71, %c2, %c0_72], %234 {strides = array<i32>} : memref<2x8x24xf32, #tpu.memory_space<vmem>>, vector<2x1x24xf32>,
    %236 = vector.shape_cast %233 : vector<2x24xf32> to vector<2x1x24xf32>
    %c0_73 = arith.constant 0 : index
    %c5 = arith.constant 5 : index
    %c0_74 = arith.constant 0 : index
    %237 = vector.load %arg40[%c0_73, %c5, %c0_74] : memref<2x8x24xf32, #tpu.memory_space<vmem>>, vector<2x1x24xf32>
    tpu.vector_store %arg40[%c0_73, %c5, %c0_74], %236 {strides = array<i32>} : memref<2x8x24xf32, #tpu.memory_space<vmem>>, vector<2x1x24xf32>,
    %238 = vector.extract_strided_slice %36 {offsets = [0, 3, 0], sizes = [2, 1, 72], strides = [1, 1, 1]} : vector<2x8x72xf32> to vector<2x1x72xf32>
    %239 = vector.shape_cast %238 : vector<2x1x72xf32> to vector<2x72xf32>
    %cst_75 = arith.constant dense<0.000000e+00> : vector<2x72xf32>
    %240 = tpu.matmul %202, %23, %cst_75 {dimension_numbers = #tpu.dot_dimension_numbers<[1], [0], [0], [1], [0, 0, 1, 1], [], []>} : vector<2x24xf32>, vector<24x72xf32>, vector<2x72xf32> -> vector<2x72xf32>
    %241 = vector.broadcast %25 : vector<1x72xf32> to vector<2x72xf32>
    %242 = arith.addf %240, %241 : vector<2x72xf32>
    %243 = vector.extract_strided_slice %239 {offsets = [0, 0], sizes = [2, 24], strides = [1, 1]} : vector<2x72xf32> to vector<2x24xf32>
    %244 = vector.extract_strided_slice %242 {offsets = [0, 0], sizes = [2, 24], strides = [1, 1]} : vector<2x72xf32> to vector<2x24xf32>
    %245 = arith.addf %243, %244 : vector<2x24xf32>
    %246 = arith.negf %245 : vector<2x24xf32>
    %247 = math.exp %246 : vector<2x24xf32>
    %cst_76 = arith.constant 1.000000e+00 : f32
    %248 = vector.broadcast %cst_76 : f32 to vector<2x24xf32>
    %249 = arith.addf %248, %247 : vector<2x24xf32>
    %250 = arith.divf %248, %249 : vector<2x24xf32>
    %251 = vector.extract_strided_slice %239 {offsets = [0, 24], sizes = [2, 24], strides = [1, 1]} : vector<2x72xf32> to vector<2x24xf32>
    %252 = vector.extract_strided_slice %242 {offsets = [0, 24], sizes = [2, 24], strides = [1, 1]} : vector<2x72xf32> to vector<2x24xf32>
    %253 = arith.addf %251, %252 : vector<2x24xf32>
    %254 = arith.negf %253 : vector<2x24xf32>
    %255 = math.exp %254 : vector<2x24xf32>
    %cst_77 = arith.constant 1.000000e+00 : f32
    %256 = vector.broadcast %cst_77 : f32 to vector<2x24xf32>
    %257 = arith.addf %256, %255 : vector<2x24xf32>
    %258 = arith.divf %256, %257 : vector<2x24xf32>
    %259 = vector.extract_strided_slice %239 {offsets = [0, 48], sizes = [2, 24], strides = [1, 1]} : vector<2x72xf32> to vector<2x24xf32>
    %260 = vector.extract_strided_slice %242 {offsets = [0, 48], sizes = [2, 24], strides = [1, 1]} : vector<2x72xf32> to vector<2x24xf32>
    %261 = arith.mulf %250, %260 : vector<2x24xf32>
    %262 = arith.addf %259, %261 : vector<2x24xf32>
    %263 = math.tanh %262 : vector<2x24xf32>
    %cst_78 = arith.constant 1.000000e+00 : f32
    %264 = vector.broadcast %cst_78 : f32 to vector<2x24xf32>
    %265 = arith.subf %264, %258 : vector<2x24xf32>
    %266 = arith.mulf %265, %263 : vector<2x24xf32>
    %267 = arith.mulf %258, %202 : vector<2x24xf32>
    %268 = arith.addf %266, %267 : vector<2x24xf32>
    %269 = vector.extract_strided_slice %37 {offsets = [0, 4, 0], sizes = [2, 1, 72], strides = [1, 1, 1]} : vector<2x8x72xf32> to vector<2x1x72xf32>
    %270 = vector.shape_cast %269 : vector<2x1x72xf32> to vector<2x72xf32>
    %cst_79 = arith.constant dense<0.000000e+00> : vector<2x72xf32>
    %271 = tpu.matmul %233, %27, %cst_79 {dimension_numbers = #tpu.dot_dimension_numbers<[1], [0], [0], [1], [0, 0, 1, 1], [], []>} : vector<2x24xf32>, vector<24x72xf32>, vector<2x72xf32> -> vector<2x72xf32>
    %272 = vector.broadcast %29 : vector<1x72xf32> to vector<2x72xf32>
    %273 = arith.addf %271, %272 : vector<2x72xf32>
    %274 = vector.extract_strided_slice %270 {offsets = [0, 0], sizes = [2, 24], strides = [1, 1]} : vector<2x72xf32> to vector<2x24xf32>
    %275 = vector.extract_strided_slice %273 {offsets = [0, 0], sizes = [2, 24], strides = [1, 1]} : vector<2x72xf32> to vector<2x24xf32>
    %276 = arith.addf %274, %275 : vector<2x24xf32>
    %277 = arith.negf %276 : vector<2x24xf32>
    %278 = math.exp %277 : vector<2x24xf32>
    %cst_80 = arith.constant 1.000000e+00 : f32
    %279 = vector.broadcast %cst_80 : f32 to vector<2x24xf32>
    %280 = arith.addf %279, %278 : vector<2x24xf32>
    %281 = arith.divf %279, %280 : vector<2x24xf32>
    %282 = vector.extract_strided_slice %270 {offsets = [0, 24], sizes = [2, 24], strides = [1, 1]} : vector<2x72xf32> to vector<2x24xf32>
    %283 = vector.extract_strided_slice %273 {offsets = [0, 24], sizes = [2, 24], strides = [1, 1]} : vector<2x72xf32> to vector<2x24xf32>
    %284 = arith.addf %282, %283 : vector<2x24xf32>
    %285 = arith.negf %284 : vector<2x24xf32>
    %286 = math.exp %285 : vector<2x24xf32>
    %cst_81 = arith.constant 1.000000e+00 : f32
    %287 = vector.broadcast %cst_81 : f32 to vector<2x24xf32>
    %288 = arith.addf %287, %286 : vector<2x24xf32>
    %289 = arith.divf %287, %288 : vector<2x24xf32>
    %290 = vector.extract_strided_slice %270 {offsets = [0, 48], sizes = [2, 24], strides = [1, 1]} : vector<2x72xf32> to vector<2x24xf32>
    %291 = vector.extract_strided_slice %273 {offsets = [0, 48], sizes = [2, 24], strides = [1, 1]} : vector<2x72xf32> to vector<2x24xf32>
    %292 = arith.mulf %281, %291 : vector<2x24xf32>
    %293 = arith.addf %290, %292 : vector<2x24xf32>
    %294 = math.tanh %293 : vector<2x24xf32>
    %cst_82 = arith.constant 1.000000e+00 : f32
    %295 = vector.broadcast %cst_82 : f32 to vector<2x24xf32>
    %296 = arith.subf %295, %289 : vector<2x24xf32>
    %297 = arith.mulf %296, %294 : vector<2x24xf32>
    %298 = arith.mulf %289, %233 : vector<2x24xf32>
    %299 = arith.addf %297, %298 : vector<2x24xf32>
    %300 = vector.shape_cast %268 : vector<2x24xf32> to vector<2x1x24xf32>
    %c0_83 = arith.constant 0 : index
    %c3 = arith.constant 3 : index
    %c0_84 = arith.constant 0 : index
    %301 = vector.load %arg39[%c0_83, %c3, %c0_84] : memref<2x8x24xf32, #tpu.memory_space<vmem>>, vector<2x1x24xf32>
    tpu.vector_store %arg39[%c0_83, %c3, %c0_84], %300 {strides = array<i32>} : memref<2x8x24xf32, #tpu.memory_space<vmem>>, vector<2x1x24xf32>,
    %302 = vector.shape_cast %299 : vector<2x24xf32> to vector<2x1x24xf32>
    %c0_85 = arith.constant 0 : index
    %c4 = arith.constant 4 : index
    %c0_86 = arith.constant 0 : index
    %303 = vector.load %arg40[%c0_85, %c4, %c0_86] : memref<2x8x24xf32, #tpu.memory_space<vmem>>, vector<2x1x24xf32>
    tpu.vector_store %arg40[%c0_85, %c4, %c0_86], %302 {strides = array<i32>} : memref<2x8x24xf32, #tpu.memory_space<vmem>>, vector<2x1x24xf32>,
    %304 = vector.extract_strided_slice %36 {offsets = [0, 4, 0], sizes = [2, 1, 72], strides = [1, 1, 1]} : vector<2x8x72xf32> to vector<2x1x72xf32>
    %305 = vector.shape_cast %304 : vector<2x1x72xf32> to vector<2x72xf32>
    %cst_87 = arith.constant dense<0.000000e+00> : vector<2x72xf32>
    %306 = tpu.matmul %268, %23, %cst_87 {dimension_numbers = #tpu.dot_dimension_numbers<[1], [0], [0], [1], [0, 0, 1, 1], [], []>} : vector<2x24xf32>, vector<24x72xf32>, vector<2x72xf32> -> vector<2x72xf32>
    %307 = vector.broadcast %25 : vector<1x72xf32> to vector<2x72xf32>
    %308 = arith.addf %306, %307 : vector<2x72xf32>
    %309 = vector.extract_strided_slice %305 {offsets = [0, 0], sizes = [2, 24], strides = [1, 1]} : vector<2x72xf32> to vector<2x24xf32>
    %310 = vector.extract_strided_slice %308 {offsets = [0, 0], sizes = [2, 24], strides = [1, 1]} : vector<2x72xf32> to vector<2x24xf32>
    %311 = arith.addf %309, %310 : vector<2x24xf32>
    %312 = arith.negf %311 : vector<2x24xf32>
    %313 = math.exp %312 : vector<2x24xf32>
    %cst_88 = arith.constant 1.000000e+00 : f32
    %314 = vector.broadcast %cst_88 : f32 to vector<2x24xf32>
    %315 = arith.addf %314, %313 : vector<2x24xf32>
    %316 = arith.divf %314, %315 : vector<2x24xf32>
    %317 = vector.extract_strided_slice %305 {offsets = [0, 24], sizes = [2, 24], strides = [1, 1]} : vector<2x72xf32> to vector<2x24xf32>
    %318 = vector.extract_strided_slice %308 {offsets = [0, 24], sizes = [2, 24], strides = [1, 1]} : vector<2x72xf32> to vector<2x24xf32>
    %319 = arith.addf %317, %318 : vector<2x24xf32>
    %320 = arith.negf %319 : vector<2x24xf32>
    %321 = math.exp %320 : vector<2x24xf32>
    %cst_89 = arith.constant 1.000000e+00 : f32
    %322 = vector.broadcast %cst_89 : f32 to vector<2x24xf32>
    %323 = arith.addf %322, %321 : vector<2x24xf32>
    %324 = arith.divf %322, %323 : vector<2x24xf32>
    %325 = vector.extract_strided_slice %305 {offsets = [0, 48], sizes = [2, 24], strides = [1, 1]} : vector<2x72xf32> to vector<2x24xf32>
    %326 = vector.extract_strided_slice %308 {offsets = [0, 48], sizes = [2, 24], strides = [1, 1]} : vector<2x72xf32> to vector<2x24xf32>
    %327 = arith.mulf %316, %326 : vector<2x24xf32>
    %328 = arith.addf %325, %327 : vector<2x24xf32>
    %329 = math.tanh %328 : vector<2x24xf32>
    %cst_90 = arith.constant 1.000000e+00 : f32
    %330 = vector.broadcast %cst_90 : f32 to vector<2x24xf32>
    %331 = arith.subf %330, %324 : vector<2x24xf32>
    %332 = arith.mulf %331, %329 : vector<2x24xf32>
    %333 = arith.mulf %324, %268 : vector<2x24xf32>
    %334 = arith.addf %332, %333 : vector<2x24xf32>
    %335 = vector.extract_strided_slice %37 {offsets = [0, 3, 0], sizes = [2, 1, 72], strides = [1, 1, 1]} : vector<2x8x72xf32> to vector<2x1x72xf32>
    %336 = vector.shape_cast %335 : vector<2x1x72xf32> to vector<2x72xf32>
    %cst_91 = arith.constant dense<0.000000e+00> : vector<2x72xf32>
    %337 = tpu.matmul %299, %27, %cst_91 {dimension_numbers = #tpu.dot_dimension_numbers<[1], [0], [0], [1], [0, 0, 1, 1], [], []>} : vector<2x24xf32>, vector<24x72xf32>, vector<2x72xf32> -> vector<2x72xf32>
    %338 = vector.broadcast %29 : vector<1x72xf32> to vector<2x72xf32>
    %339 = arith.addf %337, %338 : vector<2x72xf32>
    %340 = vector.extract_strided_slice %336 {offsets = [0, 0], sizes = [2, 24], strides = [1, 1]} : vector<2x72xf32> to vector<2x24xf32>
    %341 = vector.extract_strided_slice %339 {offsets = [0, 0], sizes = [2, 24], strides = [1, 1]} : vector<2x72xf32> to vector<2x24xf32>
    %342 = arith.addf %340, %341 : vector<2x24xf32>
    %343 = arith.negf %342 : vector<2x24xf32>
    %344 = math.exp %343 : vector<2x24xf32>
    %cst_92 = arith.constant 1.000000e+00 : f32
    %345 = vector.broadcast %cst_92 : f32 to vector<2x24xf32>
    %346 = arith.addf %345, %344 : vector<2x24xf32>
    %347 = arith.divf %345, %346 : vector<2x24xf32>
    %348 = vector.extract_strided_slice %336 {offsets = [0, 24], sizes = [2, 24], strides = [1, 1]} : vector<2x72xf32> to vector<2x24xf32>
    %349 = vector.extract_strided_slice %339 {offsets = [0, 24], sizes = [2, 24], strides = [1, 1]} : vector<2x72xf32> to vector<2x24xf32>
    %350 = arith.addf %348, %349 : vector<2x24xf32>
    %351 = arith.negf %350 : vector<2x24xf32>
    %352 = math.exp %351 : vector<2x24xf32>
    %cst_93 = arith.constant 1.000000e+00 : f32
    %353 = vector.broadcast %cst_93 : f32 to vector<2x24xf32>
    %354 = arith.addf %353, %352 : vector<2x24xf32>
    %355 = arith.divf %353, %354 : vector<2x24xf32>
    %356 = vector.extract_strided_slice %336 {offsets = [0, 48], sizes = [2, 24], strides = [1, 1]} : vector<2x72xf32> to vector<2x24xf32>
    %357 = vector.extract_strided_slice %339 {offsets = [0, 48], sizes = [2, 24], strides = [1, 1]} : vector<2x72xf32> to vector<2x24xf32>
    %358 = arith.mulf %347, %357 : vector<2x24xf32>
    %359 = arith.addf %356, %358 : vector<2x24xf32>
    %360 = math.tanh %359 : vector<2x24xf32>
    %cst_94 = arith.constant 1.000000e+00 : f32
    %361 = vector.broadcast %cst_94 : f32 to vector<2x24xf32>
    %362 = arith.subf %361, %355 : vector<2x24xf32>
    %363 = arith.mulf %362, %360 : vector<2x24xf32>
    %364 = arith.mulf %355, %299 : vector<2x24xf32>
    %365 = arith.addf %363, %364 : vector<2x24xf32>
    %366 = vector.shape_cast %334 : vector<2x24xf32> to vector<2x1x24xf32>
    %c0_95 = arith.constant 0 : index
    %c4_96 = arith.constant 4 : index
    %c0_97 = arith.constant 0 : index
    %367 = vector.load %arg39[%c0_95, %c4_96, %c0_97] : memref<2x8x24xf32, #tpu.memory_space<vmem>>, vector<2x1x24xf32>
    tpu.vector_store %arg39[%c0_95, %c4_96, %c0_97], %366 {strides = array<i32>} : memref<2x8x24xf32, #tpu.memory_space<vmem>>, vector<2x1x24xf32>,
    %368 = vector.shape_cast %365 : vector<2x24xf32> to vector<2x1x24xf32>
    %c0_98 = arith.constant 0 : index
    %c3_99 = arith.constant 3 : index
    %c0_100 = arith.constant 0 : index
    %369 = vector.load %arg40[%c0_98, %c3_99, %c0_100] : memref<2x8x24xf32, #tpu.memory_space<vmem>>, vector<2x1x24xf32>
    tpu.vector_store %arg40[%c0_98, %c3_99, %c0_100], %368 {strides = array<i32>} : memref<2x8x24xf32, #tpu.memory_space<vmem>>, vector<2x1x24xf32>,
    %370 = vector.extract_strided_slice %36 {offsets = [0, 5, 0], sizes = [2, 1, 72], strides = [1, 1, 1]} : vector<2x8x72xf32> to vector<2x1x72xf32>
    %371 = vector.shape_cast %370 : vector<2x1x72xf32> to vector<2x72xf32>
    %cst_101 = arith.constant dense<0.000000e+00> : vector<2x72xf32>
    %372 = tpu.matmul %334, %23, %cst_101 {dimension_numbers = #tpu.dot_dimension_numbers<[1], [0], [0], [1], [0, 0, 1, 1], [], []>} : vector<2x24xf32>, vector<24x72xf32>, vector<2x72xf32> -> vector<2x72xf32>
    %373 = vector.broadcast %25 : vector<1x72xf32> to vector<2x72xf32>
    %374 = arith.addf %372, %373 : vector<2x72xf32>
    %375 = vector.extract_strided_slice %371 {offsets = [0, 0], sizes = [2, 24], strides = [1, 1]} : vector<2x72xf32> to vector<2x24xf32>
    %376 = vector.extract_strided_slice %374 {offsets = [0, 0], sizes = [2, 24], strides = [1, 1]} : vector<2x72xf32> to vector<2x24xf32>
    %377 = arith.addf %375, %376 : vector<2x24xf32>
    %378 = arith.negf %377 : vector<2x24xf32>
    %379 = math.exp %378 : vector<2x24xf32>
    %cst_102 = arith.constant 1.000000e+00 : f32
    %380 = vector.broadcast %cst_102 : f32 to vector<2x24xf32>
    %381 = arith.addf %380, %379 : vector<2x24xf32>
    %382 = arith.divf %380, %381 : vector<2x24xf32>
    %383 = vector.extract_strided_slice %371 {offsets = [0, 24], sizes = [2, 24], strides = [1, 1]} : vector<2x72xf32> to vector<2x24xf32>
    %384 = vector.extract_strided_slice %374 {offsets = [0, 24], sizes = [2, 24], strides = [1, 1]} : vector<2x72xf32> to vector<2x24xf32>
    %385 = arith.addf %383, %384 : vector<2x24xf32>
    %386 = arith.negf %385 : vector<2x24xf32>
    %387 = math.exp %386 : vector<2x24xf32>
    %cst_103 = arith.constant 1.000000e+00 : f32
    %388 = vector.broadcast %cst_103 : f32 to vector<2x24xf32>
    %389 = arith.addf %388, %387 : vector<2x24xf32>
    %390 = arith.divf %388, %389 : vector<2x24xf32>
    %391 = vector.extract_strided_slice %371 {offsets = [0, 48], sizes = [2, 24], strides = [1, 1]} : vector<2x72xf32> to vector<2x24xf32>
    %392 = vector.extract_strided_slice %374 {offsets = [0, 48], sizes = [2, 24], strides = [1, 1]} : vector<2x72xf32> to vector<2x24xf32>
    %393 = arith.mulf %382, %392 : vector<2x24xf32>
    %394 = arith.addf %391, %393 : vector<2x24xf32>
    %395 = math.tanh %394 : vector<2x24xf32>
    %cst_104 = arith.constant 1.000000e+00 : f32
    %396 = vector.broadcast %cst_104 : f32 to vector<2x24xf32>
    %397 = arith.subf %396, %390 : vector<2x24xf32>
    %398 = arith.mulf %397, %395 : vector<2x24xf32>
    %399 = arith.mulf %390, %334 : vector<2x24xf32>
    %400 = arith.addf %398, %399 : vector<2x24xf32>
    %401 = vector.extract_strided_slice %37 {offsets = [0, 2, 0], sizes = [2, 1, 72], strides = [1, 1, 1]} : vector<2x8x72xf32> to vector<2x1x72xf32>
    %402 = vector.shape_cast %401 : vector<2x1x72xf32> to vector<2x72xf32>
    %cst_105 = arith.constant dense<0.000000e+00> : vector<2x72xf32>
    %403 = tpu.matmul %365, %27, %cst_105 {dimension_numbers = #tpu.dot_dimension_numbers<[1], [0], [0], [1], [0, 0, 1, 1], [], []>} : vector<2x24xf32>, vector<24x72xf32>, vector<2x72xf32> -> vector<2x72xf32>
    %404 = vector.broadcast %29 : vector<1x72xf32> to vector<2x72xf32>
    %405 = arith.addf %403, %404 : vector<2x72xf32>
    %406 = vector.extract_strided_slice %402 {offsets = [0, 0], sizes = [2, 24], strides = [1, 1]} : vector<2x72xf32> to vector<2x24xf32>
    %407 = vector.extract_strided_slice %405 {offsets = [0, 0], sizes = [2, 24], strides = [1, 1]} : vector<2x72xf32> to vector<2x24xf32>
    %408 = arith.addf %406, %407 : vector<2x24xf32>
    %409 = arith.negf %408 : vector<2x24xf32>
    %410 = math.exp %409 : vector<2x24xf32>
    %cst_106 = arith.constant 1.000000e+00 : f32
    %411 = vector.broadcast %cst_106 : f32 to vector<2x24xf32>
    %412 = arith.addf %411, %410 : vector<2x24xf32>
    %413 = arith.divf %411, %412 : vector<2x24xf32>
    %414 = vector.extract_strided_slice %402 {offsets = [0, 24], sizes = [2, 24], strides = [1, 1]} : vector<2x72xf32> to vector<2x24xf32>
    %415 = vector.extract_strided_slice %405 {offsets = [0, 24], sizes = [2, 24], strides = [1, 1]} : vector<2x72xf32> to vector<2x24xf32>
    %416 = arith.addf %414, %415 : vector<2x24xf32>
    %417 = arith.negf %416 : vector<2x24xf32>
    %418 = math.exp %417 : vector<2x24xf32>
    %cst_107 = arith.constant 1.000000e+00 : f32
    %419 = vector.broadcast %cst_107 : f32 to vector<2x24xf32>
    %420 = arith.addf %419, %418 : vector<2x24xf32>
    %421 = arith.divf %419, %420 : vector<2x24xf32>
    %422 = vector.extract_strided_slice %402 {offsets = [0, 48], sizes = [2, 24], strides = [1, 1]} : vector<2x72xf32> to vector<2x24xf32>
    %423 = vector.extract_strided_slice %405 {offsets = [0, 48], sizes = [2, 24], strides = [1, 1]} : vector<2x72xf32> to vector<2x24xf32>
    %424 = arith.mulf %413, %423 : vector<2x24xf32>
    %425 = arith.addf %422, %424 : vector<2x24xf32>
    %426 = math.tanh %425 : vector<2x24xf32>
    %cst_108 = arith.constant 1.000000e+00 : f32
    %427 = vector.broadcast %cst_108 : f32 to vector<2x24xf32>
    %428 = arith.subf %427, %421 : vector<2x24xf32>
    %429 = arith.mulf %428, %426 : vector<2x24xf32>
    %430 = arith.mulf %421, %365 : vector<2x24xf32>
    %431 = arith.addf %429, %430 : vector<2x24xf32>
    %432 = vector.shape_cast %400 : vector<2x24xf32> to vector<2x1x24xf32>
    %c0_109 = arith.constant 0 : index
    %c5_110 = arith.constant 5 : index
    %c0_111 = arith.constant 0 : index
    %433 = vector.load %arg39[%c0_109, %c5_110, %c0_111] : memref<2x8x24xf32, #tpu.memory_space<vmem>>, vector<2x1x24xf32>
    tpu.vector_store %arg39[%c0_109, %c5_110, %c0_111], %432 {strides = array<i32>} : memref<2x8x24xf32, #tpu.memory_space<vmem>>, vector<2x1x24xf32>,
    %434 = vector.shape_cast %431 : vector<2x24xf32> to vector<2x1x24xf32>
    %c0_112 = arith.constant 0 : index
    %c2_113 = arith.constant 2 : index
    %c0_114 = arith.constant 0 : index
    %435 = vector.load %arg40[%c0_112, %c2_113, %c0_114] : memref<2x8x24xf32, #tpu.memory_space<vmem>>, vector<2x1x24xf32>
    tpu.vector_store %arg40[%c0_112, %c2_113, %c0_114], %434 {strides = array<i32>} : memref<2x8x24xf32, #tpu.memory_space<vmem>>, vector<2x1x24xf32>,
    %436 = vector.extract_strided_slice %36 {offsets = [0, 6, 0], sizes = [2, 1, 72], strides = [1, 1, 1]} : vector<2x8x72xf32> to vector<2x1x72xf32>
    %437 = vector.shape_cast %436 : vector<2x1x72xf32> to vector<2x72xf32>
    %cst_115 = arith.constant dense<0.000000e+00> : vector<2x72xf32>
    %438 = tpu.matmul %400, %23, %cst_115 {dimension_numbers = #tpu.dot_dimension_numbers<[1], [0], [0], [1], [0, 0, 1, 1], [], []>} : vector<2x24xf32>, vector<24x72xf32>, vector<2x72xf32> -> vector<2x72xf32>
    %439 = vector.broadcast %25 : vector<1x72xf32> to vector<2x72xf32>
    %440 = arith.addf %438, %439 : vector<2x72xf32>
    %441 = vector.extract_strided_slice %437 {offsets = [0, 0], sizes = [2, 24], strides = [1, 1]} : vector<2x72xf32> to vector<2x24xf32>
    %442 = vector.extract_strided_slice %440 {offsets = [0, 0], sizes = [2, 24], strides = [1, 1]} : vector<2x72xf32> to vector<2x24xf32>
    %443 = arith.addf %441, %442 : vector<2x24xf32>
    %444 = arith.negf %443 : vector<2x24xf32>
    %445 = math.exp %444 : vector<2x24xf32>
    %cst_116 = arith.constant 1.000000e+00 : f32
    %446 = vector.broadcast %cst_116 : f32 to vector<2x24xf32>
    %447 = arith.addf %446, %445 : vector<2x24xf32>
    %448 = arith.divf %446, %447 : vector<2x24xf32>
    %449 = vector.extract_strided_slice %437 {offsets = [0, 24], sizes = [2, 24], strides = [1, 1]} : vector<2x72xf32> to vector<2x24xf32>
    %450 = vector.extract_strided_slice %440 {offsets = [0, 24], sizes = [2, 24], strides = [1, 1]} : vector<2x72xf32> to vector<2x24xf32>
    %451 = arith.addf %449, %450 : vector<2x24xf32>
    %452 = arith.negf %451 : vector<2x24xf32>
    %453 = math.exp %452 : vector<2x24xf32>
    %cst_117 = arith.constant 1.000000e+00 : f32
    %454 = vector.broadcast %cst_117 : f32 to vector<2x24xf32>
    %455 = arith.addf %454, %453 : vector<2x24xf32>
    %456 = arith.divf %454, %455 : vector<2x24xf32>
    %457 = vector.extract_strided_slice %437 {offsets = [0, 48], sizes = [2, 24], strides = [1, 1]} : vector<2x72xf32> to vector<2x24xf32>
    %458 = vector.extract_strided_slice %440 {offsets = [0, 48], sizes = [2, 24], strides = [1, 1]} : vector<2x72xf32> to vector<2x24xf32>
    %459 = arith.mulf %448, %458 : vector<2x24xf32>
    %460 = arith.addf %457, %459 : vector<2x24xf32>
    %461 = math.tanh %460 : vector<2x24xf32>
    %cst_118 = arith.constant 1.000000e+00 : f32
    %462 = vector.broadcast %cst_118 : f32 to vector<2x24xf32>
    %463 = arith.subf %462, %456 : vector<2x24xf32>
    %464 = arith.mulf %463, %461 : vector<2x24xf32>
    %465 = arith.mulf %456, %400 : vector<2x24xf32>
    %466 = arith.addf %464, %465 : vector<2x24xf32>
    %467 = vector.extract_strided_slice %37 {offsets = [0, 1, 0], sizes = [2, 1, 72], strides = [1, 1, 1]} : vector<2x8x72xf32> to vector<2x1x72xf32>
    %468 = vector.shape_cast %467 : vector<2x1x72xf32> to vector<2x72xf32>
    %cst_119 = arith.constant dense<0.000000e+00> : vector<2x72xf32>
    %469 = tpu.matmul %431, %27, %cst_119 {dimension_numbers = #tpu.dot_dimension_numbers<[1], [0], [0], [1], [0, 0, 1, 1], [], []>} : vector<2x24xf32>, vector<24x72xf32>, vector<2x72xf32> -> vector<2x72xf32>
    %470 = vector.broadcast %29 : vector<1x72xf32> to vector<2x72xf32>
    %471 = arith.addf %469, %470 : vector<2x72xf32>
    %472 = vector.extract_strided_slice %468 {offsets = [0, 0], sizes = [2, 24], strides = [1, 1]} : vector<2x72xf32> to vector<2x24xf32>
    %473 = vector.extract_strided_slice %471 {offsets = [0, 0], sizes = [2, 24], strides = [1, 1]} : vector<2x72xf32> to vector<2x24xf32>
    %474 = arith.addf %472, %473 : vector<2x24xf32>
    %475 = arith.negf %474 : vector<2x24xf32>
    %476 = math.exp %475 : vector<2x24xf32>
    %cst_120 = arith.constant 1.000000e+00 : f32
    %477 = vector.broadcast %cst_120 : f32 to vector<2x24xf32>
    %478 = arith.addf %477, %476 : vector<2x24xf32>
    %479 = arith.divf %477, %478 : vector<2x24xf32>
    %480 = vector.extract_strided_slice %468 {offsets = [0, 24], sizes = [2, 24], strides = [1, 1]} : vector<2x72xf32> to vector<2x24xf32>
    %481 = vector.extract_strided_slice %471 {offsets = [0, 24], sizes = [2, 24], strides = [1, 1]} : vector<2x72xf32> to vector<2x24xf32>
    %482 = arith.addf %480, %481 : vector<2x24xf32>
    %483 = arith.negf %482 : vector<2x24xf32>
    %484 = math.exp %483 : vector<2x24xf32>
    %cst_121 = arith.constant 1.000000e+00 : f32
    %485 = vector.broadcast %cst_121 : f32 to vector<2x24xf32>
    %486 = arith.addf %485, %484 : vector<2x24xf32>
    %487 = arith.divf %485, %486 : vector<2x24xf32>
    %488 = vector.extract_strided_slice %468 {offsets = [0, 48], sizes = [2, 24], strides = [1, 1]} : vector<2x72xf32> to vector<2x24xf32>
    %489 = vector.extract_strided_slice %471 {offsets = [0, 48], sizes = [2, 24], strides = [1, 1]} : vector<2x72xf32> to vector<2x24xf32>
    %490 = arith.mulf %479, %489 : vector<2x24xf32>
    %491 = arith.addf %488, %490 : vector<2x24xf32>
    %492 = math.tanh %491 : vector<2x24xf32>
    %cst_122 = arith.constant 1.000000e+00 : f32
    %493 = vector.broadcast %cst_122 : f32 to vector<2x24xf32>
    %494 = arith.subf %493, %487 : vector<2x24xf32>
    %495 = arith.mulf %494, %492 : vector<2x24xf32>
    %496 = arith.mulf %487, %431 : vector<2x24xf32>
    %497 = arith.addf %495, %496 : vector<2x24xf32>
    %498 = vector.shape_cast %466 : vector<2x24xf32> to vector<2x1x24xf32>
    %c0_123 = arith.constant 0 : index
    %c6_124 = arith.constant 6 : index
    %c0_125 = arith.constant 0 : index
    %499 = vector.load %arg39[%c0_123, %c6_124, %c0_125] : memref<2x8x24xf32, #tpu.memory_space<vmem>>, vector<2x1x24xf32>
    tpu.vector_store %arg39[%c0_123, %c6_124, %c0_125], %498 {strides = array<i32>} : memref<2x8x24xf32, #tpu.memory_space<vmem>>, vector<2x1x24xf32>,
    %500 = vector.shape_cast %497 : vector<2x24xf32> to vector<2x1x24xf32>
    %c0_126 = arith.constant 0 : index
    %c1_127 = arith.constant 1 : index
    %c0_128 = arith.constant 0 : index
    %501 = vector.load %arg40[%c0_126, %c1_127, %c0_128] : memref<2x8x24xf32, #tpu.memory_space<vmem>>, vector<2x1x24xf32>
    tpu.vector_store %arg40[%c0_126, %c1_127, %c0_128], %500 {strides = array<i32>} : memref<2x8x24xf32, #tpu.memory_space<vmem>>, vector<2x1x24xf32>,
    %502 = vector.extract_strided_slice %36 {offsets = [0, 7, 0], sizes = [2, 1, 72], strides = [1, 1, 1]} : vector<2x8x72xf32> to vector<2x1x72xf32>
    %503 = vector.shape_cast %502 : vector<2x1x72xf32> to vector<2x72xf32>
    %cst_129 = arith.constant dense<0.000000e+00> : vector<2x72xf32>
    %504 = tpu.matmul %466, %23, %cst_129 {dimension_numbers = #tpu.dot_dimension_numbers<[1], [0], [0], [1], [0, 0, 1, 1], [], []>} : vector<2x24xf32>, vector<24x72xf32>, vector<2x72xf32> -> vector<2x72xf32>
    %505 = vector.broadcast %25 : vector<1x72xf32> to vector<2x72xf32>
    %506 = arith.addf %504, %505 : vector<2x72xf32>
    %507 = vector.extract_strided_slice %503 {offsets = [0, 0], sizes = [2, 24], strides = [1, 1]} : vector<2x72xf32> to vector<2x24xf32>
    %508 = vector.extract_strided_slice %506 {offsets = [0, 0], sizes = [2, 24], strides = [1, 1]} : vector<2x72xf32> to vector<2x24xf32>
    %509 = arith.addf %507, %508 : vector<2x24xf32>
    %510 = arith.negf %509 : vector<2x24xf32>
    %511 = math.exp %510 : vector<2x24xf32>
    %cst_130 = arith.constant 1.000000e+00 : f32
    %512 = vector.broadcast %cst_130 : f32 to vector<2x24xf32>
    %513 = arith.addf %512, %511 : vector<2x24xf32>
    %514 = arith.divf %512, %513 : vector<2x24xf32>
    %515 = vector.extract_strided_slice %503 {offsets = [0, 24], sizes = [2, 24], strides = [1, 1]} : vector<2x72xf32> to vector<2x24xf32>
    %516 = vector.extract_strided_slice %506 {offsets = [0, 24], sizes = [2, 24], strides = [1, 1]} : vector<2x72xf32> to vector<2x24xf32>
    %517 = arith.addf %515, %516 : vector<2x24xf32>
    %518 = arith.negf %517 : vector<2x24xf32>
    %519 = math.exp %518 : vector<2x24xf32>
    %cst_131 = arith.constant 1.000000e+00 : f32
    %520 = vector.broadcast %cst_131 : f32 to vector<2x24xf32>
    %521 = arith.addf %520, %519 : vector<2x24xf32>
    %522 = arith.divf %520, %521 : vector<2x24xf32>
    %523 = vector.extract_strided_slice %503 {offsets = [0, 48], sizes = [2, 24], strides = [1, 1]} : vector<2x72xf32> to vector<2x24xf32>
    %524 = vector.extract_strided_slice %506 {offsets = [0, 48], sizes = [2, 24], strides = [1, 1]} : vector<2x72xf32> to vector<2x24xf32>
    %525 = arith.mulf %514, %524 : vector<2x24xf32>
    %526 = arith.addf %523, %525 : vector<2x24xf32>
    %527 = math.tanh %526 : vector<2x24xf32>
    %cst_132 = arith.constant 1.000000e+00 : f32
    %528 = vector.broadcast %cst_132 : f32 to vector<2x24xf32>
    %529 = arith.subf %528, %522 : vector<2x24xf32>
    %530 = arith.mulf %529, %527 : vector<2x24xf32>
    %531 = arith.mulf %522, %466 : vector<2x24xf32>
    %532 = arith.addf %530, %531 : vector<2x24xf32>
    %533 = vector.extract_strided_slice %37 {offsets = [0, 0, 0], sizes = [2, 1, 72], strides = [1, 1, 1]} : vector<2x8x72xf32> to vector<2x1x72xf32>
    %534 = vector.shape_cast %533 : vector<2x1x72xf32> to vector<2x72xf32>
    %cst_133 = arith.constant dense<0.000000e+00> : vector<2x72xf32>
    %535 = tpu.matmul %497, %27, %cst_133 {dimension_numbers = #tpu.dot_dimension_numbers<[1], [0], [0], [1], [0, 0, 1, 1], [], []>} : vector<2x24xf32>, vector<24x72xf32>, vector<2x72xf32> -> vector<2x72xf32>
    %536 = vector.broadcast %29 : vector<1x72xf32> to vector<2x72xf32>
    %537 = arith.addf %535, %536 : vector<2x72xf32>
    %538 = vector.extract_strided_slice %534 {offsets = [0, 0], sizes = [2, 24], strides = [1, 1]} : vector<2x72xf32> to vector<2x24xf32>
    %539 = vector.extract_strided_slice %537 {offsets = [0, 0], sizes = [2, 24], strides = [1, 1]} : vector<2x72xf32> to vector<2x24xf32>
    %540 = arith.addf %538, %539 : vector<2x24xf32>
    %541 = arith.negf %540 : vector<2x24xf32>
    %542 = math.exp %541 : vector<2x24xf32>
    %cst_134 = arith.constant 1.000000e+00 : f32
    %543 = vector.broadcast %cst_134 : f32 to vector<2x24xf32>
    %544 = arith.addf %543, %542 : vector<2x24xf32>
    %545 = arith.divf %543, %544 : vector<2x24xf32>
    %546 = vector.extract_strided_slice %534 {offsets = [0, 24], sizes = [2, 24], strides = [1, 1]} : vector<2x72xf32> to vector<2x24xf32>
    %547 = vector.extract_strided_slice %537 {offsets = [0, 24], sizes = [2, 24], strides = [1, 1]} : vector<2x72xf32> to vector<2x24xf32>
    %548 = arith.addf %546, %547 : vector<2x24xf32>
    %549 = arith.negf %548 : vector<2x24xf32>
    %550 = math.exp %549 : vector<2x24xf32>
    %cst_135 = arith.constant 1.000000e+00 : f32
    %551 = vector.broadcast %cst_135 : f32 to vector<2x24xf32>
    %552 = arith.addf %551, %550 : vector<2x24xf32>
    %553 = arith.divf %551, %552 : vector<2x24xf32>
    %554 = vector.extract_strided_slice %534 {offsets = [0, 48], sizes = [2, 24], strides = [1, 1]} : vector<2x72xf32> to vector<2x24xf32>
    %555 = vector.extract_strided_slice %537 {offsets = [0, 48], sizes = [2, 24], strides = [1, 1]} : vector<2x72xf32> to vector<2x24xf32>
    %556 = arith.mulf %545, %555 : vector<2x24xf32>
    %557 = arith.addf %554, %556 : vector<2x24xf32>
    %558 = math.tanh %557 : vector<2x24xf32>
    %cst_136 = arith.constant 1.000000e+00 : f32
    %559 = vector.broadcast %cst_136 : f32 to vector<2x24xf32>
    %560 = arith.subf %559, %553 : vector<2x24xf32>
    %561 = arith.mulf %560, %558 : vector<2x24xf32>
    %562 = arith.mulf %553, %497 : vector<2x24xf32>
    %563 = arith.addf %561, %562 : vector<2x24xf32>
    %564 = vector.shape_cast %532 : vector<2x24xf32> to vector<2x1x24xf32>
    %c0_137 = arith.constant 0 : index
    %c7_138 = arith.constant 7 : index
    %c0_139 = arith.constant 0 : index
    %565 = vector.load %arg39[%c0_137, %c7_138, %c0_139] : memref<2x8x24xf32, #tpu.memory_space<vmem>>, vector<2x1x24xf32>
    tpu.vector_store %arg39[%c0_137, %c7_138, %c0_139], %564 {strides = array<i32>} : memref<2x8x24xf32, #tpu.memory_space<vmem>>, vector<2x1x24xf32>,
    %566 = vector.shape_cast %563 : vector<2x24xf32> to vector<2x1x24xf32>
    %c0_140 = arith.constant 0 : index
    %c0_141 = arith.constant 0 : index
    %c0_142 = arith.constant 0 : index
    %567 = vector.load %arg40[%c0_140, %c0_141, %c0_142] : memref<2x8x24xf32, #tpu.memory_space<vmem>>, vector<2x1x24xf32>
    tpu.vector_store %arg40[%c0_140, %c0_141, %c0_142], %566 {strides = array<i32>} : memref<2x8x24xf32, #tpu.memory_space<vmem>>, vector<2x1x24xf32>,
    %c0_143 = arith.constant 0 : index
    %c0_144 = arith.constant 0 : index
    %568 = vector.load %arg19[%c0_143, %c0_144] : memref<48x72xf32, #tpu.memory_space<vmem>>, vector<48x72xf32>
    %c0_145 = arith.constant 0 : index
    %c0_146 = arith.constant 0 : index
    %569 = vector.load %arg20[%c0_145, %c0_146] : memref<24x72xf32, #tpu.memory_space<vmem>>, vector<24x72xf32>
    %c0_147 = arith.constant 0 : index
    %c0_148 = arith.constant 0 : index
    %570 = vector.load %arg21[%c0_147, %c0_148] : memref<1x72xf32, #tpu.memory_space<vmem>>, vector<1x72xf32>
    %c0_149 = arith.constant 0 : index
    %c0_150 = arith.constant 0 : index
    %571 = vector.load %arg22[%c0_149, %c0_150] : memref<1x72xf32, #tpu.memory_space<vmem>>, vector<1x72xf32>
    %c0_151 = arith.constant 0 : index
    %c0_152 = arith.constant 0 : index
    %572 = vector.load %arg23[%c0_151, %c0_152] : memref<48x72xf32, #tpu.memory_space<vmem>>, vector<48x72xf32>
    %c0_153 = arith.constant 0 : index
    %c0_154 = arith.constant 0 : index
    %573 = vector.load %arg24[%c0_153, %c0_154] : memref<24x72xf32, #tpu.memory_space<vmem>>, vector<24x72xf32>
    %c0_155 = arith.constant 0 : index
    %c0_156 = arith.constant 0 : index
    %574 = vector.load %arg25[%c0_155, %c0_156] : memref<1x72xf32, #tpu.memory_space<vmem>>, vector<1x72xf32>
    %c0_157 = arith.constant 0 : index
    %c0_158 = arith.constant 0 : index
    %575 = vector.load %arg26[%c0_157, %c0_158] : memref<1x72xf32, #tpu.memory_space<vmem>>, vector<1x72xf32>
    %c0_159 = arith.constant 0 : index
    %c0_160 = arith.constant 0 : index
    %c0_161 = arith.constant 0 : index
    %576 = vector.load %arg39[%c0_159, %c0_160, %c0_161] : memref<2x8x24xf32, #tpu.memory_space<vmem>>, vector<2x8x24xf32>
    %577 = vector.shape_cast %576 : vector<2x8x24xf32> to vector<16x24xf32>
    %c0_162 = arith.constant 0 : index
    %c0_163 = arith.constant 0 : index
    %c0_164 = arith.constant 0 : index
    %578 = vector.load %arg40[%c0_162, %c0_163, %c0_164] : memref<2x8x24xf32, #tpu.memory_space<vmem>>, vector<2x8x24xf32>
    %579 = vector.shape_cast %578 : vector<2x8x24xf32> to vector<16x24xf32>
    %580 = vector.extract_strided_slice %568 {offsets = [0, 0], sizes = [24, 72], strides = [1, 1]} : vector<48x72xf32> to vector<24x72xf32>
    %cst_165 = arith.constant dense<0.000000e+00> : vector<16x72xf32>
    %581 = tpu.matmul %577, %580, %cst_165 {dimension_numbers = #tpu.dot_dimension_numbers<[1], [0], [0], [1], [0, 0, 1, 1], [], []>} : vector<16x24xf32>, vector<24x72xf32>, vector<16x72xf32> -> vector<16x72xf32>
    %582 = vector.extract_strided_slice %568 {offsets = [24, 0], sizes = [24, 72], strides = [1, 1]} : vector<48x72xf32> to vector<24x72xf32>
    %cst_166 = arith.constant dense<0.000000e+00> : vector<16x72xf32>
    %583 = tpu.matmul %579, %582, %cst_166 {dimension_numbers = #tpu.dot_dimension_numbers<[1], [0], [0], [1], [0, 0, 1, 1], [], []>} : vector<16x24xf32>, vector<24x72xf32>, vector<16x72xf32> -> vector<16x72xf32>
    %584 = arith.addf %581, %583 : vector<16x72xf32>
    %585 = vector.broadcast %570 : vector<1x72xf32> to vector<16x72xf32>
    %586 = arith.addf %584, %585 : vector<16x72xf32>
    %587 = vector.extract_strided_slice %572 {offsets = [0, 0], sizes = [24, 72], strides = [1, 1]} : vector<48x72xf32> to vector<24x72xf32>
    %cst_167 = arith.constant dense<0.000000e+00> : vector<16x72xf32>
    %588 = tpu.matmul %577, %587, %cst_167 {dimension_numbers = #tpu.dot_dimension_numbers<[1], [0], [0], [1], [0, 0, 1, 1], [], []>} : vector<16x24xf32>, vector<24x72xf32>, vector<16x72xf32> -> vector<16x72xf32>
    %589 = vector.extract_strided_slice %572 {offsets = [24, 0], sizes = [24, 72], strides = [1, 1]} : vector<48x72xf32> to vector<24x72xf32>
    %cst_168 = arith.constant dense<0.000000e+00> : vector<16x72xf32>
    %590 = tpu.matmul %579, %589, %cst_168 {dimension_numbers = #tpu.dot_dimension_numbers<[1], [0], [0], [1], [0, 0, 1, 1], [], []>} : vector<16x24xf32>, vector<24x72xf32>, vector<16x72xf32> -> vector<16x72xf32>
    %591 = arith.addf %588, %590 : vector<16x72xf32>
    %592 = vector.broadcast %574 : vector<1x72xf32> to vector<16x72xf32>
    %593 = arith.addf %591, %592 : vector<16x72xf32>
    %594 = vector.shape_cast %586 : vector<16x72xf32> to vector<2x8x72xf32>
    %595 = vector.shape_cast %593 : vector<16x72xf32> to vector<2x8x72xf32>
    %cst_169 = arith.constant 0.000000e+00 : f32
    %596 = vector.broadcast %cst_169 : f32 to vector<2x24xf32>
    %cst_170 = arith.constant 0.000000e+00 : f32
    %597 = vector.broadcast %cst_170 : f32 to vector<2x24xf32>
    %598 = vector.extract_strided_slice %594 {offsets = [0, 0, 0], sizes = [2, 1, 72], strides = [1, 1, 1]} : vector<2x8x72xf32> to vector<2x1x72xf32>
    %599 = vector.shape_cast %598 : vector<2x1x72xf32> to vector<2x72xf32>
    %cst_171 = arith.constant dense<0.000000e+00> : vector<2x72xf32>
    %600 = tpu.matmul %596, %569, %cst_171 {dimension_numbers = #tpu.dot_dimension_numbers<[1], [0], [0], [1], [0, 0, 1, 1], [], []>} : vector<2x24xf32>, vector<24x72xf32>, vector<2x72xf32> -> vector<2x72xf32>
    %601 = vector.broadcast %571 : vector<1x72xf32> to vector<2x72xf32>
    %602 = arith.addf %600, %601 : vector<2x72xf32>
    %603 = vector.extract_strided_slice %599 {offsets = [0, 0], sizes = [2, 24], strides = [1, 1]} : vector<2x72xf32> to vector<2x24xf32>
    %604 = vector.extract_strided_slice %602 {offsets = [0, 0], sizes = [2, 24], strides = [1, 1]} : vector<2x72xf32> to vector<2x24xf32>
    %605 = arith.addf %603, %604 : vector<2x24xf32>
    %606 = arith.negf %605 : vector<2x24xf32>
    %607 = math.exp %606 : vector<2x24xf32>
    %cst_172 = arith.constant 1.000000e+00 : f32
    %608 = vector.broadcast %cst_172 : f32 to vector<2x24xf32>
    %609 = arith.addf %608, %607 : vector<2x24xf32>
    %610 = arith.divf %608, %609 : vector<2x24xf32>
    %611 = vector.extract_strided_slice %599 {offsets = [0, 24], sizes = [2, 24], strides = [1, 1]} : vector<2x72xf32> to vector<2x24xf32>
    %612 = vector.extract_strided_slice %602 {offsets = [0, 24], sizes = [2, 24], strides = [1, 1]} : vector<2x72xf32> to vector<2x24xf32>
    %613 = arith.addf %611, %612 : vector<2x24xf32>
    %614 = arith.negf %613 : vector<2x24xf32>
    %615 = math.exp %614 : vector<2x24xf32>
    %cst_173 = arith.constant 1.000000e+00 : f32
    %616 = vector.broadcast %cst_173 : f32 to vector<2x24xf32>
    %617 = arith.addf %616, %615 : vector<2x24xf32>
    %618 = arith.divf %616, %617 : vector<2x24xf32>
    %619 = vector.extract_strided_slice %599 {offsets = [0, 48], sizes = [2, 24], strides = [1, 1]} : vector<2x72xf32> to vector<2x24xf32>
    %620 = vector.extract_strided_slice %602 {offsets = [0, 48], sizes = [2, 24], strides = [1, 1]} : vector<2x72xf32> to vector<2x24xf32>
    %621 = arith.mulf %610, %620 : vector<2x24xf32>
    %622 = arith.addf %619, %621 : vector<2x24xf32>
    %623 = math.tanh %622 : vector<2x24xf32>
    %cst_174 = arith.constant 1.000000e+00 : f32
    %624 = vector.broadcast %cst_174 : f32 to vector<2x24xf32>
    %625 = arith.subf %624, %618 : vector<2x24xf32>
    %626 = arith.mulf %625, %623 : vector<2x24xf32>
    %627 = arith.mulf %618, %596 : vector<2x24xf32>
    %628 = arith.addf %626, %627 : vector<2x24xf32>
    %629 = vector.extract_strided_slice %595 {offsets = [0, 7, 0], sizes = [2, 1, 72], strides = [1, 1, 1]} : vector<2x8x72xf32> to vector<2x1x72xf32>
    %630 = vector.shape_cast %629 : vector<2x1x72xf32> to vector<2x72xf32>
    %cst_175 = arith.constant dense<0.000000e+00> : vector<2x72xf32>
    %631 = tpu.matmul %597, %573, %cst_175 {dimension_numbers = #tpu.dot_dimension_numbers<[1], [0], [0], [1], [0, 0, 1, 1], [], []>} : vector<2x24xf32>, vector<24x72xf32>, vector<2x72xf32> -> vector<2x72xf32>
    %632 = vector.broadcast %575 : vector<1x72xf32> to vector<2x72xf32>
    %633 = arith.addf %631, %632 : vector<2x72xf32>
    %634 = vector.extract_strided_slice %630 {offsets = [0, 0], sizes = [2, 24], strides = [1, 1]} : vector<2x72xf32> to vector<2x24xf32>
    %635 = vector.extract_strided_slice %633 {offsets = [0, 0], sizes = [2, 24], strides = [1, 1]} : vector<2x72xf32> to vector<2x24xf32>
    %636 = arith.addf %634, %635 : vector<2x24xf32>
    %637 = arith.negf %636 : vector<2x24xf32>
    %638 = math.exp %637 : vector<2x24xf32>
    %cst_176 = arith.constant 1.000000e+00 : f32
    %639 = vector.broadcast %cst_176 : f32 to vector<2x24xf32>
    %640 = arith.addf %639, %638 : vector<2x24xf32>
    %641 = arith.divf %639, %640 : vector<2x24xf32>
    %642 = vector.extract_strided_slice %630 {offsets = [0, 24], sizes = [2, 24], strides = [1, 1]} : vector<2x72xf32> to vector<2x24xf32>
    %643 = vector.extract_strided_slice %633 {offsets = [0, 24], sizes = [2, 24], strides = [1, 1]} : vector<2x72xf32> to vector<2x24xf32>
    %644 = arith.addf %642, %643 : vector<2x24xf32>
    %645 = arith.negf %644 : vector<2x24xf32>
    %646 = math.exp %645 : vector<2x24xf32>
    %cst_177 = arith.constant 1.000000e+00 : f32
    %647 = vector.broadcast %cst_177 : f32 to vector<2x24xf32>
    %648 = arith.addf %647, %646 : vector<2x24xf32>
    %649 = arith.divf %647, %648 : vector<2x24xf32>
    %650 = vector.extract_strided_slice %630 {offsets = [0, 48], sizes = [2, 24], strides = [1, 1]} : vector<2x72xf32> to vector<2x24xf32>
    %651 = vector.extract_strided_slice %633 {offsets = [0, 48], sizes = [2, 24], strides = [1, 1]} : vector<2x72xf32> to vector<2x24xf32>
    %652 = arith.mulf %641, %651 : vector<2x24xf32>
    %653 = arith.addf %650, %652 : vector<2x24xf32>
    %654 = math.tanh %653 : vector<2x24xf32>
    %cst_178 = arith.constant 1.000000e+00 : f32
    %655 = vector.broadcast %cst_178 : f32 to vector<2x24xf32>
    %656 = arith.subf %655, %649 : vector<2x24xf32>
    %657 = arith.mulf %656, %654 : vector<2x24xf32>
    %658 = arith.mulf %649, %597 : vector<2x24xf32>
    %659 = arith.addf %657, %658 : vector<2x24xf32>
    %660 = vector.shape_cast %628 : vector<2x24xf32> to vector<2x1x24xf32>
    %c0_179 = arith.constant 0 : index
    %c0_180 = arith.constant 0 : index
    %c0_181 = arith.constant 0 : index
    %661 = vector.load %arg41[%c0_179, %c0_180, %c0_181] : memref<2x8x24xf32, #tpu.memory_space<vmem>>, vector<2x1x24xf32>
    tpu.vector_store %arg41[%c0_179, %c0_180, %c0_181], %660 {strides = array<i32>} : memref<2x8x24xf32, #tpu.memory_space<vmem>>, vector<2x1x24xf32>,
    %662 = vector.shape_cast %659 : vector<2x24xf32> to vector<2x1x24xf32>
    %c0_182 = arith.constant 0 : index
    %c7_183 = arith.constant 7 : index
    %c0_184 = arith.constant 0 : index
    %663 = vector.load %arg42[%c0_182, %c7_183, %c0_184] : memref<2x8x24xf32, #tpu.memory_space<vmem>>, vector<2x1x24xf32>
    tpu.vector_store %arg42[%c0_182, %c7_183, %c0_184], %662 {strides = array<i32>} : memref<2x8x24xf32, #tpu.memory_space<vmem>>, vector<2x1x24xf32>,
    %664 = vector.extract_strided_slice %594 {offsets = [0, 1, 0], sizes = [2, 1, 72], strides = [1, 1, 1]} : vector<2x8x72xf32> to vector<2x1x72xf32>
    %665 = vector.shape_cast %664 : vector<2x1x72xf32> to vector<2x72xf32>
    %cst_185 = arith.constant dense<0.000000e+00> : vector<2x72xf32>
    %666 = tpu.matmul %628, %569, %cst_185 {dimension_numbers = #tpu.dot_dimension_numbers<[1], [0], [0], [1], [0, 0, 1, 1], [], []>} : vector<2x24xf32>, vector<24x72xf32>, vector<2x72xf32> -> vector<2x72xf32>
    %667 = vector.broadcast %571 : vector<1x72xf32> to vector<2x72xf32>
    %668 = arith.addf %666, %667 : vector<2x72xf32>
    %669 = vector.extract_strided_slice %665 {offsets = [0, 0], sizes = [2, 24], strides = [1, 1]} : vector<2x72xf32> to vector<2x24xf32>
    %670 = vector.extract_strided_slice %668 {offsets = [0, 0], sizes = [2, 24], strides = [1, 1]} : vector<2x72xf32> to vector<2x24xf32>
    %671 = arith.addf %669, %670 : vector<2x24xf32>
    %672 = arith.negf %671 : vector<2x24xf32>
    %673 = math.exp %672 : vector<2x24xf32>
    %cst_186 = arith.constant 1.000000e+00 : f32
    %674 = vector.broadcast %cst_186 : f32 to vector<2x24xf32>
    %675 = arith.addf %674, %673 : vector<2x24xf32>
    %676 = arith.divf %674, %675 : vector<2x24xf32>
    %677 = vector.extract_strided_slice %665 {offsets = [0, 24], sizes = [2, 24], strides = [1, 1]} : vector<2x72xf32> to vector<2x24xf32>
    %678 = vector.extract_strided_slice %668 {offsets = [0, 24], sizes = [2, 24], strides = [1, 1]} : vector<2x72xf32> to vector<2x24xf32>
    %679 = arith.addf %677, %678 : vector<2x24xf32>
    %680 = arith.negf %679 : vector<2x24xf32>
    %681 = math.exp %680 : vector<2x24xf32>
    %cst_187 = arith.constant 1.000000e+00 : f32
    %682 = vector.broadcast %cst_187 : f32 to vector<2x24xf32>
    %683 = arith.addf %682, %681 : vector<2x24xf32>
    %684 = arith.divf %682, %683 : vector<2x24xf32>
    %685 = vector.extract_strided_slice %665 {offsets = [0, 48], sizes = [2, 24], strides = [1, 1]} : vector<2x72xf32> to vector<2x24xf32>
    %686 = vector.extract_strided_slice %668 {offsets = [0, 48], sizes = [2, 24], strides = [1, 1]} : vector<2x72xf32> to vector<2x24xf32>
    %687 = arith.mulf %676, %686 : vector<2x24xf32>
    %688 = arith.addf %685, %687 : vector<2x24xf32>
    %689 = math.tanh %688 : vector<2x24xf32>
    %cst_188 = arith.constant 1.000000e+00 : f32
    %690 = vector.broadcast %cst_188 : f32 to vector<2x24xf32>
    %691 = arith.subf %690, %684 : vector<2x24xf32>
    %692 = arith.mulf %691, %689 : vector<2x24xf32>
    %693 = arith.mulf %684, %628 : vector<2x24xf32>
    %694 = arith.addf %692, %693 : vector<2x24xf32>
    %695 = vector.extract_strided_slice %595 {offsets = [0, 6, 0], sizes = [2, 1, 72], strides = [1, 1, 1]} : vector<2x8x72xf32> to vector<2x1x72xf32>
    %696 = vector.shape_cast %695 : vector<2x1x72xf32> to vector<2x72xf32>
    %cst_189 = arith.constant dense<0.000000e+00> : vector<2x72xf32>
    %697 = tpu.matmul %659, %573, %cst_189 {dimension_numbers = #tpu.dot_dimension_numbers<[1], [0], [0], [1], [0, 0, 1, 1], [], []>} : vector<2x24xf32>, vector<24x72xf32>, vector<2x72xf32> -> vector<2x72xf32>
    %698 = vector.broadcast %575 : vector<1x72xf32> to vector<2x72xf32>
    %699 = arith.addf %697, %698 : vector<2x72xf32>
    %700 = vector.extract_strided_slice %696 {offsets = [0, 0], sizes = [2, 24], strides = [1, 1]} : vector<2x72xf32> to vector<2x24xf32>
    %701 = vector.extract_strided_slice %699 {offsets = [0, 0], sizes = [2, 24], strides = [1, 1]} : vector<2x72xf32> to vector<2x24xf32>
    %702 = arith.addf %700, %701 : vector<2x24xf32>
    %703 = arith.negf %702 : vector<2x24xf32>
    %704 = math.exp %703 : vector<2x24xf32>
    %cst_190 = arith.constant 1.000000e+00 : f32
    %705 = vector.broadcast %cst_190 : f32 to vector<2x24xf32>
    %706 = arith.addf %705, %704 : vector<2x24xf32>
    %707 = arith.divf %705, %706 : vector<2x24xf32>
    %708 = vector.extract_strided_slice %696 {offsets = [0, 24], sizes = [2, 24], strides = [1, 1]} : vector<2x72xf32> to vector<2x24xf32>
    %709 = vector.extract_strided_slice %699 {offsets = [0, 24], sizes = [2, 24], strides = [1, 1]} : vector<2x72xf32> to vector<2x24xf32>
    %710 = arith.addf %708, %709 : vector<2x24xf32>
    %711 = arith.negf %710 : vector<2x24xf32>
    %712 = math.exp %711 : vector<2x24xf32>
    %cst_191 = arith.constant 1.000000e+00 : f32
    %713 = vector.broadcast %cst_191 : f32 to vector<2x24xf32>
    %714 = arith.addf %713, %712 : vector<2x24xf32>
    %715 = arith.divf %713, %714 : vector<2x24xf32>
    %716 = vector.extract_strided_slice %696 {offsets = [0, 48], sizes = [2, 24], strides = [1, 1]} : vector<2x72xf32> to vector<2x24xf32>
    %717 = vector.extract_strided_slice %699 {offsets = [0, 48], sizes = [2, 24], strides = [1, 1]} : vector<2x72xf32> to vector<2x24xf32>
    %718 = arith.mulf %707, %717 : vector<2x24xf32>
    %719 = arith.addf %716, %718 : vector<2x24xf32>
    %720 = math.tanh %719 : vector<2x24xf32>
    %cst_192 = arith.constant 1.000000e+00 : f32
    %721 = vector.broadcast %cst_192 : f32 to vector<2x24xf32>
    %722 = arith.subf %721, %715 : vector<2x24xf32>
    %723 = arith.mulf %722, %720 : vector<2x24xf32>
    %724 = arith.mulf %715, %659 : vector<2x24xf32>
    %725 = arith.addf %723, %724 : vector<2x24xf32>
    %726 = vector.shape_cast %694 : vector<2x24xf32> to vector<2x1x24xf32>
    %c0_193 = arith.constant 0 : index
    %c1_194 = arith.constant 1 : index
    %c0_195 = arith.constant 0 : index
    %727 = vector.load %arg41[%c0_193, %c1_194, %c0_195] : memref<2x8x24xf32, #tpu.memory_space<vmem>>, vector<2x1x24xf32>
    tpu.vector_store %arg41[%c0_193, %c1_194, %c0_195], %726 {strides = array<i32>} : memref<2x8x24xf32, #tpu.memory_space<vmem>>, vector<2x1x24xf32>,
    %728 = vector.shape_cast %725 : vector<2x24xf32> to vector<2x1x24xf32>
    %c0_196 = arith.constant 0 : index
    %c6_197 = arith.constant 6 : index
    %c0_198 = arith.constant 0 : index
    %729 = vector.load %arg42[%c0_196, %c6_197, %c0_198] : memref<2x8x24xf32, #tpu.memory_space<vmem>>, vector<2x1x24xf32>
    tpu.vector_store %arg42[%c0_196, %c6_197, %c0_198], %728 {strides = array<i32>} : memref<2x8x24xf32, #tpu.memory_space<vmem>>, vector<2x1x24xf32>,
    %730 = vector.extract_strided_slice %594 {offsets = [0, 2, 0], sizes = [2, 1, 72], strides = [1, 1, 1]} : vector<2x8x72xf32> to vector<2x1x72xf32>
    %731 = vector.shape_cast %730 : vector<2x1x72xf32> to vector<2x72xf32>
    %cst_199 = arith.constant dense<0.000000e+00> : vector<2x72xf32>
    %732 = tpu.matmul %694, %569, %cst_199 {dimension_numbers = #tpu.dot_dimension_numbers<[1], [0], [0], [1], [0, 0, 1, 1], [], []>} : vector<2x24xf32>, vector<24x72xf32>, vector<2x72xf32> -> vector<2x72xf32>
    %733 = vector.broadcast %571 : vector<1x72xf32> to vector<2x72xf32>
    %734 = arith.addf %732, %733 : vector<2x72xf32>
    %735 = vector.extract_strided_slice %731 {offsets = [0, 0], sizes = [2, 24], strides = [1, 1]} : vector<2x72xf32> to vector<2x24xf32>
    %736 = vector.extract_strided_slice %734 {offsets = [0, 0], sizes = [2, 24], strides = [1, 1]} : vector<2x72xf32> to vector<2x24xf32>
    %737 = arith.addf %735, %736 : vector<2x24xf32>
    %738 = arith.negf %737 : vector<2x24xf32>
    %739 = math.exp %738 : vector<2x24xf32>
    %cst_200 = arith.constant 1.000000e+00 : f32
    %740 = vector.broadcast %cst_200 : f32 to vector<2x24xf32>
    %741 = arith.addf %740, %739 : vector<2x24xf32>
    %742 = arith.divf %740, %741 : vector<2x24xf32>
    %743 = vector.extract_strided_slice %731 {offsets = [0, 24], sizes = [2, 24], strides = [1, 1]} : vector<2x72xf32> to vector<2x24xf32>
    %744 = vector.extract_strided_slice %734 {offsets = [0, 24], sizes = [2, 24], strides = [1, 1]} : vector<2x72xf32> to vector<2x24xf32>
    %745 = arith.addf %743, %744 : vector<2x24xf32>
    %746 = arith.negf %745 : vector<2x24xf32>
    %747 = math.exp %746 : vector<2x24xf32>
    %cst_201 = arith.constant 1.000000e+00 : f32
    %748 = vector.broadcast %cst_201 : f32 to vector<2x24xf32>
    %749 = arith.addf %748, %747 : vector<2x24xf32>
    %750 = arith.divf %748, %749 : vector<2x24xf32>
    %751 = vector.extract_strided_slice %731 {offsets = [0, 48], sizes = [2, 24], strides = [1, 1]} : vector<2x72xf32> to vector<2x24xf32>
    %752 = vector.extract_strided_slice %734 {offsets = [0, 48], sizes = [2, 24], strides = [1, 1]} : vector<2x72xf32> to vector<2x24xf32>
    %753 = arith.mulf %742, %752 : vector<2x24xf32>
    %754 = arith.addf %751, %753 : vector<2x24xf32>
    %755 = math.tanh %754 : vector<2x24xf32>
    %cst_202 = arith.constant 1.000000e+00 : f32
    %756 = vector.broadcast %cst_202 : f32 to vector<2x24xf32>
    %757 = arith.subf %756, %750 : vector<2x24xf32>
    %758 = arith.mulf %757, %755 : vector<2x24xf32>
    %759 = arith.mulf %750, %694 : vector<2x24xf32>
    %760 = arith.addf %758, %759 : vector<2x24xf32>
    %761 = vector.extract_strided_slice %595 {offsets = [0, 5, 0], sizes = [2, 1, 72], strides = [1, 1, 1]} : vector<2x8x72xf32> to vector<2x1x72xf32>
    %762 = vector.shape_cast %761 : vector<2x1x72xf32> to vector<2x72xf32>
    %cst_203 = arith.constant dense<0.000000e+00> : vector<2x72xf32>
    %763 = tpu.matmul %725, %573, %cst_203 {dimension_numbers = #tpu.dot_dimension_numbers<[1], [0], [0], [1], [0, 0, 1, 1], [], []>} : vector<2x24xf32>, vector<24x72xf32>, vector<2x72xf32> -> vector<2x72xf32>
    %764 = vector.broadcast %575 : vector<1x72xf32> to vector<2x72xf32>
    %765 = arith.addf %763, %764 : vector<2x72xf32>
    %766 = vector.extract_strided_slice %762 {offsets = [0, 0], sizes = [2, 24], strides = [1, 1]} : vector<2x72xf32> to vector<2x24xf32>
    %767 = vector.extract_strided_slice %765 {offsets = [0, 0], sizes = [2, 24], strides = [1, 1]} : vector<2x72xf32> to vector<2x24xf32>
    %768 = arith.addf %766, %767 : vector<2x24xf32>
    %769 = arith.negf %768 : vector<2x24xf32>
    %770 = math.exp %769 : vector<2x24xf32>
    %cst_204 = arith.constant 1.000000e+00 : f32
    %771 = vector.broadcast %cst_204 : f32 to vector<2x24xf32>
    %772 = arith.addf %771, %770 : vector<2x24xf32>
    %773 = arith.divf %771, %772 : vector<2x24xf32>
    %774 = vector.extract_strided_slice %762 {offsets = [0, 24], sizes = [2, 24], strides = [1, 1]} : vector<2x72xf32> to vector<2x24xf32>
    %775 = vector.extract_strided_slice %765 {offsets = [0, 24], sizes = [2, 24], strides = [1, 1]} : vector<2x72xf32> to vector<2x24xf32>
    %776 = arith.addf %774, %775 : vector<2x24xf32>
    %777 = arith.negf %776 : vector<2x24xf32>
    %778 = math.exp %777 : vector<2x24xf32>
    %cst_205 = arith.constant 1.000000e+00 : f32
    %779 = vector.broadcast %cst_205 : f32 to vector<2x24xf32>
    %780 = arith.addf %779, %778 : vector<2x24xf32>
    %781 = arith.divf %779, %780 : vector<2x24xf32>
    %782 = vector.extract_strided_slice %762 {offsets = [0, 48], sizes = [2, 24], strides = [1, 1]} : vector<2x72xf32> to vector<2x24xf32>
    %783 = vector.extract_strided_slice %765 {offsets = [0, 48], sizes = [2, 24], strides = [1, 1]} : vector<2x72xf32> to vector<2x24xf32>
    %784 = arith.mulf %773, %783 : vector<2x24xf32>
    %785 = arith.addf %782, %784 : vector<2x24xf32>
    %786 = math.tanh %785 : vector<2x24xf32>
    %cst_206 = arith.constant 1.000000e+00 : f32
    %787 = vector.broadcast %cst_206 : f32 to vector<2x24xf32>
    %788 = arith.subf %787, %781 : vector<2x24xf32>
    %789 = arith.mulf %788, %786 : vector<2x24xf32>
    %790 = arith.mulf %781, %725 : vector<2x24xf32>
    %791 = arith.addf %789, %790 : vector<2x24xf32>
    %792 = vector.shape_cast %760 : vector<2x24xf32> to vector<2x1x24xf32>
    %c0_207 = arith.constant 0 : index
    %c2_208 = arith.constant 2 : index
    %c0_209 = arith.constant 0 : index
    %793 = vector.load %arg41[%c0_207, %c2_208, %c0_209] : memref<2x8x24xf32, #tpu.memory_space<vmem>>, vector<2x1x24xf32>
    tpu.vector_store %arg41[%c0_207, %c2_208, %c0_209], %792 {strides = array<i32>} : memref<2x8x24xf32, #tpu.memory_space<vmem>>, vector<2x1x24xf32>,
    %794 = vector.shape_cast %791 : vector<2x24xf32> to vector<2x1x24xf32>
    %c0_210 = arith.constant 0 : index
    %c5_211 = arith.constant 5 : index
    %c0_212 = arith.constant 0 : index
    %795 = vector.load %arg42[%c0_210, %c5_211, %c0_212] : memref<2x8x24xf32, #tpu.memory_space<vmem>>, vector<2x1x24xf32>
    tpu.vector_store %arg42[%c0_210, %c5_211, %c0_212], %794 {strides = array<i32>} : memref<2x8x24xf32, #tpu.memory_space<vmem>>, vector<2x1x24xf32>,
    %796 = vector.extract_strided_slice %594 {offsets = [0, 3, 0], sizes = [2, 1, 72], strides = [1, 1, 1]} : vector<2x8x72xf32> to vector<2x1x72xf32>
    %797 = vector.shape_cast %796 : vector<2x1x72xf32> to vector<2x72xf32>
    %cst_213 = arith.constant dense<0.000000e+00> : vector<2x72xf32>
    %798 = tpu.matmul %760, %569, %cst_213 {dimension_numbers = #tpu.dot_dimension_numbers<[1], [0], [0], [1], [0, 0, 1, 1], [], []>} : vector<2x24xf32>, vector<24x72xf32>, vector<2x72xf32> -> vector<2x72xf32>
    %799 = vector.broadcast %571 : vector<1x72xf32> to vector<2x72xf32>
    %800 = arith.addf %798, %799 : vector<2x72xf32>
    %801 = vector.extract_strided_slice %797 {offsets = [0, 0], sizes = [2, 24], strides = [1, 1]} : vector<2x72xf32> to vector<2x24xf32>
    %802 = vector.extract_strided_slice %800 {offsets = [0, 0], sizes = [2, 24], strides = [1, 1]} : vector<2x72xf32> to vector<2x24xf32>
    %803 = arith.addf %801, %802 : vector<2x24xf32>
    %804 = arith.negf %803 : vector<2x24xf32>
    %805 = math.exp %804 : vector<2x24xf32>
    %cst_214 = arith.constant 1.000000e+00 : f32
    %806 = vector.broadcast %cst_214 : f32 to vector<2x24xf32>
    %807 = arith.addf %806, %805 : vector<2x24xf32>
    %808 = arith.divf %806, %807 : vector<2x24xf32>
    %809 = vector.extract_strided_slice %797 {offsets = [0, 24], sizes = [2, 24], strides = [1, 1]} : vector<2x72xf32> to vector<2x24xf32>
    %810 = vector.extract_strided_slice %800 {offsets = [0, 24], sizes = [2, 24], strides = [1, 1]} : vector<2x72xf32> to vector<2x24xf32>
    %811 = arith.addf %809, %810 : vector<2x24xf32>
    %812 = arith.negf %811 : vector<2x24xf32>
    %813 = math.exp %812 : vector<2x24xf32>
    %cst_215 = arith.constant 1.000000e+00 : f32
    %814 = vector.broadcast %cst_215 : f32 to vector<2x24xf32>
    %815 = arith.addf %814, %813 : vector<2x24xf32>
    %816 = arith.divf %814, %815 : vector<2x24xf32>
    %817 = vector.extract_strided_slice %797 {offsets = [0, 48], sizes = [2, 24], strides = [1, 1]} : vector<2x72xf32> to vector<2x24xf32>
    %818 = vector.extract_strided_slice %800 {offsets = [0, 48], sizes = [2, 24], strides = [1, 1]} : vector<2x72xf32> to vector<2x24xf32>
    %819 = arith.mulf %808, %818 : vector<2x24xf32>
    %820 = arith.addf %817, %819 : vector<2x24xf32>
    %821 = math.tanh %820 : vector<2x24xf32>
    %cst_216 = arith.constant 1.000000e+00 : f32
    %822 = vector.broadcast %cst_216 : f32 to vector<2x24xf32>
    %823 = arith.subf %822, %816 : vector<2x24xf32>
    %824 = arith.mulf %823, %821 : vector<2x24xf32>
    %825 = arith.mulf %816, %760 : vector<2x24xf32>
    %826 = arith.addf %824, %825 : vector<2x24xf32>
    %827 = vector.extract_strided_slice %595 {offsets = [0, 4, 0], sizes = [2, 1, 72], strides = [1, 1, 1]} : vector<2x8x72xf32> to vector<2x1x72xf32>
    %828 = vector.shape_cast %827 : vector<2x1x72xf32> to vector<2x72xf32>
    %cst_217 = arith.constant dense<0.000000e+00> : vector<2x72xf32>
    %829 = tpu.matmul %791, %573, %cst_217 {dimension_numbers = #tpu.dot_dimension_numbers<[1], [0], [0], [1], [0, 0, 1, 1], [], []>} : vector<2x24xf32>, vector<24x72xf32>, vector<2x72xf32> -> vector<2x72xf32>
    %830 = vector.broadcast %575 : vector<1x72xf32> to vector<2x72xf32>
    %831 = arith.addf %829, %830 : vector<2x72xf32>
    %832 = vector.extract_strided_slice %828 {offsets = [0, 0], sizes = [2, 24], strides = [1, 1]} : vector<2x72xf32> to vector<2x24xf32>
    %833 = vector.extract_strided_slice %831 {offsets = [0, 0], sizes = [2, 24], strides = [1, 1]} : vector<2x72xf32> to vector<2x24xf32>
    %834 = arith.addf %832, %833 : vector<2x24xf32>
    %835 = arith.negf %834 : vector<2x24xf32>
    %836 = math.exp %835 : vector<2x24xf32>
    %cst_218 = arith.constant 1.000000e+00 : f32
    %837 = vector.broadcast %cst_218 : f32 to vector<2x24xf32>
    %838 = arith.addf %837, %836 : vector<2x24xf32>
    %839 = arith.divf %837, %838 : vector<2x24xf32>
    %840 = vector.extract_strided_slice %828 {offsets = [0, 24], sizes = [2, 24], strides = [1, 1]} : vector<2x72xf32> to vector<2x24xf32>
    %841 = vector.extract_strided_slice %831 {offsets = [0, 24], sizes = [2, 24], strides = [1, 1]} : vector<2x72xf32> to vector<2x24xf32>
    %842 = arith.addf %840, %841 : vector<2x24xf32>
    %843 = arith.negf %842 : vector<2x24xf32>
    %844 = math.exp %843 : vector<2x24xf32>
    %cst_219 = arith.constant 1.000000e+00 : f32
    %845 = vector.broadcast %cst_219 : f32 to vector<2x24xf32>
    %846 = arith.addf %845, %844 : vector<2x24xf32>
    %847 = arith.divf %845, %846 : vector<2x24xf32>
    %848 = vector.extract_strided_slice %828 {offsets = [0, 48], sizes = [2, 24], strides = [1, 1]} : vector<2x72xf32> to vector<2x24xf32>
    %849 = vector.extract_strided_slice %831 {offsets = [0, 48], sizes = [2, 24], strides = [1, 1]} : vector<2x72xf32> to vector<2x24xf32>
    %850 = arith.mulf %839, %849 : vector<2x24xf32>
    %851 = arith.addf %848, %850 : vector<2x24xf32>
    %852 = math.tanh %851 : vector<2x24xf32>
    %cst_220 = arith.constant 1.000000e+00 : f32
    %853 = vector.broadcast %cst_220 : f32 to vector<2x24xf32>
    %854 = arith.subf %853, %847 : vector<2x24xf32>
    %855 = arith.mulf %854, %852 : vector<2x24xf32>
    %856 = arith.mulf %847, %791 : vector<2x24xf32>
    %857 = arith.addf %855, %856 : vector<2x24xf32>
    %858 = vector.shape_cast %826 : vector<2x24xf32> to vector<2x1x24xf32>
    %c0_221 = arith.constant 0 : index
    %c3_222 = arith.constant 3 : index
    %c0_223 = arith.constant 0 : index
    %859 = vector.load %arg41[%c0_221, %c3_222, %c0_223] : memref<2x8x24xf32, #tpu.memory_space<vmem>>, vector<2x1x24xf32>
    tpu.vector_store %arg41[%c0_221, %c3_222, %c0_223], %858 {strides = array<i32>} : memref<2x8x24xf32, #tpu.memory_space<vmem>>, vector<2x1x24xf32>,
    %860 = vector.shape_cast %857 : vector<2x24xf32> to vector<2x1x24xf32>
    %c0_224 = arith.constant 0 : index
    %c4_225 = arith.constant 4 : index
    %c0_226 = arith.constant 0 : index
    %861 = vector.load %arg42[%c0_224, %c4_225, %c0_226] : memref<2x8x24xf32, #tpu.memory_space<vmem>>, vector<2x1x24xf32>
    tpu.vector_store %arg42[%c0_224, %c4_225, %c0_226], %860 {strides = array<i32>} : memref<2x8x24xf32, #tpu.memory_space<vmem>>, vector<2x1x24xf32>,
    %862 = vector.extract_strided_slice %594 {offsets = [0, 4, 0], sizes = [2, 1, 72], strides = [1, 1, 1]} : vector<2x8x72xf32> to vector<2x1x72xf32>
    %863 = vector.shape_cast %862 : vector<2x1x72xf32> to vector<2x72xf32>
    %cst_227 = arith.constant dense<0.000000e+00> : vector<2x72xf32>
    %864 = tpu.matmul %826, %569, %cst_227 {dimension_numbers = #tpu.dot_dimension_numbers<[1], [0], [0], [1], [0, 0, 1, 1], [], []>} : vector<2x24xf32>, vector<24x72xf32>, vector<2x72xf32> -> vector<2x72xf32>
    %865 = vector.broadcast %571 : vector<1x72xf32> to vector<2x72xf32>
    %866 = arith.addf %864, %865 : vector<2x72xf32>
    %867 = vector.extract_strided_slice %863 {offsets = [0, 0], sizes = [2, 24], strides = [1, 1]} : vector<2x72xf32> to vector<2x24xf32>
    %868 = vector.extract_strided_slice %866 {offsets = [0, 0], sizes = [2, 24], strides = [1, 1]} : vector<2x72xf32> to vector<2x24xf32>
    %869 = arith.addf %867, %868 : vector<2x24xf32>
    %870 = arith.negf %869 : vector<2x24xf32>
    %871 = math.exp %870 : vector<2x24xf32>
    %cst_228 = arith.constant 1.000000e+00 : f32
    %872 = vector.broadcast %cst_228 : f32 to vector<2x24xf32>
    %873 = arith.addf %872, %871 : vector<2x24xf32>
    %874 = arith.divf %872, %873 : vector<2x24xf32>
    %875 = vector.extract_strided_slice %863 {offsets = [0, 24], sizes = [2, 24], strides = [1, 1]} : vector<2x72xf32> to vector<2x24xf32>
    %876 = vector.extract_strided_slice %866 {offsets = [0, 24], sizes = [2, 24], strides = [1, 1]} : vector<2x72xf32> to vector<2x24xf32>
    %877 = arith.addf %875, %876 : vector<2x24xf32>
    %878 = arith.negf %877 : vector<2x24xf32>
    %879 = math.exp %878 : vector<2x24xf32>
    %cst_229 = arith.constant 1.000000e+00 : f32
    %880 = vector.broadcast %cst_229 : f32 to vector<2x24xf32>
    %881 = arith.addf %880, %879 : vector<2x24xf32>
    %882 = arith.divf %880, %881 : vector<2x24xf32>
    %883 = vector.extract_strided_slice %863 {offsets = [0, 48], sizes = [2, 24], strides = [1, 1]} : vector<2x72xf32> to vector<2x24xf32>
    %884 = vector.extract_strided_slice %866 {offsets = [0, 48], sizes = [2, 24], strides = [1, 1]} : vector<2x72xf32> to vector<2x24xf32>
    %885 = arith.mulf %874, %884 : vector<2x24xf32>
    %886 = arith.addf %883, %885 : vector<2x24xf32>
    %887 = math.tanh %886 : vector<2x24xf32>
    %cst_230 = arith.constant 1.000000e+00 : f32
    %888 = vector.broadcast %cst_230 : f32 to vector<2x24xf32>
    %889 = arith.subf %888, %882 : vector<2x24xf32>
    %890 = arith.mulf %889, %887 : vector<2x24xf32>
    %891 = arith.mulf %882, %826 : vector<2x24xf32>
    %892 = arith.addf %890, %891 : vector<2x24xf32>
    %893 = vector.extract_strided_slice %595 {offsets = [0, 3, 0], sizes = [2, 1, 72], strides = [1, 1, 1]} : vector<2x8x72xf32> to vector<2x1x72xf32>
    %894 = vector.shape_cast %893 : vector<2x1x72xf32> to vector<2x72xf32>
    %cst_231 = arith.constant dense<0.000000e+00> : vector<2x72xf32>
    %895 = tpu.matmul %857, %573, %cst_231 {dimension_numbers = #tpu.dot_dimension_numbers<[1], [0], [0], [1], [0, 0, 1, 1], [], []>} : vector<2x24xf32>, vector<24x72xf32>, vector<2x72xf32> -> vector<2x72xf32>
    %896 = vector.broadcast %575 : vector<1x72xf32> to vector<2x72xf32>
    %897 = arith.addf %895, %896 : vector<2x72xf32>
    %898 = vector.extract_strided_slice %894 {offsets = [0, 0], sizes = [2, 24], strides = [1, 1]} : vector<2x72xf32> to vector<2x24xf32>
    %899 = vector.extract_strided_slice %897 {offsets = [0, 0], sizes = [2, 24], strides = [1, 1]} : vector<2x72xf32> to vector<2x24xf32>
    %900 = arith.addf %898, %899 : vector<2x24xf32>
    %901 = arith.negf %900 : vector<2x24xf32>
    %902 = math.exp %901 : vector<2x24xf32>
    %cst_232 = arith.constant 1.000000e+00 : f32
    %903 = vector.broadcast %cst_232 : f32 to vector<2x24xf32>
    %904 = arith.addf %903, %902 : vector<2x24xf32>
    %905 = arith.divf %903, %904 : vector<2x24xf32>
    %906 = vector.extract_strided_slice %894 {offsets = [0, 24], sizes = [2, 24], strides = [1, 1]} : vector<2x72xf32> to vector<2x24xf32>
    %907 = vector.extract_strided_slice %897 {offsets = [0, 24], sizes = [2, 24], strides = [1, 1]} : vector<2x72xf32> to vector<2x24xf32>
    %908 = arith.addf %906, %907 : vector<2x24xf32>
    %909 = arith.negf %908 : vector<2x24xf32>
    %910 = math.exp %909 : vector<2x24xf32>
    %cst_233 = arith.constant 1.000000e+00 : f32
    %911 = vector.broadcast %cst_233 : f32 to vector<2x24xf32>
    %912 = arith.addf %911, %910 : vector<2x24xf32>
    %913 = arith.divf %911, %912 : vector<2x24xf32>
    %914 = vector.extract_strided_slice %894 {offsets = [0, 48], sizes = [2, 24], strides = [1, 1]} : vector<2x72xf32> to vector<2x24xf32>
    %915 = vector.extract_strided_slice %897 {offsets = [0, 48], sizes = [2, 24], strides = [1, 1]} : vector<2x72xf32> to vector<2x24xf32>
    %916 = arith.mulf %905, %915 : vector<2x24xf32>
    %917 = arith.addf %914, %916 : vector<2x24xf32>
    %918 = math.tanh %917 : vector<2x24xf32>
    %cst_234 = arith.constant 1.000000e+00 : f32
    %919 = vector.broadcast %cst_234 : f32 to vector<2x24xf32>
    %920 = arith.subf %919, %913 : vector<2x24xf32>
    %921 = arith.mulf %920, %918 : vector<2x24xf32>
    %922 = arith.mulf %913, %857 : vector<2x24xf32>
    %923 = arith.addf %921, %922 : vector<2x24xf32>
    %924 = vector.shape_cast %892 : vector<2x24xf32> to vector<2x1x24xf32>
    %c0_235 = arith.constant 0 : index
    %c4_236 = arith.constant 4 : index
    %c0_237 = arith.constant 0 : index
    %925 = vector.load %arg41[%c0_235, %c4_236, %c0_237] : memref<2x8x24xf32, #tpu.memory_space<vmem>>, vector<2x1x24xf32>
    tpu.vector_store %arg41[%c0_235, %c4_236, %c0_237], %924 {strides = array<i32>} : memref<2x8x24xf32, #tpu.memory_space<vmem>>, vector<2x1x24xf32>,
    %926 = vector.shape_cast %923 : vector<2x24xf32> to vector<2x1x24xf32>
    %c0_238 = arith.constant 0 : index
    %c3_239 = arith.constant 3 : index
    %c0_240 = arith.constant 0 : index
    %927 = vector.load %arg42[%c0_238, %c3_239, %c0_240] : memref<2x8x24xf32, #tpu.memory_space<vmem>>, vector<2x1x24xf32>
    tpu.vector_store %arg42[%c0_238, %c3_239, %c0_240], %926 {strides = array<i32>} : memref<2x8x24xf32, #tpu.memory_space<vmem>>, vector<2x1x24xf32>,
    %928 = vector.extract_strided_slice %594 {offsets = [0, 5, 0], sizes = [2, 1, 72], strides = [1, 1, 1]} : vector<2x8x72xf32> to vector<2x1x72xf32>
    %929 = vector.shape_cast %928 : vector<2x1x72xf32> to vector<2x72xf32>
    %cst_241 = arith.constant dense<0.000000e+00> : vector<2x72xf32>
    %930 = tpu.matmul %892, %569, %cst_241 {dimension_numbers = #tpu.dot_dimension_numbers<[1], [0], [0], [1], [0, 0, 1, 1], [], []>} : vector<2x24xf32>, vector<24x72xf32>, vector<2x72xf32> -> vector<2x72xf32>
    %931 = vector.broadcast %571 : vector<1x72xf32> to vector<2x72xf32>
    %932 = arith.addf %930, %931 : vector<2x72xf32>
    %933 = vector.extract_strided_slice %929 {offsets = [0, 0], sizes = [2, 24], strides = [1, 1]} : vector<2x72xf32> to vector<2x24xf32>
    %934 = vector.extract_strided_slice %932 {offsets = [0, 0], sizes = [2, 24], strides = [1, 1]} : vector<2x72xf32> to vector<2x24xf32>
    %935 = arith.addf %933, %934 : vector<2x24xf32>
    %936 = arith.negf %935 : vector<2x24xf32>
    %937 = math.exp %936 : vector<2x24xf32>
    %cst_242 = arith.constant 1.000000e+00 : f32
    %938 = vector.broadcast %cst_242 : f32 to vector<2x24xf32>
    %939 = arith.addf %938, %937 : vector<2x24xf32>
    %940 = arith.divf %938, %939 : vector<2x24xf32>
    %941 = vector.extract_strided_slice %929 {offsets = [0, 24], sizes = [2, 24], strides = [1, 1]} : vector<2x72xf32> to vector<2x24xf32>
    %942 = vector.extract_strided_slice %932 {offsets = [0, 24], sizes = [2, 24], strides = [1, 1]} : vector<2x72xf32> to vector<2x24xf32>
    %943 = arith.addf %941, %942 : vector<2x24xf32>
    %944 = arith.negf %943 : vector<2x24xf32>
    %945 = math.exp %944 : vector<2x24xf32>
    %cst_243 = arith.constant 1.000000e+00 : f32
    %946 = vector.broadcast %cst_243 : f32 to vector<2x24xf32>
    %947 = arith.addf %946, %945 : vector<2x24xf32>
    %948 = arith.divf %946, %947 : vector<2x24xf32>
    %949 = vector.extract_strided_slice %929 {offsets = [0, 48], sizes = [2, 24], strides = [1, 1]} : vector<2x72xf32> to vector<2x24xf32>
    %950 = vector.extract_strided_slice %932 {offsets = [0, 48], sizes = [2, 24], strides = [1, 1]} : vector<2x72xf32> to vector<2x24xf32>
    %951 = arith.mulf %940, %950 : vector<2x24xf32>
    %952 = arith.addf %949, %951 : vector<2x24xf32>
    %953 = math.tanh %952 : vector<2x24xf32>
    %cst_244 = arith.constant 1.000000e+00 : f32
    %954 = vector.broadcast %cst_244 : f32 to vector<2x24xf32>
    %955 = arith.subf %954, %948 : vector<2x24xf32>
    %956 = arith.mulf %955, %953 : vector<2x24xf32>
    %957 = arith.mulf %948, %892 : vector<2x24xf32>
    %958 = arith.addf %956, %957 : vector<2x24xf32>
    %959 = vector.extract_strided_slice %595 {offsets = [0, 2, 0], sizes = [2, 1, 72], strides = [1, 1, 1]} : vector<2x8x72xf32> to vector<2x1x72xf32>
    %960 = vector.shape_cast %959 : vector<2x1x72xf32> to vector<2x72xf32>
    %cst_245 = arith.constant dense<0.000000e+00> : vector<2x72xf32>
    %961 = tpu.matmul %923, %573, %cst_245 {dimension_numbers = #tpu.dot_dimension_numbers<[1], [0], [0], [1], [0, 0, 1, 1], [], []>} : vector<2x24xf32>, vector<24x72xf32>, vector<2x72xf32> -> vector<2x72xf32>
    %962 = vector.broadcast %575 : vector<1x72xf32> to vector<2x72xf32>
    %963 = arith.addf %961, %962 : vector<2x72xf32>
    %964 = vector.extract_strided_slice %960 {offsets = [0, 0], sizes = [2, 24], strides = [1, 1]} : vector<2x72xf32> to vector<2x24xf32>
    %965 = vector.extract_strided_slice %963 {offsets = [0, 0], sizes = [2, 24], strides = [1, 1]} : vector<2x72xf32> to vector<2x24xf32>
    %966 = arith.addf %964, %965 : vector<2x24xf32>
    %967 = arith.negf %966 : vector<2x24xf32>
    %968 = math.exp %967 : vector<2x24xf32>
    %cst_246 = arith.constant 1.000000e+00 : f32
    %969 = vector.broadcast %cst_246 : f32 to vector<2x24xf32>
    %970 = arith.addf %969, %968 : vector<2x24xf32>
    %971 = arith.divf %969, %970 : vector<2x24xf32>
    %972 = vector.extract_strided_slice %960 {offsets = [0, 24], sizes = [2, 24], strides = [1, 1]} : vector<2x72xf32> to vector<2x24xf32>
    %973 = vector.extract_strided_slice %963 {offsets = [0, 24], sizes = [2, 24], strides = [1, 1]} : vector<2x72xf32> to vector<2x24xf32>
    %974 = arith.addf %972, %973 : vector<2x24xf32>
    %975 = arith.negf %974 : vector<2x24xf32>
    %976 = math.exp %975 : vector<2x24xf32>
    %cst_247 = arith.constant 1.000000e+00 : f32
    %977 = vector.broadcast %cst_247 : f32 to vector<2x24xf32>
    %978 = arith.addf %977, %976 : vector<2x24xf32>
    %979 = arith.divf %977, %978 : vector<2x24xf32>
    %980 = vector.extract_strided_slice %960 {offsets = [0, 48], sizes = [2, 24], strides = [1, 1]} : vector<2x72xf32> to vector<2x24xf32>
    %981 = vector.extract_strided_slice %963 {offsets = [0, 48], sizes = [2, 24], strides = [1, 1]} : vector<2x72xf32> to vector<2x24xf32>
    %982 = arith.mulf %971, %981 : vector<2x24xf32>
    %983 = arith.addf %980, %982 : vector<2x24xf32>
    %984 = math.tanh %983 : vector<2x24xf32>
    %cst_248 = arith.constant 1.000000e+00 : f32
    %985 = vector.broadcast %cst_248 : f32 to vector<2x24xf32>
    %986 = arith.subf %985, %979 : vector<2x24xf32>
    %987 = arith.mulf %986, %984 : vector<2x24xf32>
    %988 = arith.mulf %979, %923 : vector<2x24xf32>
    %989 = arith.addf %987, %988 : vector<2x24xf32>
    %990 = vector.shape_cast %958 : vector<2x24xf32> to vector<2x1x24xf32>
    %c0_249 = arith.constant 0 : index
    %c5_250 = arith.constant 5 : index
    %c0_251 = arith.constant 0 : index
    %991 = vector.load %arg41[%c0_249, %c5_250, %c0_251] : memref<2x8x24xf32, #tpu.memory_space<vmem>>, vector<2x1x24xf32>
    tpu.vector_store %arg41[%c0_249, %c5_250, %c0_251], %990 {strides = array<i32>} : memref<2x8x24xf32, #tpu.memory_space<vmem>>, vector<2x1x24xf32>,
    %992 = vector.shape_cast %989 : vector<2x24xf32> to vector<2x1x24xf32>
    %c0_252 = arith.constant 0 : index
    %c2_253 = arith.constant 2 : index
    %c0_254 = arith.constant 0 : index
    %993 = vector.load %arg42[%c0_252, %c2_253, %c0_254] : memref<2x8x24xf32, #tpu.memory_space<vmem>>, vector<2x1x24xf32>
    tpu.vector_store %arg42[%c0_252, %c2_253, %c0_254], %992 {strides = array<i32>} : memref<2x8x24xf32, #tpu.memory_space<vmem>>, vector<2x1x24xf32>,
    %994 = vector.extract_strided_slice %594 {offsets = [0, 6, 0], sizes = [2, 1, 72], strides = [1, 1, 1]} : vector<2x8x72xf32> to vector<2x1x72xf32>
    %995 = vector.shape_cast %994 : vector<2x1x72xf32> to vector<2x72xf32>
    %cst_255 = arith.constant dense<0.000000e+00> : vector<2x72xf32>
    %996 = tpu.matmul %958, %569, %cst_255 {dimension_numbers = #tpu.dot_dimension_numbers<[1], [0], [0], [1], [0, 0, 1, 1], [], []>} : vector<2x24xf32>, vector<24x72xf32>, vector<2x72xf32> -> vector<2x72xf32>
    %997 = vector.broadcast %571 : vector<1x72xf32> to vector<2x72xf32>
    %998 = arith.addf %996, %997 : vector<2x72xf32>
    %999 = vector.extract_strided_slice %995 {offsets = [0, 0], sizes = [2, 24], strides = [1, 1]} : vector<2x72xf32> to vector<2x24xf32>
    %1000 = vector.extract_strided_slice %998 {offsets = [0, 0], sizes = [2, 24], strides = [1, 1]} : vector<2x72xf32> to vector<2x24xf32>
    %1001 = arith.addf %999, %1000 : vector<2x24xf32>
    %1002 = arith.negf %1001 : vector<2x24xf32>
    %1003 = math.exp %1002 : vector<2x24xf32>
    %cst_256 = arith.constant 1.000000e+00 : f32
    %1004 = vector.broadcast %cst_256 : f32 to vector<2x24xf32>
    %1005 = arith.addf %1004, %1003 : vector<2x24xf32>
    %1006 = arith.divf %1004, %1005 : vector<2x24xf32>
    %1007 = vector.extract_strided_slice %995 {offsets = [0, 24], sizes = [2, 24], strides = [1, 1]} : vector<2x72xf32> to vector<2x24xf32>
    %1008 = vector.extract_strided_slice %998 {offsets = [0, 24], sizes = [2, 24], strides = [1, 1]} : vector<2x72xf32> to vector<2x24xf32>
    %1009 = arith.addf %1007, %1008 : vector<2x24xf32>
    %1010 = arith.negf %1009 : vector<2x24xf32>
    %1011 = math.exp %1010 : vector<2x24xf32>
    %cst_257 = arith.constant 1.000000e+00 : f32
    %1012 = vector.broadcast %cst_257 : f32 to vector<2x24xf32>
    %1013 = arith.addf %1012, %1011 : vector<2x24xf32>
    %1014 = arith.divf %1012, %1013 : vector<2x24xf32>
    %1015 = vector.extract_strided_slice %995 {offsets = [0, 48], sizes = [2, 24], strides = [1, 1]} : vector<2x72xf32> to vector<2x24xf32>
    %1016 = vector.extract_strided_slice %998 {offsets = [0, 48], sizes = [2, 24], strides = [1, 1]} : vector<2x72xf32> to vector<2x24xf32>
    %1017 = arith.mulf %1006, %1016 : vector<2x24xf32>
    %1018 = arith.addf %1015, %1017 : vector<2x24xf32>
    %1019 = math.tanh %1018 : vector<2x24xf32>
    %cst_258 = arith.constant 1.000000e+00 : f32
    %1020 = vector.broadcast %cst_258 : f32 to vector<2x24xf32>
    %1021 = arith.subf %1020, %1014 : vector<2x24xf32>
    %1022 = arith.mulf %1021, %1019 : vector<2x24xf32>
    %1023 = arith.mulf %1014, %958 : vector<2x24xf32>
    %1024 = arith.addf %1022, %1023 : vector<2x24xf32>
    %1025 = vector.extract_strided_slice %595 {offsets = [0, 1, 0], sizes = [2, 1, 72], strides = [1, 1, 1]} : vector<2x8x72xf32> to vector<2x1x72xf32>
    %1026 = vector.shape_cast %1025 : vector<2x1x72xf32> to vector<2x72xf32>
    %cst_259 = arith.constant dense<0.000000e+00> : vector<2x72xf32>
    %1027 = tpu.matmul %989, %573, %cst_259 {dimension_numbers = #tpu.dot_dimension_numbers<[1], [0], [0], [1], [0, 0, 1, 1], [], []>} : vector<2x24xf32>, vector<24x72xf32>, vector<2x72xf32> -> vector<2x72xf32>
    %1028 = vector.broadcast %575 : vector<1x72xf32> to vector<2x72xf32>
    %1029 = arith.addf %1027, %1028 : vector<2x72xf32>
    %1030 = vector.extract_strided_slice %1026 {offsets = [0, 0], sizes = [2, 24], strides = [1, 1]} : vector<2x72xf32> to vector<2x24xf32>
    %1031 = vector.extract_strided_slice %1029 {offsets = [0, 0], sizes = [2, 24], strides = [1, 1]} : vector<2x72xf32> to vector<2x24xf32>
    %1032 = arith.addf %1030, %1031 : vector<2x24xf32>
    %1033 = arith.negf %1032 : vector<2x24xf32>
    %1034 = math.exp %1033 : vector<2x24xf32>
    %cst_260 = arith.constant 1.000000e+00 : f32
    %1035 = vector.broadcast %cst_260 : f32 to vector<2x24xf32>
    %1036 = arith.addf %1035, %1034 : vector<2x24xf32>
    %1037 = arith.divf %1035, %1036 : vector<2x24xf32>
    %1038 = vector.extract_strided_slice %1026 {offsets = [0, 24], sizes = [2, 24], strides = [1, 1]} : vector<2x72xf32> to vector<2x24xf32>
    %1039 = vector.extract_strided_slice %1029 {offsets = [0, 24], sizes = [2, 24], strides = [1, 1]} : vector<2x72xf32> to vector<2x24xf32>
    %1040 = arith.addf %1038, %1039 : vector<2x24xf32>
    %1041 = arith.negf %1040 : vector<2x24xf32>
    %1042 = math.exp %1041 : vector<2x24xf32>
    %cst_261 = arith.constant 1.000000e+00 : f32
    %1043 = vector.broadcast %cst_261 : f32 to vector<2x24xf32>
    %1044 = arith.addf %1043, %1042 : vector<2x24xf32>
    %1045 = arith.divf %1043, %1044 : vector<2x24xf32>
    %1046 = vector.extract_strided_slice %1026 {offsets = [0, 48], sizes = [2, 24], strides = [1, 1]} : vector<2x72xf32> to vector<2x24xf32>
    %1047 = vector.extract_strided_slice %1029 {offsets = [0, 48], sizes = [2, 24], strides = [1, 1]} : vector<2x72xf32> to vector<2x24xf32>
    %1048 = arith.mulf %1037, %1047 : vector<2x24xf32>
    %1049 = arith.addf %1046, %1048 : vector<2x24xf32>
    %1050 = math.tanh %1049 : vector<2x24xf32>
    %cst_262 = arith.constant 1.000000e+00 : f32
    %1051 = vector.broadcast %cst_262 : f32 to vector<2x24xf32>
    %1052 = arith.subf %1051, %1045 : vector<2x24xf32>
    %1053 = arith.mulf %1052, %1050 : vector<2x24xf32>
    %1054 = arith.mulf %1045, %989 : vector<2x24xf32>
    %1055 = arith.addf %1053, %1054 : vector<2x24xf32>
    %1056 = vector.shape_cast %1024 : vector<2x24xf32> to vector<2x1x24xf32>
    %c0_263 = arith.constant 0 : index
    %c6_264 = arith.constant 6 : index
    %c0_265 = arith.constant 0 : index
    %1057 = vector.load %arg41[%c0_263, %c6_264, %c0_265] : memref<2x8x24xf32, #tpu.memory_space<vmem>>, vector<2x1x24xf32>
    tpu.vector_store %arg41[%c0_263, %c6_264, %c0_265], %1056 {strides = array<i32>} : memref<2x8x24xf32, #tpu.memory_space<vmem>>, vector<2x1x24xf32>,
    %1058 = vector.shape_cast %1055 : vector<2x24xf32> to vector<2x1x24xf32>
    %c0_266 = arith.constant 0 : index
    %c1_267 = arith.constant 1 : index
    %c0_268 = arith.constant 0 : index
    %1059 = vector.load %arg42[%c0_266, %c1_267, %c0_268] : memref<2x8x24xf32, #tpu.memory_space<vmem>>, vector<2x1x24xf32>
    tpu.vector_store %arg42[%c0_266, %c1_267, %c0_268], %1058 {strides = array<i32>} : memref<2x8x24xf32, #tpu.memory_space<vmem>>, vector<2x1x24xf32>,
    %1060 = vector.extract_strided_slice %594 {offsets = [0, 7, 0], sizes = [2, 1, 72], strides = [1, 1, 1]} : vector<2x8x72xf32> to vector<2x1x72xf32>
    %1061 = vector.shape_cast %1060 : vector<2x1x72xf32> to vector<2x72xf32>
    %cst_269 = arith.constant dense<0.000000e+00> : vector<2x72xf32>
    %1062 = tpu.matmul %1024, %569, %cst_269 {dimension_numbers = #tpu.dot_dimension_numbers<[1], [0], [0], [1], [0, 0, 1, 1], [], []>} : vector<2x24xf32>, vector<24x72xf32>, vector<2x72xf32> -> vector<2x72xf32>
    %1063 = vector.broadcast %571 : vector<1x72xf32> to vector<2x72xf32>
    %1064 = arith.addf %1062, %1063 : vector<2x72xf32>
    %1065 = vector.extract_strided_slice %1061 {offsets = [0, 0], sizes = [2, 24], strides = [1, 1]} : vector<2x72xf32> to vector<2x24xf32>
    %1066 = vector.extract_strided_slice %1064 {offsets = [0, 0], sizes = [2, 24], strides = [1, 1]} : vector<2x72xf32> to vector<2x24xf32>
    %1067 = arith.addf %1065, %1066 : vector<2x24xf32>
    %1068 = arith.negf %1067 : vector<2x24xf32>
    %1069 = math.exp %1068 : vector<2x24xf32>
    %cst_270 = arith.constant 1.000000e+00 : f32
    %1070 = vector.broadcast %cst_270 : f32 to vector<2x24xf32>
    %1071 = arith.addf %1070, %1069 : vector<2x24xf32>
    %1072 = arith.divf %1070, %1071 : vector<2x24xf32>
    %1073 = vector.extract_strided_slice %1061 {offsets = [0, 24], sizes = [2, 24], strides = [1, 1]} : vector<2x72xf32> to vector<2x24xf32>
    %1074 = vector.extract_strided_slice %1064 {offsets = [0, 24], sizes = [2, 24], strides = [1, 1]} : vector<2x72xf32> to vector<2x24xf32>
    %1075 = arith.addf %1073, %1074 : vector<2x24xf32>
    %1076 = arith.negf %1075 : vector<2x24xf32>
    %1077 = math.exp %1076 : vector<2x24xf32>
    %cst_271 = arith.constant 1.000000e+00 : f32
    %1078 = vector.broadcast %cst_271 : f32 to vector<2x24xf32>
    %1079 = arith.addf %1078, %1077 : vector<2x24xf32>
    %1080 = arith.divf %1078, %1079 : vector<2x24xf32>
    %1081 = vector.extract_strided_slice %1061 {offsets = [0, 48], sizes = [2, 24], strides = [1, 1]} : vector<2x72xf32> to vector<2x24xf32>
    %1082 = vector.extract_strided_slice %1064 {offsets = [0, 48], sizes = [2, 24], strides = [1, 1]} : vector<2x72xf32> to vector<2x24xf32>
    %1083 = arith.mulf %1072, %1082 : vector<2x24xf32>
    %1084 = arith.addf %1081, %1083 : vector<2x24xf32>
    %1085 = math.tanh %1084 : vector<2x24xf32>
    %cst_272 = arith.constant 1.000000e+00 : f32
    %1086 = vector.broadcast %cst_272 : f32 to vector<2x24xf32>
    %1087 = arith.subf %1086, %1080 : vector<2x24xf32>
    %1088 = arith.mulf %1087, %1085 : vector<2x24xf32>
    %1089 = arith.mulf %1080, %1024 : vector<2x24xf32>
    %1090 = arith.addf %1088, %1089 : vector<2x24xf32>
    %1091 = vector.extract_strided_slice %595 {offsets = [0, 0, 0], sizes = [2, 1, 72], strides = [1, 1, 1]} : vector<2x8x72xf32> to vector<2x1x72xf32>
    %1092 = vector.shape_cast %1091 : vector<2x1x72xf32> to vector<2x72xf32>
    %cst_273 = arith.constant dense<0.000000e+00> : vector<2x72xf32>
    %1093 = tpu.matmul %1055, %573, %cst_273 {dimension_numbers = #tpu.dot_dimension_numbers<[1], [0], [0], [1], [0, 0, 1, 1], [], []>} : vector<2x24xf32>, vector<24x72xf32>, vector<2x72xf32> -> vector<2x72xf32>
    %1094 = vector.broadcast %575 : vector<1x72xf32> to vector<2x72xf32>
    %1095 = arith.addf %1093, %1094 : vector<2x72xf32>
    %1096 = vector.extract_strided_slice %1092 {offsets = [0, 0], sizes = [2, 24], strides = [1, 1]} : vector<2x72xf32> to vector<2x24xf32>
    %1097 = vector.extract_strided_slice %1095 {offsets = [0, 0], sizes = [2, 24], strides = [1, 1]} : vector<2x72xf32> to vector<2x24xf32>
    %1098 = arith.addf %1096, %1097 : vector<2x24xf32>
    %1099 = arith.negf %1098 : vector<2x24xf32>
    %1100 = math.exp %1099 : vector<2x24xf32>
    %cst_274 = arith.constant 1.000000e+00 : f32
    %1101 = vector.broadcast %cst_274 : f32 to vector<2x24xf32>
    %1102 = arith.addf %1101, %1100 : vector<2x24xf32>
    %1103 = arith.divf %1101, %1102 : vector<2x24xf32>
    %1104 = vector.extract_strided_slice %1092 {offsets = [0, 24], sizes = [2, 24], strides = [1, 1]} : vector<2x72xf32> to vector<2x24xf32>
    %1105 = vector.extract_strided_slice %1095 {offsets = [0, 24], sizes = [2, 24], strides = [1, 1]} : vector<2x72xf32> to vector<2x24xf32>
    %1106 = arith.addf %1104, %1105 : vector<2x24xf32>
    %1107 = arith.negf %1106 : vector<2x24xf32>
    %1108 = math.exp %1107 : vector<2x24xf32>
    %cst_275 = arith.constant 1.000000e+00 : f32
    %1109 = vector.broadcast %cst_275 : f32 to vector<2x24xf32>
    %1110 = arith.addf %1109, %1108 : vector<2x24xf32>
    %1111 = arith.divf %1109, %1110 : vector<2x24xf32>
    %1112 = vector.extract_strided_slice %1092 {offsets = [0, 48], sizes = [2, 24], strides = [1, 1]} : vector<2x72xf32> to vector<2x24xf32>
    %1113 = vector.extract_strided_slice %1095 {offsets = [0, 48], sizes = [2, 24], strides = [1, 1]} : vector<2x72xf32> to vector<2x24xf32>
    %1114 = arith.mulf %1103, %1113 : vector<2x24xf32>
    %1115 = arith.addf %1112, %1114 : vector<2x24xf32>
    %1116 = math.tanh %1115 : vector<2x24xf32>
    %cst_276 = arith.constant 1.000000e+00 : f32
    %1117 = vector.broadcast %cst_276 : f32 to vector<2x24xf32>
    %1118 = arith.subf %1117, %1111 : vector<2x24xf32>
    %1119 = arith.mulf %1118, %1116 : vector<2x24xf32>
    %1120 = arith.mulf %1111, %1055 : vector<2x24xf32>
    %1121 = arith.addf %1119, %1120 : vector<2x24xf32>
    %1122 = vector.shape_cast %1090 : vector<2x24xf32> to vector<2x1x24xf32>
    %c0_277 = arith.constant 0 : index
    %c7_278 = arith.constant 7 : index
    %c0_279 = arith.constant 0 : index
    %1123 = vector.load %arg41[%c0_277, %c7_278, %c0_279] : memref<2x8x24xf32, #tpu.memory_space<vmem>>, vector<2x1x24xf32>
    tpu.vector_store %arg41[%c0_277, %c7_278, %c0_279], %1122 {strides = array<i32>} : memref<2x8x24xf32, #tpu.memory_space<vmem>>, vector<2x1x24xf32>,
    %1124 = vector.shape_cast %1121 : vector<2x24xf32> to vector<2x1x24xf32>
    %c0_280 = arith.constant 0 : index
    %c0_281 = arith.constant 0 : index
    %c0_282 = arith.constant 0 : index
    %1125 = vector.load %arg42[%c0_280, %c0_281, %c0_282] : memref<2x8x24xf32, #tpu.memory_space<vmem>>, vector<2x1x24xf32>
    tpu.vector_store %arg42[%c0_280, %c0_281, %c0_282], %1124 {strides = array<i32>} : memref<2x8x24xf32, #tpu.memory_space<vmem>>, vector<2x1x24xf32>,
    %c0_283 = arith.constant 0 : index
    %c0_284 = arith.constant 0 : index
    %1126 = vector.load %arg27[%c0_283, %c0_284] : memref<48x72xf32, #tpu.memory_space<vmem>>, vector<48x72xf32>
    %c0_285 = arith.constant 0 : index
    %c0_286 = arith.constant 0 : index
    %1127 = vector.load %arg28[%c0_285, %c0_286] : memref<24x72xf32, #tpu.memory_space<vmem>>, vector<24x72xf32>
    %c0_287 = arith.constant 0 : index
    %c0_288 = arith.constant 0 : index
    %1128 = vector.load %arg29[%c0_287, %c0_288] : memref<1x72xf32, #tpu.memory_space<vmem>>, vector<1x72xf32>
    %c0_289 = arith.constant 0 : index
    %c0_290 = arith.constant 0 : index
    %1129 = vector.load %arg30[%c0_289, %c0_290] : memref<1x72xf32, #tpu.memory_space<vmem>>, vector<1x72xf32>
    %c0_291 = arith.constant 0 : index
    %c0_292 = arith.constant 0 : index
    %1130 = vector.load %arg31[%c0_291, %c0_292] : memref<48x72xf32, #tpu.memory_space<vmem>>, vector<48x72xf32>
    %c0_293 = arith.constant 0 : index
    %c0_294 = arith.constant 0 : index
    %1131 = vector.load %arg32[%c0_293, %c0_294] : memref<24x72xf32, #tpu.memory_space<vmem>>, vector<24x72xf32>
    %c0_295 = arith.constant 0 : index
    %c0_296 = arith.constant 0 : index
    %1132 = vector.load %arg33[%c0_295, %c0_296] : memref<1x72xf32, #tpu.memory_space<vmem>>, vector<1x72xf32>
    %c0_297 = arith.constant 0 : index
    %c0_298 = arith.constant 0 : index
    %1133 = vector.load %arg34[%c0_297, %c0_298] : memref<1x72xf32, #tpu.memory_space<vmem>>, vector<1x72xf32>
    %c0_299 = arith.constant 0 : index
    %c0_300 = arith.constant 0 : index
    %c0_301 = arith.constant 0 : index
    %1134 = vector.load %arg41[%c0_299, %c0_300, %c0_301] : memref<2x8x24xf32, #tpu.memory_space<vmem>>, vector<2x8x24xf32>
    %1135 = vector.shape_cast %1134 : vector<2x8x24xf32> to vector<16x24xf32>
    %c0_302 = arith.constant 0 : index
    %c0_303 = arith.constant 0 : index
    %c0_304 = arith.constant 0 : index
    %1136 = vector.load %arg42[%c0_302, %c0_303, %c0_304] : memref<2x8x24xf32, #tpu.memory_space<vmem>>, vector<2x8x24xf32>
    %1137 = vector.shape_cast %1136 : vector<2x8x24xf32> to vector<16x24xf32>
    %1138 = vector.extract_strided_slice %1126 {offsets = [0, 0], sizes = [24, 72], strides = [1, 1]} : vector<48x72xf32> to vector<24x72xf32>
    %cst_305 = arith.constant dense<0.000000e+00> : vector<16x72xf32>
    %1139 = tpu.matmul %1135, %1138, %cst_305 {dimension_numbers = #tpu.dot_dimension_numbers<[1], [0], [0], [1], [0, 0, 1, 1], [], []>} : vector<16x24xf32>, vector<24x72xf32>, vector<16x72xf32> -> vector<16x72xf32>
    %1140 = vector.extract_strided_slice %1126 {offsets = [24, 0], sizes = [24, 72], strides = [1, 1]} : vector<48x72xf32> to vector<24x72xf32>
    %cst_306 = arith.constant dense<0.000000e+00> : vector<16x72xf32>
    %1141 = tpu.matmul %1137, %1140, %cst_306 {dimension_numbers = #tpu.dot_dimension_numbers<[1], [0], [0], [1], [0, 0, 1, 1], [], []>} : vector<16x24xf32>, vector<24x72xf32>, vector<16x72xf32> -> vector<16x72xf32>
    %1142 = arith.addf %1139, %1141 : vector<16x72xf32>
    %1143 = vector.broadcast %1128 : vector<1x72xf32> to vector<16x72xf32>
    %1144 = arith.addf %1142, %1143 : vector<16x72xf32>
    %1145 = vector.extract_strided_slice %1130 {offsets = [0, 0], sizes = [24, 72], strides = [1, 1]} : vector<48x72xf32> to vector<24x72xf32>
    %cst_307 = arith.constant dense<0.000000e+00> : vector<16x72xf32>
    %1146 = tpu.matmul %1135, %1145, %cst_307 {dimension_numbers = #tpu.dot_dimension_numbers<[1], [0], [0], [1], [0, 0, 1, 1], [], []>} : vector<16x24xf32>, vector<24x72xf32>, vector<16x72xf32> -> vector<16x72xf32>
    %1147 = vector.extract_strided_slice %1130 {offsets = [24, 0], sizes = [24, 72], strides = [1, 1]} : vector<48x72xf32> to vector<24x72xf32>
    %cst_308 = arith.constant dense<0.000000e+00> : vector<16x72xf32>
    %1148 = tpu.matmul %1137, %1147, %cst_308 {dimension_numbers = #tpu.dot_dimension_numbers<[1], [0], [0], [1], [0, 0, 1, 1], [], []>} : vector<16x24xf32>, vector<24x72xf32>, vector<16x72xf32> -> vector<16x72xf32>
    %1149 = arith.addf %1146, %1148 : vector<16x72xf32>
    %1150 = vector.broadcast %1132 : vector<1x72xf32> to vector<16x72xf32>
    %1151 = arith.addf %1149, %1150 : vector<16x72xf32>
    %1152 = vector.shape_cast %1144 : vector<16x72xf32> to vector<2x8x72xf32>
    %1153 = vector.shape_cast %1151 : vector<16x72xf32> to vector<2x8x72xf32>
    %cst_309 = arith.constant 0.000000e+00 : f32
    %1154 = vector.broadcast %cst_309 : f32 to vector<2x24xf32>
    %cst_310 = arith.constant 0.000000e+00 : f32
    %1155 = vector.broadcast %cst_310 : f32 to vector<2x24xf32>
    %1156 = vector.extract_strided_slice %1152 {offsets = [0, 0, 0], sizes = [2, 1, 72], strides = [1, 1, 1]} : vector<2x8x72xf32> to vector<2x1x72xf32>
    %1157 = vector.shape_cast %1156 : vector<2x1x72xf32> to vector<2x72xf32>
    %cst_311 = arith.constant dense<0.000000e+00> : vector<2x72xf32>
    %1158 = tpu.matmul %1154, %1127, %cst_311 {dimension_numbers = #tpu.dot_dimension_numbers<[1], [0], [0], [1], [0, 0, 1, 1], [], []>} : vector<2x24xf32>, vector<24x72xf32>, vector<2x72xf32> -> vector<2x72xf32>
    %1159 = vector.broadcast %1129 : vector<1x72xf32> to vector<2x72xf32>
    %1160 = arith.addf %1158, %1159 : vector<2x72xf32>
    %1161 = vector.extract_strided_slice %1157 {offsets = [0, 0], sizes = [2, 24], strides = [1, 1]} : vector<2x72xf32> to vector<2x24xf32>
    %1162 = vector.extract_strided_slice %1160 {offsets = [0, 0], sizes = [2, 24], strides = [1, 1]} : vector<2x72xf32> to vector<2x24xf32>
    %1163 = arith.addf %1161, %1162 : vector<2x24xf32>
    %1164 = arith.negf %1163 : vector<2x24xf32>
    %1165 = math.exp %1164 : vector<2x24xf32>
    %cst_312 = arith.constant 1.000000e+00 : f32
    %1166 = vector.broadcast %cst_312 : f32 to vector<2x24xf32>
    %1167 = arith.addf %1166, %1165 : vector<2x24xf32>
    %1168 = arith.divf %1166, %1167 : vector<2x24xf32>
    %1169 = vector.extract_strided_slice %1157 {offsets = [0, 24], sizes = [2, 24], strides = [1, 1]} : vector<2x72xf32> to vector<2x24xf32>
    %1170 = vector.extract_strided_slice %1160 {offsets = [0, 24], sizes = [2, 24], strides = [1, 1]} : vector<2x72xf32> to vector<2x24xf32>
    %1171 = arith.addf %1169, %1170 : vector<2x24xf32>
    %1172 = arith.negf %1171 : vector<2x24xf32>
    %1173 = math.exp %1172 : vector<2x24xf32>
    %cst_313 = arith.constant 1.000000e+00 : f32
    %1174 = vector.broadcast %cst_313 : f32 to vector<2x24xf32>
    %1175 = arith.addf %1174, %1173 : vector<2x24xf32>
    %1176 = arith.divf %1174, %1175 : vector<2x24xf32>
    %1177 = vector.extract_strided_slice %1157 {offsets = [0, 48], sizes = [2, 24], strides = [1, 1]} : vector<2x72xf32> to vector<2x24xf32>
    %1178 = vector.extract_strided_slice %1160 {offsets = [0, 48], sizes = [2, 24], strides = [1, 1]} : vector<2x72xf32> to vector<2x24xf32>
    %1179 = arith.mulf %1168, %1178 : vector<2x24xf32>
    %1180 = arith.addf %1177, %1179 : vector<2x24xf32>
    %1181 = math.tanh %1180 : vector<2x24xf32>
    %cst_314 = arith.constant 1.000000e+00 : f32
    %1182 = vector.broadcast %cst_314 : f32 to vector<2x24xf32>
    %1183 = arith.subf %1182, %1176 : vector<2x24xf32>
    %1184 = arith.mulf %1183, %1181 : vector<2x24xf32>
    %1185 = arith.mulf %1176, %1154 : vector<2x24xf32>
    %1186 = arith.addf %1184, %1185 : vector<2x24xf32>
    %1187 = vector.extract_strided_slice %1153 {offsets = [0, 7, 0], sizes = [2, 1, 72], strides = [1, 1, 1]} : vector<2x8x72xf32> to vector<2x1x72xf32>
    %1188 = vector.shape_cast %1187 : vector<2x1x72xf32> to vector<2x72xf32>
    %cst_315 = arith.constant dense<0.000000e+00> : vector<2x72xf32>
    %1189 = tpu.matmul %1155, %1131, %cst_315 {dimension_numbers = #tpu.dot_dimension_numbers<[1], [0], [0], [1], [0, 0, 1, 1], [], []>} : vector<2x24xf32>, vector<24x72xf32>, vector<2x72xf32> -> vector<2x72xf32>
    %1190 = vector.broadcast %1133 : vector<1x72xf32> to vector<2x72xf32>
    %1191 = arith.addf %1189, %1190 : vector<2x72xf32>
    %1192 = vector.extract_strided_slice %1188 {offsets = [0, 0], sizes = [2, 24], strides = [1, 1]} : vector<2x72xf32> to vector<2x24xf32>
    %1193 = vector.extract_strided_slice %1191 {offsets = [0, 0], sizes = [2, 24], strides = [1, 1]} : vector<2x72xf32> to vector<2x24xf32>
    %1194 = arith.addf %1192, %1193 : vector<2x24xf32>
    %1195 = arith.negf %1194 : vector<2x24xf32>
    %1196 = math.exp %1195 : vector<2x24xf32>
    %cst_316 = arith.constant 1.000000e+00 : f32
    %1197 = vector.broadcast %cst_316 : f32 to vector<2x24xf32>
    %1198 = arith.addf %1197, %1196 : vector<2x24xf32>
    %1199 = arith.divf %1197, %1198 : vector<2x24xf32>
    %1200 = vector.extract_strided_slice %1188 {offsets = [0, 24], sizes = [2, 24], strides = [1, 1]} : vector<2x72xf32> to vector<2x24xf32>
    %1201 = vector.extract_strided_slice %1191 {offsets = [0, 24], sizes = [2, 24], strides = [1, 1]} : vector<2x72xf32> to vector<2x24xf32>
    %1202 = arith.addf %1200, %1201 : vector<2x24xf32>
    %1203 = arith.negf %1202 : vector<2x24xf32>
    %1204 = math.exp %1203 : vector<2x24xf32>
    %cst_317 = arith.constant 1.000000e+00 : f32
    %1205 = vector.broadcast %cst_317 : f32 to vector<2x24xf32>
    %1206 = arith.addf %1205, %1204 : vector<2x24xf32>
    %1207 = arith.divf %1205, %1206 : vector<2x24xf32>
    %1208 = vector.extract_strided_slice %1188 {offsets = [0, 48], sizes = [2, 24], strides = [1, 1]} : vector<2x72xf32> to vector<2x24xf32>
    %1209 = vector.extract_strided_slice %1191 {offsets = [0, 48], sizes = [2, 24], strides = [1, 1]} : vector<2x72xf32> to vector<2x24xf32>
    %1210 = arith.mulf %1199, %1209 : vector<2x24xf32>
    %1211 = arith.addf %1208, %1210 : vector<2x24xf32>
    %1212 = math.tanh %1211 : vector<2x24xf32>
    %cst_318 = arith.constant 1.000000e+00 : f32
    %1213 = vector.broadcast %cst_318 : f32 to vector<2x24xf32>
    %1214 = arith.subf %1213, %1207 : vector<2x24xf32>
    %1215 = arith.mulf %1214, %1212 : vector<2x24xf32>
    %1216 = arith.mulf %1207, %1155 : vector<2x24xf32>
    %1217 = arith.addf %1215, %1216 : vector<2x24xf32>
    %1218 = vector.shape_cast %1186 : vector<2x24xf32> to vector<2x1x24xf32>
    %c0_319 = arith.constant 0 : index
    %c0_320 = arith.constant 0 : index
    %c0_321 = arith.constant 0 : index
    %1219 = vector.load %arg39[%c0_319, %c0_320, %c0_321] : memref<2x8x24xf32, #tpu.memory_space<vmem>>, vector<2x1x24xf32>
    tpu.vector_store %arg39[%c0_319, %c0_320, %c0_321], %1218 {strides = array<i32>} : memref<2x8x24xf32, #tpu.memory_space<vmem>>, vector<2x1x24xf32>,
    %1220 = vector.shape_cast %1217 : vector<2x24xf32> to vector<2x1x24xf32>
    %c0_322 = arith.constant 0 : index
    %c7_323 = arith.constant 7 : index
    %c0_324 = arith.constant 0 : index
    %1221 = vector.load %arg40[%c0_322, %c7_323, %c0_324] : memref<2x8x24xf32, #tpu.memory_space<vmem>>, vector<2x1x24xf32>
    tpu.vector_store %arg40[%c0_322, %c7_323, %c0_324], %1220 {strides = array<i32>} : memref<2x8x24xf32, #tpu.memory_space<vmem>>, vector<2x1x24xf32>,
    %1222 = vector.extract_strided_slice %1152 {offsets = [0, 1, 0], sizes = [2, 1, 72], strides = [1, 1, 1]} : vector<2x8x72xf32> to vector<2x1x72xf32>
    %1223 = vector.shape_cast %1222 : vector<2x1x72xf32> to vector<2x72xf32>
    %cst_325 = arith.constant dense<0.000000e+00> : vector<2x72xf32>
    %1224 = tpu.matmul %1186, %1127, %cst_325 {dimension_numbers = #tpu.dot_dimension_numbers<[1], [0], [0], [1], [0, 0, 1, 1], [], []>} : vector<2x24xf32>, vector<24x72xf32>, vector<2x72xf32> -> vector<2x72xf32>
    %1225 = vector.broadcast %1129 : vector<1x72xf32> to vector<2x72xf32>
    %1226 = arith.addf %1224, %1225 : vector<2x72xf32>
    %1227 = vector.extract_strided_slice %1223 {offsets = [0, 0], sizes = [2, 24], strides = [1, 1]} : vector<2x72xf32> to vector<2x24xf32>
    %1228 = vector.extract_strided_slice %1226 {offsets = [0, 0], sizes = [2, 24], strides = [1, 1]} : vector<2x72xf32> to vector<2x24xf32>
    %1229 = arith.addf %1227, %1228 : vector<2x24xf32>
    %1230 = arith.negf %1229 : vector<2x24xf32>
    %1231 = math.exp %1230 : vector<2x24xf32>
    %cst_326 = arith.constant 1.000000e+00 : f32
    %1232 = vector.broadcast %cst_326 : f32 to vector<2x24xf32>
    %1233 = arith.addf %1232, %1231 : vector<2x24xf32>
    %1234 = arith.divf %1232, %1233 : vector<2x24xf32>
    %1235 = vector.extract_strided_slice %1223 {offsets = [0, 24], sizes = [2, 24], strides = [1, 1]} : vector<2x72xf32> to vector<2x24xf32>
    %1236 = vector.extract_strided_slice %1226 {offsets = [0, 24], sizes = [2, 24], strides = [1, 1]} : vector<2x72xf32> to vector<2x24xf32>
    %1237 = arith.addf %1235, %1236 : vector<2x24xf32>
    %1238 = arith.negf %1237 : vector<2x24xf32>
    %1239 = math.exp %1238 : vector<2x24xf32>
    %cst_327 = arith.constant 1.000000e+00 : f32
    %1240 = vector.broadcast %cst_327 : f32 to vector<2x24xf32>
    %1241 = arith.addf %1240, %1239 : vector<2x24xf32>
    %1242 = arith.divf %1240, %1241 : vector<2x24xf32>
    %1243 = vector.extract_strided_slice %1223 {offsets = [0, 48], sizes = [2, 24], strides = [1, 1]} : vector<2x72xf32> to vector<2x24xf32>
    %1244 = vector.extract_strided_slice %1226 {offsets = [0, 48], sizes = [2, 24], strides = [1, 1]} : vector<2x72xf32> to vector<2x24xf32>
    %1245 = arith.mulf %1234, %1244 : vector<2x24xf32>
    %1246 = arith.addf %1243, %1245 : vector<2x24xf32>
    %1247 = math.tanh %1246 : vector<2x24xf32>
    %cst_328 = arith.constant 1.000000e+00 : f32
    %1248 = vector.broadcast %cst_328 : f32 to vector<2x24xf32>
    %1249 = arith.subf %1248, %1242 : vector<2x24xf32>
    %1250 = arith.mulf %1249, %1247 : vector<2x24xf32>
    %1251 = arith.mulf %1242, %1186 : vector<2x24xf32>
    %1252 = arith.addf %1250, %1251 : vector<2x24xf32>
    %1253 = vector.extract_strided_slice %1153 {offsets = [0, 6, 0], sizes = [2, 1, 72], strides = [1, 1, 1]} : vector<2x8x72xf32> to vector<2x1x72xf32>
    %1254 = vector.shape_cast %1253 : vector<2x1x72xf32> to vector<2x72xf32>
    %cst_329 = arith.constant dense<0.000000e+00> : vector<2x72xf32>
    %1255 = tpu.matmul %1217, %1131, %cst_329 {dimension_numbers = #tpu.dot_dimension_numbers<[1], [0], [0], [1], [0, 0, 1, 1], [], []>} : vector<2x24xf32>, vector<24x72xf32>, vector<2x72xf32> -> vector<2x72xf32>
    %1256 = vector.broadcast %1133 : vector<1x72xf32> to vector<2x72xf32>
    %1257 = arith.addf %1255, %1256 : vector<2x72xf32>
    %1258 = vector.extract_strided_slice %1254 {offsets = [0, 0], sizes = [2, 24], strides = [1, 1]} : vector<2x72xf32> to vector<2x24xf32>
    %1259 = vector.extract_strided_slice %1257 {offsets = [0, 0], sizes = [2, 24], strides = [1, 1]} : vector<2x72xf32> to vector<2x24xf32>
    %1260 = arith.addf %1258, %1259 : vector<2x24xf32>
    %1261 = arith.negf %1260 : vector<2x24xf32>
    %1262 = math.exp %1261 : vector<2x24xf32>
    %cst_330 = arith.constant 1.000000e+00 : f32
    %1263 = vector.broadcast %cst_330 : f32 to vector<2x24xf32>
    %1264 = arith.addf %1263, %1262 : vector<2x24xf32>
    %1265 = arith.divf %1263, %1264 : vector<2x24xf32>
    %1266 = vector.extract_strided_slice %1254 {offsets = [0, 24], sizes = [2, 24], strides = [1, 1]} : vector<2x72xf32> to vector<2x24xf32>
    %1267 = vector.extract_strided_slice %1257 {offsets = [0, 24], sizes = [2, 24], strides = [1, 1]} : vector<2x72xf32> to vector<2x24xf32>
    %1268 = arith.addf %1266, %1267 : vector<2x24xf32>
    %1269 = arith.negf %1268 : vector<2x24xf32>
    %1270 = math.exp %1269 : vector<2x24xf32>
    %cst_331 = arith.constant 1.000000e+00 : f32
    %1271 = vector.broadcast %cst_331 : f32 to vector<2x24xf32>
    %1272 = arith.addf %1271, %1270 : vector<2x24xf32>
    %1273 = arith.divf %1271, %1272 : vector<2x24xf32>
    %1274 = vector.extract_strided_slice %1254 {offsets = [0, 48], sizes = [2, 24], strides = [1, 1]} : vector<2x72xf32> to vector<2x24xf32>
    %1275 = vector.extract_strided_slice %1257 {offsets = [0, 48], sizes = [2, 24], strides = [1, 1]} : vector<2x72xf32> to vector<2x24xf32>
    %1276 = arith.mulf %1265, %1275 : vector<2x24xf32>
    %1277 = arith.addf %1274, %1276 : vector<2x24xf32>
    %1278 = math.tanh %1277 : vector<2x24xf32>
    %cst_332 = arith.constant 1.000000e+00 : f32
    %1279 = vector.broadcast %cst_332 : f32 to vector<2x24xf32>
    %1280 = arith.subf %1279, %1273 : vector<2x24xf32>
    %1281 = arith.mulf %1280, %1278 : vector<2x24xf32>
    %1282 = arith.mulf %1273, %1217 : vector<2x24xf32>
    %1283 = arith.addf %1281, %1282 : vector<2x24xf32>
    %1284 = vector.shape_cast %1252 : vector<2x24xf32> to vector<2x1x24xf32>
    %c0_333 = arith.constant 0 : index
    %c1_334 = arith.constant 1 : index
    %c0_335 = arith.constant 0 : index
    %1285 = vector.load %arg39[%c0_333, %c1_334, %c0_335] : memref<2x8x24xf32, #tpu.memory_space<vmem>>, vector<2x1x24xf32>
    tpu.vector_store %arg39[%c0_333, %c1_334, %c0_335], %1284 {strides = array<i32>} : memref<2x8x24xf32, #tpu.memory_space<vmem>>, vector<2x1x24xf32>,
    %1286 = vector.shape_cast %1283 : vector<2x24xf32> to vector<2x1x24xf32>
    %c0_336 = arith.constant 0 : index
    %c6_337 = arith.constant 6 : index
    %c0_338 = arith.constant 0 : index
    %1287 = vector.load %arg40[%c0_336, %c6_337, %c0_338] : memref<2x8x24xf32, #tpu.memory_space<vmem>>, vector<2x1x24xf32>
    tpu.vector_store %arg40[%c0_336, %c6_337, %c0_338], %1286 {strides = array<i32>} : memref<2x8x24xf32, #tpu.memory_space<vmem>>, vector<2x1x24xf32>,
    %1288 = vector.extract_strided_slice %1152 {offsets = [0, 2, 0], sizes = [2, 1, 72], strides = [1, 1, 1]} : vector<2x8x72xf32> to vector<2x1x72xf32>
    %1289 = vector.shape_cast %1288 : vector<2x1x72xf32> to vector<2x72xf32>
    %cst_339 = arith.constant dense<0.000000e+00> : vector<2x72xf32>
    %1290 = tpu.matmul %1252, %1127, %cst_339 {dimension_numbers = #tpu.dot_dimension_numbers<[1], [0], [0], [1], [0, 0, 1, 1], [], []>} : vector<2x24xf32>, vector<24x72xf32>, vector<2x72xf32> -> vector<2x72xf32>
    %1291 = vector.broadcast %1129 : vector<1x72xf32> to vector<2x72xf32>
    %1292 = arith.addf %1290, %1291 : vector<2x72xf32>
    %1293 = vector.extract_strided_slice %1289 {offsets = [0, 0], sizes = [2, 24], strides = [1, 1]} : vector<2x72xf32> to vector<2x24xf32>
    %1294 = vector.extract_strided_slice %1292 {offsets = [0, 0], sizes = [2, 24], strides = [1, 1]} : vector<2x72xf32> to vector<2x24xf32>
    %1295 = arith.addf %1293, %1294 : vector<2x24xf32>
    %1296 = arith.negf %1295 : vector<2x24xf32>
    %1297 = math.exp %1296 : vector<2x24xf32>
    %cst_340 = arith.constant 1.000000e+00 : f32
    %1298 = vector.broadcast %cst_340 : f32 to vector<2x24xf32>
    %1299 = arith.addf %1298, %1297 : vector<2x24xf32>
    %1300 = arith.divf %1298, %1299 : vector<2x24xf32>
    %1301 = vector.extract_strided_slice %1289 {offsets = [0, 24], sizes = [2, 24], strides = [1, 1]} : vector<2x72xf32> to vector<2x24xf32>
    %1302 = vector.extract_strided_slice %1292 {offsets = [0, 24], sizes = [2, 24], strides = [1, 1]} : vector<2x72xf32> to vector<2x24xf32>
    %1303 = arith.addf %1301, %1302 : vector<2x24xf32>
    %1304 = arith.negf %1303 : vector<2x24xf32>
    %1305 = math.exp %1304 : vector<2x24xf32>
    %cst_341 = arith.constant 1.000000e+00 : f32
    %1306 = vector.broadcast %cst_341 : f32 to vector<2x24xf32>
    %1307 = arith.addf %1306, %1305 : vector<2x24xf32>
    %1308 = arith.divf %1306, %1307 : vector<2x24xf32>
    %1309 = vector.extract_strided_slice %1289 {offsets = [0, 48], sizes = [2, 24], strides = [1, 1]} : vector<2x72xf32> to vector<2x24xf32>
    %1310 = vector.extract_strided_slice %1292 {offsets = [0, 48], sizes = [2, 24], strides = [1, 1]} : vector<2x72xf32> to vector<2x24xf32>
    %1311 = arith.mulf %1300, %1310 : vector<2x24xf32>
    %1312 = arith.addf %1309, %1311 : vector<2x24xf32>
    %1313 = math.tanh %1312 : vector<2x24xf32>
    %cst_342 = arith.constant 1.000000e+00 : f32
    %1314 = vector.broadcast %cst_342 : f32 to vector<2x24xf32>
    %1315 = arith.subf %1314, %1308 : vector<2x24xf32>
    %1316 = arith.mulf %1315, %1313 : vector<2x24xf32>
    %1317 = arith.mulf %1308, %1252 : vector<2x24xf32>
    %1318 = arith.addf %1316, %1317 : vector<2x24xf32>
    %1319 = vector.extract_strided_slice %1153 {offsets = [0, 5, 0], sizes = [2, 1, 72], strides = [1, 1, 1]} : vector<2x8x72xf32> to vector<2x1x72xf32>
    %1320 = vector.shape_cast %1319 : vector<2x1x72xf32> to vector<2x72xf32>
    %cst_343 = arith.constant dense<0.000000e+00> : vector<2x72xf32>
    %1321 = tpu.matmul %1283, %1131, %cst_343 {dimension_numbers = #tpu.dot_dimension_numbers<[1], [0], [0], [1], [0, 0, 1, 1], [], []>} : vector<2x24xf32>, vector<24x72xf32>, vector<2x72xf32> -> vector<2x72xf32>
    %1322 = vector.broadcast %1133 : vector<1x72xf32> to vector<2x72xf32>
    %1323 = arith.addf %1321, %1322 : vector<2x72xf32>
    %1324 = vector.extract_strided_slice %1320 {offsets = [0, 0], sizes = [2, 24], strides = [1, 1]} : vector<2x72xf32> to vector<2x24xf32>
    %1325 = vector.extract_strided_slice %1323 {offsets = [0, 0], sizes = [2, 24], strides = [1, 1]} : vector<2x72xf32> to vector<2x24xf32>
    %1326 = arith.addf %1324, %1325 : vector<2x24xf32>
    %1327 = arith.negf %1326 : vector<2x24xf32>
    %1328 = math.exp %1327 : vector<2x24xf32>
    %cst_344 = arith.constant 1.000000e+00 : f32
    %1329 = vector.broadcast %cst_344 : f32 to vector<2x24xf32>
    %1330 = arith.addf %1329, %1328 : vector<2x24xf32>
    %1331 = arith.divf %1329, %1330 : vector<2x24xf32>
    %1332 = vector.extract_strided_slice %1320 {offsets = [0, 24], sizes = [2, 24], strides = [1, 1]} : vector<2x72xf32> to vector<2x24xf32>
    %1333 = vector.extract_strided_slice %1323 {offsets = [0, 24], sizes = [2, 24], strides = [1, 1]} : vector<2x72xf32> to vector<2x24xf32>
    %1334 = arith.addf %1332, %1333 : vector<2x24xf32>
    %1335 = arith.negf %1334 : vector<2x24xf32>
    %1336 = math.exp %1335 : vector<2x24xf32>
    %cst_345 = arith.constant 1.000000e+00 : f32
    %1337 = vector.broadcast %cst_345 : f32 to vector<2x24xf32>
    %1338 = arith.addf %1337, %1336 : vector<2x24xf32>
    %1339 = arith.divf %1337, %1338 : vector<2x24xf32>
    %1340 = vector.extract_strided_slice %1320 {offsets = [0, 48], sizes = [2, 24], strides = [1, 1]} : vector<2x72xf32> to vector<2x24xf32>
    %1341 = vector.extract_strided_slice %1323 {offsets = [0, 48], sizes = [2, 24], strides = [1, 1]} : vector<2x72xf32> to vector<2x24xf32>
    %1342 = arith.mulf %1331, %1341 : vector<2x24xf32>
    %1343 = arith.addf %1340, %1342 : vector<2x24xf32>
    %1344 = math.tanh %1343 : vector<2x24xf32>
    %cst_346 = arith.constant 1.000000e+00 : f32
    %1345 = vector.broadcast %cst_346 : f32 to vector<2x24xf32>
    %1346 = arith.subf %1345, %1339 : vector<2x24xf32>
    %1347 = arith.mulf %1346, %1344 : vector<2x24xf32>
    %1348 = arith.mulf %1339, %1283 : vector<2x24xf32>
    %1349 = arith.addf %1347, %1348 : vector<2x24xf32>
    %1350 = vector.shape_cast %1318 : vector<2x24xf32> to vector<2x1x24xf32>
    %c0_347 = arith.constant 0 : index
    %c2_348 = arith.constant 2 : index
    %c0_349 = arith.constant 0 : index
    %1351 = vector.load %arg39[%c0_347, %c2_348, %c0_349] : memref<2x8x24xf32, #tpu.memory_space<vmem>>, vector<2x1x24xf32>
    tpu.vector_store %arg39[%c0_347, %c2_348, %c0_349], %1350 {strides = array<i32>} : memref<2x8x24xf32, #tpu.memory_space<vmem>>, vector<2x1x24xf32>,
    %1352 = vector.shape_cast %1349 : vector<2x24xf32> to vector<2x1x24xf32>
    %c0_350 = arith.constant 0 : index
    %c5_351 = arith.constant 5 : index
    %c0_352 = arith.constant 0 : index
    %1353 = vector.load %arg40[%c0_350, %c5_351, %c0_352] : memref<2x8x24xf32, #tpu.memory_space<vmem>>, vector<2x1x24xf32>
    tpu.vector_store %arg40[%c0_350, %c5_351, %c0_352], %1352 {strides = array<i32>} : memref<2x8x24xf32, #tpu.memory_space<vmem>>, vector<2x1x24xf32>,
    %1354 = vector.extract_strided_slice %1152 {offsets = [0, 3, 0], sizes = [2, 1, 72], strides = [1, 1, 1]} : vector<2x8x72xf32> to vector<2x1x72xf32>
    %1355 = vector.shape_cast %1354 : vector<2x1x72xf32> to vector<2x72xf32>
    %cst_353 = arith.constant dense<0.000000e+00> : vector<2x72xf32>
    %1356 = tpu.matmul %1318, %1127, %cst_353 {dimension_numbers = #tpu.dot_dimension_numbers<[1], [0], [0], [1], [0, 0, 1, 1], [], []>} : vector<2x24xf32>, vector<24x72xf32>, vector<2x72xf32> -> vector<2x72xf32>
    %1357 = vector.broadcast %1129 : vector<1x72xf32> to vector<2x72xf32>
    %1358 = arith.addf %1356, %1357 : vector<2x72xf32>
    %1359 = vector.extract_strided_slice %1355 {offsets = [0, 0], sizes = [2, 24], strides = [1, 1]} : vector<2x72xf32> to vector<2x24xf32>
    %1360 = vector.extract_strided_slice %1358 {offsets = [0, 0], sizes = [2, 24], strides = [1, 1]} : vector<2x72xf32> to vector<2x24xf32>
    %1361 = arith.addf %1359, %1360 : vector<2x24xf32>
    %1362 = arith.negf %1361 : vector<2x24xf32>
    %1363 = math.exp %1362 : vector<2x24xf32>
    %cst_354 = arith.constant 1.000000e+00 : f32
    %1364 = vector.broadcast %cst_354 : f32 to vector<2x24xf32>
    %1365 = arith.addf %1364, %1363 : vector<2x24xf32>
    %1366 = arith.divf %1364, %1365 : vector<2x24xf32>
    %1367 = vector.extract_strided_slice %1355 {offsets = [0, 24], sizes = [2, 24], strides = [1, 1]} : vector<2x72xf32> to vector<2x24xf32>
    %1368 = vector.extract_strided_slice %1358 {offsets = [0, 24], sizes = [2, 24], strides = [1, 1]} : vector<2x72xf32> to vector<2x24xf32>
    %1369 = arith.addf %1367, %1368 : vector<2x24xf32>
    %1370 = arith.negf %1369 : vector<2x24xf32>
    %1371 = math.exp %1370 : vector<2x24xf32>
    %cst_355 = arith.constant 1.000000e+00 : f32
    %1372 = vector.broadcast %cst_355 : f32 to vector<2x24xf32>
    %1373 = arith.addf %1372, %1371 : vector<2x24xf32>
    %1374 = arith.divf %1372, %1373 : vector<2x24xf32>
    %1375 = vector.extract_strided_slice %1355 {offsets = [0, 48], sizes = [2, 24], strides = [1, 1]} : vector<2x72xf32> to vector<2x24xf32>
    %1376 = vector.extract_strided_slice %1358 {offsets = [0, 48], sizes = [2, 24], strides = [1, 1]} : vector<2x72xf32> to vector<2x24xf32>
    %1377 = arith.mulf %1366, %1376 : vector<2x24xf32>
    %1378 = arith.addf %1375, %1377 : vector<2x24xf32>
    %1379 = math.tanh %1378 : vector<2x24xf32>
    %cst_356 = arith.constant 1.000000e+00 : f32
    %1380 = vector.broadcast %cst_356 : f32 to vector<2x24xf32>
    %1381 = arith.subf %1380, %1374 : vector<2x24xf32>
    %1382 = arith.mulf %1381, %1379 : vector<2x24xf32>
    %1383 = arith.mulf %1374, %1318 : vector<2x24xf32>
    %1384 = arith.addf %1382, %1383 : vector<2x24xf32>
    %1385 = vector.extract_strided_slice %1153 {offsets = [0, 4, 0], sizes = [2, 1, 72], strides = [1, 1, 1]} : vector<2x8x72xf32> to vector<2x1x72xf32>
    %1386 = vector.shape_cast %1385 : vector<2x1x72xf32> to vector<2x72xf32>
    %cst_357 = arith.constant dense<0.000000e+00> : vector<2x72xf32>
    %1387 = tpu.matmul %1349, %1131, %cst_357 {dimension_numbers = #tpu.dot_dimension_numbers<[1], [0], [0], [1], [0, 0, 1, 1], [], []>} : vector<2x24xf32>, vector<24x72xf32>, vector<2x72xf32> -> vector<2x72xf32>
    %1388 = vector.broadcast %1133 : vector<1x72xf32> to vector<2x72xf32>
    %1389 = arith.addf %1387, %1388 : vector<2x72xf32>
    %1390 = vector.extract_strided_slice %1386 {offsets = [0, 0], sizes = [2, 24], strides = [1, 1]} : vector<2x72xf32> to vector<2x24xf32>
    %1391 = vector.extract_strided_slice %1389 {offsets = [0, 0], sizes = [2, 24], strides = [1, 1]} : vector<2x72xf32> to vector<2x24xf32>
    %1392 = arith.addf %1390, %1391 : vector<2x24xf32>
    %1393 = arith.negf %1392 : vector<2x24xf32>
    %1394 = math.exp %1393 : vector<2x24xf32>
    %cst_358 = arith.constant 1.000000e+00 : f32
    %1395 = vector.broadcast %cst_358 : f32 to vector<2x24xf32>
    %1396 = arith.addf %1395, %1394 : vector<2x24xf32>
    %1397 = arith.divf %1395, %1396 : vector<2x24xf32>
    %1398 = vector.extract_strided_slice %1386 {offsets = [0, 24], sizes = [2, 24], strides = [1, 1]} : vector<2x72xf32> to vector<2x24xf32>
    %1399 = vector.extract_strided_slice %1389 {offsets = [0, 24], sizes = [2, 24], strides = [1, 1]} : vector<2x72xf32> to vector<2x24xf32>
    %1400 = arith.addf %1398, %1399 : vector<2x24xf32>
    %1401 = arith.negf %1400 : vector<2x24xf32>
    %1402 = math.exp %1401 : vector<2x24xf32>
    %cst_359 = arith.constant 1.000000e+00 : f32
    %1403 = vector.broadcast %cst_359 : f32 to vector<2x24xf32>
    %1404 = arith.addf %1403, %1402 : vector<2x24xf32>
    %1405 = arith.divf %1403, %1404 : vector<2x24xf32>
    %1406 = vector.extract_strided_slice %1386 {offsets = [0, 48], sizes = [2, 24], strides = [1, 1]} : vector<2x72xf32> to vector<2x24xf32>
    %1407 = vector.extract_strided_slice %1389 {offsets = [0, 48], sizes = [2, 24], strides = [1, 1]} : vector<2x72xf32> to vector<2x24xf32>
    %1408 = arith.mulf %1397, %1407 : vector<2x24xf32>
    %1409 = arith.addf %1406, %1408 : vector<2x24xf32>
    %1410 = math.tanh %1409 : vector<2x24xf32>
    %cst_360 = arith.constant 1.000000e+00 : f32
    %1411 = vector.broadcast %cst_360 : f32 to vector<2x24xf32>
    %1412 = arith.subf %1411, %1405 : vector<2x24xf32>
    %1413 = arith.mulf %1412, %1410 : vector<2x24xf32>
    %1414 = arith.mulf %1405, %1349 : vector<2x24xf32>
    %1415 = arith.addf %1413, %1414 : vector<2x24xf32>
    %1416 = vector.shape_cast %1384 : vector<2x24xf32> to vector<2x1x24xf32>
    %c0_361 = arith.constant 0 : index
    %c3_362 = arith.constant 3 : index
    %c0_363 = arith.constant 0 : index
    %1417 = vector.load %arg39[%c0_361, %c3_362, %c0_363] : memref<2x8x24xf32, #tpu.memory_space<vmem>>, vector<2x1x24xf32>
    tpu.vector_store %arg39[%c0_361, %c3_362, %c0_363], %1416 {strides = array<i32>} : memref<2x8x24xf32, #tpu.memory_space<vmem>>, vector<2x1x24xf32>,
    %1418 = vector.shape_cast %1415 : vector<2x24xf32> to vector<2x1x24xf32>
    %c0_364 = arith.constant 0 : index
    %c4_365 = arith.constant 4 : index
    %c0_366 = arith.constant 0 : index
    %1419 = vector.load %arg40[%c0_364, %c4_365, %c0_366] : memref<2x8x24xf32, #tpu.memory_space<vmem>>, vector<2x1x24xf32>
    tpu.vector_store %arg40[%c0_364, %c4_365, %c0_366], %1418 {strides = array<i32>} : memref<2x8x24xf32, #tpu.memory_space<vmem>>, vector<2x1x24xf32>,
    %1420 = vector.extract_strided_slice %1152 {offsets = [0, 4, 0], sizes = [2, 1, 72], strides = [1, 1, 1]} : vector<2x8x72xf32> to vector<2x1x72xf32>
    %1421 = vector.shape_cast %1420 : vector<2x1x72xf32> to vector<2x72xf32>
    %cst_367 = arith.constant dense<0.000000e+00> : vector<2x72xf32>
    %1422 = tpu.matmul %1384, %1127, %cst_367 {dimension_numbers = #tpu.dot_dimension_numbers<[1], [0], [0], [1], [0, 0, 1, 1], [], []>} : vector<2x24xf32>, vector<24x72xf32>, vector<2x72xf32> -> vector<2x72xf32>
    %1423 = vector.broadcast %1129 : vector<1x72xf32> to vector<2x72xf32>
    %1424 = arith.addf %1422, %1423 : vector<2x72xf32>
    %1425 = vector.extract_strided_slice %1421 {offsets = [0, 0], sizes = [2, 24], strides = [1, 1]} : vector<2x72xf32> to vector<2x24xf32>
    %1426 = vector.extract_strided_slice %1424 {offsets = [0, 0], sizes = [2, 24], strides = [1, 1]} : vector<2x72xf32> to vector<2x24xf32>
    %1427 = arith.addf %1425, %1426 : vector<2x24xf32>
    %1428 = arith.negf %1427 : vector<2x24xf32>
    %1429 = math.exp %1428 : vector<2x24xf32>
    %cst_368 = arith.constant 1.000000e+00 : f32
    %1430 = vector.broadcast %cst_368 : f32 to vector<2x24xf32>
    %1431 = arith.addf %1430, %1429 : vector<2x24xf32>
    %1432 = arith.divf %1430, %1431 : vector<2x24xf32>
    %1433 = vector.extract_strided_slice %1421 {offsets = [0, 24], sizes = [2, 24], strides = [1, 1]} : vector<2x72xf32> to vector<2x24xf32>
    %1434 = vector.extract_strided_slice %1424 {offsets = [0, 24], sizes = [2, 24], strides = [1, 1]} : vector<2x72xf32> to vector<2x24xf32>
    %1435 = arith.addf %1433, %1434 : vector<2x24xf32>
    %1436 = arith.negf %1435 : vector<2x24xf32>
    %1437 = math.exp %1436 : vector<2x24xf32>
    %cst_369 = arith.constant 1.000000e+00 : f32
    %1438 = vector.broadcast %cst_369 : f32 to vector<2x24xf32>
    %1439 = arith.addf %1438, %1437 : vector<2x24xf32>
    %1440 = arith.divf %1438, %1439 : vector<2x24xf32>
    %1441 = vector.extract_strided_slice %1421 {offsets = [0, 48], sizes = [2, 24], strides = [1, 1]} : vector<2x72xf32> to vector<2x24xf32>
    %1442 = vector.extract_strided_slice %1424 {offsets = [0, 48], sizes = [2, 24], strides = [1, 1]} : vector<2x72xf32> to vector<2x24xf32>
    %1443 = arith.mulf %1432, %1442 : vector<2x24xf32>
    %1444 = arith.addf %1441, %1443 : vector<2x24xf32>
    %1445 = math.tanh %1444 : vector<2x24xf32>
    %cst_370 = arith.constant 1.000000e+00 : f32
    %1446 = vector.broadcast %cst_370 : f32 to vector<2x24xf32>
    %1447 = arith.subf %1446, %1440 : vector<2x24xf32>
    %1448 = arith.mulf %1447, %1445 : vector<2x24xf32>
    %1449 = arith.mulf %1440, %1384 : vector<2x24xf32>
    %1450 = arith.addf %1448, %1449 : vector<2x24xf32>
    %1451 = vector.extract_strided_slice %1153 {offsets = [0, 3, 0], sizes = [2, 1, 72], strides = [1, 1, 1]} : vector<2x8x72xf32> to vector<2x1x72xf32>
    %1452 = vector.shape_cast %1451 : vector<2x1x72xf32> to vector<2x72xf32>
    %cst_371 = arith.constant dense<0.000000e+00> : vector<2x72xf32>
    %1453 = tpu.matmul %1415, %1131, %cst_371 {dimension_numbers = #tpu.dot_dimension_numbers<[1], [0], [0], [1], [0, 0, 1, 1], [], []>} : vector<2x24xf32>, vector<24x72xf32>, vector<2x72xf32> -> vector<2x72xf32>
    %1454 = vector.broadcast %1133 : vector<1x72xf32> to vector<2x72xf32>
    %1455 = arith.addf %1453, %1454 : vector<2x72xf32>
    %1456 = vector.extract_strided_slice %1452 {offsets = [0, 0], sizes = [2, 24], strides = [1, 1]} : vector<2x72xf32> to vector<2x24xf32>
    %1457 = vector.extract_strided_slice %1455 {offsets = [0, 0], sizes = [2, 24], strides = [1, 1]} : vector<2x72xf32> to vector<2x24xf32>
    %1458 = arith.addf %1456, %1457 : vector<2x24xf32>
    %1459 = arith.negf %1458 : vector<2x24xf32>
    %1460 = math.exp %1459 : vector<2x24xf32>
    %cst_372 = arith.constant 1.000000e+00 : f32
    %1461 = vector.broadcast %cst_372 : f32 to vector<2x24xf32>
    %1462 = arith.addf %1461, %1460 : vector<2x24xf32>
    %1463 = arith.divf %1461, %1462 : vector<2x24xf32>
    %1464 = vector.extract_strided_slice %1452 {offsets = [0, 24], sizes = [2, 24], strides = [1, 1]} : vector<2x72xf32> to vector<2x24xf32>
    %1465 = vector.extract_strided_slice %1455 {offsets = [0, 24], sizes = [2, 24], strides = [1, 1]} : vector<2x72xf32> to vector<2x24xf32>
    %1466 = arith.addf %1464, %1465 : vector<2x24xf32>
    %1467 = arith.negf %1466 : vector<2x24xf32>
    %1468 = math.exp %1467 : vector<2x24xf32>
    %cst_373 = arith.constant 1.000000e+00 : f32
    %1469 = vector.broadcast %cst_373 : f32 to vector<2x24xf32>
    %1470 = arith.addf %1469, %1468 : vector<2x24xf32>
    %1471 = arith.divf %1469, %1470 : vector<2x24xf32>
    %1472 = vector.extract_strided_slice %1452 {offsets = [0, 48], sizes = [2, 24], strides = [1, 1]} : vector<2x72xf32> to vector<2x24xf32>
    %1473 = vector.extract_strided_slice %1455 {offsets = [0, 48], sizes = [2, 24], strides = [1, 1]} : vector<2x72xf32> to vector<2x24xf32>
    %1474 = arith.mulf %1463, %1473 : vector<2x24xf32>
    %1475 = arith.addf %1472, %1474 : vector<2x24xf32>
    %1476 = math.tanh %1475 : vector<2x24xf32>
    %cst_374 = arith.constant 1.000000e+00 : f32
    %1477 = vector.broadcast %cst_374 : f32 to vector<2x24xf32>
    %1478 = arith.subf %1477, %1471 : vector<2x24xf32>
    %1479 = arith.mulf %1478, %1476 : vector<2x24xf32>
    %1480 = arith.mulf %1471, %1415 : vector<2x24xf32>
    %1481 = arith.addf %1479, %1480 : vector<2x24xf32>
    %1482 = vector.shape_cast %1450 : vector<2x24xf32> to vector<2x1x24xf32>
    %c0_375 = arith.constant 0 : index
    %c4_376 = arith.constant 4 : index
    %c0_377 = arith.constant 0 : index
    %1483 = vector.load %arg39[%c0_375, %c4_376, %c0_377] : memref<2x8x24xf32, #tpu.memory_space<vmem>>, vector<2x1x24xf32>
    tpu.vector_store %arg39[%c0_375, %c4_376, %c0_377], %1482 {strides = array<i32>} : memref<2x8x24xf32, #tpu.memory_space<vmem>>, vector<2x1x24xf32>,
    %1484 = vector.shape_cast %1481 : vector<2x24xf32> to vector<2x1x24xf32>
    %c0_378 = arith.constant 0 : index
    %c3_379 = arith.constant 3 : index
    %c0_380 = arith.constant 0 : index
    %1485 = vector.load %arg40[%c0_378, %c3_379, %c0_380] : memref<2x8x24xf32, #tpu.memory_space<vmem>>, vector<2x1x24xf32>
    tpu.vector_store %arg40[%c0_378, %c3_379, %c0_380], %1484 {strides = array<i32>} : memref<2x8x24xf32, #tpu.memory_space<vmem>>, vector<2x1x24xf32>,
    %1486 = vector.extract_strided_slice %1152 {offsets = [0, 5, 0], sizes = [2, 1, 72], strides = [1, 1, 1]} : vector<2x8x72xf32> to vector<2x1x72xf32>
    %1487 = vector.shape_cast %1486 : vector<2x1x72xf32> to vector<2x72xf32>
    %cst_381 = arith.constant dense<0.000000e+00> : vector<2x72xf32>
    %1488 = tpu.matmul %1450, %1127, %cst_381 {dimension_numbers = #tpu.dot_dimension_numbers<[1], [0], [0], [1], [0, 0, 1, 1], [], []>} : vector<2x24xf32>, vector<24x72xf32>, vector<2x72xf32> -> vector<2x72xf32>
    %1489 = vector.broadcast %1129 : vector<1x72xf32> to vector<2x72xf32>
    %1490 = arith.addf %1488, %1489 : vector<2x72xf32>
    %1491 = vector.extract_strided_slice %1487 {offsets = [0, 0], sizes = [2, 24], strides = [1, 1]} : vector<2x72xf32> to vector<2x24xf32>
    %1492 = vector.extract_strided_slice %1490 {offsets = [0, 0], sizes = [2, 24], strides = [1, 1]} : vector<2x72xf32> to vector<2x24xf32>
    %1493 = arith.addf %1491, %1492 : vector<2x24xf32>
    %1494 = arith.negf %1493 : vector<2x24xf32>
    %1495 = math.exp %1494 : vector<2x24xf32>
    %cst_382 = arith.constant 1.000000e+00 : f32
    %1496 = vector.broadcast %cst_382 : f32 to vector<2x24xf32>
    %1497 = arith.addf %1496, %1495 : vector<2x24xf32>
    %1498 = arith.divf %1496, %1497 : vector<2x24xf32>
    %1499 = vector.extract_strided_slice %1487 {offsets = [0, 24], sizes = [2, 24], strides = [1, 1]} : vector<2x72xf32> to vector<2x24xf32>
    %1500 = vector.extract_strided_slice %1490 {offsets = [0, 24], sizes = [2, 24], strides = [1, 1]} : vector<2x72xf32> to vector<2x24xf32>
    %1501 = arith.addf %1499, %1500 : vector<2x24xf32>
    %1502 = arith.negf %1501 : vector<2x24xf32>
    %1503 = math.exp %1502 : vector<2x24xf32>
    %cst_383 = arith.constant 1.000000e+00 : f32
    %1504 = vector.broadcast %cst_383 : f32 to vector<2x24xf32>
    %1505 = arith.addf %1504, %1503 : vector<2x24xf32>
    %1506 = arith.divf %1504, %1505 : vector<2x24xf32>
    %1507 = vector.extract_strided_slice %1487 {offsets = [0, 48], sizes = [2, 24], strides = [1, 1]} : vector<2x72xf32> to vector<2x24xf32>
    %1508 = vector.extract_strided_slice %1490 {offsets = [0, 48], sizes = [2, 24], strides = [1, 1]} : vector<2x72xf32> to vector<2x24xf32>
    %1509 = arith.mulf %1498, %1508 : vector<2x24xf32>
    %1510 = arith.addf %1507, %1509 : vector<2x24xf32>
    %1511 = math.tanh %1510 : vector<2x24xf32>
    %cst_384 = arith.constant 1.000000e+00 : f32
    %1512 = vector.broadcast %cst_384 : f32 to vector<2x24xf32>
    %1513 = arith.subf %1512, %1506 : vector<2x24xf32>
    %1514 = arith.mulf %1513, %1511 : vector<2x24xf32>
    %1515 = arith.mulf %1506, %1450 : vector<2x24xf32>
    %1516 = arith.addf %1514, %1515 : vector<2x24xf32>
    %1517 = vector.extract_strided_slice %1153 {offsets = [0, 2, 0], sizes = [2, 1, 72], strides = [1, 1, 1]} : vector<2x8x72xf32> to vector<2x1x72xf32>
    %1518 = vector.shape_cast %1517 : vector<2x1x72xf32> to vector<2x72xf32>
    %cst_385 = arith.constant dense<0.000000e+00> : vector<2x72xf32>
    %1519 = tpu.matmul %1481, %1131, %cst_385 {dimension_numbers = #tpu.dot_dimension_numbers<[1], [0], [0], [1], [0, 0, 1, 1], [], []>} : vector<2x24xf32>, vector<24x72xf32>, vector<2x72xf32> -> vector<2x72xf32>
    %1520 = vector.broadcast %1133 : vector<1x72xf32> to vector<2x72xf32>
    %1521 = arith.addf %1519, %1520 : vector<2x72xf32>
    %1522 = vector.extract_strided_slice %1518 {offsets = [0, 0], sizes = [2, 24], strides = [1, 1]} : vector<2x72xf32> to vector<2x24xf32>
    %1523 = vector.extract_strided_slice %1521 {offsets = [0, 0], sizes = [2, 24], strides = [1, 1]} : vector<2x72xf32> to vector<2x24xf32>
    %1524 = arith.addf %1522, %1523 : vector<2x24xf32>
    %1525 = arith.negf %1524 : vector<2x24xf32>
    %1526 = math.exp %1525 : vector<2x24xf32>
    %cst_386 = arith.constant 1.000000e+00 : f32
    %1527 = vector.broadcast %cst_386 : f32 to vector<2x24xf32>
    %1528 = arith.addf %1527, %1526 : vector<2x24xf32>
    %1529 = arith.divf %1527, %1528 : vector<2x24xf32>
    %1530 = vector.extract_strided_slice %1518 {offsets = [0, 24], sizes = [2, 24], strides = [1, 1]} : vector<2x72xf32> to vector<2x24xf32>
    %1531 = vector.extract_strided_slice %1521 {offsets = [0, 24], sizes = [2, 24], strides = [1, 1]} : vector<2x72xf32> to vector<2x24xf32>
    %1532 = arith.addf %1530, %1531 : vector<2x24xf32>
    %1533 = arith.negf %1532 : vector<2x24xf32>
    %1534 = math.exp %1533 : vector<2x24xf32>
    %cst_387 = arith.constant 1.000000e+00 : f32
    %1535 = vector.broadcast %cst_387 : f32 to vector<2x24xf32>
    %1536 = arith.addf %1535, %1534 : vector<2x24xf32>
    %1537 = arith.divf %1535, %1536 : vector<2x24xf32>
    %1538 = vector.extract_strided_slice %1518 {offsets = [0, 48], sizes = [2, 24], strides = [1, 1]} : vector<2x72xf32> to vector<2x24xf32>
    %1539 = vector.extract_strided_slice %1521 {offsets = [0, 48], sizes = [2, 24], strides = [1, 1]} : vector<2x72xf32> to vector<2x24xf32>
    %1540 = arith.mulf %1529, %1539 : vector<2x24xf32>
    %1541 = arith.addf %1538, %1540 : vector<2x24xf32>
    %1542 = math.tanh %1541 : vector<2x24xf32>
    %cst_388 = arith.constant 1.000000e+00 : f32
    %1543 = vector.broadcast %cst_388 : f32 to vector<2x24xf32>
    %1544 = arith.subf %1543, %1537 : vector<2x24xf32>
    %1545 = arith.mulf %1544, %1542 : vector<2x24xf32>
    %1546 = arith.mulf %1537, %1481 : vector<2x24xf32>
    %1547 = arith.addf %1545, %1546 : vector<2x24xf32>
    %1548 = vector.shape_cast %1516 : vector<2x24xf32> to vector<2x1x24xf32>
    %c0_389 = arith.constant 0 : index
    %c5_390 = arith.constant 5 : index
    %c0_391 = arith.constant 0 : index
    %1549 = vector.load %arg39[%c0_389, %c5_390, %c0_391] : memref<2x8x24xf32, #tpu.memory_space<vmem>>, vector<2x1x24xf32>
    tpu.vector_store %arg39[%c0_389, %c5_390, %c0_391], %1548 {strides = array<i32>} : memref<2x8x24xf32, #tpu.memory_space<vmem>>, vector<2x1x24xf32>,
    %1550 = vector.shape_cast %1547 : vector<2x24xf32> to vector<2x1x24xf32>
    %c0_392 = arith.constant 0 : index
    %c2_393 = arith.constant 2 : index
    %c0_394 = arith.constant 0 : index
    %1551 = vector.load %arg40[%c0_392, %c2_393, %c0_394] : memref<2x8x24xf32, #tpu.memory_space<vmem>>, vector<2x1x24xf32>
    tpu.vector_store %arg40[%c0_392, %c2_393, %c0_394], %1550 {strides = array<i32>} : memref<2x8x24xf32, #tpu.memory_space<vmem>>, vector<2x1x24xf32>,
    %1552 = vector.extract_strided_slice %1152 {offsets = [0, 6, 0], sizes = [2, 1, 72], strides = [1, 1, 1]} : vector<2x8x72xf32> to vector<2x1x72xf32>
    %1553 = vector.shape_cast %1552 : vector<2x1x72xf32> to vector<2x72xf32>
    %cst_395 = arith.constant dense<0.000000e+00> : vector<2x72xf32>
    %1554 = tpu.matmul %1516, %1127, %cst_395 {dimension_numbers = #tpu.dot_dimension_numbers<[1], [0], [0], [1], [0, 0, 1, 1], [], []>} : vector<2x24xf32>, vector<24x72xf32>, vector<2x72xf32> -> vector<2x72xf32>
    %1555 = vector.broadcast %1129 : vector<1x72xf32> to vector<2x72xf32>
    %1556 = arith.addf %1554, %1555 : vector<2x72xf32>
    %1557 = vector.extract_strided_slice %1553 {offsets = [0, 0], sizes = [2, 24], strides = [1, 1]} : vector<2x72xf32> to vector<2x24xf32>
    %1558 = vector.extract_strided_slice %1556 {offsets = [0, 0], sizes = [2, 24], strides = [1, 1]} : vector<2x72xf32> to vector<2x24xf32>
    %1559 = arith.addf %1557, %1558 : vector<2x24xf32>
    %1560 = arith.negf %1559 : vector<2x24xf32>
    %1561 = math.exp %1560 : vector<2x24xf32>
    %cst_396 = arith.constant 1.000000e+00 : f32
    %1562 = vector.broadcast %cst_396 : f32 to vector<2x24xf32>
    %1563 = arith.addf %1562, %1561 : vector<2x24xf32>
    %1564 = arith.divf %1562, %1563 : vector<2x24xf32>
    %1565 = vector.extract_strided_slice %1553 {offsets = [0, 24], sizes = [2, 24], strides = [1, 1]} : vector<2x72xf32> to vector<2x24xf32>
    %1566 = vector.extract_strided_slice %1556 {offsets = [0, 24], sizes = [2, 24], strides = [1, 1]} : vector<2x72xf32> to vector<2x24xf32>
    %1567 = arith.addf %1565, %1566 : vector<2x24xf32>
    %1568 = arith.negf %1567 : vector<2x24xf32>
    %1569 = math.exp %1568 : vector<2x24xf32>
    %cst_397 = arith.constant 1.000000e+00 : f32
    %1570 = vector.broadcast %cst_397 : f32 to vector<2x24xf32>
    %1571 = arith.addf %1570, %1569 : vector<2x24xf32>
    %1572 = arith.divf %1570, %1571 : vector<2x24xf32>
    %1573 = vector.extract_strided_slice %1553 {offsets = [0, 48], sizes = [2, 24], strides = [1, 1]} : vector<2x72xf32> to vector<2x24xf32>
    %1574 = vector.extract_strided_slice %1556 {offsets = [0, 48], sizes = [2, 24], strides = [1, 1]} : vector<2x72xf32> to vector<2x24xf32>
    %1575 = arith.mulf %1564, %1574 : vector<2x24xf32>
    %1576 = arith.addf %1573, %1575 : vector<2x24xf32>
    %1577 = math.tanh %1576 : vector<2x24xf32>
    %cst_398 = arith.constant 1.000000e+00 : f32
    %1578 = vector.broadcast %cst_398 : f32 to vector<2x24xf32>
    %1579 = arith.subf %1578, %1572 : vector<2x24xf32>
    %1580 = arith.mulf %1579, %1577 : vector<2x24xf32>
    %1581 = arith.mulf %1572, %1516 : vector<2x24xf32>
    %1582 = arith.addf %1580, %1581 : vector<2x24xf32>
    %1583 = vector.extract_strided_slice %1153 {offsets = [0, 1, 0], sizes = [2, 1, 72], strides = [1, 1, 1]} : vector<2x8x72xf32> to vector<2x1x72xf32>
    %1584 = vector.shape_cast %1583 : vector<2x1x72xf32> to vector<2x72xf32>
    %cst_399 = arith.constant dense<0.000000e+00> : vector<2x72xf32>
    %1585 = tpu.matmul %1547, %1131, %cst_399 {dimension_numbers = #tpu.dot_dimension_numbers<[1], [0], [0], [1], [0, 0, 1, 1], [], []>} : vector<2x24xf32>, vector<24x72xf32>, vector<2x72xf32> -> vector<2x72xf32>
    %1586 = vector.broadcast %1133 : vector<1x72xf32> to vector<2x72xf32>
    %1587 = arith.addf %1585, %1586 : vector<2x72xf32>
    %1588 = vector.extract_strided_slice %1584 {offsets = [0, 0], sizes = [2, 24], strides = [1, 1]} : vector<2x72xf32> to vector<2x24xf32>
    %1589 = vector.extract_strided_slice %1587 {offsets = [0, 0], sizes = [2, 24], strides = [1, 1]} : vector<2x72xf32> to vector<2x24xf32>
    %1590 = arith.addf %1588, %1589 : vector<2x24xf32>
    %1591 = arith.negf %1590 : vector<2x24xf32>
    %1592 = math.exp %1591 : vector<2x24xf32>
    %cst_400 = arith.constant 1.000000e+00 : f32
    %1593 = vector.broadcast %cst_400 : f32 to vector<2x24xf32>
    %1594 = arith.addf %1593, %1592 : vector<2x24xf32>
    %1595 = arith.divf %1593, %1594 : vector<2x24xf32>
    %1596 = vector.extract_strided_slice %1584 {offsets = [0, 24], sizes = [2, 24], strides = [1, 1]} : vector<2x72xf32> to vector<2x24xf32>
    %1597 = vector.extract_strided_slice %1587 {offsets = [0, 24], sizes = [2, 24], strides = [1, 1]} : vector<2x72xf32> to vector<2x24xf32>
    %1598 = arith.addf %1596, %1597 : vector<2x24xf32>
    %1599 = arith.negf %1598 : vector<2x24xf32>
    %1600 = math.exp %1599 : vector<2x24xf32>
    %cst_401 = arith.constant 1.000000e+00 : f32
    %1601 = vector.broadcast %cst_401 : f32 to vector<2x24xf32>
    %1602 = arith.addf %1601, %1600 : vector<2x24xf32>
    %1603 = arith.divf %1601, %1602 : vector<2x24xf32>
    %1604 = vector.extract_strided_slice %1584 {offsets = [0, 48], sizes = [2, 24], strides = [1, 1]} : vector<2x72xf32> to vector<2x24xf32>
    %1605 = vector.extract_strided_slice %1587 {offsets = [0, 48], sizes = [2, 24], strides = [1, 1]} : vector<2x72xf32> to vector<2x24xf32>
    %1606 = arith.mulf %1595, %1605 : vector<2x24xf32>
    %1607 = arith.addf %1604, %1606 : vector<2x24xf32>
    %1608 = math.tanh %1607 : vector<2x24xf32>
    %cst_402 = arith.constant 1.000000e+00 : f32
    %1609 = vector.broadcast %cst_402 : f32 to vector<2x24xf32>
    %1610 = arith.subf %1609, %1603 : vector<2x24xf32>
    %1611 = arith.mulf %1610, %1608 : vector<2x24xf32>
    %1612 = arith.mulf %1603, %1547 : vector<2x24xf32>
    %1613 = arith.addf %1611, %1612 : vector<2x24xf32>
    %1614 = vector.shape_cast %1582 : vector<2x24xf32> to vector<2x1x24xf32>
    %c0_403 = arith.constant 0 : index
    %c6_404 = arith.constant 6 : index
    %c0_405 = arith.constant 0 : index
    %1615 = vector.load %arg39[%c0_403, %c6_404, %c0_405] : memref<2x8x24xf32, #tpu.memory_space<vmem>>, vector<2x1x24xf32>
    tpu.vector_store %arg39[%c0_403, %c6_404, %c0_405], %1614 {strides = array<i32>} : memref<2x8x24xf32, #tpu.memory_space<vmem>>, vector<2x1x24xf32>,
    %1616 = vector.shape_cast %1613 : vector<2x24xf32> to vector<2x1x24xf32>
    %c0_406 = arith.constant 0 : index
    %c1_407 = arith.constant 1 : index
    %c0_408 = arith.constant 0 : index
    %1617 = vector.load %arg40[%c0_406, %c1_407, %c0_408] : memref<2x8x24xf32, #tpu.memory_space<vmem>>, vector<2x1x24xf32>
    tpu.vector_store %arg40[%c0_406, %c1_407, %c0_408], %1616 {strides = array<i32>} : memref<2x8x24xf32, #tpu.memory_space<vmem>>, vector<2x1x24xf32>,
    %1618 = vector.extract_strided_slice %1152 {offsets = [0, 7, 0], sizes = [2, 1, 72], strides = [1, 1, 1]} : vector<2x8x72xf32> to vector<2x1x72xf32>
    %1619 = vector.shape_cast %1618 : vector<2x1x72xf32> to vector<2x72xf32>
    %cst_409 = arith.constant dense<0.000000e+00> : vector<2x72xf32>
    %1620 = tpu.matmul %1582, %1127, %cst_409 {dimension_numbers = #tpu.dot_dimension_numbers<[1], [0], [0], [1], [0, 0, 1, 1], [], []>} : vector<2x24xf32>, vector<24x72xf32>, vector<2x72xf32> -> vector<2x72xf32>
    %1621 = vector.broadcast %1129 : vector<1x72xf32> to vector<2x72xf32>
    %1622 = arith.addf %1620, %1621 : vector<2x72xf32>
    %1623 = vector.extract_strided_slice %1619 {offsets = [0, 0], sizes = [2, 24], strides = [1, 1]} : vector<2x72xf32> to vector<2x24xf32>
    %1624 = vector.extract_strided_slice %1622 {offsets = [0, 0], sizes = [2, 24], strides = [1, 1]} : vector<2x72xf32> to vector<2x24xf32>
    %1625 = arith.addf %1623, %1624 : vector<2x24xf32>
    %1626 = arith.negf %1625 : vector<2x24xf32>
    %1627 = math.exp %1626 : vector<2x24xf32>
    %cst_410 = arith.constant 1.000000e+00 : f32
    %1628 = vector.broadcast %cst_410 : f32 to vector<2x24xf32>
    %1629 = arith.addf %1628, %1627 : vector<2x24xf32>
    %1630 = arith.divf %1628, %1629 : vector<2x24xf32>
    %1631 = vector.extract_strided_slice %1619 {offsets = [0, 24], sizes = [2, 24], strides = [1, 1]} : vector<2x72xf32> to vector<2x24xf32>
    %1632 = vector.extract_strided_slice %1622 {offsets = [0, 24], sizes = [2, 24], strides = [1, 1]} : vector<2x72xf32> to vector<2x24xf32>
    %1633 = arith.addf %1631, %1632 : vector<2x24xf32>
    %1634 = arith.negf %1633 : vector<2x24xf32>
    %1635 = math.exp %1634 : vector<2x24xf32>
    %cst_411 = arith.constant 1.000000e+00 : f32
    %1636 = vector.broadcast %cst_411 : f32 to vector<2x24xf32>
    %1637 = arith.addf %1636, %1635 : vector<2x24xf32>
    %1638 = arith.divf %1636, %1637 : vector<2x24xf32>
    %1639 = vector.extract_strided_slice %1619 {offsets = [0, 48], sizes = [2, 24], strides = [1, 1]} : vector<2x72xf32> to vector<2x24xf32>
    %1640 = vector.extract_strided_slice %1622 {offsets = [0, 48], sizes = [2, 24], strides = [1, 1]} : vector<2x72xf32> to vector<2x24xf32>
    %1641 = arith.mulf %1630, %1640 : vector<2x24xf32>
    %1642 = arith.addf %1639, %1641 : vector<2x24xf32>
    %1643 = math.tanh %1642 : vector<2x24xf32>
    %cst_412 = arith.constant 1.000000e+00 : f32
    %1644 = vector.broadcast %cst_412 : f32 to vector<2x24xf32>
    %1645 = arith.subf %1644, %1638 : vector<2x24xf32>
    %1646 = arith.mulf %1645, %1643 : vector<2x24xf32>
    %1647 = arith.mulf %1638, %1582 : vector<2x24xf32>
    %1648 = arith.addf %1646, %1647 : vector<2x24xf32>
    %1649 = vector.extract_strided_slice %1153 {offsets = [0, 0, 0], sizes = [2, 1, 72], strides = [1, 1, 1]} : vector<2x8x72xf32> to vector<2x1x72xf32>
    %1650 = vector.shape_cast %1649 : vector<2x1x72xf32> to vector<2x72xf32>
    %cst_413 = arith.constant dense<0.000000e+00> : vector<2x72xf32>
    %1651 = tpu.matmul %1613, %1131, %cst_413 {dimension_numbers = #tpu.dot_dimension_numbers<[1], [0], [0], [1], [0, 0, 1, 1], [], []>} : vector<2x24xf32>, vector<24x72xf32>, vector<2x72xf32> -> vector<2x72xf32>
    %1652 = vector.broadcast %1133 : vector<1x72xf32> to vector<2x72xf32>
    %1653 = arith.addf %1651, %1652 : vector<2x72xf32>
    %1654 = vector.extract_strided_slice %1650 {offsets = [0, 0], sizes = [2, 24], strides = [1, 1]} : vector<2x72xf32> to vector<2x24xf32>
    %1655 = vector.extract_strided_slice %1653 {offsets = [0, 0], sizes = [2, 24], strides = [1, 1]} : vector<2x72xf32> to vector<2x24xf32>
    %1656 = arith.addf %1654, %1655 : vector<2x24xf32>
    %1657 = arith.negf %1656 : vector<2x24xf32>
    %1658 = math.exp %1657 : vector<2x24xf32>
    %cst_414 = arith.constant 1.000000e+00 : f32
    %1659 = vector.broadcast %cst_414 : f32 to vector<2x24xf32>
    %1660 = arith.addf %1659, %1658 : vector<2x24xf32>
    %1661 = arith.divf %1659, %1660 : vector<2x24xf32>
    %1662 = vector.extract_strided_slice %1650 {offsets = [0, 24], sizes = [2, 24], strides = [1, 1]} : vector<2x72xf32> to vector<2x24xf32>
    %1663 = vector.extract_strided_slice %1653 {offsets = [0, 24], sizes = [2, 24], strides = [1, 1]} : vector<2x72xf32> to vector<2x24xf32>
    %1664 = arith.addf %1662, %1663 : vector<2x24xf32>
    %1665 = arith.negf %1664 : vector<2x24xf32>
    %1666 = math.exp %1665 : vector<2x24xf32>
    %cst_415 = arith.constant 1.000000e+00 : f32
    %1667 = vector.broadcast %cst_415 : f32 to vector<2x24xf32>
    %1668 = arith.addf %1667, %1666 : vector<2x24xf32>
    %1669 = arith.divf %1667, %1668 : vector<2x24xf32>
    %1670 = vector.extract_strided_slice %1650 {offsets = [0, 48], sizes = [2, 24], strides = [1, 1]} : vector<2x72xf32> to vector<2x24xf32>
    %1671 = vector.extract_strided_slice %1653 {offsets = [0, 48], sizes = [2, 24], strides = [1, 1]} : vector<2x72xf32> to vector<2x24xf32>
    %1672 = arith.mulf %1661, %1671 : vector<2x24xf32>
    %1673 = arith.addf %1670, %1672 : vector<2x24xf32>
    %1674 = math.tanh %1673 : vector<2x24xf32>
    %cst_416 = arith.constant 1.000000e+00 : f32
    %1675 = vector.broadcast %cst_416 : f32 to vector<2x24xf32>
    %1676 = arith.subf %1675, %1669 : vector<2x24xf32>
    %1677 = arith.mulf %1676, %1674 : vector<2x24xf32>
    %1678 = arith.mulf %1669, %1613 : vector<2x24xf32>
    %1679 = arith.addf %1677, %1678 : vector<2x24xf32>
    %1680 = vector.shape_cast %1648 : vector<2x24xf32> to vector<2x1x24xf32>
    %c0_417 = arith.constant 0 : index
    %c7_418 = arith.constant 7 : index
    %c0_419 = arith.constant 0 : index
    %1681 = vector.load %arg39[%c0_417, %c7_418, %c0_419] : memref<2x8x24xf32, #tpu.memory_space<vmem>>, vector<2x1x24xf32>
    tpu.vector_store %arg39[%c0_417, %c7_418, %c0_419], %1680 {strides = array<i32>} : memref<2x8x24xf32, #tpu.memory_space<vmem>>, vector<2x1x24xf32>,
    %1682 = vector.shape_cast %1679 : vector<2x24xf32> to vector<2x1x24xf32>
    %c0_420 = arith.constant 0 : index
    %c0_421 = arith.constant 0 : index
    %c0_422 = arith.constant 0 : index
    %1683 = vector.load %arg40[%c0_420, %c0_421, %c0_422] : memref<2x8x24xf32, #tpu.memory_space<vmem>>, vector<2x1x24xf32>
    tpu.vector_store %arg40[%c0_420, %c0_421, %c0_422], %1682 {strides = array<i32>} : memref<2x8x24xf32, #tpu.memory_space<vmem>>, vector<2x1x24xf32>,
    %c0_423 = arith.constant 0 : index
    %c0_424 = arith.constant 0 : index
    %c0_425 = arith.constant 0 : index
    %1684 = vector.load %arg39[%c0_423, %c0_424, %c0_425] : memref<2x8x24xf32, #tpu.memory_space<vmem>>, vector<2x8x24xf32>
    %1685 = vector.shape_cast %1684 : vector<2x8x24xf32> to vector<16x24xf32>
    %c0_426 = arith.constant 0 : index
    %c0_427 = arith.constant 0 : index
    %c0_428 = arith.constant 0 : index
    %1686 = vector.load %arg40[%c0_426, %c0_427, %c0_428] : memref<2x8x24xf32, #tpu.memory_space<vmem>>, vector<2x8x24xf32>
    %1687 = vector.shape_cast %1686 : vector<2x8x24xf32> to vector<16x24xf32>
    %c0_429 = arith.constant 0 : index
    %c0_430 = arith.constant 0 : index
    %1688 = vector.load %arg9[%c0_429, %c0_430] : memref<48x3xf32, #tpu.memory_space<vmem>>, vector<48x3xf32>
    %1689 = vector.extract_strided_slice %1688 {offsets = [0, 0], sizes = [24, 3], strides = [1, 1]} : vector<48x3xf32> to vector<24x3xf32>
    %cst_431 = arith.constant dense<0.000000e+00> : vector<16x3xf32>
    %1690 = tpu.matmul %1685, %1689, %cst_431 {dimension_numbers = #tpu.dot_dimension_numbers<[1], [0], [0], [1], [0, 0, 1, 1], [], []>} : vector<16x24xf32>, vector<24x3xf32>, vector<16x3xf32> -> vector<16x3xf32>
    %1691 = vector.extract_strided_slice %1688 {offsets = [24, 0], sizes = [24, 3], strides = [1, 1]} : vector<48x3xf32> to vector<24x3xf32>
    %cst_432 = arith.constant dense<0.000000e+00> : vector<16x3xf32>
    %1692 = tpu.matmul %1687, %1691, %cst_432 {dimension_numbers = #tpu.dot_dimension_numbers<[1], [0], [0], [1], [0, 0, 1, 1], [], []>} : vector<16x24xf32>, vector<24x3xf32>, vector<16x3xf32> -> vector<16x3xf32>
    %1693 = arith.addf %1690, %1692 : vector<16x3xf32>
    %c0_433 = arith.constant 0 : index
    %c0_434 = arith.constant 0 : index
    %1694 = vector.load %arg10[%c0_433, %c0_434] : memref<1x3xf32, #tpu.memory_space<vmem>>, vector<1x3xf32>
    %1695 = vector.broadcast %1694 : vector<1x3xf32> to vector<16x3xf32>
    %1696 = arith.addf %1693, %1695 : vector<16x3xf32>
    %cst_435 = arith.constant 9.99999974E-6 : f32
    %1697 = vector.broadcast %cst_435 : f32 to vector<16x3xf32>
    %1698 = arith.addf %1696, %1697 : vector<16x3xf32>
    %c0_436 = arith.constant 0 : index
    %c0_437 = arith.constant 0 : index
    %1699 = vector.load %arg35[%c0_436, %c0_437] : memref<16x3xf32, #tpu.memory_space<vmem>>, vector<16x3xf32>
    tpu.vector_store %arg35[%c0_436, %c0_437], %1698 {strides = array<i32>} : memref<16x3xf32, #tpu.memory_space<vmem>>, vector<16x3xf32>,
    %c0_438 = arith.constant 0 : index
    %c0_439 = arith.constant 0 : index
    %1700 = vector.load %arg1[%c0_438, %c0_439] : memref<16x1xi32, #tpu.memory_space<vmem>>, vector<16x1xi32>
    %1701 = tpu.iota {dimensions = array<i32: 1>} : vector<16x3xi32>
    %c-1_i32 = arith.constant -1 : i32
    %1702 = vector.broadcast %c-1_i32 : i32 to vector<16x1xi32>
    %1703 = arith.cmpi ne, %1700, %1702 : vector<16x1xi32>
    %1704 = arith.extui %1703 : vector<16x1xi1> to vector<16x1xi32>
    %1705 = arith.sitofp %1704 : vector<16x1xi32> to vector<16x1xf32>
    %1706 = vector.broadcast %1700 : vector<16x1xi32> to vector<16x3xi32>
    %1707 = arith.cmpi eq, %1706, %1701 : vector<16x3xi32>
    %1708 = arith.extui %1707 : vector<16x3xi1> to vector<16x3xi32>
    %1709 = arith.sitofp %1708 : vector<16x3xi32> to vector<16x3xf32>
    %1710 = vector.broadcast %1705 : vector<16x1xf32> to vector<16x3xf32>
    %1711 = arith.mulf %1709, %1710 : vector<16x3xf32>
    %cst_440 = arith.constant dense<0xFF800000> : vector<16xf32>
    %1712 = vector.multi_reduction <maximumf>, %1698, %cst_440 [1] : vector<16x3xf32> to vector<16xf32>
    %1713 = vector.shape_cast %1712 : vector<16xf32> to vector<16x1xf32>
    %1714 = vector.broadcast %1713 : vector<16x1xf32> to vector<16x3xf32>
    %1715 = arith.subf %1698, %1714 : vector<16x3xf32>
    %1716 = math.exp %1715 : vector<16x3xf32>
    %cst_441 = arith.constant dense<0.000000e+00> : vector<16xf32>
    %1717 = vector.multi_reduction <add>, %1716, %cst_441 [1] : vector<16x3xf32> to vector<16xf32>
    %1718 = vector.shape_cast %1717 : vector<16xf32> to vector<16x1xf32>
    %1719 = vector.broadcast %1713 : vector<16x1xf32> to vector<16x3xf32>
    %1720 = arith.subf %1698, %1719 : vector<16x3xf32>
    %1721 = math.log %1718 : vector<16x1xf32>
    %1722 = vector.broadcast %1721 : vector<16x1xf32> to vector<16x3xf32>
    %1723 = arith.subf %1720, %1722 : vector<16x3xf32>
    %1724 = vector.broadcast %1718 : vector<16x1xf32> to vector<16x3xf32>
    %1725 = arith.divf %1716, %1724 : vector<16x3xf32>
    %c0_442 = arith.constant 0 : index
    %c0_443 = arith.constant 0 : index
    %1726 = vector.load %arg2[%c0_442, %c0_443] : memref<1x3xf32, #tpu.memory_space<vmem>>, vector<1x3xf32>
    %1727 = arith.mulf %1723, %1711 : vector<16x3xf32>
    %cst_444 = arith.constant dense<0.000000e+00> : vector<16xf32>
    %1728 = vector.multi_reduction <add>, %1727, %cst_444 [1] : vector<16x3xf32> to vector<16xf32>
    %1729 = vector.shape_cast %1728 : vector<16xf32> to vector<16x1xf32>
    %cst_445 = arith.constant 0.000000e+00 : f32
    %1730 = vector.broadcast %cst_445 : f32 to vector<16x1xf32>
    %1731 = arith.subf %1730, %1729 : vector<16x1xf32>
    %1732 = vector.broadcast %1726 : vector<1x3xf32> to vector<16x3xf32>
    %1733 = arith.mulf %1711, %1732 : vector<16x3xf32>
    %cst_446 = arith.constant dense<0.000000e+00> : vector<16xf32>
    %1734 = vector.multi_reduction <add>, %1733, %cst_446 [1] : vector<16x3xf32> to vector<16xf32>
    %1735 = vector.shape_cast %1734 : vector<16xf32> to vector<16x1xf32>
    %1736 = arith.mulf %1735, %1731 : vector<16x1xf32>
    %cst_447 = arith.constant dense<0.000000e+00> : vector<1xf32>
    %1737 = vector.multi_reduction <add>, %1736, %cst_447 [0] : vector<16x1xf32> to vector<1xf32>
    %1738 = vector.shape_cast %1737 : vector<1xf32> to vector<1x1xf32>
    %cst_448 = arith.constant dense<0.000000e+00> : vector<1xf32>
    %1739 = vector.multi_reduction <add>, %1735, %cst_448 [0] : vector<16x1xf32> to vector<1xf32>
    %1740 = vector.shape_cast %1739 : vector<1xf32> to vector<1x1xf32>
    %cst_449 = arith.constant 9.99999996E-13 : f32
    %1741 = vector.broadcast %cst_449 : f32 to vector<1x1xf32>
    %1742 = arith.maximumf %1740, %1741 : vector<1x1xf32>
    %1743 = arith.divf %1738, %1742 : vector<1x1xf32>
    %1744 = vector.broadcast %1705 : vector<16x1xf32> to vector<16x3xf32>
    %1745 = arith.mulf %1725, %1744 : vector<16x3xf32>
    %1746 = arith.mulf %1745, %1711 : vector<16x3xf32>
    %cst_450 = arith.constant dense<0.000000e+00> : vector<3xf32>
    %1747 = vector.multi_reduction <add>, %1746, %cst_450 [0] : vector<16x3xf32> to vector<3xf32>
    %1748 = vector.shape_cast %1747 : vector<3xf32> to vector<1x3xf32>
    %cst_451 = arith.constant dense<0.000000e+00> : vector<3xf32>
    %1749 = vector.multi_reduction <add>, %1745, %cst_451 [0] : vector<16x3xf32> to vector<3xf32>
    %1750 = vector.shape_cast %1749 : vector<3xf32> to vector<1x3xf32>
    %cst_452 = arith.constant dense<0.000000e+00> : vector<3xf32>
    %1751 = vector.multi_reduction <add>, %1711, %cst_452 [0] : vector<16x3xf32> to vector<3xf32>
    %1752 = vector.shape_cast %1751 : vector<3xf32> to vector<1x3xf32>
    %1753 = arith.addf %1750, %1752 : vector<1x3xf32>
    %cst_453 = arith.constant 2.000000e+00 : f32
    %1754 = vector.broadcast %cst_453 : f32 to vector<1x3xf32>
    %1755 = arith.mulf %1754, %1748 : vector<1x3xf32>
    %cst_454 = arith.constant 9.99999997E-7 : f32
    %1756 = vector.broadcast %cst_454 : f32 to vector<1x3xf32>
    %1757 = arith.addf %1755, %1756 : vector<1x3xf32>
    %cst_455 = arith.constant 9.99999997E-7 : f32
    %1758 = vector.broadcast %cst_455 : f32 to vector<1x3xf32>
    %1759 = arith.addf %1753, %1758 : vector<1x3xf32>
    %1760 = arith.divf %1757, %1759 : vector<1x3xf32>
    %cst_456 = arith.constant dense<0.000000e+00> : vector<1xf32>
    %1761 = vector.multi_reduction <add>, %1760, %cst_456 [1] : vector<1x3xf32> to vector<1xf32>
    %1762 = vector.shape_cast %1761 : vector<1xf32> to vector<1x1xf32>
    %cst_457 = arith.constant 3.000000e+00 : f32
    %1763 = vector.broadcast %cst_457 : f32 to vector<1x1xf32>
    %1764 = arith.divf %1762, %1763 : vector<1x1xf32>
    %cst_458 = arith.constant 1.000000e+00 : f32
    %1765 = vector.broadcast %cst_458 : f32 to vector<1x1xf32>
    %1766 = arith.subf %1765, %1764 : vector<1x1xf32>
    %1767 = arith.addf %1743, %1766 : vector<1x1xf32>
    %c0_459 = arith.constant 0 : index
    %c0_460 = arith.constant 0 : index
    %1768 = vector.load %arg36[%c0_459, %c0_460] : memref<1x1xf32, #tpu.memory_space<vmem>>, vector<1x1xf32>
    tpu.vector_store %arg36[%c0_459, %c0_460], %1767 {strides = array<i32>} : memref<1x1xf32, #tpu.memory_space<vmem>>, vector<1x1xf32>,
    %c0_461 = arith.constant 0 : index
    %c0_462 = arith.constant 0 : index
    %1769 = vector.load %arg37[%c0_461, %c0_462] : memref<1x1xf32, #tpu.memory_space<vmem>>, vector<1x1xf32>
    tpu.vector_store %arg37[%c0_461, %c0_462], %1743 {strides = array<i32>} : memref<1x1xf32, #tpu.memory_space<vmem>>, vector<1x1xf32>,
    %c0_463 = arith.constant 0 : index
    %c0_464 = arith.constant 0 : index
    %1770 = vector.load %arg38[%c0_463, %c0_464] : memref<1x1xf32, #tpu.memory_space<vmem>>, vector<1x1xf32>
    tpu.vector_store %arg38[%c0_463, %c0_464], %1766 {strides = array<i32>} : memref<1x1xf32, #tpu.memory_space<vmem>>, vector<1x1xf32>,
    return
  }
}

</mosaic_0001>

<llo_original>
// kernel: model_8_forward.1
$region0: #{model_8_forward.1}
  #allocation0 [shape = 'u32[]', space=smem, size = 0x4, offset = 0x4, fixed_abs, tag = 'smem constant byte address 0x4 - core index']
  #allocation1 [shape = 'u32[72,128]{1,0:T(1,128)}', space=vmem, size = 0x9000, scoped, tag = 'internal scratch']
  #allocation2 [shape = 'f32[2,8,24]{2,1,0:T(8,128)}', space=vmem, size = 0x2000, scoped, tag = 'scratch operand']
  #allocation3 [shape = 'f32[2,8,24]{2,1,0:T(8,128)}', space=vmem, size = 0x2000, scoped, tag = 'scratch operand']
  #allocation4 [shape = 'f32[2,8,24]{2,1,0:T(8,128)}', space=vmem, size = 0x2000, scoped, tag = 'scratch operand']
  #allocation5 [shape = 'f32[2,8,24]{2,1,0:T(8,128)}', space=vmem, size = 0x2000, scoped, tag = 'scratch operand']
  %s0 = inlined_call_operand.smem [shape: u32[39], index: -1, kind: input, shape index: {}]
  %s1 = sld [smem:[%s0]]
  %s2 = scalar_lea.smem %s0, 1
  %s3 = sld [smem:[%s2]]
  %s4 = scalar_lea.smem %s0, 2
  %s5 = sld [smem:[%s4]]
  %s6 = scalar_lea.smem %s0, 3
  %s7 = sld [smem:[%s6]]
  %s8 = scalar_lea.smem %s0, 4
  %s9 = sld [smem:[%s8]]
  %s10 = scalar_lea.smem %s0, 5
  %s11 = sld [smem:[%s10]]
  %s12 = scalar_lea.smem %s0, 6
  %s13 = sld [smem:[%s12]]
  %s14 = scalar_lea.smem %s0, 7
  %s15 = sld [smem:[%s14]]
  %s16 = scalar_lea.smem %s0, 8
  %s17 = sld [smem:[%s16]]
  %s18 = scalar_lea.smem %s0, 9
  %s19 = sld [smem:[%s18]]
  %s20 = scalar_lea.smem %s0, 10
  %s21 = sld [smem:[%s20]]
  %s22 = scalar_lea.smem %s0, 11
  %s23 = sld [smem:[%s22]]
  %s24 = scalar_lea.smem %s0, 12
  %s25 = sld [smem:[%s24]]
  %s26 = scalar_lea.smem %s0, 13
  %s27 = sld [smem:[%s26]]
  %s28 = scalar_lea.smem %s0, 14
  %s29 = sld [smem:[%s28]]
  %s30 = scalar_lea.smem %s0, 15
  %s31 = sld [smem:[%s30]]
  %s32 = scalar_lea.smem %s0, 16
  %s33 = sld [smem:[%s32]]
  %s34 = scalar_lea.smem %s0, 17
  %s35 = sld [smem:[%s34]]
  %s36 = scalar_lea.smem %s0, 18
  %s37 = sld [smem:[%s36]]
  %s38 = scalar_lea.smem %s0, 19
  %s39 = sld [smem:[%s38]]
  %s40 = scalar_lea.smem %s0, 20
  %s41 = sld [smem:[%s40]]
  %s42 = scalar_lea.smem %s0, 21
  %s43 = sld [smem:[%s42]]
  %s44 = scalar_lea.smem %s0, 22
  %s45 = sld [smem:[%s44]]
  %s46 = scalar_lea.smem %s0, 23
  %s47 = sld [smem:[%s46]]
  %s48 = scalar_lea.smem %s0, 24
  %s49 = sld [smem:[%s48]]
  %s50 = scalar_lea.smem %s0, 25
  %s51 = sld [smem:[%s50]]
  %s52 = scalar_lea.smem %s0, 26
  %s53 = sld [smem:[%s52]]
  %s54 = scalar_lea.smem %s0, 27
  %s55 = sld [smem:[%s54]]
  %s56 = scalar_lea.smem %s0, 28
  %s57 = sld [smem:[%s56]]
  %s58 = scalar_lea.smem %s0, 29
  %s59 = sld [smem:[%s58]]
  %s60 = scalar_lea.smem %s0, 30
  %s61 = sld [smem:[%s60]]
  %s62 = scalar_lea.smem %s0, 31
  %s63 = sld [smem:[%s62]]
  %s64 = scalar_lea.smem %s0, 32
  %s65 = sld [smem:[%s64]]
  %s66 = scalar_lea.smem %s0, 33
  %s67 = sld [smem:[%s66]]
  %s68 = scalar_lea.smem %s0, 34
  %s69 = sld [smem:[%s68]]
  %s70 = scalar_lea.smem %s0, 35
  %s71 = sld [smem:[%s70]]
  %s72 = scalar_lea.smem %s0, 36
  %s73 = sld [smem:[%s72]]
  %s74 = scalar_lea.smem %s0, 37
  %s75 = sld [smem:[%s74]]
  %s76 = scalar_lea.smem %s0, 38
  %s77 = sld [smem:[%s76]]
  %78 = xla_tuple %s71, %s73, %s75, %s77
  %s79 = sld [smem:[#allocation0]]
  $region258: #{model_8_forward.1} parent=0
    _
  %s81 = ssub.s32 1, %s79
  %s82 = scalar_select 0, %s81, %s79
  $region1: #{model_8_forward.1} parent=0
    #allocation6 [shape = 'u8[4096]{0}', space=vmem, size = 0x1000, scoped, tag = 'input window, operand 11, single buffered']
    #allocation7 [shape = 's32[1]{0}', space=sflag, size = 0x4, scoped, tag = 'scoped memory for model_8_forward.1']
    #allocation8 [shape = 's32[1]{0}', space=sflag, size = 0x4, scoped, tag = 'scoped memory for model_8_forward.1']
    #allocation9 [shape = 'u8[512]{0}', space=vmem, size = 0x400, scoped, tag = 'input window, operand 13, single buffered']
    #allocation10 [shape = 's32[1]{0}', space=sflag, size = 0x4, scoped, tag = 'scoped memory for model_8_forward.1']
    #allocation11 [shape = 'u8[512]{0}', space=vmem, size = 0x400, scoped, tag = 'input window, operand 14, single buffered']
    #allocation12 [shape = 'u8[4096]{0}', space=vmem, size = 0x1000, scoped, tag = 'input window, operand 15, single buffered']
    #allocation13 [shape = 's32[1]{0}', space=sflag, size = 0x4, scoped, tag = 'scoped memory for model_8_forward.1']
    #allocation14 [shape = 'u8[12288]{0}', space=vmem, size = 0x3000, scoped, tag = 'input window, operand 16, single buffered']
    #allocation15 [shape = 'u8[512]{0}', space=vmem, size = 0x400, scoped, tag = 'input window, operand 17, single buffered']
    #allocation16 [shape = 's32[1]{0}', space=sflag, size = 0x4, scoped, tag = 'scoped memory for model_8_forward.1']
    #allocation17 [shape = 'u8[512]{0}', space=vmem, size = 0x400, scoped, tag = 'input window, operand 18, single buffered']
    #allocation18 [shape = 'u8[12288]{0}', space=vmem, size = 0x3000, scoped, tag = 'input window, operand 20, single buffered']
    #allocation19 [shape = 's32[1]{0}', space=sflag, size = 0x4, scoped, tag = 'scoped memory for model_8_forward.1']
    #allocation20 [shape = 'u8[512]{0}', space=vmem, size = 0x400, scoped, tag = 'input window, operand 21, single buffered']
    #allocation21 [shape = 'u8[512]{0}', space=vmem, size = 0x400, scoped, tag = 'input window, operand 22, single buffered']
    #allocation22 [shape = 's32[1]{0}', space=sflag, size = 0x4, scoped, tag = 'scoped memory for model_8_forward.1']
    #allocation23 [shape = 'u8[12288]{0}', space=vmem, size = 0x3000, scoped, tag = 'input window, operand 24, single buffered']
    #allocation24 [shape = 'u8[512]{0}', space=vmem, size = 0x400, scoped, tag = 'input window, operand 25, single buffered']
    #allocation25 [shape = 's32[1]{0}', space=sflag, size = 0x4, scoped, tag = 'scoped memory for model_8_forward.1']
    #allocation26 [shape = 'u8[512]{0}', space=vmem, size = 0x400, scoped, tag = 'input window, operand 26, single buffered']
    #allocation27 [shape = 'u8[24576]{0}', space=vmem, size = 0x6000, scoped, tag = 'input window, operand 27, single buffered']
    #allocation28 [shape = 's32[1]{0}', space=sflag, size = 0x4, scoped, tag = 'scoped memory for model_8_forward.1']
    #allocation29 [shape = 'u8[12288]{0}', space=vmem, size = 0x3000, scoped, tag = 'input window, operand 28, single buffered']
    #allocation30 [shape = 'u8[512]{0}', space=vmem, size = 0x400, scoped, tag = 'input window, operand 29, single buffered']
    #allocation31 [shape = 's32[1]{0}', space=sflag, size = 0x4, scoped, tag = 'scoped memory for model_8_forward.1']
    #allocation32 [shape = 'u8[512]{0}', space=vmem, size = 0x400, scoped, tag = 'input window, operand 30, single buffered']
    #allocation33 [shape = 'u8[24576]{0}', space=vmem, size = 0x6000, scoped, tag = 'input window, operand 31, single buffered']
    #allocation34 [shape = 's32[1]{0}', space=sflag, size = 0x4, scoped, tag = 'scoped memory for model_8_forward.1']
    #allocation35 [shape = 'u8[12288]{0}', space=vmem, size = 0x3000, scoped, tag = 'input window, operand 32, single buffered']
    #allocation36 [shape = 'u8[512]{0}', space=vmem, size = 0x400, scoped, tag = 'input window, operand 33, single buffered']
    #allocation37 [shape = 's32[1]{0}', space=sflag, size = 0x4, scoped, tag = 'scoped memory for model_8_forward.1']
    #allocation38 [shape = 'u8[512]{0}', space=vmem, size = 0x400, scoped, tag = 'input window, operand 34, single buffered']
    #allocation39 [shape = 'u8[512]{0}', space=vmem, size = 0x400, scoped, tag = 'output window, operand 1, single buffered']
    #allocation40 [shape = 'u8[512]{0}', space=vmem, size = 0x400, scoped, tag = 'output window, operand 2, single buffered']
    #allocation41 [shape = 's32[1]{0}', space=sflag, size = 0x4, scoped, tag = 'scoped memory for model_8_forward.1']
    #allocation42 [shape = 'u8[512]{0}', space=vmem, size = 0x400, scoped, tag = 'output window, operand 3, single buffered']
    %83 = vsyncpa [#allocation7], 0
    %84 = vsyncpa [#allocation10], 0
    %85 = vsyncpa [#allocation13], 0
    %86 = vsyncpa [#allocation16], 0
    %87 = vsyncpa [#allocation19], 0
    %88 = vsyncpa [#allocation22], 0
    %89 = vsyncpa [#allocation25], 0
    %90 = vsyncpa [#allocation28], 0
    %91 = vsyncpa [#allocation31], 0
    %92 = vsyncpa [#allocation34], 0
    %93 = vsyncpa [#allocation37], 0
    %94 = vsyncpa [#allocation8], 0
    %95 = vsyncpa [#allocation41], 0
    // Predicated region
    $region2: #{model_8_forward.1} parent=1 // pred_check
      _
    $region3: #{model_8_forward.1} parent=1 // pred_check_branch
      %97 = sbr.rel (0) target = $region5
    $region4: #{model_8_forward.1} parent=1 // pred_region
      _
    $region5: #{model_8_forward.1} parent=1 // pred_fallthru
      _
    // Predicated region
    $region6: #{model_8_forward.1} parent=1 // pred_check
      _
    $region7: #{model_8_forward.1} parent=1 // pred_check_branch
      %99 = sbr.rel (0) target = $region9
    $region8: #{model_8_forward.1} parent=1 // pred_region
      _
    $region9: #{model_8_forward.1} parent=1 // pred_fallthru
      _
    // Predicated region
    $region10: #{model_8_forward.1} parent=1 // pred_check
      _
    $region11: #{model_8_forward.1} parent=1 // pred_check_branch
      %101 = sbr.rel (0) target = $region13
    $region12: #{model_8_forward.1} parent=1 // pred_region
      _
    $region13: #{model_8_forward.1} parent=1 // pred_fallthru
      _
    // Predicated region
    $region14: #{model_8_forward.1} parent=1 // pred_check
      _
    $region15: #{model_8_forward.1} parent=1 // pred_check_branch
      %103 = sbr.rel (0) target = $region17
    $region16: #{model_8_forward.1} parent=1 // pred_region
      _
    $region17: #{model_8_forward.1} parent=1 // pred_fallthru
      _
    // Predicated region
    $region18: #{model_8_forward.1} parent=1 // pred_check
      _
    $region19: #{model_8_forward.1} parent=1 // pred_check_branch
      %105 = sbr.rel (0) target = $region21
    $region20: #{model_8_forward.1} parent=1 // pred_region
      _
    $region21: #{model_8_forward.1} parent=1 // pred_fallthru
      _
    // Predicated region
    $region22: #{model_8_forward.1} parent=1 // pred_check
      _
    $region23: #{model_8_forward.1} parent=1 // pred_check_branch
      %107 = sbr.rel (0) target = $region25
    $region24: #{model_8_forward.1} parent=1 // pred_region
      _
    $region25: #{model_8_forward.1} parent=1 // pred_fallthru
      _
    // Predicated region
    $region26: #{model_8_forward.1} parent=1 // pred_check
      _
    $region27: #{model_8_forward.1} parent=1 // pred_check_branch
      %109 = sbr.rel (0) target = $region29
    $region28: #{model_8_forward.1} parent=1 // pred_region
      _
    $region29: #{model_8_forward.1} parent=1 // pred_fallthru
      _
    // Predicated region
    $region30: #{model_8_forward.1} parent=1 // pred_check
      _
    $region31: #{model_8_forward.1} parent=1 // pred_check_branch
      %111 = sbr.rel (0) target = $region33
    $region32: #{model_8_forward.1} parent=1 // pred_region
      _
    $region33: #{model_8_forward.1} parent=1 // pred_fallthru
      _
    // Predicated region
    $region34: #{model_8_forward.1} parent=1 // pred_check
      _
    $region35: #{model_8_forward.1} parent=1 // pred_check_branch
      %113 = sbr.rel (0) target = $region37
    $region36: #{model_8_forward.1} parent=1 // pred_region
      _
    $region37: #{model_8_forward.1} parent=1 // pred_fallthru
      _
    // Predicated region
    $region38: #{model_8_forward.1} parent=1 // pred_check
      _
    $region39: #{model_8_forward.1} parent=1 // pred_check_branch
      %115 = sbr.rel (0) target = $region41
    $region40: #{model_8_forward.1} parent=1 // pred_region
      _
    $region41: #{model_8_forward.1} parent=1 // pred_fallthru
      _
    // Predicated region
    $region42: #{model_8_forward.1} parent=1 // pred_check
      _
    $region43: #{model_8_forward.1} parent=1 // pred_check_branch
      %117 = sbr.rel (0) target = $region45
    $region44: #{model_8_forward.1} parent=1 // pred_region
      _
    $region45: #{model_8_forward.1} parent=1 // pred_fallthru
      _
    // Predicated region
    $region46: #{model_8_forward.1} parent=1 // pred_check
      _
    $region47: #{model_8_forward.1} parent=1 // pred_check_branch
      %119 = sbr.rel (0) target = $region49
    $region48: #{model_8_forward.1} parent=1 // pred_region
      %121 = vsyncadd [#allocation7], 0
      %s123 = sshll.u32 %s23, 4
      %s124 = int_to_ptr.hbm [resolvable:$true] %s123
      %s125 = sshll.u32 [#allocation6], 4
      %s126 = int_to_ptr.vmem [resolvable:$true] %s125
      %128 = dma.hbm_to_vmem [thread:$0]  %s124, 128, %s126, [#allocation7]
    $region49: #{model_8_forward.1} parent=1 // pred_fallthru
      _
    // Predicated region
    $region50: #{model_8_forward.1} parent=1 // pred_check
      _
    $region51: #{model_8_forward.1} parent=1 // pred_check_branch
      %130 = sbr.rel (0) target = $region53
    $region52: #{model_8_forward.1} parent=1 // pred_region
      _
    $region53: #{model_8_forward.1} parent=1 // pred_fallthru
      _
    // Predicated region
    $region54: #{model_8_forward.1} parent=1 // pred_check
      _
    $region55: #{model_8_forward.1} parent=1 // pred_check_branch
      %132 = sbr.rel (0) target = $region57
    $region56: #{model_8_forward.1} parent=1 // pred_region
      %134 = vsyncadd [#allocation10], 0
      %s136 = sshll.u32 %s27, 4
      %s137 = int_to_ptr.hbm [resolvable:$true] %s136
      %s138 = sshll.u32 [#allocation9], 4
      %s139 = int_to_ptr.vmem [resolvable:$true] %s138
      %141 = dma.hbm_to_vmem [thread:$0]  %s137, 16, %s139, [#allocation10]
    $region57: #{model_8_forward.1} parent=1 // pred_fallthru
      _
    // Predicated region
    $region58: #{model_8_forward.1} parent=1 // pred_check
      _
    $region59: #{model_8_forward.1} parent=1 // pred_check_branch
      %143 = sbr.rel (0) target = $region61
    $region60: #{model_8_forward.1} parent=1 // pred_region
      %145 = vsyncadd [#allocation10], 0
      %s147 = sshll.u32 %s29, 4
      %s148 = int_to_ptr.hbm [resolvable:$true] %s147
      %s149 = sshll.u32 [#allocation11], 4
      %s150 = int_to_ptr.vmem [resolvable:$true] %s149
      %152 = dma.hbm_to_vmem [thread:$0]  %s148, 16, %s150, [#allocation10]
    $region61: #{model_8_forward.1} parent=1 // pred_fallthru
      _
    // Predicated region
    $region62: #{model_8_forward.1} parent=1 // pred_check
      _
    $region63: #{model_8_forward.1} parent=1 // pred_check_branch
      %154 = sbr.rel (0) target = $region65
    $region64: #{model_8_forward.1} parent=1 // pred_region
      %156 = vsyncadd [#allocation13], 0
      %s158 = sshll.u32 %s31, 4
      %s159 = int_to_ptr.hbm [resolvable:$true] %s158
      %s160 = sshll.u32 [#allocation12], 4
      %s161 = int_to_ptr.vmem [resolvable:$true] %s160
      %163 = dma.hbm_to_vmem [thread:$0]  %s159, 128, %s161, [#allocation13]
    $region65: #{model_8_forward.1} parent=1 // pred_fallthru
      _
    // Predicated region
    $region66: #{model_8_forward.1} parent=1 // pred_check
      _
    $region67: #{model_8_forward.1} parent=1 // pred_check_branch
      %165 = sbr.rel (0) target = $region69
    $region68: #{model_8_forward.1} parent=1 // pred_region
      %167 = vsyncadd [#allocation13], 0
      %s168 = sshll.u32 %s33, 4
      %s169 = int_to_ptr.hbm [resolvable:$true] %s168
      %s170 = sshll.u32 [#allocation14], 4
      %s171 = int_to_ptr.vmem [resolvable:$true] %s170
      %176 = dma.hbm_to_vmem [thread:$0]  %s169, 384, %s171, [#allocation13], 128, 128, 8
    $region69: #{model_8_forward.1} parent=1 // pred_fallthru
      _
    // Predicated region
    $region70: #{model_8_forward.1} parent=1 // pred_check
      _
    $region71: #{model_8_forward.1} parent=1 // pred_check_branch
      %178 = sbr.rel (0) target = $region73
    $region72: #{model_8_forward.1} parent=1 // pred_region
      %180 = vsyncadd [#allocation16], 0
      %s182 = sshll.u32 %s35, 4
      %s183 = int_to_ptr.hbm [resolvable:$true] %s182
      %s184 = sshll.u32 [#allocation15], 4
      %s185 = int_to_ptr.vmem [resolvable:$true] %s184
      %187 = dma.hbm_to_vmem [thread:$0]  %s183, 16, %s185, [#allocation16]
    $region73: #{model_8_forward.1} parent=1 // pred_fallthru
      _
    // Predicated region
    $region74: #{model_8_forward.1} parent=1 // pred_check
      _
    $region75: #{model_8_forward.1} parent=1 // pred_check_branch
      %189 = sbr.rel (0) target = $region77
    $region76: #{model_8_forward.1} parent=1 // pred_region
      %191 = vsyncadd [#allocation16], 0
      %s193 = sshll.u32 %s37, 4
      %s194 = int_to_ptr.hbm [resolvable:$true] %s193
      %s195 = sshll.u32 [#allocation17], 4
      %s196 = int_to_ptr.vmem [resolvable:$true] %s195
      %198 = dma.hbm_to_vmem [thread:$0]  %s194, 16, %s196, [#allocation16]
    $region77: #{model_8_forward.1} parent=1 // pred_fallthru
      _
    // Predicated region
    $region78: #{model_8_forward.1} parent=1 // pred_check
      _
    $region79: #{model_8_forward.1} parent=1 // pred_check_branch
      %200 = sbr.rel (0) target = $region81
    $region80: #{model_8_forward.1} parent=1 // pred_region
      _
    $region81: #{model_8_forward.1} parent=1 // pred_fallthru
      _
    // Predicated region
    $region82: #{model_8_forward.1} parent=1 // pred_check
      _
    $region83: #{model_8_forward.1} parent=1 // pred_check_branch
      %202 = sbr.rel (0) target = $region85
    $region84: #{model_8_forward.1} parent=1 // pred_region
      %204 = vsyncadd [#allocation19], 0
      %s205 = sshll.u32 %s41, 4
      %s206 = int_to_ptr.hbm [resolvable:$true] %s205
      %s207 = sshll.u32 [#allocation18], 4
      %s208 = int_to_ptr.vmem [resolvable:$true] %s207
      %213 = dma.hbm_to_vmem [thread:$0]  %s206, 384, %s208, [#allocation19], 128, 128, 8
    $region85: #{model_8_forward.1} parent=1 // pred_fallthru
      _
    // Predicated region
    $region86: #{model_8_forward.1} parent=1 // pred_check
      _
    $region87: #{model_8_forward.1} parent=1 // pred_check_branch
      %215 = sbr.rel (0) target = $region89
    $region88: #{model_8_forward.1} parent=1 // pred_region
      %217 = vsyncadd [#allocation19], 0
      %s219 = sshll.u32 %s43, 4
      %s220 = int_to_ptr.hbm [resolvable:$true] %s219
      %s221 = sshll.u32 [#allocation20], 4
      %s222 = int_to_ptr.vmem [resolvable:$true] %s221
      %224 = dma.hbm_to_vmem [thread:$0]  %s220, 16, %s222, [#allocation19]
    $region89: #{model_8_forward.1} parent=1 // pred_fallthru
      _
    // Predicated region
    $region90: #{model_8_forward.1} parent=1 // pred_check
      _
    $region91: #{model_8_forward.1} parent=1 // pred_check_branch
      %226 = sbr.rel (0) target = $region93
    $region92: #{model_8_forward.1} parent=1 // pred_region
      %228 = vsyncadd [#allocation22], 0
      %s230 = sshll.u32 %s45, 4
      %s231 = int_to_ptr.hbm [resolvable:$true] %s230
      %s232 = sshll.u32 [#allocation21], 4
      %s233 = int_to_ptr.vmem [resolvable:$true] %s232
      %235 = dma.hbm_to_vmem [thread:$0]  %s231, 16, %s233, [#allocation22]
    $region93: #{model_8_forward.1} parent=1 // pred_fallthru
      _
    // Predicated region
    $region94: #{model_8_forward.1} parent=1 // pred_check
      _
    $region95: #{model_8_forward.1} parent=1 // pred_check_branch
      %237 = sbr.rel (0) target = $region97
    $region96: #{model_8_forward.1} parent=1 // pred_region
      _
    $region97: #{model_8_forward.1} parent=1 // pred_fallthru
      _
    // Predicated region
    $region98: #{model_8_forward.1} parent=1 // pred_check
      _
    $region99: #{model_8_forward.1} parent=1 // pred_check_branch
      %239 = sbr.rel (0) target = $region101
    $region100: #{model_8_forward.1} parent=1 // pred_region
      %241 = vsyncadd [#allocation22], 0
      %s242 = sshll.u32 %s49, 4
      %s243 = int_to_ptr.hbm [resolvable:$true] %s242
      %s244 = sshll.u32 [#allocation23], 4
      %s245 = int_to_ptr.vmem [resolvable:$true] %s244
      %250 = dma.hbm_to_vmem [thread:$0]  %s243, 384, %s245, [#allocation22], 128, 128, 8
    $region101: #{model_8_forward.1} parent=1 // pred_fallthru
      _
    // Predicated region
    $region102: #{model_8_forward.1} parent=1 // pred_check
      _
    $region103: #{model_8_forward.1} parent=1 // pred_check_branch
      %252 = sbr.rel (0) target = $region105
    $region104: #{model_8_forward.1} parent=1 // pred_region
      %254 = vsyncadd [#allocation25], 0
      %s256 = sshll.u32 %s51, 4
      %s257 = int_to_ptr.hbm [resolvable:$true] %s256
      %s258 = sshll.u32 [#allocation24], 4
      %s259 = int_to_ptr.vmem [resolvable:$true] %s258
      %261 = dma.hbm_to_vmem [thread:$0]  %s257, 16, %s259, [#allocation25]
    $region105: #{model_8_forward.1} parent=1 // pred_fallthru
      _
    // Predicated region
    $region106: #{model_8_forward.1} parent=1 // pred_check
      _
    $region107: #{model_8_forward.1} parent=1 // pred_check_branch
      %263 = sbr.rel (0) target = $region109
    $region108: #{model_8_forward.1} parent=1 // pred_region
      %265 = vsyncadd [#allocation25], 0
      %s267 = sshll.u32 %s53, 4
      %s268 = int_to_ptr.hbm [resolvable:$true] %s267
      %s269 = sshll.u32 [#allocation26], 4
      %s270 = int_to_ptr.vmem [resolvable:$true] %s269
      %272 = dma.hbm_to_vmem [thread:$0]  %s268, 16, %s270, [#allocation25]
    $region109: #{model_8_forward.1} parent=1 // pred_fallthru
      _
    // Predicated region
    $region110: #{model_8_forward.1} parent=1 // pred_check
      _
    $region111: #{model_8_forward.1} parent=1 // pred_check_branch
      %274 = sbr.rel (0) target = $region113
    $region112: #{model_8_forward.1} parent=1 // pred_region
      %276 = vsyncadd [#allocation28], 0
      %s277 = sshll.u32 %s55, 4
      %s278 = int_to_ptr.hbm [resolvable:$true] %s277
      %s279 = sshll.u32 [#allocation27], 4
      %s280 = int_to_ptr.vmem [resolvable:$true] %s279
      %285 = dma.hbm_to_vmem [thread:$0]  %s278, 768, %s280, [#allocation28], 128, 128, 8
    $region113: #{model_8_forward.1} parent=1 // pred_fallthru
      _
    // Predicated region
    $region114: #{model_8_forward.1} parent=1 // pred_check
      _
    $region115: #{model_8_forward.1} parent=1 // pred_check_branch
      %287 = sbr.rel (0) target = $region117
    $region116: #{model_8_forward.1} parent=1 // pred_region
      %289 = vsyncadd [#allocation28], 0
      %s290 = sshll.u32 %s57, 4
      %s291 = int_to_ptr.hbm [resolvable:$true] %s290
      %s292 = sshll.u32 [#allocation29], 4
      %s293 = int_to_ptr.vmem [resolvable:$true] %s292
      %298 = dma.hbm_to_vmem [thread:$0]  %s291, 384, %s293, [#allocation28], 128, 128, 8
    $region117: #{model_8_forward.1} parent=1 // pred_fallthru
      _
    // Predicated region
    $region118: #{model_8_forward.1} parent=1 // pred_check
      _
    $region119: #{model_8_forward.1} parent=1 // pred_check_branch
      %300 = sbr.rel (0) target = $region121
    $region120: #{model_8_forward.1} parent=1 // pred_region
      %302 = vsyncadd [#allocation31], 0
      %s304 = sshll.u32 %s59, 4
      %s305 = int_to_ptr.hbm [resolvable:$true] %s304
      %s306 = sshll.u32 [#allocation30], 4
      %s307 = int_to_ptr.vmem [resolvable:$true] %s306
      %309 = dma.hbm_to_vmem [thread:$0]  %s305, 16, %s307, [#allocation31]
    $region121: #{model_8_forward.1} parent=1 // pred_fallthru
      _
    // Predicated region
    $region122: #{model_8_forward.1} parent=1 // pred_check
      _
    $region123: #{model_8_forward.1} parent=1 // pred_check_branch
      %311 = sbr.rel (0) target = $region125
    $region124: #{model_8_forward.1} parent=1 // pred_region
      %313 = vsyncadd [#allocation31], 0
      %s315 = sshll.u32 %s61, 4
      %s316 = int_to_ptr.hbm [resolvable:$true] %s315
      %s317 = sshll.u32 [#allocation32], 4
      %s318 = int_to_ptr.vmem [resolvable:$true] %s317
      %320 = dma.hbm_to_vmem [thread:$0]  %s316, 16, %s318, [#allocation31]
    $region125: #{model_8_forward.1} parent=1 // pred_fallthru
      _
    // Predicated region
    $region126: #{model_8_forward.1} parent=1 // pred_check
      _
    $region127: #{model_8_forward.1} parent=1 // pred_check_branch
      %322 = sbr.rel (0) target = $region129
    $region128: #{model_8_forward.1} parent=1 // pred_region
      %324 = vsyncadd [#allocation34], 0
      %s325 = sshll.u32 %s63, 4
      %s326 = int_to_ptr.hbm [resolvable:$true] %s325
      %s327 = sshll.u32 [#allocation33], 4
      %s328 = int_to_ptr.vmem [resolvable:$true] %s327
      %333 = dma.hbm_to_vmem [thread:$0]  %s326, 768, %s328, [#allocation34], 128, 128, 8
    $region129: #{model_8_forward.1} parent=1 // pred_fallthru
      _
    // Predicated region
    $region130: #{model_8_forward.1} parent=1 // pred_check
      _
    $region131: #{model_8_forward.1} parent=1 // pred_check_branch
      %335 = sbr.rel (0) target = $region133
    $region132: #{model_8_forward.1} parent=1 // pred_region
      %337 = vsyncadd [#allocation34], 0
      %s338 = sshll.u32 %s65, 4
      %s339 = int_to_ptr.hbm [resolvable:$true] %s338
      %s340 = sshll.u32 [#allocation35], 4
      %s341 = int_to_ptr.vmem [resolvable:$true] %s340
      %346 = dma.hbm_to_vmem [thread:$0]  %s339, 384, %s341, [#allocation34], 128, 128, 8
    $region133: #{model_8_forward.1} parent=1 // pred_fallthru
      _
    // Predicated region
    $region134: #{model_8_forward.1} parent=1 // pred_check
      _
    $region135: #{model_8_forward.1} parent=1 // pred_check_branch
      %348 = sbr.rel (0) target = $region137
    $region136: #{model_8_forward.1} parent=1 // pred_region
      %350 = vsyncadd [#allocation37], 0
      %s352 = sshll.u32 %s67, 4
      %s353 = int_to_ptr.hbm [resolvable:$true] %s352
      %s354 = sshll.u32 [#allocation36], 4
      %s355 = int_to_ptr.vmem [resolvable:$true] %s354
      %357 = dma.hbm_to_vmem [thread:$0]  %s353, 16, %s355, [#allocation37]
    $region137: #{model_8_forward.1} parent=1 // pred_fallthru
      _
    // Predicated region
    $region138: #{model_8_forward.1} parent=1 // pred_check
      _
    $region139: #{model_8_forward.1} parent=1 // pred_check_branch
      %359 = sbr.rel (0) target = $region141
    $region140: #{model_8_forward.1} parent=1 // pred_region
      %361 = vsyncadd [#allocation37], 0
      %s363 = sshll.u32 %s69, 4
      %s364 = int_to_ptr.hbm [resolvable:$true] %s363
      %s365 = sshll.u32 [#allocation38], 4
      %s366 = int_to_ptr.vmem [resolvable:$true] %s365
      %368 = dma.hbm_to_vmem [thread:$0]  %s364, 16, %s366, [#allocation37]
    $region141: #{model_8_forward.1} parent=1 // pred_fallthru
      _
    // Predicated region
    $region142: #{model_8_forward.1} parent=1 // pred_check
      _
    $region143: #{model_8_forward.1} parent=1 // pred_check_branch
      %370 = sbr.rel (0) target = $region145
    $region144: #{model_8_forward.1} parent=1 // pred_region
      %372 = dma.done [#allocation7], 128
    $region145: #{model_8_forward.1} parent=1 // pred_fallthru
      _
    // Predicated region
    $region146: #{model_8_forward.1} parent=1 // pred_check
      _
    $region147: #{model_8_forward.1} parent=1 // pred_check_branch
      %374 = sbr.rel (0) target = $region149
    $region148: #{model_8_forward.1} parent=1 // pred_region
      %376 = dma.done [#allocation10], 16
    $region149: #{model_8_forward.1} parent=1 // pred_fallthru
      _
    // Predicated region
    $region150: #{model_8_forward.1} parent=1 // pred_check
      _
    $region151: #{model_8_forward.1} parent=1 // pred_check_branch
      %378 = sbr.rel (0) target = $region153
    $region152: #{model_8_forward.1} parent=1 // pred_region
      %380 = dma.done [#allocation10], 16
    $region153: #{model_8_forward.1} parent=1 // pred_fallthru
      _
    // Predicated region
    $region154: #{model_8_forward.1} parent=1 // pred_check
      _
    $region155: #{model_8_forward.1} parent=1 // pred_check_branch
      %382 = sbr.rel (0) target = $region157
    $region156: #{model_8_forward.1} parent=1 // pred_region
      %384 = dma.done [#allocation13], 128
    $region157: #{model_8_forward.1} parent=1 // pred_fallthru
      _
    // Predicated region
    $region158: #{model_8_forward.1} parent=1 // pred_check
      _
    $region159: #{model_8_forward.1} parent=1 // pred_check_branch
      %386 = sbr.rel (0) target = $region161
    $region160: #{model_8_forward.1} parent=1 // pred_region
      %388 = dma.done [#allocation13], 384
    $region161: #{model_8_forward.1} parent=1 // pred_fallthru
      _
    // Predicated region
    $region162: #{model_8_forward.1} parent=1 // pred_check
      _
    $region163: #{model_8_forward.1} parent=1 // pred_check_branch
      %390 = sbr.rel (0) target = $region165
    $region164: #{model_8_forward.1} parent=1 // pred_region
      %392 = dma.done [#allocation16], 16
    $region165: #{model_8_forward.1} parent=1 // pred_fallthru
      _
    // Predicated region
    $region166: #{model_8_forward.1} parent=1 // pred_check
      _
    $region167: #{model_8_forward.1} parent=1 // pred_check_branch
      %394 = sbr.rel (0) target = $region169
    $region168: #{model_8_forward.1} parent=1 // pred_region
      %396 = dma.done [#allocation16], 16
    $region169: #{model_8_forward.1} parent=1 // pred_fallthru
      _
    // Predicated region
    $region170: #{model_8_forward.1} parent=1 // pred_check
      _
    $region171: #{model_8_forward.1} parent=1 // pred_check_branch
      %398 = sbr.rel (0) target = $region173
    $region172: #{model_8_forward.1} parent=1 // pred_region
      %400 = dma.done [#allocation19], 384
    $region173: #{model_8_forward.1} parent=1 // pred_fallthru
      _
    // Predicated region
    $region174: #{model_8_forward.1} parent=1 // pred_check
      _
    $region175: #{model_8_forward.1} parent=1 // pred_check_branch
      %402 = sbr.rel (0) target = $region177
    $region176: #{model_8_forward.1} parent=1 // pred_region
      %404 = dma.done [#allocation19], 16
    $region177: #{model_8_forward.1} parent=1 // pred_fallthru
      _
    // Predicated region
    $region178: #{model_8_forward.1} parent=1 // pred_check
      _
    $region179: #{model_8_forward.1} parent=1 // pred_check_branch
      %406 = sbr.rel (0) target = $region181
    $region180: #{model_8_forward.1} parent=1 // pred_region
      %408 = dma.done [#allocation22], 16
    $region181: #{model_8_forward.1} parent=1 // pred_fallthru
      _
    // Predicated region
    $region182: #{model_8_forward.1} parent=1 // pred_check
      _
    $region183: #{model_8_forward.1} parent=1 // pred_check_branch
      %410 = sbr.rel (0) target = $region185
    $region184: #{model_8_forward.1} parent=1 // pred_region
      %412 = dma.done [#allocation22], 384
    $region185: #{model_8_forward.1} parent=1 // pred_fallthru
      _
    // Predicated region
    $region186: #{model_8_forward.1} parent=1 // pred_check
      _
    $region187: #{model_8_forward.1} parent=1 // pred_check_branch
      %414 = sbr.rel (0) target = $region189
    $region188: #{model_8_forward.1} parent=1 // pred_region
      %416 = dma.done [#allocation25], 16
    $region189: #{model_8_forward.1} parent=1 // pred_fallthru
      _
    // Predicated region
    $region190: #{model_8_forward.1} parent=1 // pred_check
      _
    $region191: #{model_8_forward.1} parent=1 // pred_check_branch
      %418 = sbr.rel (0) target = $region193
    $region192: #{model_8_forward.1} parent=1 // pred_region
      %420 = dma.done [#allocation25], 16
    $region193: #{model_8_forward.1} parent=1 // pred_fallthru
      _
    // Predicated region
    $region194: #{model_8_forward.1} parent=1 // pred_check
      _
    $region195: #{model_8_forward.1} parent=1 // pred_check_branch
      %422 = sbr.rel (0) target = $region197
    $region196: #{model_8_forward.1} parent=1 // pred_region
      %424 = dma.done [#allocation28], 768
    $region197: #{model_8_forward.1} parent=1 // pred_fallthru
      _
    // Predicated region
    $region198: #{model_8_forward.1} parent=1 // pred_check
      _
    $region199: #{model_8_forward.1} parent=1 // pred_check_branch
      %426 = sbr.rel (0) target = $region201
    $region200: #{model_8_forward.1} parent=1 // pred_region
      %428 = dma.done [#allocation28], 384
    $region201: #{model_8_forward.1} parent=1 // pred_fallthru
      _
    // Predicated region
    $region202: #{model_8_forward.1} parent=1 // pred_check
      _
    $region203: #{model_8_forward.1} parent=1 // pred_check_branch
      %430 = sbr.rel (0) target = $region205
    $region204: #{model_8_forward.1} parent=1 // pred_region
      %432 = dma.done [#allocation31], 16
    $region205: #{model_8_forward.1} parent=1 // pred_fallthru
      _
    // Predicated region
    $region206: #{model_8_forward.1} parent=1 // pred_check
      _
    $region207: #{model_8_forward.1} parent=1 // pred_check_branch
      %434 = sbr.rel (0) target = $region209
    $region208: #{model_8_forward.1} parent=1 // pred_region
      %436 = dma.done [#allocation31], 16
    $region209: #{model_8_forward.1} parent=1 // pred_fallthru
      _
    // Predicated region
    $region210: #{model_8_forward.1} parent=1 // pred_check
      _
    $region211: #{model_8_forward.1} parent=1 // pred_check_branch
      %438 = sbr.rel (0) target = $region213
    $region212: #{model_8_forward.1} parent=1 // pred_region
      %440 = dma.done [#allocation34], 768
    $region213: #{model_8_forward.1} parent=1 // pred_fallthru
      _
    // Predicated region
    $region214: #{model_8_forward.1} parent=1 // pred_check
      _
    $region215: #{model_8_forward.1} parent=1 // pred_check_branch
      %442 = sbr.rel (0) target = $region217
    $region216: #{model_8_forward.1} parent=1 // pred_region
      %444 = dma.done [#allocation34], 384
    $region217: #{model_8_forward.1} parent=1 // pred_fallthru
      _
    // Predicated region
    $region218: #{model_8_forward.1} parent=1 // pred_check
      _
    $region219: #{model_8_forward.1} parent=1 // pred_check_branch
      %446 = sbr.rel (0) target = $region221
    $region220: #{model_8_forward.1} parent=1 // pred_region
      %448 = dma.done [#allocation37], 16
    $region221: #{model_8_forward.1} parent=1 // pred_fallthru
      _
    // Predicated region
    $region222: #{model_8_forward.1} parent=1 // pred_check
      _
    $region223: #{model_8_forward.1} parent=1 // pred_check_branch
      %450 = sbr.rel (0) target = $region225
    $region224: #{model_8_forward.1} parent=1 // pred_region
      %452 = dma.done [#allocation37], 16
    $region225: #{model_8_forward.1} parent=1 // pred_fallthru
      _
    %v453 = vld [vmem:[%s1] sm:$0xff]
    %v454 = vld [vmem:[%s1 + $0x8] sm:$0xff]
    %v455 = vld [vmem:[%s7] sm:$0x3f]
    %v456 = vld [vmem:[%s9] sm:$0x1]
    %v458 = vperm.slane %v456, 0
    %vm460 = vcmask 48128
    %v462 = vsel %vm460, %v453, 0
    %v465 = vsel %vm460, %v454, 0
    %vm467 = vcmask 1045504
    %v469 = vsel %vm467, %v455, 0
    %471 = vmatpush.msra.mxu0 0.0
    %472 = vmatpush.msra.mxu0 0.0
    %473 = vmatpush.msra.mxu0 0.0
    %474 = vmatpush.msra.mxu0 0.0
    %475 = vmatpush.msra.mxu0 0.0
    %476 = vmatpush.msra.mxu0 0.0
    %477 = vmatpush.msra.mxu0 0.0
    %478 = vmatpush.msra.mxu0 0.0
    %479 = vmatpush.msra.mxu0 0.0
    %480 = vmatpush.msra.mxu0 0.0
    %481 = vmatpush.msra.mxu0 0.0
    %482 = vmatpush.msra.mxu0 0.0
    %483 = vmatpush.msra.mxu0 0.0
    %484 = vmatpush.msra.mxu0 0.0
    %485 = vmatpush.msra.mxu0 0.0
    %486 = vmatpush.msra.mxu0 %v469
    %487 = vmatmul.f32.gmra.mxu0 %v462
    %v488 = vpop.f32.mrf.mxu0
    %v489 = vadd.f32 %v458, %v488
    %490 = vmatmul.f32.gmra.mxu0 %v465
    %v491 = vpop.f32.mrf.mxu0
    %v492 = vadd.f32 %v458, %v491
    %493 = vdwg.mxu0
    %v494 = vmax.f32 %v489, 0.0
    %v495 = vmax.f32 %v492, 0.0
    %v496 = vld [vmem:[%s11] sm:$0xff]
    %v497 = vld [vmem:[%s11 + $0x8] sm:$0xff]
    %v498 = vld [vmem:[%s11 + $0x10] sm:$0xff]
    %v499 = vld [vmem:[%s11 + $0x18] sm:$0xff]
    %v500 = vld [vmem:[%s11 + $0x20] sm:$0xf]
    %v501 = vld [vmem:[%s13] sm:$0x1]
    %v503 = vperm.slane %v501, 0
    %vm505 = vcmask 293888
    %v507 = vsel %vm505, %v494, 0
    %v510 = vsel %vm505, %v495, 0
    %vm512 = vcmask 1043456
    %v514 = vsel %vm512, %v500, 0
    %516 = vmatpush.msra.mxu0 0.0
    %517 = vmatpush.msra.mxu0 0.0
    %518 = vmatpush.msra.mxu0 0.0
    %519 = vmatpush.msra.mxu0 0.0
    %520 = vmatpush.msra.mxu0 0.0
    %521 = vmatpush.msra.mxu0 0.0
    %522 = vmatpush.msra.mxu0 0.0
    %523 = vmatpush.msra.mxu0 0.0
    %524 = vmatpush.msra.mxu0 0.0
    %525 = vmatpush.msra.mxu0 0.0
    %526 = vmatpush.msra.mxu0 0.0
    %527 = vmatpush.msra.mxu0 %v514
    %528 = vmatpush.msra.mxu0 %v499
    %529 = vmatpush.msra.mxu0 %v498
    %530 = vmatpush.msra.mxu0 %v497
    %531 = vmatpush.msra.mxu0 %v496
    %532 = vmatmul.f32.gmra.mxu0 %v507
    %v533 = vpop.f32.mrf.mxu0
    %v534 = vadd.f32 %v503, %v533
    %535 = vmatmul.f32.gmra.mxu0 %v510
    %v536 = vpop.f32.mrf.mxu0
    %v537 = vadd.f32 %v503, %v536
    %538 = vdwg.mxu0
    %v539 = vmax.f32 %v534, 0.0
    %v540 = vmax.f32 %v537, 0.0
    %v541 = vld [vmem:[%s15] sm:$0xff]
    %v542 = vld [vmem:[%s15 + $0x8] sm:$0xff]
    %v543 = vld [vmem:[%s15 + $0x10] sm:$0xff]
    %v544 = vld [vmem:[%s15 + $0x18] sm:$0xff]
    %v545 = vld [vmem:[%s15 + $0x20] sm:$0xf]
    %v546 = vld [vmem:[%s17] sm:$0x1]
    %v548 = vperm.slane %v546, 0
    %v551 = vsel %vm505, %v539, 0
    %v554 = vsel %vm505, %v540, 0
    %v557 = vsel %vm512, %v545, 0
    %559 = vmatpush.msra.mxu0 0.0
    %560 = vmatpush.msra.mxu0 0.0
    %561 = vmatpush.msra.mxu0 0.0
    %562 = vmatpush.msra.mxu0 0.0
    %563 = vmatpush.msra.mxu0 0.0
    %564 = vmatpush.msra.mxu0 0.0
    %565 = vmatpush.msra.mxu0 0.0
    %566 = vmatpush.msra.mxu0 0.0
    %567 = vmatpush.msra.mxu0 0.0
    %568 = vmatpush.msra.mxu0 0.0
    %569 = vmatpush.msra.mxu0 0.0
    %570 = vmatpush.msra.mxu0 %v557
    %571 = vmatpush.msra.mxu0 %v544
    %572 = vmatpush.msra.mxu0 %v543
    %573 = vmatpush.msra.mxu0 %v542
    %574 = vmatpush.msra.mxu0 %v541
    %575 = vmatmul.f32.gmra.mxu0 %v551
    %v576 = vpop.f32.mrf.mxu0
    %v577 = vadd.f32 %v548, %v576
    %578 = vmatmul.f32.gmra.mxu0 %v554
    %v579 = vpop.f32.mrf.mxu0
    %v580 = vadd.f32 %v548, %v579
    %581 = vdwg.mxu0
    %v582 = vmax.f32 %v577, 0.0
    %v583 = vmax.f32 %v580, 0.0
    %v584 = vld [vmem:[#allocation6] sm:$0xff]
    %v585 = vld [vmem:[%s25] sm:$0xff]
    %v586 = vld [vmem:[%s25 + $0x8] sm:$0xff]
    %v587 = vld [vmem:[%s25 + $0x10] sm:$0xff]
    %v588 = vld [vmem:[#allocation9] sm:$0x1]
    %v589 = vld [vmem:[#allocation11] sm:$0x1]
    %v590 = vld [vmem:[#allocation12] sm:$0xff]
    %v591 = vld [vmem:[#allocation14] sm:$0xff]
    %v592 = vld [vmem:[#allocation14 + $0x8] sm:$0xff]
    %v593 = vld [vmem:[#allocation14 + $0x10] sm:$0xff]
    %v594 = vld [vmem:[#allocation15] sm:$0x1]
    %v595 = vld [vmem:[#allocation17] sm:$0x1]
    %v597 = vperm.slane %v588, 0
    %vm599 = vcmask 64512
    %v601 = vsel %vm599, %v582, 0
    %v604 = vsel %vm599, %v583, 0
    %606 = vmatpush.msra.mxu0 0.0
    %607 = vmatpush.msra.mxu0 0.0
    %608 = vmatpush.msra.mxu0 0.0
    %609 = vmatpush.msra.mxu0 0.0
    %610 = vmatpush.msra.mxu0 0.0
    %611 = vmatpush.msra.mxu0 0.0
    %612 = vmatpush.msra.mxu0 0.0
    %613 = vmatpush.msra.mxu0 0.0
    %614 = vmatpush.msra.mxu0 0.0
    %615 = vmatpush.msra.mxu0 0.0
    %616 = vmatpush.msra.mxu0 0.0
    %617 = vmatpush.msra.mxu0 0.0
    %618 = vmatpush.msra.mxu0 0.0
    %619 = vmatpush.msra.mxu0 0.0
    %620 = vmatpush.msra.mxu0 0.0
    %621 = vmatpush.msra.mxu0 %v584
    %622 = vmatmul.f32.gmra.mxu0 %v601
    %v623 = vpop.f32.mrf.mxu0
    %v624 = vadd.f32 %v597, %v623
    %625 = vmatmul.f32.gmra.mxu0 %v604
    %v626 = vpop.f32.mrf.mxu0
    %v627 = vadd.f32 %v597, %v626
    %628 = vdwg.mxu0
    %v630 = vperm.slane %v594, 0
    %632 = vmatpush.msra.mxu0 0.0
    %633 = vmatpush.msra.mxu0 0.0
    %634 = vmatpush.msra.mxu0 0.0
    %635 = vmatpush.msra.mxu0 0.0
    %636 = vmatpush.msra.mxu0 0.0
    %637 = vmatpush.msra.mxu0 0.0
    %638 = vmatpush.msra.mxu0 0.0
    %639 = vmatpush.msra.mxu0 0.0
    %640 = vmatpush.msra.mxu0 0.0
    %641 = vmatpush.msra.mxu0 0.0
    %642 = vmatpush.msra.mxu0 0.0
    %643 = vmatpush.msra.mxu0 0.0
    %644 = vmatpush.msra.mxu0 0.0
    %645 = vmatpush.msra.mxu0 0.0
    %646 = vmatpush.msra.mxu0 0.0
    %647 = vmatpush.msra.mxu0 %v590
    %648 = vmatmul.f32.gmra.mxu0 %v601
    %v649 = vpop.f32.mrf.mxu0
    %v650 = vadd.f32 %v630, %v649
    %651 = vmatmul.f32.gmra.mxu0 %v604
    %v652 = vpop.f32.mrf.mxu0
    %v653 = vadd.f32 %v630, %v652
    %654 = vdwg.mxu0
    %v656 = vperm.slane %v589, 0
    %vm658 = vcmask 195584
    %v660 = vsel %vm658, 0.0, 0
    %662 = vmatpush.msra.mxu0 0.0
    %663 = vmatpush.msra.mxu0 0.0
    %664 = vmatpush.msra.mxu0 0.0
    %665 = vmatpush.msra.mxu0 0.0
    %666 = vmatpush.msra.mxu0 0.0
    %667 = vmatpush.msra.mxu0 0.0
    %668 = vmatpush.msra.mxu0 0.0
    %669 = vmatpush.msra.mxu0 0.0
    %670 = vmatpush.msra.mxu0 0.0
    %671 = vmatpush.msra.mxu0 0.0
    %672 = vmatpush.msra.mxu0 0.0
    %673 = vmatpush.msra.mxu0 0.0
    %674 = vmatpush.msra.mxu0 0.0
    %675 = vmatpush.msra.mxu0 %v587
    %676 = vmatpush.msra.mxu0 %v586
    %677 = vmatpush.msra.mxu0 %v585
    %678 = vmatmul.f32.gmra.mxu0 %v660
    %v679 = vpop.f32.mrf.mxu0
    %v680 = vadd.f32 %v656, %v679
    %681 = vdwg.mxu0
    %v683 = vrot.slane %v680, 1
    %v686 = vadd.f32 %v624, %v680
    %v687 = vadd.f32 %v627, %v683
    %v688 = vxor.u32 %v686, 2147483648
    %v689 = vxor.u32 %v687, 2147483648
    %v690 = vmul.f32 %v688, 1.442695
    %v691 = vpow.pop %v690
    %v692 = vmul.f32 %v689, 1.442695
    %v693 = vpow.pop %v692
    %v694 = vadd.f32 %v691, 1.0
    %v695 = vadd.f32 %v693, 1.0
    %v696 = vrcp.pop %v694
    %v697 = vmul.f32 %v694, %v696
    %v698 = vsub.f32 1.0, %v697
    %v699 = vmul.f32 %v696, %v698
    %v700 = vadd.f32 %v696, %v699
    %vm701 = vweird.f32 %v694
    %vm702 = vweird.f32 %v696
    %vm703 = vmor %vm701, %vm702
    %v704 = vsel %vm703, %v696, %v700
    %v705 = vand.u32 2147483647, %v694
    %vm706 = vcmp.eq.f32.partialorder %v705, 8.507059e+37
    %v707 = vand.u32 %v694, 2147483648
    %v708 = vor.u32 1.1754944e-38, %v707
    %v709 = vsel %vm706, %v708, %v704
    %v710 = vmul.f32 1.0, %v709
    %v711 = vrcp.pop %v695
    %v712 = vmul.f32 %v695, %v711
    %v713 = vsub.f32 1.0, %v712
    %v714 = vmul.f32 %v711, %v713
    %v715 = vadd.f32 %v711, %v714
    %vm716 = vweird.f32 %v695
    %vm717 = vweird.f32 %v711
    %vm718 = vmor %vm716, %vm717
    %v719 = vsel %vm718, %v711, %v715
    %v720 = vand.u32 2147483647, %v695
    %vm721 = vcmp.eq.f32.partialorder %v720, 8.507059e+37
    %v722 = vand.u32 %v695, 2147483648
    %v723 = vor.u32 1.1754944e-38, %v722
    %v724 = vsel %vm721, %v723, %v719
    %v725 = vmul.f32 1.0, %v724
    %726 = vrot.lane.b32.xlu0 %v680, 80
    %v727 = vpop.permute.xlu0 %726
    %728 = vrot.lane.b32.xlu0 %v683, 80
    %v729 = vpop.permute.xlu0 %728
    %v732 = vmul.f32 %v710, %v727
    %v733 = vmul.f32 %v725, %v729
    %736 = vrot.lane.b32.xlu0 %v732, 48
    %v737 = vpop.permute.xlu0 %736
    %738 = vrot.lane.b32.xlu0 %v733, 48
    %v739 = vpop.permute.xlu0 %738
    %v742 = vadd.f32 %v624, %v737
    %v743 = vadd.f32 %v627, %v739
    %v744 = vtanh.pop %v742
    %v745 = vtanh.pop %v743
    %v746 = vsub.f32 1.0, %v710
    %v747 = vsub.f32 1.0, %v725
    %750 = vrot.lane.b32.xlu0 %v744, 104
    %v751 = vpop.permute.xlu0 %750
    %752 = vrot.lane.b32.xlu0 %v745, 104
    %v753 = vpop.permute.xlu0 %752
    %v756 = vmul.f32 %v746, %v751
    %v757 = vmul.f32 %v747, %v753
    %v758 = vmul.f32 %v710, 0.0
    %v759 = vmul.f32 %v725, 0.0
    %v760 = vadd.f32 %v756, %v758
    %v761 = vadd.f32 %v757, %v759
    %v763 = vperm.slane %v595, 0
    %765 = vmatpush.msra.mxu0 0.0
    %766 = vmatpush.msra.mxu0 0.0
    %767 = vmatpush.msra.mxu0 0.0
    %768 = vmatpush.msra.mxu0 0.0
    %769 = vmatpush.msra.mxu0 0.0
    %770 = vmatpush.msra.mxu0 0.0
    %771 = vmatpush.msra.mxu0 0.0
    %772 = vmatpush.msra.mxu0 0.0
    %773 = vmatpush.msra.mxu0 0.0
    %774 = vmatpush.msra.mxu0 0.0
    %775 = vmatpush.msra.mxu0 0.0
    %776 = vmatpush.msra.mxu0 0.0
    %777 = vmatpush.msra.mxu0 0.0
    %778 = vmatpush.msra.mxu0 %v593
    %779 = vmatpush.msra.mxu0 %v592
    %780 = vmatpush.msra.mxu0 %v591
    %781 = vmatmul.f32.gmra.mxu0 %v660
    %v782 = vpop.f32.mrf.mxu0
    %v783 = vadd.f32 %v763, %v782
    %784 = vdwg.mxu0
    %v786 = vrot.slane %v783, 1
    %v787 = vrot.slane %v783, 2
    %v790 = vadd.f32 %v650, %v786
    %v791 = vadd.f32 %v653, %v787
    %v792 = vxor.u32 %v790, 2147483648
    %v793 = vxor.u32 %v791, 2147483648
    %v794 = vmul.f32 %v792, 1.442695
    %v795 = vpow.pop %v794
    %v796 = vmul.f32 %v793, 1.442695
    %v797 = vpow.pop %v796
    %v798 = vadd.f32 %v795, 1.0
    %v799 = vadd.f32 %v797, 1.0
    %v800 = vrcp.pop %v798
    %v801 = vmul.f32 %v798, %v800
    %v802 = vsub.f32 1.0, %v801
    %v803 = vmul.f32 %v800, %v802
    %v804 = vadd.f32 %v800, %v803
    %vm805 = vweird.f32 %v798
    %vm806 = vweird.f32 %v800
    %vm807 = vmor %vm805, %vm806
    %v808 = vsel %vm807, %v800, %v804
    %v809 = vand.u32 2147483647, %v798
    %vm810 = vcmp.eq.f32.partialorder %v809, 8.507059e+37
    %v811 = vand.u32 %v798, 2147483648
    %v812 = vor.u32 1.1754944e-38, %v811
    %v813 = vsel %vm810, %v812, %v808
    %v814 = vmul.f32 1.0, %v813
    %v815 = vrcp.pop %v799
    %v816 = vmul.f32 %v799, %v815
    %v817 = vsub.f32 1.0, %v816
    %v818 = vmul.f32 %v815, %v817
    %v819 = vadd.f32 %v815, %v818
    %vm820 = vweird.f32 %v799
    %vm821 = vweird.f32 %v815
    %vm822 = vmor %vm820, %vm821
    %v823 = vsel %vm822, %v815, %v819
    %v824 = vand.u32 2147483647, %v799
    %vm825 = vcmp.eq.f32.partialorder %v824, 8.507059e+37
    %v826 = vand.u32 %v799, 2147483648
    %v827 = vor.u32 1.1754944e-38, %v826
    %v828 = vsel %vm825, %v827, %v823
    %v829 = vmul.f32 1.0, %v828
    %830 = vrot.lane.b32.xlu0 %v786, 80
    %v831 = vpop.permute.xlu0 %830
    %832 = vrot.lane.b32.xlu0 %v787, 80
    %v833 = vpop.permute.xlu0 %832
    %v836 = vmul.f32 %v814, %v831
    %v837 = vmul.f32 %v829, %v833
    %840 = vrot.lane.b32.xlu0 %v836, 48
    %v841 = vpop.permute.xlu0 %840
    %842 = vrot.lane.b32.xlu0 %v837, 48
    %v843 = vpop.permute.xlu0 %842
    %v846 = vadd.f32 %v650, %v841
    %v847 = vadd.f32 %v653, %v843
    %v848 = vtanh.pop %v846
    %v849 = vtanh.pop %v847
    %v850 = vsub.f32 1.0, %v814
    %v851 = vsub.f32 1.0, %v829
    %854 = vrot.lane.b32.xlu0 %v848, 104
    %v855 = vpop.permute.xlu0 %854
    %856 = vrot.lane.b32.xlu0 %v849, 104
    %v857 = vpop.permute.xlu0 %856
    %v860 = vmul.f32 %v850, %v855
    %v861 = vmul.f32 %v851, %v857
    %v862 = vmul.f32 %v814, 0.0
    %v863 = vmul.f32 %v829, 0.0
    %v864 = vadd.f32 %v860, %v862
    %v865 = vadd.f32 %v861, %v863
    %868 = vrot.lane.b32.xlu0 %v760, 104
    %v869 = vpop.permute.xlu0 %868
    %870 = vrot.lane.b32.xlu0 %v761, 104
    %v871 = vpop.permute.xlu0 %870
    %vm874 = vcmask 188416
    %875 = vst.msk [vmem:[#allocation2] sm:$0x1] %vm874, %v869
    %876 = vst.msk [vmem:[#allocation2 + $0x8] sm:$0x1] %vm874, %v871
    %879 = vrot.lane.b32.xlu0 %v864, 104
    %v880 = vpop.permute.xlu0 %879
    %881 = vrot.lane.b32.xlu0 %v865, 104
    %v882 = vpop.permute.xlu0 %881
    %vm885 = vcmask 195591
    %886 = vst.msk [vmem:[#allocation3] sm:$0x80] %vm885, %v880
    %887 = vst.msk [vmem:[#allocation3 + $0x8] sm:$0x80] %vm885, %v882
    %v888 = vrot.slane %v761, 7
    %vm889 = vcmask 1041409
    %v890 = vsel %vm889, %v888, %v760
    %891 = vrot.lane.b32.xlu0 %v890, 104
    %v892 = vpop.permute.xlu0 %891
    %v893 = vsel %vm658, %v892, 0
    %895 = vmatpush.msra.mxu0 0.0
    %896 = vmatpush.msra.mxu0 0.0
    %897 = vmatpush.msra.mxu0 0.0
    %898 = vmatpush.msra.mxu0 0.0
    %899 = vmatpush.msra.mxu0 0.0
    %900 = vmatpush.msra.mxu0 0.0
    %901 = vmatpush.msra.mxu0 0.0
    %902 = vmatpush.msra.mxu0 0.0
    %903 = vmatpush.msra.mxu0 0.0
    %904 = vmatpush.msra.mxu0 0.0
    %905 = vmatpush.msra.mxu0 0.0
    %906 = vmatpush.msra.mxu0 0.0
    %907 = vmatpush.msra.mxu0 0.0
    %908 = vmatpush.msra.mxu0 %v587
    %909 = vmatpush.msra.mxu0 %v586
    %910 = vmatpush.msra.mxu0 %v585
    %911 = vmatmul.f32.gmra.mxu0 %v893
    %v912 = vpop.f32.mrf.mxu0
    %v913 = vadd.f32 %v656, %v912
    %914 = vdwg.mxu0
    %v916 = vrot.slane %v913, 7
    %v919 = vadd.f32 %v624, %v916
    %v920 = vadd.f32 %v627, %v913
    %v921 = vxor.u32 %v919, 2147483648
    %v922 = vxor.u32 %v920, 2147483648
    %v923 = vmul.f32 %v921, 1.442695
    %v924 = vpow.pop %v923
    %v925 = vmul.f32 %v922, 1.442695
    %v926 = vpow.pop %v925
    %v927 = vadd.f32 %v924, 1.0
    %v928 = vadd.f32 %v926, 1.0
    %v929 = vrcp.pop %v927
    %v930 = vmul.f32 %v927, %v929
    %v931 = vsub.f32 1.0, %v930
    %v932 = vmul.f32 %v929, %v931
    %v933 = vadd.f32 %v929, %v932
    %vm934 = vweird.f32 %v927
    %vm935 = vweird.f32 %v929
    %vm936 = vmor %vm934, %vm935
    %v937 = vsel %vm936, %v929, %v933
    %v938 = vand.u32 2147483647, %v927
    %vm939 = vcmp.eq.f32.partialorder %v938, 8.507059e+37
    %v940 = vand.u32 %v927, 2147483648
    %v941 = vor.u32 1.1754944e-38, %v940
    %v942 = vsel %vm939, %v941, %v937
    %v943 = vmul.f32 1.0, %v942
    %v944 = vrcp.pop %v928
    %v945 = vmul.f32 %v928, %v944
    %v946 = vsub.f32 1.0, %v945
    %v947 = vmul.f32 %v944, %v946
    %v948 = vadd.f32 %v944, %v947
    %vm949 = vweird.f32 %v928
    %vm950 = vweird.f32 %v944
    %vm951 = vmor %vm949, %vm950
    %v952 = vsel %vm951, %v944, %v948
    %v953 = vand.u32 2147483647, %v928
    %vm954 = vcmp.eq.f32.partialorder %v953, 8.507059e+37
    %v955 = vand.u32 %v928, 2147483648
    %v956 = vor.u32 1.1754944e-38, %v955
    %v957 = vsel %vm954, %v956, %v952
    %v958 = vmul.f32 1.0, %v957
    %959 = vrot.lane.b32.xlu0 %v916, 80
    %v960 = vpop.permute.xlu0 %959
    %961 = vrot.lane.b32.xlu0 %v913, 80
    %v962 = vpop.permute.xlu0 %961
    %v965 = vmul.f32 %v943, %v960
    %v966 = vmul.f32 %v958, %v962
    %969 = vrot.lane.b32.xlu0 %v965, 48
    %v970 = vpop.permute.xlu0 %969
    %971 = vrot.lane.b32.xlu0 %v966, 48
    %v972 = vpop.permute.xlu0 %971
    %v975 = vadd.f32 %v624, %v970
    %v976 = vadd.f32 %v627, %v972
    %v977 = vtanh.pop %v975
    %v978 = vtanh.pop %v976
    %v979 = vsub.f32 1.0, %v943
    %v980 = vsub.f32 1.0, %v958
    %983 = vrot.lane.b32.xlu0 %v977, 104
    %v984 = vpop.permute.xlu0 %983
    %985 = vrot.lane.b32.xlu0 %v978, 104
    %v986 = vpop.permute.xlu0 %985
    %v989 = vmul.f32 %v979, %v984
    %v990 = vmul.f32 %v980, %v986
    %v991 = vrot.slane %v760, 7
    %v994 = vmul.f32 %v943, %v991
    %v995 = vmul.f32 %v958, %v888
    %v996 = vadd.f32 %v989, %v994
    %v997 = vadd.f32 %v990, %v995
    %v998 = vrot.slane %v864, 7
    %v999 = vrot.slane %v865, 6
    %v1000 = vsel %vm889, %v999, %v998
    %1001 = vrot.lane.b32.xlu0 %v1000, 104
    %v1002 = vpop.permute.xlu0 %1001
    %v1003 = vsel %vm658, %v1002, 0
    %1005 = vmatpush.msra.mxu0 0.0
    %1006 = vmatpush.msra.mxu0 0.0
    %1007 = vmatpush.msra.mxu0 0.0
    %1008 = vmatpush.msra.mxu0 0.0
    %1009 = vmatpush.msra.mxu0 0.0
    %1010 = vmatpush.msra.mxu0 0.0
    %1011 = vmatpush.msra.mxu0 0.0
    %1012 = vmatpush.msra.mxu0 0.0
    %1013 = vmatpush.msra.mxu0 0.0
    %1014 = vmatpush.msra.mxu0 0.0
    %1015 = vmatpush.msra.mxu0 0.0
    %1016 = vmatpush.msra.mxu0 0.0
    %1017 = vmatpush.msra.mxu0 0.0
    %1018 = vmatpush.msra.mxu0 %v593
    %1019 = vmatpush.msra.mxu0 %v592
    %1020 = vmatpush.msra.mxu0 %v591
    %1021 = vmatmul.f32.gmra.mxu0 %v1003
    %v1022 = vpop.f32.mrf.mxu0
    %v1023 = vadd.f32 %v763, %v1022
    %1024 = vdwg.mxu0
    %v1026 = vrot.slane %v1023, 2
    %v1027 = vrot.slane %v1023, 3
    %v1030 = vadd.f32 %v650, %v1026
    %v1031 = vadd.f32 %v653, %v1027
    %v1032 = vxor.u32 %v1030, 2147483648
    %v1033 = vxor.u32 %v1031, 2147483648
    %v1034 = vmul.f32 %v1032, 1.442695
    %v1035 = vpow.pop %v1034
    %v1036 = vmul.f32 %v1033, 1.442695
    %v1037 = vpow.pop %v1036
    %v1038 = vadd.f32 %v1035, 1.0
    %v1039 = vadd.f32 %v1037, 1.0
    %v1040 = vrcp.pop %v1038
    %v1041 = vmul.f32 %v1038, %v1040
    %v1042 = vsub.f32 1.0, %v1041
    %v1043 = vmul.f32 %v1040, %v1042
    %v1044 = vadd.f32 %v1040, %v1043
    %vm1045 = vweird.f32 %v1038
    %vm1046 = vweird.f32 %v1040
    %vm1047 = vmor %vm1045, %vm1046
    %v1048 = vsel %vm1047, %v1040, %v1044
    %v1049 = vand.u32 2147483647, %v1038
    %vm1050 = vcmp.eq.f32.partialorder %v1049, 8.507059e+37
    %v1051 = vand.u32 %v1038, 2147483648
    %v1052 = vor.u32 1.1754944e-38, %v1051
    %v1053 = vsel %vm1050, %v1052, %v1048
    %v1054 = vmul.f32 1.0, %v1053
    %v1055 = vrcp.pop %v1039
    %v1056 = vmul.f32 %v1039, %v1055
    %v1057 = vsub.f32 1.0, %v1056
    %v1058 = vmul.f32 %v1055, %v1057
    %v1059 = vadd.f32 %v1055, %v1058
    %vm1060 = vweird.f32 %v1039
    %vm1061 = vweird.f32 %v1055
    %vm1062 = vmor %vm1060, %vm1061
    %v1063 = vsel %vm1062, %v1055, %v1059
    %v1064 = vand.u32 2147483647, %v1039
    %vm1065 = vcmp.eq.f32.partialorder %v1064, 8.507059e+37
    %v1066 = vand.u32 %v1039, 2147483648
    %v1067 = vor.u32 1.1754944e-38, %v1066
    %v1068 = vsel %vm1065, %v1067, %v1063
    %v1069 = vmul.f32 1.0, %v1068
    %1070 = vrot.lane.b32.xlu0 %v1026, 80
    %v1071 = vpop.permute.xlu0 %1070
    %1072 = vrot.lane.b32.xlu0 %v1027, 80
    %v1073 = vpop.permute.xlu0 %1072
    %v1076 = vmul.f32 %v1054, %v1071
    %v1077 = vmul.f32 %v1069, %v1073
    %1080 = vrot.lane.b32.xlu0 %v1076, 48
    %v1081 = vpop.permute.xlu0 %1080
    %1082 = vrot.lane.b32.xlu0 %v1077, 48
    %v1083 = vpop.permute.xlu0 %1082
    %v1086 = vadd.f32 %v650, %v1081
    %v1087 = vadd.f32 %v653, %v1083
    %v1088 = vtanh.pop %v1086
    %v1089 = vtanh.pop %v1087
    %v1090 = vsub.f32 1.0, %v1054
    %v1091 = vsub.f32 1.0, %v1069
    %1094 = vrot.lane.b32.xlu0 %v1088, 104
    %v1095 = vpop.permute.xlu0 %1094
    %1096 = vrot.lane.b32.xlu0 %v1089, 104
    %v1097 = vpop.permute.xlu0 %1096
    %v1100 = vmul.f32 %v1090, %v1095
    %v1101 = vmul.f32 %v1091, %v1097
    %v1102 = vrot.slane %v864, 1
    %v1103 = vrot.slane %v865, 1
    %v1106 = vmul.f32 %v1054, %v1102
    %v1107 = vmul.f32 %v1069, %v1103
    %v1108 = vadd.f32 %v1100, %v1106
    %v1109 = vadd.f32 %v1101, %v1107
    %1112 = vrot.lane.b32.xlu0 %v996, 104
    %v1113 = vpop.permute.xlu0 %1112
    %1114 = vrot.lane.b32.xlu0 %v997, 104
    %v1115 = vpop.permute.xlu0 %1114
    %vm1118 = vcmask 189441
    %1119 = vst.msk [vmem:[#allocation2] sm:$0x2] %vm1118, %v1113
    %1120 = vst.msk [vmem:[#allocation2 + $0x8] sm:$0x2] %vm1118, %v1115
    %1123 = vrot.lane.b32.xlu0 %v1108, 104
    %v1124 = vpop.permute.xlu0 %1123
    %1125 = vrot.lane.b32.xlu0 %v1109, 104
    %v1126 = vpop.permute.xlu0 %1125
    %vm1129 = vcmask 194566
    %1130 = vst.msk [vmem:[#allocation3] sm:$0x40] %vm1129, %v1124
    %1131 = vst.msk [vmem:[#allocation3 + $0x8] sm:$0x40] %vm1129, %v1126
    %v1132 = vrot.slane %v996, 1
    %v1133 = vsel %vm889, %v997, %v1132
    %1134 = vrot.lane.b32.xlu0 %v1133, 104
    %v1135 = vpop.permute.xlu0 %1134
    %v1136 = vsel %vm658, %v1135, 0
    %1138 = vmatpush.msra.mxu0 0.0
    %1139 = vmatpush.msra.mxu0 0.0
    %1140 = vmatpush.msra.mxu0 0.0
    %1141 = vmatpush.msra.mxu0 0.0
    %1142 = vmatpush.msra.mxu0 0.0
    %1143 = vmatpush.msra.mxu0 0.0
    %1144 = vmatpush.msra.mxu0 0.0
    %1145 = vmatpush.msra.mxu0 0.0
    %1146 = vmatpush.msra.mxu0 0.0
    %1147 = vmatpush.msra.mxu0 0.0
    %1148 = vmatpush.msra.mxu0 0.0
    %1149 = vmatpush.msra.mxu0 0.0
    %1150 = vmatpush.msra.mxu0 0.0
    %1151 = vmatpush.msra.mxu0 %v587
    %1152 = vmatpush.msra.mxu0 %v586
    %1153 = vmatpush.msra.mxu0 %v585
    %1154 = vmatmul.f32.gmra.mxu0 %v1136
    %v1155 = vpop.f32.mrf.mxu0
    %v1156 = vadd.f32 %v656, %v1155
    %1157 = vdwg.mxu0
    %v1159 = vrot.slane %v1156, 6
    %v1160 = vrot.slane %v1156, 7
    %v1163 = vadd.f32 %v624, %v1159
    %v1164 = vadd.f32 %v627, %v1160
    %v1165 = vxor.u32 %v1163, 2147483648
    %v1166 = vxor.u32 %v1164, 2147483648
    %v1167 = vmul.f32 %v1165, 1.442695
    %v1168 = vpow.pop %v1167
    %v1169 = vmul.f32 %v1166, 1.442695
    %v1170 = vpow.pop %v1169
    %v1171 = vadd.f32 %v1168, 1.0
    %v1172 = vadd.f32 %v1170, 1.0
    %v1173 = vrcp.pop %v1171
    %v1174 = vmul.f32 %v1171, %v1173
    %v1175 = vsub.f32 1.0, %v1174
    %v1176 = vmul.f32 %v1173, %v1175
    %v1177 = vadd.f32 %v1173, %v1176
    %vm1178 = vweird.f32 %v1171
    %vm1179 = vweird.f32 %v1173
    %vm1180 = vmor %vm1178, %vm1179
    %v1181 = vsel %vm1180, %v1173, %v1177
    %v1182 = vand.u32 2147483647, %v1171
    %vm1183 = vcmp.eq.f32.partialorder %v1182, 8.507059e+37
    %v1184 = vand.u32 %v1171, 2147483648
    %v1185 = vor.u32 1.1754944e-38, %v1184
    %v1186 = vsel %vm1183, %v1185, %v1181
    %v1187 = vmul.f32 1.0, %v1186
    %v1188 = vrcp.pop %v1172
    %v1189 = vmul.f32 %v1172, %v1188
    %v1190 = vsub.f32 1.0, %v1189
    %v1191 = vmul.f32 %v1188, %v1190
    %v1192 = vadd.f32 %v1188, %v1191
    %vm1193 = vweird.f32 %v1172
    %vm1194 = vweird.f32 %v1188
    %vm1195 = vmor %vm1193, %vm1194
    %v1196 = vsel %vm1195, %v1188, %v1192
    %v1197 = vand.u32 2147483647, %v1172
    %vm1198 = vcmp.eq.f32.partialorder %v1197, 8.507059e+37
    %v1199 = vand.u32 %v1172, 2147483648
    %v1200 = vor.u32 1.1754944e-38, %v1199
    %v1201 = vsel %vm1198, %v1200, %v1196
    %v1202 = vmul.f32 1.0, %v1201
    %1203 = vrot.lane.b32.xlu0 %v1159, 80
    %v1204 = vpop.permute.xlu0 %1203
    %1205 = vrot.lane.b32.xlu0 %v1160, 80
    %v1206 = vpop.permute.xlu0 %1205
    %v1209 = vmul.f32 %v1187, %v1204
    %v1210 = vmul.f32 %v1202, %v1206
    %1213 = vrot.lane.b32.xlu0 %v1209, 48
    %v1214 = vpop.permute.xlu0 %1213
    %1215 = vrot.lane.b32.xlu0 %v1210, 48
    %v1216 = vpop.permute.xlu0 %1215
    %v1219 = vadd.f32 %v624, %v1214
    %v1220 = vadd.f32 %v627, %v1216
    %v1221 = vtanh.pop %v1219
    %v1222 = vtanh.pop %v1220
    %v1223 = vsub.f32 1.0, %v1187
    %v1224 = vsub.f32 1.0, %v1202
    %1227 = vrot.lane.b32.xlu0 %v1221, 104
    %v1228 = vpop.permute.xlu0 %1227
    %1229 = vrot.lane.b32.xlu0 %v1222, 104
    %v1230 = vpop.permute.xlu0 %1229
    %v1233 = vmul.f32 %v1223, %v1228
    %v1234 = vmul.f32 %v1224, %v1230
    %v1235 = vrot.slane %v996, 7
    %v1236 = vrot.slane %v997, 7
    %v1239 = vmul.f32 %v1187, %v1235
    %v1240 = vmul.f32 %v1202, %v1236
    %v1241 = vadd.f32 %v1233, %v1239
    %v1242 = vadd.f32 %v1234, %v1240
    %v1243 = vrot.slane %v1108, 6
    %v1244 = vrot.slane %v1109, 5
    %v1245 = vsel %vm889, %v1244, %v1243
    %1246 = vrot.lane.b32.xlu0 %v1245, 104
    %v1247 = vpop.permute.xlu0 %1246
    %v1248 = vsel %vm658, %v1247, 0
    %1250 = vmatpush.msra.mxu0 0.0
    %1251 = vmatpush.msra.mxu0 0.0
    %1252 = vmatpush.msra.mxu0 0.0
    %1253 = vmatpush.msra.mxu0 0.0
    %1254 = vmatpush.msra.mxu0 0.0
    %1255 = vmatpush.msra.mxu0 0.0
    %1256 = vmatpush.msra.mxu0 0.0
    %1257 = vmatpush.msra.mxu0 0.0
    %1258 = vmatpush.msra.mxu0 0.0
    %1259 = vmatpush.msra.mxu0 0.0
    %1260 = vmatpush.msra.mxu0 0.0
    %1261 = vmatpush.msra.mxu0 0.0
    %1262 = vmatpush.msra.mxu0 0.0
    %1263 = vmatpush.msra.mxu0 %v593
    %1264 = vmatpush.msra.mxu0 %v592
    %1265 = vmatpush.msra.mxu0 %v591
    %1266 = vmatmul.f32.gmra.mxu0 %v1248
    %v1267 = vpop.f32.mrf.mxu0
    %v1268 = vadd.f32 %v763, %v1267
    %1269 = vdwg.mxu0
    %v1271 = vrot.slane %v1268, 3
    %v1272 = vrot.slane %v1268, 4
    %v1275 = vadd.f32 %v650, %v1271
    %v1276 = vadd.f32 %v653, %v1272
    %v1277 = vxor.u32 %v1275, 2147483648
    %v1278 = vxor.u32 %v1276, 2147483648
    %v1279 = vmul.f32 %v1277, 1.442695
    %v1280 = vpow.pop %v1279
    %v1281 = vmul.f32 %v1278, 1.442695
    %v1282 = vpow.pop %v1281
    %v1283 = vadd.f32 %v1280, 1.0
    %v1284 = vadd.f32 %v1282, 1.0
    %v1285 = vrcp.pop %v1283
    %v1286 = vmul.f32 %v1283, %v1285
    %v1287 = vsub.f32 1.0, %v1286
    %v1288 = vmul.f32 %v1285, %v1287
    %v1289 = vadd.f32 %v1285, %v1288
    %vm1290 = vweird.f32 %v1283
    %vm1291 = vweird.f32 %v1285
    %vm1292 = vmor %vm1290, %vm1291
    %v1293 = vsel %vm1292, %v1285, %v1289
    %v1294 = vand.u32 2147483647, %v1283
    %vm1295 = vcmp.eq.f32.partialorder %v1294, 8.507059e+37
    %v1296 = vand.u32 %v1283, 2147483648
    %v1297 = vor.u32 1.1754944e-38, %v1296
    %v1298 = vsel %vm1295, %v1297, %v1293
    %v1299 = vmul.f32 1.0, %v1298
    %v1300 = vrcp.pop %v1284
    %v1301 = vmul.f32 %v1284, %v1300
    %v1302 = vsub.f32 1.0, %v1301
    %v1303 = vmul.f32 %v1300, %v1302
    %v1304 = vadd.f32 %v1300, %v1303
    %vm1305 = vweird.f32 %v1284
    %vm1306 = vweird.f32 %v1300
    %vm1307 = vmor %vm1305, %vm1306
    %v1308 = vsel %vm1307, %v1300, %v1304
    %v1309 = vand.u32 2147483647, %v1284
    %vm1310 = vcmp.eq.f32.partialorder %v1309, 8.507059e+37
    %v1311 = vand.u32 %v1284, 2147483648
    %v1312 = vor.u32 1.1754944e-38, %v1311
    %v1313 = vsel %vm1310, %v1312, %v1308
    %v1314 = vmul.f32 1.0, %v1313
    %1315 = vrot.lane.b32.xlu0 %v1271, 80
    %v1316 = vpop.permute.xlu0 %1315
    %1317 = vrot.lane.b32.xlu0 %v1272, 80
    %v1318 = vpop.permute.xlu0 %1317
    %v1321 = vmul.f32 %v1299, %v1316
    %v1322 = vmul.f32 %v1314, %v1318
    %1325 = vrot.lane.b32.xlu0 %v1321, 48
    %v1326 = vpop.permute.xlu0 %1325
    %1327 = vrot.lane.b32.xlu0 %v1322, 48
    %v1328 = vpop.permute.xlu0 %1327
    %v1331 = vadd.f32 %v650, %v1326
    %v1332 = vadd.f32 %v653, %v1328
    %v1333 = vtanh.pop %v1331
    %v1334 = vtanh.pop %v1332
    %v1335 = vsub.f32 1.0, %v1299
    %v1336 = vsub.f32 1.0, %v1314
    %1339 = vrot.lane.b32.xlu0 %v1333, 104
    %v1340 = vpop.permute.xlu0 %1339
    %1341 = vrot.lane.b32.xlu0 %v1334, 104
    %v1342 = vpop.permute.xlu0 %1341
    %v1345 = vmul.f32 %v1335, %v1340
    %v1346 = vmul.f32 %v1336, %v1342
    %v1347 = vrot.slane %v1108, 1
    %v1348 = vrot.slane %v1109, 1
    %v1351 = vmul.f32 %v1299, %v1347
    %v1352 = vmul.f32 %v1314, %v1348
    %v1353 = vadd.f32 %v1345, %v1351
    %v1354 = vadd.f32 %v1346, %v1352
    %1357 = vrot.lane.b32.xlu0 %v1241, 104
    %v1358 = vpop.permute.xlu0 %1357
    %1359 = vrot.lane.b32.xlu0 %v1242, 104
    %v1360 = vpop.permute.xlu0 %1359
    %vm1363 = vcmask 190466
    %1364 = vst.msk [vmem:[#allocation2] sm:$0x4] %vm1363, %v1358
    %1365 = vst.msk [vmem:[#allocation2 + $0x8] sm:$0x4] %vm1363, %v1360
    %1368 = vrot.lane.b32.xlu0 %v1353, 104
    %v1369 = vpop.permute.xlu0 %1368
    %1370 = vrot.lane.b32.xlu0 %v1354, 104
    %v1371 = vpop.permute.xlu0 %1370
    %vm1374 = vcmask 193541
    %1375 = vst.msk [vmem:[#allocation3] sm:$0x20] %vm1374, %v1369
    %1376 = vst.msk [vmem:[#allocation3 + $0x8] sm:$0x20] %vm1374, %v1371
    %v1377 = vrot.slane %v1241, 2
    %v1378 = vrot.slane %v1242, 1
    %v1379 = vsel %vm889, %v1378, %v1377
    %1380 = vrot.lane.b32.xlu0 %v1379, 104
    %v1381 = vpop.permute.xlu0 %1380
    %v1382 = vsel %vm658, %v1381, 0
    %1384 = vmatpush.msra.mxu0 0.0
    %1385 = vmatpush.msra.mxu0 0.0
    %1386 = vmatpush.msra.mxu0 0.0
    %1387 = vmatpush.msra.mxu0 0.0
    %1388 = vmatpush.msra.mxu0 0.0
    %1389 = vmatpush.msra.mxu0 0.0
    %1390 = vmatpush.msra.mxu0 0.0
    %1391 = vmatpush.msra.mxu0 0.0
    %1392 = vmatpush.msra.mxu0 0.0
    %1393 = vmatpush.msra.mxu0 0.0
    %1394 = vmatpush.msra.mxu0 0.0
    %1395 = vmatpush.msra.mxu0 0.0
    %1396 = vmatpush.msra.mxu0 0.0
    %1397 = vmatpush.msra.mxu0 %v587
    %1398 = vmatpush.msra.mxu0 %v586
    %1399 = vmatpush.msra.mxu0 %v585
    %1400 = vmatmul.f32.gmra.mxu0 %v1382
    %v1401 = vpop.f32.mrf.mxu0
    %v1402 = vadd.f32 %v656, %v1401
    %1403 = vdwg.mxu0
    %v1405 = vrot.slane %v1402, 5
    %v1406 = vrot.slane %v1402, 6
    %v1409 = vadd.f32 %v624, %v1405
    %v1410 = vadd.f32 %v627, %v1406
    %v1411 = vxor.u32 %v1409, 2147483648
    %v1412 = vxor.u32 %v1410, 2147483648
    %v1413 = vmul.f32 %v1411, 1.442695
    %v1414 = vpow.pop %v1413
    %v1415 = vmul.f32 %v1412, 1.442695
    %v1416 = vpow.pop %v1415
    %v1417 = vadd.f32 %v1414, 1.0
    %v1418 = vadd.f32 %v1416, 1.0
    %v1419 = vrcp.pop %v1417
    %v1420 = vmul.f32 %v1417, %v1419
    %v1421 = vsub.f32 1.0, %v1420
    %v1422 = vmul.f32 %v1419, %v1421
    %v1423 = vadd.f32 %v1419, %v1422
    %vm1424 = vweird.f32 %v1417
    %vm1425 = vweird.f32 %v1419
    %vm1426 = vmor %vm1424, %vm1425
    %v1427 = vsel %vm1426, %v1419, %v1423
    %v1428 = vand.u32 2147483647, %v1417
    %vm1429 = vcmp.eq.f32.partialorder %v1428, 8.507059e+37
    %v1430 = vand.u32 %v1417, 2147483648
    %v1431 = vor.u32 1.1754944e-38, %v1430
    %v1432 = vsel %vm1429, %v1431, %v1427
    %v1433 = vmul.f32 1.0, %v1432
    %v1434 = vrcp.pop %v1418
    %v1435 = vmul.f32 %v1418, %v1434
    %v1436 = vsub.f32 1.0, %v1435
    %v1437 = vmul.f32 %v1434, %v1436
    %v1438 = vadd.f32 %v1434, %v1437
    %vm1439 = vweird.f32 %v1418
    %vm1440 = vweird.f32 %v1434
    %vm1441 = vmor %vm1439, %vm1440
    %v1442 = vsel %vm1441, %v1434, %v1438
    %v1443 = vand.u32 2147483647, %v1418
    %vm1444 = vcmp.eq.f32.partialorder %v1443, 8.507059e+37
    %v1445 = vand.u32 %v1418, 2147483648
    %v1446 = vor.u32 1.1754944e-38, %v1445
    %v1447 = vsel %vm1444, %v1446, %v1442
    %v1448 = vmul.f32 1.0, %v1447
    %1449 = vrot.lane.b32.xlu0 %v1405, 80
    %v1450 = vpop.permute.xlu0 %1449
    %1451 = vrot.lane.b32.xlu0 %v1406, 80
    %v1452 = vpop.permute.xlu0 %1451
    %v1455 = vmul.f32 %v1433, %v1450
    %v1456 = vmul.f32 %v1448, %v1452
    %1459 = vrot.lane.b32.xlu0 %v1455, 48
    %v1460 = vpop.permute.xlu0 %1459
    %1461 = vrot.lane.b32.xlu0 %v1456, 48
    %v1462 = vpop.permute.xlu0 %1461
    %v1465 = vadd.f32 %v624, %v1460
    %v1466 = vadd.f32 %v627, %v1462
    %v1467 = vtanh.pop %v1465
    %v1468 = vtanh.pop %v1466
    %v1469 = vsub.f32 1.0, %v1433
    %v1470 = vsub.f32 1.0, %v1448
    %1473 = vrot.lane.b32.xlu0 %v1467, 104
    %v1474 = vpop.permute.xlu0 %1473
    %1475 = vrot.lane.b32.xlu0 %v1468, 104
    %v1476 = vpop.permute.xlu0 %1475
    %v1479 = vmul.f32 %v1469, %v1474
    %v1480 = vmul.f32 %v1470, %v1476
    %v1481 = vrot.slane %v1241, 7
    %v1482 = vrot.slane %v1242, 7
    %v1485 = vmul.f32 %v1433, %v1481
    %v1486 = vmul.f32 %v1448, %v1482
    %v1487 = vadd.f32 %v1479, %v1485
    %v1488 = vadd.f32 %v1480, %v1486
    %v1489 = vrot.slane %v1353, 5
    %v1490 = vrot.slane %v1354, 4
    %v1491 = vsel %vm889, %v1490, %v1489
    %1492 = vrot.lane.b32.xlu0 %v1491, 104
    %v1493 = vpop.permute.xlu0 %1492
    %v1494 = vsel %vm658, %v1493, 0
    %1496 = vmatpush.msra.mxu0 0.0
    %1497 = vmatpush.msra.mxu0 0.0
    %1498 = vmatpush.msra.mxu0 0.0
    %1499 = vmatpush.msra.mxu0 0.0
    %1500 = vmatpush.msra.mxu0 0.0
    %1501 = vmatpush.msra.mxu0 0.0
    %1502 = vmatpush.msra.mxu0 0.0
    %1503 = vmatpush.msra.mxu0 0.0
    %1504 = vmatpush.msra.mxu0 0.0
    %1505 = vmatpush.msra.mxu0 0.0
    %1506 = vmatpush.msra.mxu0 0.0
    %1507 = vmatpush.msra.mxu0 0.0
    %1508 = vmatpush.msra.mxu0 0.0
    %1509 = vmatpush.msra.mxu0 %v593
    %1510 = vmatpush.msra.mxu0 %v592
    %1511 = vmatpush.msra.mxu0 %v591
    %1512 = vmatmul.f32.gmra.mxu0 %v1494
    %v1513 = vpop.f32.mrf.mxu0
    %v1514 = vadd.f32 %v763, %v1513
    %1515 = vdwg.mxu0
    %v1517 = vrot.slane %v1514, 4
    %v1518 = vrot.slane %v1514, 5
    %v1521 = vadd.f32 %v650, %v1517
    %v1522 = vadd.f32 %v653, %v1518
    %v1523 = vxor.u32 %v1521, 2147483648
    %v1524 = vxor.u32 %v1522, 2147483648
    %v1525 = vmul.f32 %v1523, 1.442695
    %v1526 = vpow.pop %v1525
    %v1527 = vmul.f32 %v1524, 1.442695
    %v1528 = vpow.pop %v1527
    %v1529 = vadd.f32 %v1526, 1.0
    %v1530 = vadd.f32 %v1528, 1.0
    %v1531 = vrcp.pop %v1529
    %v1532 = vmul.f32 %v1529, %v1531
    %v1533 = vsub.f32 1.0, %v1532
    %v1534 = vmul.f32 %v1531, %v1533
    %v1535 = vadd.f32 %v1531, %v1534
    %vm1536 = vweird.f32 %v1529
    %vm1537 = vweird.f32 %v1531
    %vm1538 = vmor %vm1536, %vm1537
    %v1539 = vsel %vm1538, %v1531, %v1535
    %v1540 = vand.u32 2147483647, %v1529
    %vm1541 = vcmp.eq.f32.partialorder %v1540, 8.507059e+37
    %v1542 = vand.u32 %v1529, 2147483648
    %v1543 = vor.u32 1.1754944e-38, %v1542
    %v1544 = vsel %vm1541, %v1543, %v1539
    %v1545 = vmul.f32 1.0, %v1544
    %v1546 = vrcp.pop %v1530
    %v1547 = vmul.f32 %v1530, %v1546
    %v1548 = vsub.f32 1.0, %v1547
    %v1549 = vmul.f32 %v1546, %v1548
    %v1550 = vadd.f32 %v1546, %v1549
    %vm1551 = vweird.f32 %v1530
    %vm1552 = vweird.f32 %v1546
    %vm1553 = vmor %vm1551, %vm1552
    %v1554 = vsel %vm1553, %v1546, %v1550
    %v1555 = vand.u32 2147483647, %v1530
    %vm1556 = vcmp.eq.f32.partialorder %v1555, 8.507059e+37
    %v1557 = vand.u32 %v1530, 2147483648
    %v1558 = vor.u32 1.1754944e-38, %v1557
    %v1559 = vsel %vm1556, %v1558, %v1554
    %v1560 = vmul.f32 1.0, %v1559
    %1561 = vrot.lane.b32.xlu0 %v1517, 80
    %v1562 = vpop.permute.xlu0 %1561
    %1563 = vrot.lane.b32.xlu0 %v1518, 80
    %v1564 = vpop.permute.xlu0 %1563
    %v1567 = vmul.f32 %v1545, %v1562
    %v1568 = vmul.f32 %v1560, %v1564
    %1571 = vrot.lane.b32.xlu0 %v1567, 48
    %v1572 = vpop.permute.xlu0 %1571
    %1573 = vrot.lane.b32.xlu0 %v1568, 48
    %v1574 = vpop.permute.xlu0 %1573
    %v1577 = vadd.f32 %v650, %v1572
    %v1578 = vadd.f32 %v653, %v1574
    %v1579 = vtanh.pop %v1577
    %v1580 = vtanh.pop %v1578
    %v1581 = vsub.f32 1.0, %v1545
    %v1582 = vsub.f32 1.0, %v1560
    %1585 = vrot.lane.b32.xlu0 %v1579, 104
    %v1586 = vpop.permute.xlu0 %1585
    %1587 = vrot.lane.b32.xlu0 %v1580, 104
    %v1588 = vpop.permute.xlu0 %1587
    %v1591 = vmul.f32 %v1581, %v1586
    %v1592 = vmul.f32 %v1582, %v1588
    %v1593 = vrot.slane %v1353, 1
    %v1594 = vrot.slane %v1354, 1
    %v1597 = vmul.f32 %v1545, %v1593
    %v1598 = vmul.f32 %v1560, %v1594
    %v1599 = vadd.f32 %v1591, %v1597
    %v1600 = vadd.f32 %v1592, %v1598
    %1603 = vrot.lane.b32.xlu0 %v1487, 104
    %v1604 = vpop.permute.xlu0 %1603
    %1605 = vrot.lane.b32.xlu0 %v1488, 104
    %v1606 = vpop.permute.xlu0 %1605
    %vm1609 = vcmask 191491
    %1610 = vst.msk [vmem:[#allocation2] sm:$0x8] %vm1609, %v1604
    %1611 = vst.msk [vmem:[#allocation2 + $0x8] sm:$0x8] %vm1609, %v1606
    %1614 = vrot.lane.b32.xlu0 %v1599, 104
    %v1615 = vpop.permute.xlu0 %1614
    %1616 = vrot.lane.b32.xlu0 %v1600, 104
    %v1617 = vpop.permute.xlu0 %1616
    %vm1620 = vcmask 192516
    %1621 = vst.msk [vmem:[#allocation3] sm:$0x10] %vm1620, %v1615
    %1622 = vst.msk [vmem:[#allocation3 + $0x8] sm:$0x10] %vm1620, %v1617
    %v1623 = vrot.slane %v1487, 3
    %v1624 = vrot.slane %v1488, 2
    %v1625 = vsel %vm889, %v1624, %v1623
    %1626 = vrot.lane.b32.xlu0 %v1625, 104
    %v1627 = vpop.permute.xlu0 %1626
    %v1628 = vsel %vm658, %v1627, 0
    %1630 = vmatpush.msra.mxu0 0.0
    %1631 = vmatpush.msra.mxu0 0.0
    %1632 = vmatpush.msra.mxu0 0.0
    %1633 = vmatpush.msra.mxu0 0.0
    %1634 = vmatpush.msra.mxu0 0.0
    %1635 = vmatpush.msra.mxu0 0.0
    %1636 = vmatpush.msra.mxu0 0.0
    %1637 = vmatpush.msra.mxu0 0.0
    %1638 = vmatpush.msra.mxu0 0.0
    %1639 = vmatpush.msra.mxu0 0.0
    %1640 = vmatpush.msra.mxu0 0.0
    %1641 = vmatpush.msra.mxu0 0.0
    %1642 = vmatpush.msra.mxu0 0.0
    %1643 = vmatpush.msra.mxu0 %v587
    %1644 = vmatpush.msra.mxu0 %v586
    %1645 = vmatpush.msra.mxu0 %v585
    %1646 = vmatmul.f32.gmra.mxu0 %v1628
    %v1647 = vpop.f32.mrf.mxu0
    %v1648 = vadd.f32 %v656, %v1647
    %1649 = vdwg.mxu0
    %v1651 = vrot.slane %v1648, 4
    %v1652 = vrot.slane %v1648, 5
    %v1655 = vadd.f32 %v624, %v1651
    %v1656 = vadd.f32 %v627, %v1652
    %v1657 = vxor.u32 %v1655, 2147483648
    %v1658 = vxor.u32 %v1656, 2147483648
    %v1659 = vmul.f32 %v1657, 1.442695
    %v1660 = vpow.pop %v1659
    %v1661 = vmul.f32 %v1658, 1.442695
    %v1662 = vpow.pop %v1661
    %v1663 = vadd.f32 %v1660, 1.0
    %v1664 = vadd.f32 %v1662, 1.0
    %v1665 = vrcp.pop %v1663
    %v1666 = vmul.f32 %v1663, %v1665
    %v1667 = vsub.f32 1.0, %v1666
    %v1668 = vmul.f32 %v1665, %v1667
    %v1669 = vadd.f32 %v1665, %v1668
    %vm1670 = vweird.f32 %v1663
    %vm1671 = vweird.f32 %v1665
    %vm1672 = vmor %vm1670, %vm1671
    %v1673 = vsel %vm1672, %v1665, %v1669
    %v1674 = vand.u32 2147483647, %v1663
    %vm1675 = vcmp.eq.f32.partialorder %v1674, 8.507059e+37
    %v1676 = vand.u32 %v1663, 2147483648
    %v1677 = vor.u32 1.1754944e-38, %v1676
    %v1678 = vsel %vm1675, %v1677, %v1673
    %v1679 = vmul.f32 1.0, %v1678
    %v1680 = vrcp.pop %v1664
    %v1681 = vmul.f32 %v1664, %v1680
    %v1682 = vsub.f32 1.0, %v1681
    %v1683 = vmul.f32 %v1680, %v1682
    %v1684 = vadd.f32 %v1680, %v1683
    %vm1685 = vweird.f32 %v1664
    %vm1686 = vweird.f32 %v1680
    %vm1687 = vmor %vm1685, %vm1686
    %v1688 = vsel %vm1687, %v1680, %v1684
    %v1689 = vand.u32 2147483647, %v1664
    %vm1690 = vcmp.eq.f32.partialorder %v1689, 8.507059e+37
    %v1691 = vand.u32 %v1664, 2147483648
    %v1692 = vor.u32 1.1754944e-38, %v1691
    %v1693 = vsel %vm1690, %v1692, %v1688
    %v1694 = vmul.f32 1.0, %v1693
    %1695 = vrot.lane.b32.xlu0 %v1651, 80
    %v1696 = vpop.permute.xlu0 %1695
    %1697 = vrot.lane.b32.xlu0 %v1652, 80
    %v1698 = vpop.permute.xlu0 %1697
    %v1701 = vmul.f32 %v1679, %v1696
    %v1702 = vmul.f32 %v1694, %v1698
    %1705 = vrot.lane.b32.xlu0 %v1701, 48
    %v1706 = vpop.permute.xlu0 %1705
    %1707 = vrot.lane.b32.xlu0 %v1702, 48
    %v1708 = vpop.permute.xlu0 %1707
    %v1711 = vadd.f32 %v624, %v1706
    %v1712 = vadd.f32 %v627, %v1708
    %v1713 = vtanh.pop %v1711
    %v1714 = vtanh.pop %v1712
    %v1715 = vsub.f32 1.0, %v1679
    %v1716 = vsub.f32 1.0, %v1694
    %1719 = vrot.lane.b32.xlu0 %v1713, 104
    %v1720 = vpop.permute.xlu0 %1719
    %1721 = vrot.lane.b32.xlu0 %v1714, 104
    %v1722 = vpop.permute.xlu0 %1721
    %v1725 = vmul.f32 %v1715, %v1720
    %v1726 = vmul.f32 %v1716, %v1722
    %v1727 = vrot.slane %v1487, 7
    %v1728 = vrot.slane %v1488, 7
    %v1731 = vmul.f32 %v1679, %v1727
    %v1732 = vmul.f32 %v1694, %v1728
    %v1733 = vadd.f32 %v1725, %v1731
    %v1734 = vadd.f32 %v1726, %v1732
    %v1735 = vrot.slane %v1599, 4
    %v1736 = vrot.slane %v1600, 3
    %v1737 = vsel %vm889, %v1736, %v1735
    %1738 = vrot.lane.b32.xlu0 %v1737, 104
    %v1739 = vpop.permute.xlu0 %1738
    %v1740 = vsel %vm658, %v1739, 0
    %1742 = vmatpush.msra.mxu0 0.0
    %1743 = vmatpush.msra.mxu0 0.0
    %1744 = vmatpush.msra.mxu0 0.0
    %1745 = vmatpush.msra.mxu0 0.0
    %1746 = vmatpush.msra.mxu0 0.0
    %1747 = vmatpush.msra.mxu0 0.0
    %1748 = vmatpush.msra.mxu0 0.0
    %1749 = vmatpush.msra.mxu0 0.0
    %1750 = vmatpush.msra.mxu0 0.0
    %1751 = vmatpush.msra.mxu0 0.0
    %1752 = vmatpush.msra.mxu0 0.0
    %1753 = vmatpush.msra.mxu0 0.0
    %1754 = vmatpush.msra.mxu0 0.0
    %1755 = vmatpush.msra.mxu0 %v593
    %1756 = vmatpush.msra.mxu0 %v592
    %1757 = vmatpush.msra.mxu0 %v591
    %1758 = vmatmul.f32.gmra.mxu0 %v1740
    %v1759 = vpop.f32.mrf.mxu0
    %v1760 = vadd.f32 %v763, %v1759
    %1761 = vdwg.mxu0
    %v1763 = vrot.slane %v1760, 5
    %v1764 = vrot.slane %v1760, 6
    %v1767 = vadd.f32 %v650, %v1763
    %v1768 = vadd.f32 %v653, %v1764
    %v1769 = vxor.u32 %v1767, 2147483648
    %v1770 = vxor.u32 %v1768, 2147483648
    %v1771 = vmul.f32 %v1769, 1.442695
    %v1772 = vpow.pop %v1771
    %v1773 = vmul.f32 %v1770, 1.442695
    %v1774 = vpow.pop %v1773
    %v1775 = vadd.f32 %v1772, 1.0
    %v1776 = vadd.f32 %v1774, 1.0
    %v1777 = vrcp.pop %v1775
    %v1778 = vmul.f32 %v1775, %v1777
    %v1779 = vsub.f32 1.0, %v1778
    %v1780 = vmul.f32 %v1777, %v1779
    %v1781 = vadd.f32 %v1777, %v1780
    %vm1782 = vweird.f32 %v1775
    %vm1783 = vweird.f32 %v1777
    %vm1784 = vmor %vm1782, %vm1783
    %v1785 = vsel %vm1784, %v1777, %v1781
    %v1786 = vand.u32 2147483647, %v1775
    %vm1787 = vcmp.eq.f32.partialorder %v1786, 8.507059e+37
    %v1788 = vand.u32 %v1775, 2147483648
    %v1789 = vor.u32 1.1754944e-38, %v1788
    %v1790 = vsel %vm1787, %v1789, %v1785
    %v1791 = vmul.f32 1.0, %v1790
    %v1792 = vrcp.pop %v1776
    %v1793 = vmul.f32 %v1776, %v1792
    %v1794 = vsub.f32 1.0, %v1793
    %v1795 = vmul.f32 %v1792, %v1794
    %v1796 = vadd.f32 %v1792, %v1795
    %vm1797 = vweird.f32 %v1776
    %vm1798 = vweird.f32 %v1792
    %vm1799 = vmor %vm1797, %vm1798
    %v1800 = vsel %vm1799, %v1792, %v1796
    %v1801 = vand.u32 2147483647, %v1776
    %vm1802 = vcmp.eq.f32.partialorder %v1801, 8.507059e+37
    %v1803 = vand.u32 %v1776, 2147483648
    %v1804 = vor.u32 1.1754944e-38, %v1803
    %v1805 = vsel %vm1802, %v1804, %v1800
    %v1806 = vmul.f32 1.0, %v1805
    %1807 = vrot.lane.b32.xlu0 %v1763, 80
    %v1808 = vpop.permute.xlu0 %1807
    %1809 = vrot.lane.b32.xlu0 %v1764, 80
    %v1810 = vpop.permute.xlu0 %1809
    %v1813 = vmul.f32 %v1791, %v1808
    %v1814 = vmul.f32 %v1806, %v1810
    %1817 = vrot.lane.b32.xlu0 %v1813, 48
    %v1818 = vpop.permute.xlu0 %1817
    %1819 = vrot.lane.b32.xlu0 %v1814, 48
    %v1820 = vpop.permute.xlu0 %1819
    %v1823 = vadd.f32 %v650, %v1818
    %v1824 = vadd.f32 %v653, %v1820
    %v1825 = vtanh.pop %v1823
    %v1826 = vtanh.pop %v1824
    %v1827 = vsub.f32 1.0, %v1791
    %v1828 = vsub.f32 1.0, %v1806
    %1831 = vrot.lane.b32.xlu0 %v1825, 104
    %v1832 = vpop.permute.xlu0 %1831
    %1833 = vrot.lane.b32.xlu0 %v1826, 104
    %v1834 = vpop.permute.xlu0 %1833
    %v1837 = vmul.f32 %v1827, %v1832
    %v1838 = vmul.f32 %v1828, %v1834
    %v1839 = vrot.slane %v1599, 1
    %v1840 = vrot.slane %v1600, 1
    %v1843 = vmul.f32 %v1791, %v1839
    %v1844 = vmul.f32 %v1806, %v1840
    %v1845 = vadd.f32 %v1837, %v1843
    %v1846 = vadd.f32 %v1838, %v1844
    %1849 = vrot.lane.b32.xlu0 %v1733, 104
    %v1850 = vpop.permute.xlu0 %1849
    %1851 = vrot.lane.b32.xlu0 %v1734, 104
    %v1852 = vpop.permute.xlu0 %1851
    %1855 = vst.msk [vmem:[#allocation2] sm:$0x10] %vm1620, %v1850
    %1856 = vst.msk [vmem:[#allocation2 + $0x8] sm:$0x10] %vm1620, %v1852
    %1859 = vrot.lane.b32.xlu0 %v1845, 104
    %v1860 = vpop.permute.xlu0 %1859
    %1861 = vrot.lane.b32.xlu0 %v1846, 104
    %v1862 = vpop.permute.xlu0 %1861
    %1865 = vst.msk [vmem:[#allocation3] sm:$0x8] %vm1609, %v1860
    %1866 = vst.msk [vmem:[#allocation3 + $0x8] sm:$0x8] %vm1609, %v1862
    %v1867 = vrot.slane %v1733, 4
    %v1868 = vrot.slane %v1734, 3
    %v1869 = vsel %vm889, %v1868, %v1867
    %1870 = vrot.lane.b32.xlu0 %v1869, 104
    %v1871 = vpop.permute.xlu0 %1870
    %v1872 = vsel %vm658, %v1871, 0
    %1874 = vmatpush.msra.mxu0 0.0
    %1875 = vmatpush.msra.mxu0 0.0
    %1876 = vmatpush.msra.mxu0 0.0
    %1877 = vmatpush.msra.mxu0 0.0
    %1878 = vmatpush.msra.mxu0 0.0
    %1879 = vmatpush.msra.mxu0 0.0
    %1880 = vmatpush.msra.mxu0 0.0
    %1881 = vmatpush.msra.mxu0 0.0
    %1882 = vmatpush.msra.mxu0 0.0
    %1883 = vmatpush.msra.mxu0 0.0
    %1884 = vmatpush.msra.mxu0 0.0
    %1885 = vmatpush.msra.mxu0 0.0
    %1886 = vmatpush.msra.mxu0 0.0
    %1887 = vmatpush.msra.mxu0 %v587
    %1888 = vmatpush.msra.mxu0 %v586
    %1889 = vmatpush.msra.mxu0 %v585
    %1890 = vmatmul.f32.gmra.mxu0 %v1872
    %v1891 = vpop.f32.mrf.mxu0
    %v1892 = vadd.f32 %v656, %v1891
    %1893 = vdwg.mxu0
    %v1895 = vrot.slane %v1892, 3
    %v1896 = vrot.slane %v1892, 4
    %v1899 = vadd.f32 %v624, %v1895
    %v1900 = vadd.f32 %v627, %v1896
    %v1901 = vxor.u32 %v1899, 2147483648
    %v1902 = vxor.u32 %v1900, 2147483648
    %v1903 = vmul.f32 %v1901, 1.442695
    %v1904 = vpow.pop %v1903
    %v1905 = vmul.f32 %v1902, 1.442695
    %v1906 = vpow.pop %v1905
    %v1907 = vadd.f32 %v1904, 1.0
    %v1908 = vadd.f32 %v1906, 1.0
    %v1909 = vrcp.pop %v1907
    %v1910 = vmul.f32 %v1907, %v1909
    %v1911 = vsub.f32 1.0, %v1910
    %v1912 = vmul.f32 %v1909, %v1911
    %v1913 = vadd.f32 %v1909, %v1912
    %vm1914 = vweird.f32 %v1907
    %vm1915 = vweird.f32 %v1909
    %vm1916 = vmor %vm1914, %vm1915
    %v1917 = vsel %vm1916, %v1909, %v1913
    %v1918 = vand.u32 2147483647, %v1907
    %vm1919 = vcmp.eq.f32.partialorder %v1918, 8.507059e+37
    %v1920 = vand.u32 %v1907, 2147483648
    %v1921 = vor.u32 1.1754944e-38, %v1920
    %v1922 = vsel %vm1919, %v1921, %v1917
    %v1923 = vmul.f32 1.0, %v1922
    %v1924 = vrcp.pop %v1908
    %v1925 = vmul.f32 %v1908, %v1924
    %v1926 = vsub.f32 1.0, %v1925
    %v1927 = vmul.f32 %v1924, %v1926
    %v1928 = vadd.f32 %v1924, %v1927
    %vm1929 = vweird.f32 %v1908
    %vm1930 = vweird.f32 %v1924
    %vm1931 = vmor %vm1929, %vm1930
    %v1932 = vsel %vm1931, %v1924, %v1928
    %v1933 = vand.u32 2147483647, %v1908
    %vm1934 = vcmp.eq.f32.partialorder %v1933, 8.507059e+37
    %v1935 = vand.u32 %v1908, 2147483648
    %v1936 = vor.u32 1.1754944e-38, %v1935
    %v1937 = vsel %vm1934, %v1936, %v1932
    %v1938 = vmul.f32 1.0, %v1937
    %1939 = vrot.lane.b32.xlu0 %v1895, 80
    %v1940 = vpop.permute.xlu0 %1939
    %1941 = vrot.lane.b32.xlu0 %v1896, 80
    %v1942 = vpop.permute.xlu0 %1941
    %v1945 = vmul.f32 %v1923, %v1940
    %v1946 = vmul.f32 %v1938, %v1942
    %1949 = vrot.lane.b32.xlu0 %v1945, 48
    %v1950 = vpop.permute.xlu0 %1949
    %1951 = vrot.lane.b32.xlu0 %v1946, 48
    %v1952 = vpop.permute.xlu0 %1951
    %v1955 = vadd.f32 %v624, %v1950
    %v1956 = vadd.f32 %v627, %v1952
    %v1957 = vtanh.pop %v1955
    %v1958 = vtanh.pop %v1956
    %v1959 = vsub.f32 1.0, %v1923
    %v1960 = vsub.f32 1.0, %v1938
    %1963 = vrot.lane.b32.xlu0 %v1957, 104
    %v1964 = vpop.permute.xlu0 %1963
    %1965 = vrot.lane.b32.xlu0 %v1958, 104
    %v1966 = vpop.permute.xlu0 %1965
    %v1969 = vmul.f32 %v1959, %v1964
    %v1970 = vmul.f32 %v1960, %v1966
    %v1971 = vrot.slane %v1733, 7
    %v1972 = vrot.slane %v1734, 7
    %v1975 = vmul.f32 %v1923, %v1971
    %v1976 = vmul.f32 %v1938, %v1972
    %v1977 = vadd.f32 %v1969, %v1975
    %v1978 = vadd.f32 %v1970, %v1976
    %v1979 = vrot.slane %v1845, 3
    %v1980 = vrot.slane %v1846, 2
    %v1981 = vsel %vm889, %v1980, %v1979
    %1982 = vrot.lane.b32.xlu0 %v1981, 104
    %v1983 = vpop.permute.xlu0 %1982
    %v1984 = vsel %vm658, %v1983, 0
    %1986 = vmatpush.msra.mxu0 0.0
    %1987 = vmatpush.msra.mxu0 0.0
    %1988 = vmatpush.msra.mxu0 0.0
    %1989 = vmatpush.msra.mxu0 0.0
    %1990 = vmatpush.msra.mxu0 0.0
    %1991 = vmatpush.msra.mxu0 0.0
    %1992 = vmatpush.msra.mxu0 0.0
    %1993 = vmatpush.msra.mxu0 0.0
    %1994 = vmatpush.msra.mxu0 0.0
    %1995 = vmatpush.msra.mxu0 0.0
    %1996 = vmatpush.msra.mxu0 0.0
    %1997 = vmatpush.msra.mxu0 0.0
    %1998 = vmatpush.msra.mxu0 0.0
    %1999 = vmatpush.msra.mxu0 %v593
    %2000 = vmatpush.msra.mxu0 %v592
    %2001 = vmatpush.msra.mxu0 %v591
    %2002 = vmatmul.f32.gmra.mxu0 %v1984
    %v2003 = vpop.f32.mrf.mxu0
    %v2004 = vadd.f32 %v763, %v2003
    %2005 = vdwg.mxu0
    %v2007 = vrot.slane %v2004, 6
    %v2008 = vrot.slane %v2004, 7
    %v2011 = vadd.f32 %v650, %v2007
    %v2012 = vadd.f32 %v653, %v2008
    %v2013 = vxor.u32 %v2011, 2147483648
    %v2014 = vxor.u32 %v2012, 2147483648
    %v2015 = vmul.f32 %v2013, 1.442695
    %v2016 = vpow.pop %v2015
    %v2017 = vmul.f32 %v2014, 1.442695
    %v2018 = vpow.pop %v2017
    %v2019 = vadd.f32 %v2016, 1.0
    %v2020 = vadd.f32 %v2018, 1.0
    %v2021 = vrcp.pop %v2019
    %v2022 = vmul.f32 %v2019, %v2021
    %v2023 = vsub.f32 1.0, %v2022
    %v2024 = vmul.f32 %v2021, %v2023
    %v2025 = vadd.f32 %v2021, %v2024
    %vm2026 = vweird.f32 %v2019
    %vm2027 = vweird.f32 %v2021
    %vm2028 = vmor %vm2026, %vm2027
    %v2029 = vsel %vm2028, %v2021, %v2025
    %v2030 = vand.u32 2147483647, %v2019
    %vm2031 = vcmp.eq.f32.partialorder %v2030, 8.507059e+37
    %v2032 = vand.u32 %v2019, 2147483648
    %v2033 = vor.u32 1.1754944e-38, %v2032
    %v2034 = vsel %vm2031, %v2033, %v2029
    %v2035 = vmul.f32 1.0, %v2034
    %v2036 = vrcp.pop %v2020
    %v2037 = vmul.f32 %v2020, %v2036
    %v2038 = vsub.f32 1.0, %v2037
    %v2039 = vmul.f32 %v2036, %v2038
    %v2040 = vadd.f32 %v2036, %v2039
    %vm2041 = vweird.f32 %v2020
    %vm2042 = vweird.f32 %v2036
    %vm2043 = vmor %vm2041, %vm2042
    %v2044 = vsel %vm2043, %v2036, %v2040
    %v2045 = vand.u32 2147483647, %v2020
    %vm2046 = vcmp.eq.f32.partialorder %v2045, 8.507059e+37
    %v2047 = vand.u32 %v2020, 2147483648
    %v2048 = vor.u32 1.1754944e-38, %v2047
    %v2049 = vsel %vm2046, %v2048, %v2044
    %v2050 = vmul.f32 1.0, %v2049
    %2051 = vrot.lane.b32.xlu0 %v2007, 80
    %v2052 = vpop.permute.xlu0 %2051
    %2053 = vrot.lane.b32.xlu0 %v2008, 80
    %v2054 = vpop.permute.xlu0 %2053
    %v2057 = vmul.f32 %v2035, %v2052
    %v2058 = vmul.f32 %v2050, %v2054
    %2061 = vrot.lane.b32.xlu0 %v2057, 48
    %v2062 = vpop.permute.xlu0 %2061
    %2063 = vrot.lane.b32.xlu0 %v2058, 48
    %v2064 = vpop.permute.xlu0 %2063
    %v2067 = vadd.f32 %v650, %v2062
    %v2068 = vadd.f32 %v653, %v2064
    %v2069 = vtanh.pop %v2067
    %v2070 = vtanh.pop %v2068
    %v2071 = vsub.f32 1.0, %v2035
    %v2072 = vsub.f32 1.0, %v2050
    %2075 = vrot.lane.b32.xlu0 %v2069, 104
    %v2076 = vpop.permute.xlu0 %2075
    %2077 = vrot.lane.b32.xlu0 %v2070, 104
    %v2078 = vpop.permute.xlu0 %2077
    %v2081 = vmul.f32 %v2071, %v2076
    %v2082 = vmul.f32 %v2072, %v2078
    %v2083 = vrot.slane %v1845, 1
    %v2084 = vrot.slane %v1846, 1
    %v2087 = vmul.f32 %v2035, %v2083
    %v2088 = vmul.f32 %v2050, %v2084
    %v2089 = vadd.f32 %v2081, %v2087
    %v2090 = vadd.f32 %v2082, %v2088
    %2093 = vrot.lane.b32.xlu0 %v1977, 104
    %v2094 = vpop.permute.xlu0 %2093
    %2095 = vrot.lane.b32.xlu0 %v1978, 104
    %v2096 = vpop.permute.xlu0 %2095
    %2099 = vst.msk [vmem:[#allocation2] sm:$0x20] %vm1374, %v2094
    %2100 = vst.msk [vmem:[#allocation2 + $0x8] sm:$0x20] %vm1374, %v2096
    %2103 = vrot.lane.b32.xlu0 %v2089, 104
    %v2104 = vpop.permute.xlu0 %2103
    %2105 = vrot.lane.b32.xlu0 %v2090, 104
    %v2106 = vpop.permute.xlu0 %2105
    %2109 = vst.msk [vmem:[#allocation3] sm:$0x4] %vm1363, %v2104
    %2110 = vst.msk [vmem:[#allocation3 + $0x8] sm:$0x4] %vm1363, %v2106
    %v2111 = vrot.slane %v1977, 5
    %v2112 = vrot.slane %v1978, 4
    %v2113 = vsel %vm889, %v2112, %v2111
    %2114 = vrot.lane.b32.xlu0 %v2113, 104
    %v2115 = vpop.permute.xlu0 %2114
    %v2116 = vsel %vm658, %v2115, 0
    %2118 = vmatpush.msra.mxu0 0.0
    %2119 = vmatpush.msra.mxu0 0.0
    %2120 = vmatpush.msra.mxu0 0.0
    %2121 = vmatpush.msra.mxu0 0.0
    %2122 = vmatpush.msra.mxu0 0.0
    %2123 = vmatpush.msra.mxu0 0.0
    %2124 = vmatpush.msra.mxu0 0.0
    %2125 = vmatpush.msra.mxu0 0.0
    %2126 = vmatpush.msra.mxu0 0.0
    %2127 = vmatpush.msra.mxu0 0.0
    %2128 = vmatpush.msra.mxu0 0.0
    %2129 = vmatpush.msra.mxu0 0.0
    %2130 = vmatpush.msra.mxu0 0.0
    %2131 = vmatpush.msra.mxu0 %v587
    %2132 = vmatpush.msra.mxu0 %v586
    %2133 = vmatpush.msra.mxu0 %v585
    %2134 = vmatmul.f32.gmra.mxu0 %v2116
    %v2135 = vpop.f32.mrf.mxu0
    %v2136 = vadd.f32 %v656, %v2135
    %2137 = vdwg.mxu0
    %v2139 = vrot.slane %v2136, 2
    %v2140 = vrot.slane %v2136, 3
    %v2143 = vadd.f32 %v624, %v2139
    %v2144 = vadd.f32 %v627, %v2140
    %v2145 = vxor.u32 %v2143, 2147483648
    %v2146 = vxor.u32 %v2144, 2147483648
    %v2147 = vmul.f32 %v2145, 1.442695
    %v2148 = vpow.pop %v2147
    %v2149 = vmul.f32 %v2146, 1.442695
    %v2150 = vpow.pop %v2149
    %v2151 = vadd.f32 %v2148, 1.0
    %v2152 = vadd.f32 %v2150, 1.0
    %v2153 = vrcp.pop %v2151
    %v2154 = vmul.f32 %v2151, %v2153
    %v2155 = vsub.f32 1.0, %v2154
    %v2156 = vmul.f32 %v2153, %v2155
    %v2157 = vadd.f32 %v2153, %v2156
    %vm2158 = vweird.f32 %v2151
    %vm2159 = vweird.f32 %v2153
    %vm2160 = vmor %vm2158, %vm2159
    %v2161 = vsel %vm2160, %v2153, %v2157
    %v2162 = vand.u32 2147483647, %v2151
    %vm2163 = vcmp.eq.f32.partialorder %v2162, 8.507059e+37
    %v2164 = vand.u32 %v2151, 2147483648
    %v2165 = vor.u32 1.1754944e-38, %v2164
    %v2166 = vsel %vm2163, %v2165, %v2161
    %v2167 = vmul.f32 1.0, %v2166
    %v2168 = vrcp.pop %v2152
    %v2169 = vmul.f32 %v2152, %v2168
    %v2170 = vsub.f32 1.0, %v2169
    %v2171 = vmul.f32 %v2168, %v2170
    %v2172 = vadd.f32 %v2168, %v2171
    %vm2173 = vweird.f32 %v2152
    %vm2174 = vweird.f32 %v2168
    %vm2175 = vmor %vm2173, %vm2174
    %v2176 = vsel %vm2175, %v2168, %v2172
    %v2177 = vand.u32 2147483647, %v2152
    %vm2178 = vcmp.eq.f32.partialorder %v2177, 8.507059e+37
    %v2179 = vand.u32 %v2152, 2147483648
    %v2180 = vor.u32 1.1754944e-38, %v2179
    %v2181 = vsel %vm2178, %v2180, %v2176
    %v2182 = vmul.f32 1.0, %v2181
    %2183 = vrot.lane.b32.xlu0 %v2139, 80
    %v2184 = vpop.permute.xlu0 %2183
    %2185 = vrot.lane.b32.xlu0 %v2140, 80
    %v2186 = vpop.permute.xlu0 %2185
    %v2189 = vmul.f32 %v2167, %v2184
    %v2190 = vmul.f32 %v2182, %v2186
    %2193 = vrot.lane.b32.xlu0 %v2189, 48
    %v2194 = vpop.permute.xlu0 %2193
    %2195 = vrot.lane.b32.xlu0 %v2190, 48
    %v2196 = vpop.permute.xlu0 %2195
    %v2199 = vadd.f32 %v624, %v2194
    %v2200 = vadd.f32 %v627, %v2196
    %v2201 = vtanh.pop %v2199
    %v2202 = vtanh.pop %v2200
    %v2203 = vsub.f32 1.0, %v2167
    %v2204 = vsub.f32 1.0, %v2182
    %2207 = vrot.lane.b32.xlu0 %v2201, 104
    %v2208 = vpop.permute.xlu0 %2207
    %2209 = vrot.lane.b32.xlu0 %v2202, 104
    %v2210 = vpop.permute.xlu0 %2209
    %v2213 = vmul.f32 %v2203, %v2208
    %v2214 = vmul.f32 %v2204, %v2210
    %v2215 = vrot.slane %v1977, 7
    %v2216 = vrot.slane %v1978, 7
    %v2219 = vmul.f32 %v2167, %v2215
    %v2220 = vmul.f32 %v2182, %v2216
    %v2221 = vadd.f32 %v2213, %v2219
    %v2222 = vadd.f32 %v2214, %v2220
    %v2223 = vrot.slane %v2089, 2
    %v2224 = vrot.slane %v2090, 1
    %v2225 = vsel %vm889, %v2224, %v2223
    %2226 = vrot.lane.b32.xlu0 %v2225, 104
    %v2227 = vpop.permute.xlu0 %2226
    %v2228 = vsel %vm658, %v2227, 0
    %2230 = vmatpush.msra.mxu0 0.0
    %2231 = vmatpush.msra.mxu0 0.0
    %2232 = vmatpush.msra.mxu0 0.0
    %2233 = vmatpush.msra.mxu0 0.0
    %2234 = vmatpush.msra.mxu0 0.0
    %2235 = vmatpush.msra.mxu0 0.0
    %2236 = vmatpush.msra.mxu0 0.0
    %2237 = vmatpush.msra.mxu0 0.0
    %2238 = vmatpush.msra.mxu0 0.0
    %2239 = vmatpush.msra.mxu0 0.0
    %2240 = vmatpush.msra.mxu0 0.0
    %2241 = vmatpush.msra.mxu0 0.0
    %2242 = vmatpush.msra.mxu0 0.0
    %2243 = vmatpush.msra.mxu0 %v593
    %2244 = vmatpush.msra.mxu0 %v592
    %2245 = vmatpush.msra.mxu0 %v591
    %2246 = vmatmul.f32.gmra.mxu0 %v2228
    %v2247 = vpop.f32.mrf.mxu0
    %v2248 = vadd.f32 %v763, %v2247
    %2249 = vdwg.mxu0
    %v2251 = vrot.slane %v2248, 7
    %v2254 = vadd.f32 %v650, %v2251
    %v2255 = vadd.f32 %v653, %v2248
    %v2256 = vxor.u32 %v2254, 2147483648
    %v2257 = vxor.u32 %v2255, 2147483648
    %v2258 = vmul.f32 %v2256, 1.442695
    %v2259 = vpow.pop %v2258
    %v2260 = vmul.f32 %v2257, 1.442695
    %v2261 = vpow.pop %v2260
    %v2262 = vadd.f32 %v2259, 1.0
    %v2263 = vadd.f32 %v2261, 1.0
    %v2264 = vrcp.pop %v2262
    %v2265 = vmul.f32 %v2262, %v2264
    %v2266 = vsub.f32 1.0, %v2265
    %v2267 = vmul.f32 %v2264, %v2266
    %v2268 = vadd.f32 %v2264, %v2267
    %vm2269 = vweird.f32 %v2262
    %vm2270 = vweird.f32 %v2264
    %vm2271 = vmor %vm2269, %vm2270
    %v2272 = vsel %vm2271, %v2264, %v2268
    %v2273 = vand.u32 2147483647, %v2262
    %vm2274 = vcmp.eq.f32.partialorder %v2273, 8.507059e+37
    %v2275 = vand.u32 %v2262, 2147483648
    %v2276 = vor.u32 1.1754944e-38, %v2275
    %v2277 = vsel %vm2274, %v2276, %v2272
    %v2278 = vmul.f32 1.0, %v2277
    %v2279 = vrcp.pop %v2263
    %v2280 = vmul.f32 %v2263, %v2279
    %v2281 = vsub.f32 1.0, %v2280
    %v2282 = vmul.f32 %v2279, %v2281
    %v2283 = vadd.f32 %v2279, %v2282
    %vm2284 = vweird.f32 %v2263
    %vm2285 = vweird.f32 %v2279
    %vm2286 = vmor %vm2284, %vm2285
    %v2287 = vsel %vm2286, %v2279, %v2283
    %v2288 = vand.u32 2147483647, %v2263
    %vm2289 = vcmp.eq.f32.partialorder %v2288, 8.507059e+37
    %v2290 = vand.u32 %v2263, 2147483648
    %v2291 = vor.u32 1.1754944e-38, %v2290
    %v2292 = vsel %vm2289, %v2291, %v2287
    %v2293 = vmul.f32 1.0, %v2292
    %2294 = vrot.lane.b32.xlu0 %v2251, 80
    %v2295 = vpop.permute.xlu0 %2294
    %2296 = vrot.lane.b32.xlu0 %v2248, 80
    %v2297 = vpop.permute.xlu0 %2296
    %v2300 = vmul.f32 %v2278, %v2295
    %v2301 = vmul.f32 %v2293, %v2297
    %2304 = vrot.lane.b32.xlu0 %v2300, 48
    %v2305 = vpop.permute.xlu0 %2304
    %2306 = vrot.lane.b32.xlu0 %v2301, 48
    %v2307 = vpop.permute.xlu0 %2306
    %v2310 = vadd.f32 %v650, %v2305
    %v2311 = vadd.f32 %v653, %v2307
    %v2312 = vtanh.pop %v2310
    %v2313 = vtanh.pop %v2311
    %v2314 = vsub.f32 1.0, %v2278
    %v2315 = vsub.f32 1.0, %v2293
    %2318 = vrot.lane.b32.xlu0 %v2312, 104
    %v2319 = vpop.permute.xlu0 %2318
    %2320 = vrot.lane.b32.xlu0 %v2313, 104
    %v2321 = vpop.permute.xlu0 %2320
    %v2324 = vmul.f32 %v2314, %v2319
    %v2325 = vmul.f32 %v2315, %v2321
    %v2326 = vrot.slane %v2089, 1
    %v2329 = vmul.f32 %v2278, %v2326
    %v2330 = vmul.f32 %v2293, %v2224
    %v2331 = vadd.f32 %v2324, %v2329
    %v2332 = vadd.f32 %v2325, %v2330
    %2335 = vrot.lane.b32.xlu0 %v2221, 104
    %v2336 = vpop.permute.xlu0 %2335
    %2337 = vrot.lane.b32.xlu0 %v2222, 104
    %v2338 = vpop.permute.xlu0 %2337
    %2341 = vst.msk [vmem:[#allocation2] sm:$0x40] %vm1129, %v2336
    %2342 = vst.msk [vmem:[#allocation2 + $0x8] sm:$0x40] %vm1129, %v2338
    %2345 = vrot.lane.b32.xlu0 %v2331, 104
    %v2346 = vpop.permute.xlu0 %2345
    %2347 = vrot.lane.b32.xlu0 %v2332, 104
    %v2348 = vpop.permute.xlu0 %2347
    %2351 = vst.msk [vmem:[#allocation3] sm:$0x2] %vm1118, %v2346
    %2352 = vst.msk [vmem:[#allocation3 + $0x8] sm:$0x2] %vm1118, %v2348
    %v2353 = vrot.slane %v2221, 6
    %v2354 = vrot.slane %v2222, 5
    %v2355 = vsel %vm889, %v2354, %v2353
    %2356 = vrot.lane.b32.xlu0 %v2355, 104
    %v2357 = vpop.permute.xlu0 %2356
    %v2358 = vsel %vm658, %v2357, 0
    %2360 = vmatpush.msra.mxu0 0.0
    %2361 = vmatpush.msra.mxu0 0.0
    %2362 = vmatpush.msra.mxu0 0.0
    %2363 = vmatpush.msra.mxu0 0.0
    %2364 = vmatpush.msra.mxu0 0.0
    %2365 = vmatpush.msra.mxu0 0.0
    %2366 = vmatpush.msra.mxu0 0.0
    %2367 = vmatpush.msra.mxu0 0.0
    %2368 = vmatpush.msra.mxu0 0.0
    %2369 = vmatpush.msra.mxu0 0.0
    %2370 = vmatpush.msra.mxu0 0.0
    %2371 = vmatpush.msra.mxu0 0.0
    %2372 = vmatpush.msra.mxu0 0.0
    %2373 = vmatpush.msra.mxu0 %v587
    %2374 = vmatpush.msra.mxu0 %v586
    %2375 = vmatpush.msra.mxu0 %v585
    %2376 = vmatmul.f32.gmra.mxu0 %v2358
    %v2377 = vpop.f32.mrf.mxu0
    %v2378 = vadd.f32 %v656, %v2377
    %2379 = vdwg.mxu0
    %v2381 = vrot.slane %v2378, 1
    %v2382 = vrot.slane %v2378, 2
    %v2385 = vadd.f32 %v624, %v2381
    %v2386 = vadd.f32 %v627, %v2382
    %v2387 = vxor.u32 %v2385, 2147483648
    %v2388 = vxor.u32 %v2386, 2147483648
    %v2389 = vmul.f32 %v2387, 1.442695
    %v2390 = vpow.pop %v2389
    %v2391 = vmul.f32 %v2388, 1.442695
    %v2392 = vpow.pop %v2391
    %v2393 = vadd.f32 %v2390, 1.0
    %v2394 = vadd.f32 %v2392, 1.0
    %v2395 = vrcp.pop %v2393
    %v2396 = vmul.f32 %v2393, %v2395
    %v2397 = vsub.f32 1.0, %v2396
    %v2398 = vmul.f32 %v2395, %v2397
    %v2399 = vadd.f32 %v2395, %v2398
    %vm2400 = vweird.f32 %v2393
    %vm2401 = vweird.f32 %v2395
    %vm2402 = vmor %vm2400, %vm2401
    %v2403 = vsel %vm2402, %v2395, %v2399
    %v2404 = vand.u32 2147483647, %v2393
    %vm2405 = vcmp.eq.f32.partialorder %v2404, 8.507059e+37
    %v2406 = vand.u32 %v2393, 2147483648
    %v2407 = vor.u32 1.1754944e-38, %v2406
    %v2408 = vsel %vm2405, %v2407, %v2403
    %v2409 = vmul.f32 1.0, %v2408
    %v2410 = vrcp.pop %v2394
    %v2411 = vmul.f32 %v2394, %v2410
    %v2412 = vsub.f32 1.0, %v2411
    %v2413 = vmul.f32 %v2410, %v2412
    %v2414 = vadd.f32 %v2410, %v2413
    %vm2415 = vweird.f32 %v2394
    %vm2416 = vweird.f32 %v2410
    %vm2417 = vmor %vm2415, %vm2416
    %v2418 = vsel %vm2417, %v2410, %v2414
    %v2419 = vand.u32 2147483647, %v2394
    %vm2420 = vcmp.eq.f32.partialorder %v2419, 8.507059e+37
    %v2421 = vand.u32 %v2394, 2147483648
    %v2422 = vor.u32 1.1754944e-38, %v2421
    %v2423 = vsel %vm2420, %v2422, %v2418
    %v2424 = vmul.f32 1.0, %v2423
    %2425 = vrot.lane.b32.xlu0 %v2381, 80
    %v2426 = vpop.permute.xlu0 %2425
    %2427 = vrot.lane.b32.xlu0 %v2382, 80
    %v2428 = vpop.permute.xlu0 %2427
    %v2431 = vmul.f32 %v2409, %v2426
    %v2432 = vmul.f32 %v2424, %v2428
    %2435 = vrot.lane.b32.xlu0 %v2431, 48
    %v2436 = vpop.permute.xlu0 %2435
    %2437 = vrot.lane.b32.xlu0 %v2432, 48
    %v2438 = vpop.permute.xlu0 %2437
    %v2441 = vadd.f32 %v624, %v2436
    %v2442 = vadd.f32 %v627, %v2438
    %v2443 = vtanh.pop %v2441
    %v2444 = vtanh.pop %v2442
    %v2445 = vsub.f32 1.0, %v2409
    %v2446 = vsub.f32 1.0, %v2424
    %2449 = vrot.lane.b32.xlu0 %v2443, 104
    %v2450 = vpop.permute.xlu0 %2449
    %2451 = vrot.lane.b32.xlu0 %v2444, 104
    %v2452 = vpop.permute.xlu0 %2451
    %v2455 = vmul.f32 %v2445, %v2450
    %v2456 = vmul.f32 %v2446, %v2452
    %v2457 = vrot.slane %v2221, 7
    %v2458 = vrot.slane %v2222, 7
    %v2461 = vmul.f32 %v2409, %v2457
    %v2462 = vmul.f32 %v2424, %v2458
    %v2463 = vadd.f32 %v2455, %v2461
    %v2464 = vadd.f32 %v2456, %v2462
    %v2465 = vrot.slane %v2331, 1
    %v2466 = vsel %vm889, %v2332, %v2465
    %2467 = vrot.lane.b32.xlu0 %v2466, 104
    %v2468 = vpop.permute.xlu0 %2467
    %v2469 = vsel %vm658, %v2468, 0
    %2471 = vmatpush.msra.mxu0 0.0
    %2472 = vmatpush.msra.mxu0 0.0
    %2473 = vmatpush.msra.mxu0 0.0
    %2474 = vmatpush.msra.mxu0 0.0
    %2475 = vmatpush.msra.mxu0 0.0
    %2476 = vmatpush.msra.mxu0 0.0
    %2477 = vmatpush.msra.mxu0 0.0
    %2478 = vmatpush.msra.mxu0 0.0
    %2479 = vmatpush.msra.mxu0 0.0
    %2480 = vmatpush.msra.mxu0 0.0
    %2481 = vmatpush.msra.mxu0 0.0
    %2482 = vmatpush.msra.mxu0 0.0
    %2483 = vmatpush.msra.mxu0 0.0
    %2484 = vmatpush.msra.mxu0 %v593
    %2485 = vmatpush.msra.mxu0 %v592
    %2486 = vmatpush.msra.mxu0 %v591
    %2487 = vmatmul.f32.gmra.mxu0 %v2469
    %v2488 = vpop.f32.mrf.mxu0
    %v2489 = vadd.f32 %v763, %v2488
    %2490 = vdwg.mxu0
    %v2492 = vrot.slane %v2489, 1
    %v2495 = vadd.f32 %v650, %v2489
    %v2496 = vadd.f32 %v653, %v2492
    %v2497 = vxor.u32 %v2495, 2147483648
    %v2498 = vxor.u32 %v2496, 2147483648
    %v2499 = vmul.f32 %v2497, 1.442695
    %v2500 = vpow.pop %v2499
    %v2501 = vmul.f32 %v2498, 1.442695
    %v2502 = vpow.pop %v2501
    %v2503 = vadd.f32 %v2500, 1.0
    %v2504 = vadd.f32 %v2502, 1.0
    %v2505 = vrcp.pop %v2503
    %v2506 = vmul.f32 %v2503, %v2505
    %v2507 = vsub.f32 1.0, %v2506
    %v2508 = vmul.f32 %v2505, %v2507
    %v2509 = vadd.f32 %v2505, %v2508
    %vm2510 = vweird.f32 %v2503
    %vm2511 = vweird.f32 %v2505
    %vm2512 = vmor %vm2510, %vm2511
    %v2513 = vsel %vm2512, %v2505, %v2509
    %v2514 = vand.u32 2147483647, %v2503
    %vm2515 = vcmp.eq.f32.partialorder %v2514, 8.507059e+37
    %v2516 = vand.u32 %v2503, 2147483648
    %v2517 = vor.u32 1.1754944e-38, %v2516
    %v2518 = vsel %vm2515, %v2517, %v2513
    %v2519 = vmul.f32 1.0, %v2518
    %v2520 = vrcp.pop %v2504
    %v2521 = vmul.f32 %v2504, %v2520
    %v2522 = vsub.f32 1.0, %v2521
    %v2523 = vmul.f32 %v2520, %v2522
    %v2524 = vadd.f32 %v2520, %v2523
    %vm2525 = vweird.f32 %v2504
    %vm2526 = vweird.f32 %v2520
    %vm2527 = vmor %vm2525, %vm2526
    %v2528 = vsel %vm2527, %v2520, %v2524
    %v2529 = vand.u32 2147483647, %v2504
    %vm2530 = vcmp.eq.f32.partialorder %v2529, 8.507059e+37
    %v2531 = vand.u32 %v2504, 2147483648
    %v2532 = vor.u32 1.1754944e-38, %v2531
    %v2533 = vsel %vm2530, %v2532, %v2528
    %v2534 = vmul.f32 1.0, %v2533
    %2535 = vrot.lane.b32.xlu0 %v2489, 80
    %v2536 = vpop.permute.xlu0 %2535
    %2537 = vrot.lane.b32.xlu0 %v2492, 80
    %v2538 = vpop.permute.xlu0 %2537
    %v2541 = vmul.f32 %v2519, %v2536
    %v2542 = vmul.f32 %v2534, %v2538
    %2545 = vrot.lane.b32.xlu0 %v2541, 48
    %v2546 = vpop.permute.xlu0 %2545
    %2547 = vrot.lane.b32.xlu0 %v2542, 48
    %v2548 = vpop.permute.xlu0 %2547
    %v2551 = vadd.f32 %v650, %v2546
    %v2552 = vadd.f32 %v653, %v2548
    %v2553 = vtanh.pop %v2551
    %v2554 = vtanh.pop %v2552
    %v2555 = vsub.f32 1.0, %v2519
    %v2556 = vsub.f32 1.0, %v2534
    %2559 = vrot.lane.b32.xlu0 %v2553, 104
    %v2560 = vpop.permute.xlu0 %2559
    %2561 = vrot.lane.b32.xlu0 %v2554, 104
    %v2562 = vpop.permute.xlu0 %2561
    %v2565 = vmul.f32 %v2555, %v2560
    %v2566 = vmul.f32 %v2556, %v2562
    %v2567 = vrot.slane %v2332, 1
    %v2570 = vmul.f32 %v2519, %v2465
    %v2571 = vmul.f32 %v2534, %v2567
    %v2572 = vadd.f32 %v2565, %v2570
    %v2573 = vadd.f32 %v2566, %v2571
    %2576 = vrot.lane.b32.xlu0 %v2463, 104
    %v2577 = vpop.permute.xlu0 %2576
    %2578 = vrot.lane.b32.xlu0 %v2464, 104
    %v2579 = vpop.permute.xlu0 %2578
    %2582 = vst.msk [vmem:[#allocation2] sm:$0x80] %vm885, %v2577
    %2583 = vst.msk [vmem:[#allocation2 + $0x8] sm:$0x80] %vm885, %v2579
    %2586 = vrot.lane.b32.xlu0 %v2572, 104
    %v2587 = vpop.permute.xlu0 %2586
    %2588 = vrot.lane.b32.xlu0 %v2573, 104
    %v2589 = vpop.permute.xlu0 %2588
    %2592 = vst.msk [vmem:[#allocation3] sm:$0x1] %vm874, %v2587
    %2593 = vst.msk [vmem:[#allocation3 + $0x8] sm:$0x1] %vm874, %v2589
    %v2594 = vld [vmem:[%s39] sm:$0xff]
    %v2595 = vld [vmem:[%s39 + $0x8] sm:$0xff]
    %v2596 = vld [vmem:[%s39 + $0x10] sm:$0xff]
    %v2597 = vld [vmem:[%s39 + $0x18] sm:$0xff]
    %v2598 = vld [vmem:[%s39 + $0x20] sm:$0xff]
    %v2599 = vld [vmem:[%s39 + $0x28] sm:$0xff]
    %v2600 = vld [vmem:[#allocation18] sm:$0xff]
    %v2601 = vld [vmem:[#allocation18 + $0x8] sm:$0xff]
    %v2602 = vld [vmem:[#allocation18 + $0x10] sm:$0xff]
    %v2603 = vld [vmem:[#allocation20] sm:$0x1]
    %v2604 = vld [vmem:[#allocation21] sm:$0x1]
    %v2605 = vld [vmem:[%s47] sm:$0xff]
    %v2606 = vld [vmem:[%s47 + $0x8] sm:$0xff]
    %v2607 = vld [vmem:[%s47 + $0x10] sm:$0xff]
    %v2608 = vld [vmem:[%s47 + $0x18] sm:$0xff]
    %v2609 = vld [vmem:[%s47 + $0x20] sm:$0xff]
    %v2610 = vld [vmem:[%s47 + $0x28] sm:$0xff]
    %v2611 = vld [vmem:[#allocation23] sm:$0xff]
    %v2612 = vld [vmem:[#allocation23 + $0x8] sm:$0xff]
    %v2613 = vld [vmem:[#allocation23 + $0x10] sm:$0xff]
    %v2614 = vld [vmem:[#allocation24] sm:$0x1]
    %v2615 = vld [vmem:[#allocation26] sm:$0x1]
    %v2616 = vld [vmem:[#allocation2] sm:$0xff]
    %v2617 = vld [vmem:[#allocation2 + $0x8] sm:$0xff]
    %v2618 = vld [vmem:[#allocation3] sm:$0xff]
    %v2619 = vld [vmem:[#allocation3 + $0x8] sm:$0xff]
    %v2621 = vsel %vm658, %v2618, 0
    %v2624 = vsel %vm658, %v2619, 0
    %2626 = vmatpush.msra.mxu0 0.0
    %2627 = vmatpush.msra.mxu0 0.0
    %2628 = vmatpush.msra.mxu0 0.0
    %2629 = vmatpush.msra.mxu0 0.0
    %2630 = vmatpush.msra.mxu0 0.0
    %2631 = vmatpush.msra.mxu0 0.0
    %2632 = vmatpush.msra.mxu0 0.0
    %2633 = vmatpush.msra.mxu0 0.0
    %2634 = vmatpush.msra.mxu0 0.0
    %2635 = vmatpush.msra.mxu0 0.0
    %2636 = vmatpush.msra.mxu0 0.0
    %2637 = vmatpush.msra.mxu0 0.0
    %2638 = vmatpush.msra.mxu0 0.0
    %2639 = vmatpush.msra.mxu0 %v2599
    %2640 = vmatpush.msra.mxu0 %v2598
    %2641 = vmatpush.msra.mxu0 %v2597
    %2642 = vmatmul.f32.gmra.mxu0 %v2621
    %v2643 = vpop.f32.mrf.mxu0
    %v2644 = vadd.f32 0.0, %v2643
    %2645 = vmatmul.f32.gmra.mxu0 %v2624
    %v2646 = vpop.f32.mrf.mxu0
    %v2647 = vadd.f32 0.0, %v2646
    %2648 = vdwg.mxu0
    %v2650 = vsel %vm658, %v2616, 0
    %v2653 = vsel %vm658, %v2617, 0
    %2655 = vmatpush.msra.mxu0 0.0
    %2656 = vmatpush.msra.mxu0 0.0
    %2657 = vmatpush.msra.mxu0 0.0
    %2658 = vmatpush.msra.mxu0 0.0
    %2659 = vmatpush.msra.mxu0 0.0
    %2660 = vmatpush.msra.mxu0 0.0
    %2661 = vmatpush.msra.mxu0 0.0
    %2662 = vmatpush.msra.mxu0 0.0
    %2663 = vmatpush.msra.mxu0 0.0
    %2664 = vmatpush.msra.mxu0 0.0
    %2665 = vmatpush.msra.mxu0 0.0
    %2666 = vmatpush.msra.mxu0 0.0
    %2667 = vmatpush.msra.mxu0 0.0
    %2668 = vmatpush.msra.mxu0 %v2596
    %2669 = vmatpush.msra.mxu0 %v2595
    %2670 = vmatpush.msra.mxu0 %v2594
    %2671 = vmatmul.f32.gmra.mxu0 %v2650
    %v2672 = vpop.f32.mrf.mxu0
    %v2673 = vadd.f32 %v2644, %v2672
    %2674 = vmatmul.f32.gmra.mxu0 %v2653
    %v2675 = vpop.f32.mrf.mxu0
    %v2676 = vadd.f32 %v2647, %v2675
    %2677 = vdwg.mxu0
    %v2679 = vperm.slane %v2603, 0
    %v2681 = vadd.f32 %v2673, %v2679
    %v2682 = vadd.f32 %v2676, %v2679
    %2683 = vmatpush.msra.mxu0 0.0
    %2684 = vmatpush.msra.mxu0 0.0
    %2685 = vmatpush.msra.mxu0 0.0
    %2686 = vmatpush.msra.mxu0 0.0
    %2687 = vmatpush.msra.mxu0 0.0
    %2688 = vmatpush.msra.mxu0 0.0
    %2689 = vmatpush.msra.mxu0 0.0
    %2690 = vmatpush.msra.mxu0 0.0
    %2691 = vmatpush.msra.mxu0 0.0
    %2692 = vmatpush.msra.mxu0 0.0
    %2693 = vmatpush.msra.mxu0 0.0
    %2694 = vmatpush.msra.mxu0 0.0
    %2695 = vmatpush.msra.mxu0 0.0
    %2696 = vmatpush.msra.mxu0 %v2610
    %2697 = vmatpush.msra.mxu0 %v2609
    %2698 = vmatpush.msra.mxu0 %v2608
    %2699 = vmatmul.f32.gmra.mxu0 %v2621
    %v2700 = vpop.f32.mrf.mxu0
    %v2701 = vadd.f32 0.0, %v2700
    %2702 = vmatmul.f32.gmra.mxu0 %v2624
    %v2703 = vpop.f32.mrf.mxu0
    %v2704 = vadd.f32 0.0, %v2703
    %2705 = vdwg.mxu0
    %2706 = vmatpush.msra.mxu0 0.0
    %2707 = vmatpush.msra.mxu0 0.0
    %2708 = vmatpush.msra.mxu0 0.0
    %2709 = vmatpush.msra.mxu0 0.0
    %2710 = vmatpush.msra.mxu0 0.0
    %2711 = vmatpush.msra.mxu0 0.0
    %2712 = vmatpush.msra.mxu0 0.0
    %2713 = vmatpush.msra.mxu0 0.0
    %2714 = vmatpush.msra.mxu0 0.0
    %2715 = vmatpush.msra.mxu0 0.0
    %2716 = vmatpush.msra.mxu0 0.0
    %2717 = vmatpush.msra.mxu0 0.0
    %2718 = vmatpush.msra.mxu0 0.0
    %2719 = vmatpush.msra.mxu0 %v2607
    %2720 = vmatpush.msra.mxu0 %v2606
    %2721 = vmatpush.msra.mxu0 %v2605
    %2722 = vmatmul.f32.gmra.mxu0 %v2650
    %v2723 = vpop.f32.mrf.mxu0
    %v2724 = vadd.f32 %v2701, %v2723
    %2725 = vmatmul.f32.gmra.mxu0 %v2653
    %v2726 = vpop.f32.mrf.mxu0
    %v2727 = vadd.f32 %v2704, %v2726
    %2728 = vdwg.mxu0
    %v2730 = vperm.slane %v2614, 0
    %v2732 = vadd.f32 %v2724, %v2730
    %v2733 = vadd.f32 %v2727, %v2730
    %v2735 = vperm.slane %v2604, 0
    %2737 = vmatpush.msra.mxu0 0.0
    %2738 = vmatpush.msra.mxu0 0.0
    %2739 = vmatpush.msra.mxu0 0.0
    %2740 = vmatpush.msra.mxu0 0.0
    %2741 = vmatpush.msra.mxu0 0.0
    %2742 = vmatpush.msra.mxu0 0.0
    %2743 = vmatpush.msra.mxu0 0.0
    %2744 = vmatpush.msra.mxu0 0.0
    %2745 = vmatpush.msra.mxu0 0.0
    %2746 = vmatpush.msra.mxu0 0.0
    %2747 = vmatpush.msra.mxu0 0.0
    %2748 = vmatpush.msra.mxu0 0.0
    %2749 = vmatpush.msra.mxu0 0.0
    %2750 = vmatpush.msra.mxu0 %v2602
    %2751 = vmatpush.msra.mxu0 %v2601
    %2752 = vmatpush.msra.mxu0 %v2600
    %2753 = vmatmul.f32.gmra.mxu0 %v660
    %v2754 = vpop.f32.mrf.mxu0
    %v2755 = vadd.f32 %v2735, %v2754
    %2756 = vdwg.mxu0
    %v2758 = vrot.slane %v2755, 1
    %v2761 = vadd.f32 %v2681, %v2755
    %v2762 = vadd.f32 %v2682, %v2758
    %v2763 = vxor.u32 %v2761, 2147483648
    %v2764 = vxor.u32 %v2762, 2147483648
    %v2765 = vmul.f32 %v2763, 1.442695
    %v2766 = vpow.pop %v2765
    %v2767 = vmul.f32 %v2764, 1.442695
    %v2768 = vpow.pop %v2767
    %v2769 = vadd.f32 %v2766, 1.0
    %v2770 = vadd.f32 %v2768, 1.0
    %v2771 = vrcp.pop %v2769
    %v2772 = vmul.f32 %v2769, %v2771
    %v2773 = vsub.f32 1.0, %v2772
    %v2774 = vmul.f32 %v2771, %v2773
    %v2775 = vadd.f32 %v2771, %v2774
    %vm2776 = vweird.f32 %v2769
    %vm2777 = vweird.f32 %v2771
    %vm2778 = vmor %vm2776, %vm2777
    %v2779 = vsel %vm2778, %v2771, %v2775
    %v2780 = vand.u32 2147483647, %v2769
    %vm2781 = vcmp.eq.f32.partialorder %v2780, 8.507059e+37
    %v2782 = vand.u32 %v2769, 2147483648
    %v2783 = vor.u32 1.1754944e-38, %v2782
    %v2784 = vsel %vm2781, %v2783, %v2779
    %v2785 = vmul.f32 1.0, %v2784
    %v2786 = vrcp.pop %v2770
    %v2787 = vmul.f32 %v2770, %v2786
    %v2788 = vsub.f32 1.0, %v2787
    %v2789 = vmul.f32 %v2786, %v2788
    %v2790 = vadd.f32 %v2786, %v2789
    %vm2791 = vweird.f32 %v2770
    %vm2792 = vweird.f32 %v2786
    %vm2793 = vmor %vm2791, %vm2792
    %v2794 = vsel %vm2793, %v2786, %v2790
    %v2795 = vand.u32 2147483647, %v2770
    %vm2796 = vcmp.eq.f32.partialorder %v2795, 8.507059e+37
    %v2797 = vand.u32 %v2770, 2147483648
    %v2798 = vor.u32 1.1754944e-38, %v2797
    %v2799 = vsel %vm2796, %v2798, %v2794
    %v2800 = vmul.f32 1.0, %v2799
    %2801 = vrot.lane.b32.xlu0 %v2755, 80
    %v2802 = vpop.permute.xlu0 %2801
    %2803 = vrot.lane.b32.xlu0 %v2758, 80
    %v2804 = vpop.permute.xlu0 %2803
    %v2807 = vmul.f32 %v2785, %v2802
    %v2808 = vmul.f32 %v2800, %v2804
    %2811 = vrot.lane.b32.xlu0 %v2807, 48
    %v2812 = vpop.permute.xlu0 %2811
    %2813 = vrot.lane.b32.xlu0 %v2808, 48
    %v2814 = vpop.permute.xlu0 %2813
    %v2817 = vadd.f32 %v2681, %v2812
    %v2818 = vadd.f32 %v2682, %v2814
    %v2819 = vtanh.pop %v2817
    %v2820 = vtanh.pop %v2818
    %v2821 = vsub.f32 1.0, %v2785
    %v2822 = vsub.f32 1.0, %v2800
    %2825 = vrot.lane.b32.xlu0 %v2819, 104
    %v2826 = vpop.permute.xlu0 %2825
    %2827 = vrot.lane.b32.xlu0 %v2820, 104
    %v2828 = vpop.permute.xlu0 %2827
    %v2831 = vmul.f32 %v2821, %v2826
    %v2832 = vmul.f32 %v2822, %v2828
    %v2833 = vmul.f32 %v2785, 0.0
    %v2834 = vmul.f32 %v2800, 0.0
    %v2835 = vadd.f32 %v2831, %v2833
    %v2836 = vadd.f32 %v2832, %v2834
    %v2838 = vperm.slane %v2615, 0
    %2840 = vmatpush.msra.mxu0 0.0
    %2841 = vmatpush.msra.mxu0 0.0
    %2842 = vmatpush.msra.mxu0 0.0
    %2843 = vmatpush.msra.mxu0 0.0
    %2844 = vmatpush.msra.mxu0 0.0
    %2845 = vmatpush.msra.mxu0 0.0
    %2846 = vmatpush.msra.mxu0 0.0
    %2847 = vmatpush.msra.mxu0 0.0
    %2848 = vmatpush.msra.mxu0 0.0
    %2849 = vmatpush.msra.mxu0 0.0
    %2850 = vmatpush.msra.mxu0 0.0
    %2851 = vmatpush.msra.mxu0 0.0
    %2852 = vmatpush.msra.mxu0 0.0
    %2853 = vmatpush.msra.mxu0 %v2613
    %2854 = vmatpush.msra.mxu0 %v2612
    %2855 = vmatpush.msra.mxu0 %v2611
    %2856 = vmatmul.f32.gmra.mxu0 %v660
    %v2857 = vpop.f32.mrf.mxu0
    %v2858 = vadd.f32 %v2838, %v2857
    %2859 = vdwg.mxu0
    %v2861 = vrot.slane %v2858, 1
    %v2862 = vrot.slane %v2858, 2
    %v2865 = vadd.f32 %v2732, %v2861
    %v2866 = vadd.f32 %v2733, %v2862
    %v2867 = vxor.u32 %v2865, 2147483648
    %v2868 = vxor.u32 %v2866, 2147483648
    %v2869 = vmul.f32 %v2867, 1.442695
    %v2870 = vpow.pop %v2869
    %v2871 = vmul.f32 %v2868, 1.442695
    %v2872 = vpow.pop %v2871
    %v2873 = vadd.f32 %v2870, 1.0
    %v2874 = vadd.f32 %v2872, 1.0
    %v2875 = vrcp.pop %v2873
    %v2876 = vmul.f32 %v2873, %v2875
    %v2877 = vsub.f32 1.0, %v2876
    %v2878 = vmul.f32 %v2875, %v2877
    %v2879 = vadd.f32 %v2875, %v2878
    %vm2880 = vweird.f32 %v2873
    %vm2881 = vweird.f32 %v2875
    %vm2882 = vmor %vm2880, %vm2881
    %v2883 = vsel %vm2882, %v2875, %v2879
    %v2884 = vand.u32 2147483647, %v2873
    %vm2885 = vcmp.eq.f32.partialorder %v2884, 8.507059e+37
    %v2886 = vand.u32 %v2873, 2147483648
    %v2887 = vor.u32 1.1754944e-38, %v2886
    %v2888 = vsel %vm2885, %v2887, %v2883
    %v2889 = vmul.f32 1.0, %v2888
    %v2890 = vrcp.pop %v2874
    %v2891 = vmul.f32 %v2874, %v2890
    %v2892 = vsub.f32 1.0, %v2891
    %v2893 = vmul.f32 %v2890, %v2892
    %v2894 = vadd.f32 %v2890, %v2893
    %vm2895 = vweird.f32 %v2874
    %vm2896 = vweird.f32 %v2890
    %vm2897 = vmor %vm2895, %vm2896
    %v2898 = vsel %vm2897, %v2890, %v2894
    %v2899 = vand.u32 2147483647, %v2874
    %vm2900 = vcmp.eq.f32.partialorder %v2899, 8.507059e+37
    %v2901 = vand.u32 %v2874, 2147483648
    %v2902 = vor.u32 1.1754944e-38, %v2901
    %v2903 = vsel %vm2900, %v2902, %v2898
    %v2904 = vmul.f32 1.0, %v2903
    %2905 = vrot.lane.b32.xlu0 %v2861, 80
    %v2906 = vpop.permute.xlu0 %2905
    %2907 = vrot.lane.b32.xlu0 %v2862, 80
    %v2908 = vpop.permute.xlu0 %2907
    %v2911 = vmul.f32 %v2889, %v2906
    %v2912 = vmul.f32 %v2904, %v2908
    %2915 = vrot.lane.b32.xlu0 %v2911, 48
    %v2916 = vpop.permute.xlu0 %2915
    %2917 = vrot.lane.b32.xlu0 %v2912, 48
    %v2918 = vpop.permute.xlu0 %2917
    %v2921 = vadd.f32 %v2732, %v2916
    %v2922 = vadd.f32 %v2733, %v2918
    %v2923 = vtanh.pop %v2921
    %v2924 = vtanh.pop %v2922
    %v2925 = vsub.f32 1.0, %v2889
    %v2926 = vsub.f32 1.0, %v2904
    %2929 = vrot.lane.b32.xlu0 %v2923, 104
    %v2930 = vpop.permute.xlu0 %2929
    %2931 = vrot.lane.b32.xlu0 %v2924, 104
    %v2932 = vpop.permute.xlu0 %2931
    %v2935 = vmul.f32 %v2925, %v2930
    %v2936 = vmul.f32 %v2926, %v2932
    %v2937 = vmul.f32 %v2889, 0.0
    %v2938 = vmul.f32 %v2904, 0.0
    %v2939 = vadd.f32 %v2935, %v2937
    %v2940 = vadd.f32 %v2936, %v2938
    %2943 = vrot.lane.b32.xlu0 %v2835, 104
    %v2944 = vpop.permute.xlu0 %2943
    %2945 = vrot.lane.b32.xlu0 %v2836, 104
    %v2946 = vpop.permute.xlu0 %2945
    %2949 = vst.msk [vmem:[#allocation4] sm:$0x1] %vm874, %v2944
    %2950 = vst.msk [vmem:[#allocation4 + $0x8] sm:$0x1] %vm874, %v2946
    %2953 = vrot.lane.b32.xlu0 %v2939, 104
    %v2954 = vpop.permute.xlu0 %2953
    %2955 = vrot.lane.b32.xlu0 %v2940, 104
    %v2956 = vpop.permute.xlu0 %2955
    %2959 = vst.msk [vmem:[#allocation5] sm:$0x80] %vm885, %v2954
    %2960 = vst.msk [vmem:[#allocation5 + $0x8] sm:$0x80] %vm885, %v2956
    %v2961 = vrot.slane %v2836, 7
    %v2962 = vsel %vm889, %v2961, %v2835
    %2963 = vrot.lane.b32.xlu0 %v2962, 104
    %v2964 = vpop.permute.xlu0 %2963
    %v2965 = vsel %vm658, %v2964, 0
    %2967 = vmatpush.msra.mxu0 0.0
    %2968 = vmatpush.msra.mxu0 0.0
    %2969 = vmatpush.msra.mxu0 0.0
    %2970 = vmatpush.msra.mxu0 0.0
    %2971 = vmatpush.msra.mxu0 0.0
    %2972 = vmatpush.msra.mxu0 0.0
    %2973 = vmatpush.msra.mxu0 0.0
    %2974 = vmatpush.msra.mxu0 0.0
    %2975 = vmatpush.msra.mxu0 0.0
    %2976 = vmatpush.msra.mxu0 0.0
    %2977 = vmatpush.msra.mxu0 0.0
    %2978 = vmatpush.msra.mxu0 0.0
    %2979 = vmatpush.msra.mxu0 0.0
    %2980 = vmatpush.msra.mxu0 %v2602
    %2981 = vmatpush.msra.mxu0 %v2601
    %2982 = vmatpush.msra.mxu0 %v2600
    %2983 = vmatmul.f32.gmra.mxu0 %v2965
    %v2984 = vpop.f32.mrf.mxu0
    %v2985 = vadd.f32 %v2735, %v2984
    %2986 = vdwg.mxu0
    %v2988 = vrot.slane %v2985, 7
    %v2991 = vadd.f32 %v2681, %v2988
    %v2992 = vadd.f32 %v2682, %v2985
    %v2993 = vxor.u32 %v2991, 2147483648
    %v2994 = vxor.u32 %v2992, 2147483648
    %v2995 = vmul.f32 %v2993, 1.442695
    %v2996 = vpow.pop %v2995
    %v2997 = vmul.f32 %v2994, 1.442695
    %v2998 = vpow.pop %v2997
    %v2999 = vadd.f32 %v2996, 1.0
    %v3000 = vadd.f32 %v2998, 1.0
    %v3001 = vrcp.pop %v2999
    %v3002 = vmul.f32 %v2999, %v3001
    %v3003 = vsub.f32 1.0, %v3002
    %v3004 = vmul.f32 %v3001, %v3003
    %v3005 = vadd.f32 %v3001, %v3004
    %vm3006 = vweird.f32 %v2999
    %vm3007 = vweird.f32 %v3001
    %vm3008 = vmor %vm3006, %vm3007
    %v3009 = vsel %vm3008, %v3001, %v3005
    %v3010 = vand.u32 2147483647, %v2999
    %vm3011 = vcmp.eq.f32.partialorder %v3010, 8.507059e+37
    %v3012 = vand.u32 %v2999, 2147483648
    %v3013 = vor.u32 1.1754944e-38, %v3012
    %v3014 = vsel %vm3011, %v3013, %v3009
    %v3015 = vmul.f32 1.0, %v3014
    %v3016 = vrcp.pop %v3000
    %v3017 = vmul.f32 %v3000, %v3016
    %v3018 = vsub.f32 1.0, %v3017
    %v3019 = vmul.f32 %v3016, %v3018
    %v3020 = vadd.f32 %v3016, %v3019
    %vm3021 = vweird.f32 %v3000
    %vm3022 = vweird.f32 %v3016
    %vm3023 = vmor %vm3021, %vm3022
    %v3024 = vsel %vm3023, %v3016, %v3020
    %v3025 = vand.u32 2147483647, %v3000
    %vm3026 = vcmp.eq.f32.partialorder %v3025, 8.507059e+37
    %v3027 = vand.u32 %v3000, 2147483648
    %v3028 = vor.u32 1.1754944e-38, %v3027
    %v3029 = vsel %vm3026, %v3028, %v3024
    %v3030 = vmul.f32 1.0, %v3029
    %3031 = vrot.lane.b32.xlu0 %v2988, 80
    %v3032 = vpop.permute.xlu0 %3031
    %3033 = vrot.lane.b32.xlu0 %v2985, 80
    %v3034 = vpop.permute.xlu0 %3033
    %v3037 = vmul.f32 %v3015, %v3032
    %v3038 = vmul.f32 %v3030, %v3034
    %3041 = vrot.lane.b32.xlu0 %v3037, 48
    %v3042 = vpop.permute.xlu0 %3041
    %3043 = vrot.lane.b32.xlu0 %v3038, 48
    %v3044 = vpop.permute.xlu0 %3043
    %v3047 = vadd.f32 %v2681, %v3042
    %v3048 = vadd.f32 %v2682, %v3044
    %v3049 = vtanh.pop %v3047
    %v3050 = vtanh.pop %v3048
    %v3051 = vsub.f32 1.0, %v3015
    %v3052 = vsub.f32 1.0, %v3030
    %3055 = vrot.lane.b32.xlu0 %v3049, 104
    %v3056 = vpop.permute.xlu0 %3055
    %3057 = vrot.lane.b32.xlu0 %v3050, 104
    %v3058 = vpop.permute.xlu0 %3057
    %v3061 = vmul.f32 %v3051, %v3056
    %v3062 = vmul.f32 %v3052, %v3058
    %v3063 = vrot.slane %v2835, 7
    %v3066 = vmul.f32 %v3015, %v3063
    %v3067 = vmul.f32 %v3030, %v2961
    %v3068 = vadd.f32 %v3061, %v3066
    %v3069 = vadd.f32 %v3062, %v3067
    %v3070 = vrot.slane %v2939, 7
    %v3071 = vrot.slane %v2940, 6
    %v3072 = vsel %vm889, %v3071, %v3070
    %3073 = vrot.lane.b32.xlu0 %v3072, 104
    %v3074 = vpop.permute.xlu0 %3073
    %v3075 = vsel %vm658, %v3074, 0
    %3077 = vmatpush.msra.mxu0 0.0
    %3078 = vmatpush.msra.mxu0 0.0
    %3079 = vmatpush.msra.mxu0 0.0
    %3080 = vmatpush.msra.mxu0 0.0
    %3081 = vmatpush.msra.mxu0 0.0
    %3082 = vmatpush.msra.mxu0 0.0
    %3083 = vmatpush.msra.mxu0 0.0
    %3084 = vmatpush.msra.mxu0 0.0
    %3085 = vmatpush.msra.mxu0 0.0
    %3086 = vmatpush.msra.mxu0 0.0
    %3087 = vmatpush.msra.mxu0 0.0
    %3088 = vmatpush.msra.mxu0 0.0
    %3089 = vmatpush.msra.mxu0 0.0
    %3090 = vmatpush.msra.mxu0 %v2613
    %3091 = vmatpush.msra.mxu0 %v2612
    %3092 = vmatpush.msra.mxu0 %v2611
    %3093 = vmatmul.f32.gmra.mxu0 %v3075
    %v3094 = vpop.f32.mrf.mxu0
    %v3095 = vadd.f32 %v2838, %v3094
    %3096 = vdwg.mxu0
    %v3098 = vrot.slane %v3095, 2
    %v3099 = vrot.slane %v3095, 3
    %v3102 = vadd.f32 %v2732, %v3098
    %v3103 = vadd.f32 %v2733, %v3099
    %v3104 = vxor.u32 %v3102, 2147483648
    %v3105 = vxor.u32 %v3103, 2147483648
    %v3106 = vmul.f32 %v3104, 1.442695
    %v3107 = vpow.pop %v3106
    %v3108 = vmul.f32 %v3105, 1.442695
    %v3109 = vpow.pop %v3108
    %v3110 = vadd.f32 %v3107, 1.0
    %v3111 = vadd.f32 %v3109, 1.0
    %v3112 = vrcp.pop %v3110
    %v3113 = vmul.f32 %v3110, %v3112
    %v3114 = vsub.f32 1.0, %v3113
    %v3115 = vmul.f32 %v3112, %v3114
    %v3116 = vadd.f32 %v3112, %v3115
    %vm3117 = vweird.f32 %v3110
    %vm3118 = vweird.f32 %v3112
    %vm3119 = vmor %vm3117, %vm3118
    %v3120 = vsel %vm3119, %v3112, %v3116
    %v3121 = vand.u32 2147483647, %v3110
    %vm3122 = vcmp.eq.f32.partialorder %v3121, 8.507059e+37
    %v3123 = vand.u32 %v3110, 2147483648
    %v3124 = vor.u32 1.1754944e-38, %v3123
    %v3125 = vsel %vm3122, %v3124, %v3120
    %v3126 = vmul.f32 1.0, %v3125
    %v3127 = vrcp.pop %v3111
    %v3128 = vmul.f32 %v3111, %v3127
    %v3129 = vsub.f32 1.0, %v3128
    %v3130 = vmul.f32 %v3127, %v3129
    %v3131 = vadd.f32 %v3127, %v3130
    %vm3132 = vweird.f32 %v3111
    %vm3133 = vweird.f32 %v3127
    %vm3134 = vmor %vm3132, %vm3133
    %v3135 = vsel %vm3134, %v3127, %v3131
    %v3136 = vand.u32 2147483647, %v3111
    %vm3137 = vcmp.eq.f32.partialorder %v3136, 8.507059e+37
    %v3138 = vand.u32 %v3111, 2147483648
    %v3139 = vor.u32 1.1754944e-38, %v3138
    %v3140 = vsel %vm3137, %v3139, %v3135
    %v3141 = vmul.f32 1.0, %v3140
    %3142 = vrot.lane.b32.xlu0 %v3098, 80
    %v3143 = vpop.permute.xlu0 %3142
    %3144 = vrot.lane.b32.xlu0 %v3099, 80
    %v3145 = vpop.permute.xlu0 %3144
    %v3148 = vmul.f32 %v3126, %v3143
    %v3149 = vmul.f32 %v3141, %v3145
    %3152 = vrot.lane.b32.xlu0 %v3148, 48
    %v3153 = vpop.permute.xlu0 %3152
    %3154 = vrot.lane.b32.xlu0 %v3149, 48
    %v3155 = vpop.permute.xlu0 %3154
    %v3158 = vadd.f32 %v2732, %v3153
    %v3159 = vadd.f32 %v2733, %v3155
    %v3160 = vtanh.pop %v3158
    %v3161 = vtanh.pop %v3159
    %v3162 = vsub.f32 1.0, %v3126
    %v3163 = vsub.f32 1.0, %v3141
    %3166 = vrot.lane.b32.xlu0 %v3160, 104
    %v3167 = vpop.permute.xlu0 %3166
    %3168 = vrot.lane.b32.xlu0 %v3161, 104
    %v3169 = vpop.permute.xlu0 %3168
    %v3172 = vmul.f32 %v3162, %v3167
    %v3173 = vmul.f32 %v3163, %v3169
    %v3174 = vrot.slane %v2939, 1
    %v3175 = vrot.slane %v2940, 1
    %v3178 = vmul.f32 %v3126, %v3174
    %v3179 = vmul.f32 %v3141, %v3175
    %v3180 = vadd.f32 %v3172, %v3178
    %v3181 = vadd.f32 %v3173, %v3179
    %3184 = vrot.lane.b32.xlu0 %v3068, 104
    %v3185 = vpop.permute.xlu0 %3184
    %3186 = vrot.lane.b32.xlu0 %v3069, 104
    %v3187 = vpop.permute.xlu0 %3186
    %3190 = vst.msk [vmem:[#allocation4] sm:$0x2] %vm1118, %v3185
    %3191 = vst.msk [vmem:[#allocation4 + $0x8] sm:$0x2] %vm1118, %v3187
    %3194 = vrot.lane.b32.xlu0 %v3180, 104
    %v3195 = vpop.permute.xlu0 %3194
    %3196 = vrot.lane.b32.xlu0 %v3181, 104
    %v3197 = vpop.permute.xlu0 %3196
    %3200 = vst.msk [vmem:[#allocation5] sm:$0x40] %vm1129, %v3195
    %3201 = vst.msk [vmem:[#allocation5 + $0x8] sm:$0x40] %vm1129, %v3197
    %v3202 = vrot.slane %v3068, 1
    %v3203 = vsel %vm889, %v3069, %v3202
    %3204 = vrot.lane.b32.xlu0 %v3203, 104
    %v3205 = vpop.permute.xlu0 %3204
    %v3206 = vsel %vm658, %v3205, 0
    %3208 = vmatpush.msra.mxu0 0.0
    %3209 = vmatpush.msra.mxu0 0.0
    %3210 = vmatpush.msra.mxu0 0.0
    %3211 = vmatpush.msra.mxu0 0.0
    %3212 = vmatpush.msra.mxu0 0.0
    %3213 = vmatpush.msra.mxu0 0.0
    %3214 = vmatpush.msra.mxu0 0.0
    %3215 = vmatpush.msra.mxu0 0.0
    %3216 = vmatpush.msra.mxu0 0.0
    %3217 = vmatpush.msra.mxu0 0.0
    %3218 = vmatpush.msra.mxu0 0.0
    %3219 = vmatpush.msra.mxu0 0.0
    %3220 = vmatpush.msra.mxu0 0.0
    %3221 = vmatpush.msra.mxu0 %v2602
    %3222 = vmatpush.msra.mxu0 %v2601
    %3223 = vmatpush.msra.mxu0 %v2600
    %3224 = vmatmul.f32.gmra.mxu0 %v3206
    %v3225 = vpop.f32.mrf.mxu0
    %v3226 = vadd.f32 %v2735, %v3225
    %3227 = vdwg.mxu0
    %v3229 = vrot.slane %v3226, 6
    %v3230 = vrot.slane %v3226, 7
    %v3233 = vadd.f32 %v2681, %v3229
    %v3234 = vadd.f32 %v2682, %v3230
    %v3235 = vxor.u32 %v3233, 2147483648
    %v3236 = vxor.u32 %v3234, 2147483648
    %v3237 = vmul.f32 %v3235, 1.442695
    %v3238 = vpow.pop %v3237
    %v3239 = vmul.f32 %v3236, 1.442695
    %v3240 = vpow.pop %v3239
    %v3241 = vadd.f32 %v3238, 1.0
    %v3242 = vadd.f32 %v3240, 1.0
    %v3243 = vrcp.pop %v3241
    %v3244 = vmul.f32 %v3241, %v3243
    %v3245 = vsub.f32 1.0, %v3244
    %v3246 = vmul.f32 %v3243, %v3245
    %v3247 = vadd.f32 %v3243, %v3246
    %vm3248 = vweird.f32 %v3241
    %vm3249 = vweird.f32 %v3243
    %vm3250 = vmor %vm3248, %vm3249
    %v3251 = vsel %vm3250, %v3243, %v3247
    %v3252 = vand.u32 2147483647, %v3241
    %vm3253 = vcmp.eq.f32.partialorder %v3252, 8.507059e+37
    %v3254 = vand.u32 %v3241, 2147483648
    %v3255 = vor.u32 1.1754944e-38, %v3254
    %v3256 = vsel %vm3253, %v3255, %v3251
    %v3257 = vmul.f32 1.0, %v3256
    %v3258 = vrcp.pop %v3242
    %v3259 = vmul.f32 %v3242, %v3258
    %v3260 = vsub.f32 1.0, %v3259
    %v3261 = vmul.f32 %v3258, %v3260
    %v3262 = vadd.f32 %v3258, %v3261
    %vm3263 = vweird.f32 %v3242
    %vm3264 = vweird.f32 %v3258
    %vm3265 = vmor %vm3263, %vm3264
    %v3266 = vsel %vm3265, %v3258, %v3262
    %v3267 = vand.u32 2147483647, %v3242
    %vm3268 = vcmp.eq.f32.partialorder %v3267, 8.507059e+37
    %v3269 = vand.u32 %v3242, 2147483648
    %v3270 = vor.u32 1.1754944e-38, %v3269
    %v3271 = vsel %vm3268, %v3270, %v3266
    %v3272 = vmul.f32 1.0, %v3271
    %3273 = vrot.lane.b32.xlu0 %v3229, 80
    %v3274 = vpop.permute.xlu0 %3273
    %3275 = vrot.lane.b32.xlu0 %v3230, 80
    %v3276 = vpop.permute.xlu0 %3275
    %v3279 = vmul.f32 %v3257, %v3274
    %v3280 = vmul.f32 %v3272, %v3276
    %3283 = vrot.lane.b32.xlu0 %v3279, 48
    %v3284 = vpop.permute.xlu0 %3283
    %3285 = vrot.lane.b32.xlu0 %v3280, 48
    %v3286 = vpop.permute.xlu0 %3285
    %v3289 = vadd.f32 %v2681, %v3284
    %v3290 = vadd.f32 %v2682, %v3286
    %v3291 = vtanh.pop %v3289
    %v3292 = vtanh.pop %v3290
    %v3293 = vsub.f32 1.0, %v3257
    %v3294 = vsub.f32 1.0, %v3272
    %3297 = vrot.lane.b32.xlu0 %v3291, 104
    %v3298 = vpop.permute.xlu0 %3297
    %3299 = vrot.lane.b32.xlu0 %v3292, 104
    %v3300 = vpop.permute.xlu0 %3299
    %v3303 = vmul.f32 %v3293, %v3298
    %v3304 = vmul.f32 %v3294, %v3300
    %v3305 = vrot.slane %v3068, 7
    %v3306 = vrot.slane %v3069, 7
    %v3309 = vmul.f32 %v3257, %v3305
    %v3310 = vmul.f32 %v3272, %v3306
    %v3311 = vadd.f32 %v3303, %v3309
    %v3312 = vadd.f32 %v3304, %v3310
    %v3313 = vrot.slane %v3180, 6
    %v3314 = vrot.slane %v3181, 5
    %v3315 = vsel %vm889, %v3314, %v3313
    %3316 = vrot.lane.b32.xlu0 %v3315, 104
    %v3317 = vpop.permute.xlu0 %3316
    %v3318 = vsel %vm658, %v3317, 0
    %3320 = vmatpush.msra.mxu0 0.0
    %3321 = vmatpush.msra.mxu0 0.0
    %3322 = vmatpush.msra.mxu0 0.0
    %3323 = vmatpush.msra.mxu0 0.0
    %3324 = vmatpush.msra.mxu0 0.0
    %3325 = vmatpush.msra.mxu0 0.0
    %3326 = vmatpush.msra.mxu0 0.0
    %3327 = vmatpush.msra.mxu0 0.0
    %3328 = vmatpush.msra.mxu0 0.0
    %3329 = vmatpush.msra.mxu0 0.0
    %3330 = vmatpush.msra.mxu0 0.0
    %3331 = vmatpush.msra.mxu0 0.0
    %3332 = vmatpush.msra.mxu0 0.0
    %3333 = vmatpush.msra.mxu0 %v2613
    %3334 = vmatpush.msra.mxu0 %v2612
    %3335 = vmatpush.msra.mxu0 %v2611
    %3336 = vmatmul.f32.gmra.mxu0 %v3318
    %v3337 = vpop.f32.mrf.mxu0
    %v3338 = vadd.f32 %v2838, %v3337
    %3339 = vdwg.mxu0
    %v3341 = vrot.slane %v3338, 3
    %v3342 = vrot.slane %v3338, 4
    %v3345 = vadd.f32 %v2732, %v3341
    %v3346 = vadd.f32 %v2733, %v3342
    %v3347 = vxor.u32 %v3345, 2147483648
    %v3348 = vxor.u32 %v3346, 2147483648
    %v3349 = vmul.f32 %v3347, 1.442695
    %v3350 = vpow.pop %v3349
    %v3351 = vmul.f32 %v3348, 1.442695
    %v3352 = vpow.pop %v3351
    %v3353 = vadd.f32 %v3350, 1.0
    %v3354 = vadd.f32 %v3352, 1.0
    %v3355 = vrcp.pop %v3353
    %v3356 = vmul.f32 %v3353, %v3355
    %v3357 = vsub.f32 1.0, %v3356
    %v3358 = vmul.f32 %v3355, %v3357
    %v3359 = vadd.f32 %v3355, %v3358
    %vm3360 = vweird.f32 %v3353
    %vm3361 = vweird.f32 %v3355
    %vm3362 = vmor %vm3360, %vm3361
    %v3363 = vsel %vm3362, %v3355, %v3359
    %v3364 = vand.u32 2147483647, %v3353
    %vm3365 = vcmp.eq.f32.partialorder %v3364, 8.507059e+37
    %v3366 = vand.u32 %v3353, 2147483648
    %v3367 = vor.u32 1.1754944e-38, %v3366
    %v3368 = vsel %vm3365, %v3367, %v3363
    %v3369 = vmul.f32 1.0, %v3368
    %v3370 = vrcp.pop %v3354
    %v3371 = vmul.f32 %v3354, %v3370
    %v3372 = vsub.f32 1.0, %v3371
    %v3373 = vmul.f32 %v3370, %v3372
    %v3374 = vadd.f32 %v3370, %v3373
    %vm3375 = vweird.f32 %v3354
    %vm3376 = vweird.f32 %v3370
    %vm3377 = vmor %vm3375, %vm3376
    %v3378 = vsel %vm3377, %v3370, %v3374
    %v3379 = vand.u32 2147483647, %v3354
    %vm3380 = vcmp.eq.f32.partialorder %v3379, 8.507059e+37
    %v3381 = vand.u32 %v3354, 2147483648
    %v3382 = vor.u32 1.1754944e-38, %v3381
    %v3383 = vsel %vm3380, %v3382, %v3378
    %v3384 = vmul.f32 1.0, %v3383
    %3385 = vrot.lane.b32.xlu0 %v3341, 80
    %v3386 = vpop.permute.xlu0 %3385
    %3387 = vrot.lane.b32.xlu0 %v3342, 80
    %v3388 = vpop.permute.xlu0 %3387
    %v3391 = vmul.f32 %v3369, %v3386
    %v3392 = vmul.f32 %v3384, %v3388
    %3395 = vrot.lane.b32.xlu0 %v3391, 48
    %v3396 = vpop.permute.xlu0 %3395
    %3397 = vrot.lane.b32.xlu0 %v3392, 48
    %v3398 = vpop.permute.xlu0 %3397
    %v3401 = vadd.f32 %v2732, %v3396
    %v3402 = vadd.f32 %v2733, %v3398
    %v3403 = vtanh.pop %v3401
    %v3404 = vtanh.pop %v3402
    %v3405 = vsub.f32 1.0, %v3369
    %v3406 = vsub.f32 1.0, %v3384
    %3409 = vrot.lane.b32.xlu0 %v3403, 104
    %v3410 = vpop.permute.xlu0 %3409
    %3411 = vrot.lane.b32.xlu0 %v3404, 104
    %v3412 = vpop.permute.xlu0 %3411
    %v3415 = vmul.f32 %v3405, %v3410
    %v3416 = vmul.f32 %v3406, %v3412
    %v3417 = vrot.slane %v3180, 1
    %v3418 = vrot.slane %v3181, 1
    %v3421 = vmul.f32 %v3369, %v3417
    %v3422 = vmul.f32 %v3384, %v3418
    %v3423 = vadd.f32 %v3415, %v3421
    %v3424 = vadd.f32 %v3416, %v3422
    %3427 = vrot.lane.b32.xlu0 %v3311, 104
    %v3428 = vpop.permute.xlu0 %3427
    %3429 = vrot.lane.b32.xlu0 %v3312, 104
    %v3430 = vpop.permute.xlu0 %3429
    %3433 = vst.msk [vmem:[#allocation4] sm:$0x4] %vm1363, %v3428
    %3434 = vst.msk [vmem:[#allocation4 + $0x8] sm:$0x4] %vm1363, %v3430
    %3437 = vrot.lane.b32.xlu0 %v3423, 104
    %v3438 = vpop.permute.xlu0 %3437
    %3439 = vrot.lane.b32.xlu0 %v3424, 104
    %v3440 = vpop.permute.xlu0 %3439
    %3443 = vst.msk [vmem:[#allocation5] sm:$0x20] %vm1374, %v3438
    %3444 = vst.msk [vmem:[#allocation5 + $0x8] sm:$0x20] %vm1374, %v3440
    %v3445 = vrot.slane %v3311, 2
    %v3446 = vrot.slane %v3312, 1
    %v3447 = vsel %vm889, %v3446, %v3445
    %3448 = vrot.lane.b32.xlu0 %v3447, 104
    %v3449 = vpop.permute.xlu0 %3448
    %v3450 = vsel %vm658, %v3449, 0
    %3452 = vmatpush.msra.mxu0 0.0
    %3453 = vmatpush.msra.mxu0 0.0
    %3454 = vmatpush.msra.mxu0 0.0
    %3455 = vmatpush.msra.mxu0 0.0
    %3456 = vmatpush.msra.mxu0 0.0
    %3457 = vmatpush.msra.mxu0 0.0
    %3458 = vmatpush.msra.mxu0 0.0
    %3459 = vmatpush.msra.mxu0 0.0
    %3460 = vmatpush.msra.mxu0 0.0
    %3461 = vmatpush.msra.mxu0 0.0
    %3462 = vmatpush.msra.mxu0 0.0
    %3463 = vmatpush.msra.mxu0 0.0
    %3464 = vmatpush.msra.mxu0 0.0
    %3465 = vmatpush.msra.mxu0 %v2602
    %3466 = vmatpush.msra.mxu0 %v2601
    %3467 = vmatpush.msra.mxu0 %v2600
    %3468 = vmatmul.f32.gmra.mxu0 %v3450
    %v3469 = vpop.f32.mrf.mxu0
    %v3470 = vadd.f32 %v2735, %v3469
    %3471 = vdwg.mxu0
    %v3473 = vrot.slane %v3470, 5
    %v3474 = vrot.slane %v3470, 6
    %v3477 = vadd.f32 %v2681, %v3473
    %v3478 = vadd.f32 %v2682, %v3474
    %v3479 = vxor.u32 %v3477, 2147483648
    %v3480 = vxor.u32 %v3478, 2147483648
    %v3481 = vmul.f32 %v3479, 1.442695
    %v3482 = vpow.pop %v3481
    %v3483 = vmul.f32 %v3480, 1.442695
    %v3484 = vpow.pop %v3483
    %v3485 = vadd.f32 %v3482, 1.0
    %v3486 = vadd.f32 %v3484, 1.0
    %v3487 = vrcp.pop %v3485
    %v3488 = vmul.f32 %v3485, %v3487
    %v3489 = vsub.f32 1.0, %v3488
    %v3490 = vmul.f32 %v3487, %v3489
    %v3491 = vadd.f32 %v3487, %v3490
    %vm3492 = vweird.f32 %v3485
    %vm3493 = vweird.f32 %v3487
    %vm3494 = vmor %vm3492, %vm3493
    %v3495 = vsel %vm3494, %v3487, %v3491
    %v3496 = vand.u32 2147483647, %v3485
    %vm3497 = vcmp.eq.f32.partialorder %v3496, 8.507059e+37
    %v3498 = vand.u32 %v3485, 2147483648
    %v3499 = vor.u32 1.1754944e-38, %v3498
    %v3500 = vsel %vm3497, %v3499, %v3495
    %v3501 = vmul.f32 1.0, %v3500
    %v3502 = vrcp.pop %v3486
    %v3503 = vmul.f32 %v3486, %v3502
    %v3504 = vsub.f32 1.0, %v3503
    %v3505 = vmul.f32 %v3502, %v3504
    %v3506 = vadd.f32 %v3502, %v3505
    %vm3507 = vweird.f32 %v3486
    %vm3508 = vweird.f32 %v3502
    %vm3509 = vmor %vm3507, %vm3508
    %v3510 = vsel %vm3509, %v3502, %v3506
    %v3511 = vand.u32 2147483647, %v3486
    %vm3512 = vcmp.eq.f32.partialorder %v3511, 8.507059e+37
    %v3513 = vand.u32 %v3486, 2147483648
    %v3514 = vor.u32 1.1754944e-38, %v3513
    %v3515 = vsel %vm3512, %v3514, %v3510
    %v3516 = vmul.f32 1.0, %v3515
    %3517 = vrot.lane.b32.xlu0 %v3473, 80
    %v3518 = vpop.permute.xlu0 %3517
    %3519 = vrot.lane.b32.xlu0 %v3474, 80
    %v3520 = vpop.permute.xlu0 %3519
    %v3523 = vmul.f32 %v3501, %v3518
    %v3524 = vmul.f32 %v3516, %v3520
    %3527 = vrot.lane.b32.xlu0 %v3523, 48
    %v3528 = vpop.permute.xlu0 %3527
    %3529 = vrot.lane.b32.xlu0 %v3524, 48
    %v3530 = vpop.permute.xlu0 %3529
    %v3533 = vadd.f32 %v2681, %v3528
    %v3534 = vadd.f32 %v2682, %v3530
    %v3535 = vtanh.pop %v3533
    %v3536 = vtanh.pop %v3534
    %v3537 = vsub.f32 1.0, %v3501
    %v3538 = vsub.f32 1.0, %v3516
    %3541 = vrot.lane.b32.xlu0 %v3535, 104
    %v3542 = vpop.permute.xlu0 %3541
    %3543 = vrot.lane.b32.xlu0 %v3536, 104
    %v3544 = vpop.permute.xlu0 %3543
    %v3547 = vmul.f32 %v3537, %v3542
    %v3548 = vmul.f32 %v3538, %v3544
    %v3549 = vrot.slane %v3311, 7
    %v3550 = vrot.slane %v3312, 7
    %v3553 = vmul.f32 %v3501, %v3549
    %v3554 = vmul.f32 %v3516, %v3550
    %v3555 = vadd.f32 %v3547, %v3553
    %v3556 = vadd.f32 %v3548, %v3554
    %v3557 = vrot.slane %v3423, 5
    %v3558 = vrot.slane %v3424, 4
    %v3559 = vsel %vm889, %v3558, %v3557
    %3560 = vrot.lane.b32.xlu0 %v3559, 104
    %v3561 = vpop.permute.xlu0 %3560
    %v3562 = vsel %vm658, %v3561, 0
    %3564 = vmatpush.msra.mxu0 0.0
    %3565 = vmatpush.msra.mxu0 0.0
    %3566 = vmatpush.msra.mxu0 0.0
    %3567 = vmatpush.msra.mxu0 0.0
    %3568 = vmatpush.msra.mxu0 0.0
    %3569 = vmatpush.msra.mxu0 0.0
    %3570 = vmatpush.msra.mxu0 0.0
    %3571 = vmatpush.msra.mxu0 0.0
    %3572 = vmatpush.msra.mxu0 0.0
    %3573 = vmatpush.msra.mxu0 0.0
    %3574 = vmatpush.msra.mxu0 0.0
    %3575 = vmatpush.msra.mxu0 0.0
    %3576 = vmatpush.msra.mxu0 0.0
    %3577 = vmatpush.msra.mxu0 %v2613
    %3578 = vmatpush.msra.mxu0 %v2612
    %3579 = vmatpush.msra.mxu0 %v2611
    %3580 = vmatmul.f32.gmra.mxu0 %v3562
    %v3581 = vpop.f32.mrf.mxu0
    %v3582 = vadd.f32 %v2838, %v3581
    %3583 = vdwg.mxu0
    %v3585 = vrot.slane %v3582, 4
    %v3586 = vrot.slane %v3582, 5
    %v3589 = vadd.f32 %v2732, %v3585
    %v3590 = vadd.f32 %v2733, %v3586
    %v3591 = vxor.u32 %v3589, 2147483648
    %v3592 = vxor.u32 %v3590, 2147483648
    %v3593 = vmul.f32 %v3591, 1.442695
    %v3594 = vpow.pop %v3593
    %v3595 = vmul.f32 %v3592, 1.442695
    %v3596 = vpow.pop %v3595
    %v3597 = vadd.f32 %v3594, 1.0
    %v3598 = vadd.f32 %v3596, 1.0
    %v3599 = vrcp.pop %v3597
    %v3600 = vmul.f32 %v3597, %v3599
    %v3601 = vsub.f32 1.0, %v3600
    %v3602 = vmul.f32 %v3599, %v3601
    %v3603 = vadd.f32 %v3599, %v3602
    %vm3604 = vweird.f32 %v3597
    %vm3605 = vweird.f32 %v3599
    %vm3606 = vmor %vm3604, %vm3605
    %v3607 = vsel %vm3606, %v3599, %v3603
    %v3608 = vand.u32 2147483647, %v3597
    %vm3609 = vcmp.eq.f32.partialorder %v3608, 8.507059e+37
    %v3610 = vand.u32 %v3597, 2147483648
    %v3611 = vor.u32 1.1754944e-38, %v3610
    %v3612 = vsel %vm3609, %v3611, %v3607
    %v3613 = vmul.f32 1.0, %v3612
    %v3614 = vrcp.pop %v3598
    %v3615 = vmul.f32 %v3598, %v3614
    %v3616 = vsub.f32 1.0, %v3615
    %v3617 = vmul.f32 %v3614, %v3616
    %v3618 = vadd.f32 %v3614, %v3617
    %vm3619 = vweird.f32 %v3598
    %vm3620 = vweird.f32 %v3614
    %vm3621 = vmor %vm3619, %vm3620
    %v3622 = vsel %vm3621, %v3614, %v3618
    %v3623 = vand.u32 2147483647, %v3598
    %vm3624 = vcmp.eq.f32.partialorder %v3623, 8.507059e+37
    %v3625 = vand.u32 %v3598, 2147483648
    %v3626 = vor.u32 1.1754944e-38, %v3625
    %v3627 = vsel %vm3624, %v3626, %v3622
    %v3628 = vmul.f32 1.0, %v3627
    %3629 = vrot.lane.b32.xlu0 %v3585, 80
    %v3630 = vpop.permute.xlu0 %3629
    %3631 = vrot.lane.b32.xlu0 %v3586, 80
    %v3632 = vpop.permute.xlu0 %3631
    %v3635 = vmul.f32 %v3613, %v3630
    %v3636 = vmul.f32 %v3628, %v3632
    %3639 = vrot.lane.b32.xlu0 %v3635, 48
    %v3640 = vpop.permute.xlu0 %3639
    %3641 = vrot.lane.b32.xlu0 %v3636, 48
    %v3642 = vpop.permute.xlu0 %3641
    %v3645 = vadd.f32 %v2732, %v3640
    %v3646 = vadd.f32 %v2733, %v3642
    %v3647 = vtanh.pop %v3645
    %v3648 = vtanh.pop %v3646
    %v3649 = vsub.f32 1.0, %v3613
    %v3650 = vsub.f32 1.0, %v3628
    %3653 = vrot.lane.b32.xlu0 %v3647, 104
    %v3654 = vpop.permute.xlu0 %3653
    %3655 = vrot.lane.b32.xlu0 %v3648, 104
    %v3656 = vpop.permute.xlu0 %3655
    %v3659 = vmul.f32 %v3649, %v3654
    %v3660 = vmul.f32 %v3650, %v3656
    %v3661 = vrot.slane %v3423, 1
    %v3662 = vrot.slane %v3424, 1
    %v3665 = vmul.f32 %v3613, %v3661
    %v3666 = vmul.f32 %v3628, %v3662
    %v3667 = vadd.f32 %v3659, %v3665
    %v3668 = vadd.f32 %v3660, %v3666
    %3671 = vrot.lane.b32.xlu0 %v3555, 104
    %v3672 = vpop.permute.xlu0 %3671
    %3673 = vrot.lane.b32.xlu0 %v3556, 104
    %v3674 = vpop.permute.xlu0 %3673
    %3677 = vst.msk [vmem:[#allocation4] sm:$0x8] %vm1609, %v3672
    %3678 = vst.msk [vmem:[#allocation4 + $0x8] sm:$0x8] %vm1609, %v3674
    %3681 = vrot.lane.b32.xlu0 %v3667, 104
    %v3682 = vpop.permute.xlu0 %3681
    %3683 = vrot.lane.b32.xlu0 %v3668, 104
    %v3684 = vpop.permute.xlu0 %3683
    %3687 = vst.msk [vmem:[#allocation5] sm:$0x10] %vm1620, %v3682
    %3688 = vst.msk [vmem:[#allocation5 + $0x8] sm:$0x10] %vm1620, %v3684
    %v3689 = vrot.slane %v3555, 3
    %v3690 = vrot.slane %v3556, 2
    %v3691 = vsel %vm889, %v3690, %v3689
    %3692 = vrot.lane.b32.xlu0 %v3691, 104
    %v3693 = vpop.permute.xlu0 %3692
    %v3694 = vsel %vm658, %v3693, 0
    %3696 = vmatpush.msra.mxu0 0.0
    %3697 = vmatpush.msra.mxu0 0.0
    %3698 = vmatpush.msra.mxu0 0.0
    %3699 = vmatpush.msra.mxu0 0.0
    %3700 = vmatpush.msra.mxu0 0.0
    %3701 = vmatpush.msra.mxu0 0.0
    %3702 = vmatpush.msra.mxu0 0.0
    %3703 = vmatpush.msra.mxu0 0.0
    %3704 = vmatpush.msra.mxu0 0.0
    %3705 = vmatpush.msra.mxu0 0.0
    %3706 = vmatpush.msra.mxu0 0.0
    %3707 = vmatpush.msra.mxu0 0.0
    %3708 = vmatpush.msra.mxu0 0.0
    %3709 = vmatpush.msra.mxu0 %v2602
    %3710 = vmatpush.msra.mxu0 %v2601
    %3711 = vmatpush.msra.mxu0 %v2600
    %3712 = vmatmul.f32.gmra.mxu0 %v3694
    %v3713 = vpop.f32.mrf.mxu0
    %v3714 = vadd.f32 %v2735, %v3713
    %3715 = vdwg.mxu0
    %v3717 = vrot.slane %v3714, 4
    %v3718 = vrot.slane %v3714, 5
    %v3721 = vadd.f32 %v2681, %v3717
    %v3722 = vadd.f32 %v2682, %v3718
    %v3723 = vxor.u32 %v3721, 2147483648
    %v3724 = vxor.u32 %v3722, 2147483648
    %v3725 = vmul.f32 %v3723, 1.442695
    %v3726 = vpow.pop %v3725
    %v3727 = vmul.f32 %v3724, 1.442695
    %v3728 = vpow.pop %v3727
    %v3729 = vadd.f32 %v3726, 1.0
    %v3730 = vadd.f32 %v3728, 1.0
    %v3731 = vrcp.pop %v3729
    %v3732 = vmul.f32 %v3729, %v3731
    %v3733 = vsub.f32 1.0, %v3732
    %v3734 = vmul.f32 %v3731, %v3733
    %v3735 = vadd.f32 %v3731, %v3734
    %vm3736 = vweird.f32 %v3729
    %vm3737 = vweird.f32 %v3731
    %vm3738 = vmor %vm3736, %vm3737
    %v3739 = vsel %vm3738, %v3731, %v3735
    %v3740 = vand.u32 2147483647, %v3729
    %vm3741 = vcmp.eq.f32.partialorder %v3740, 8.507059e+37
    %v3742 = vand.u32 %v3729, 2147483648
    %v3743 = vor.u32 1.1754944e-38, %v3742
    %v3744 = vsel %vm3741, %v3743, %v3739
    %v3745 = vmul.f32 1.0, %v3744
    %v3746 = vrcp.pop %v3730
    %v3747 = vmul.f32 %v3730, %v3746
    %v3748 = vsub.f32 1.0, %v3747
    %v3749 = vmul.f32 %v3746, %v3748
    %v3750 = vadd.f32 %v3746, %v3749
    %vm3751 = vweird.f32 %v3730
    %vm3752 = vweird.f32 %v3746
    %vm3753 = vmor %vm3751, %vm3752
    %v3754 = vsel %vm3753, %v3746, %v3750
    %v3755 = vand.u32 2147483647, %v3730
    %vm3756 = vcmp.eq.f32.partialorder %v3755, 8.507059e+37
    %v3757 = vand.u32 %v3730, 2147483648
    %v3758 = vor.u32 1.1754944e-38, %v3757
    %v3759 = vsel %vm3756, %v3758, %v3754
    %v3760 = vmul.f32 1.0, %v3759
    %3761 = vrot.lane.b32.xlu0 %v3717, 80
    %v3762 = vpop.permute.xlu0 %3761
    %3763 = vrot.lane.b32.xlu0 %v3718, 80
    %v3764 = vpop.permute.xlu0 %3763
    %v3767 = vmul.f32 %v3745, %v3762
    %v3768 = vmul.f32 %v3760, %v3764
    %3771 = vrot.lane.b32.xlu0 %v3767, 48
    %v3772 = vpop.permute.xlu0 %3771
    %3773 = vrot.lane.b32.xlu0 %v3768, 48
    %v3774 = vpop.permute.xlu0 %3773
    %v3777 = vadd.f32 %v2681, %v3772
    %v3778 = vadd.f32 %v2682, %v3774
    %v3779 = vtanh.pop %v3777
    %v3780 = vtanh.pop %v3778
    %v3781 = vsub.f32 1.0, %v3745
    %v3782 = vsub.f32 1.0, %v3760
    %3785 = vrot.lane.b32.xlu0 %v3779, 104
    %v3786 = vpop.permute.xlu0 %3785
    %3787 = vrot.lane.b32.xlu0 %v3780, 104
    %v3788 = vpop.permute.xlu0 %3787
    %v3791 = vmul.f32 %v3781, %v3786
    %v3792 = vmul.f32 %v3782, %v3788
    %v3793 = vrot.slane %v3555, 7
    %v3794 = vrot.slane %v3556, 7
    %v3797 = vmul.f32 %v3745, %v3793
    %v3798 = vmul.f32 %v3760, %v3794
    %v3799 = vadd.f32 %v3791, %v3797
    %v3800 = vadd.f32 %v3792, %v3798
    %v3801 = vrot.slane %v3667, 4
    %v3802 = vrot.slane %v3668, 3
    %v3803 = vsel %vm889, %v3802, %v3801
    %3804 = vrot.lane.b32.xlu0 %v3803, 104
    %v3805 = vpop.permute.xlu0 %3804
    %v3806 = vsel %vm658, %v3805, 0
    %3808 = vmatpush.msra.mxu0 0.0
    %3809 = vmatpush.msra.mxu0 0.0
    %3810 = vmatpush.msra.mxu0 0.0
    %3811 = vmatpush.msra.mxu0 0.0
    %3812 = vmatpush.msra.mxu0 0.0
    %3813 = vmatpush.msra.mxu0 0.0
    %3814 = vmatpush.msra.mxu0 0.0
    %3815 = vmatpush.msra.mxu0 0.0
    %3816 = vmatpush.msra.mxu0 0.0
    %3817 = vmatpush.msra.mxu0 0.0
    %3818 = vmatpush.msra.mxu0 0.0
    %3819 = vmatpush.msra.mxu0 0.0
    %3820 = vmatpush.msra.mxu0 0.0
    %3821 = vmatpush.msra.mxu0 %v2613
    %3822 = vmatpush.msra.mxu0 %v2612
    %3823 = vmatpush.msra.mxu0 %v2611
    %3824 = vmatmul.f32.gmra.mxu0 %v3806
    %v3825 = vpop.f32.mrf.mxu0
    %v3826 = vadd.f32 %v2838, %v3825
    %3827 = vdwg.mxu0
    %v3829 = vrot.slane %v3826, 5
    %v3830 = vrot.slane %v3826, 6
    %v3833 = vadd.f32 %v2732, %v3829
    %v3834 = vadd.f32 %v2733, %v3830
    %v3835 = vxor.u32 %v3833, 2147483648
    %v3836 = vxor.u32 %v3834, 2147483648
    %v3837 = vmul.f32 %v3835, 1.442695
    %v3838 = vpow.pop %v3837
    %v3839 = vmul.f32 %v3836, 1.442695
    %v3840 = vpow.pop %v3839
    %v3841 = vadd.f32 %v3838, 1.0
    %v3842 = vadd.f32 %v3840, 1.0
    %v3843 = vrcp.pop %v3841
    %v3844 = vmul.f32 %v3841, %v3843
    %v3845 = vsub.f32 1.0, %v3844
    %v3846 = vmul.f32 %v3843, %v3845
    %v3847 = vadd.f32 %v3843, %v3846
    %vm3848 = vweird.f32 %v3841
    %vm3849 = vweird.f32 %v3843
    %vm3850 = vmor %vm3848, %vm3849
    %v3851 = vsel %vm3850, %v3843, %v3847
    %v3852 = vand.u32 2147483647, %v3841
    %vm3853 = vcmp.eq.f32.partialorder %v3852, 8.507059e+37
    %v3854 = vand.u32 %v3841, 2147483648
    %v3855 = vor.u32 1.1754944e-38, %v3854
    %v3856 = vsel %vm3853, %v3855, %v3851
    %v3857 = vmul.f32 1.0, %v3856
    %v3858 = vrcp.pop %v3842
    %v3859 = vmul.f32 %v3842, %v3858
    %v3860 = vsub.f32 1.0, %v3859
    %v3861 = vmul.f32 %v3858, %v3860
    %v3862 = vadd.f32 %v3858, %v3861
    %vm3863 = vweird.f32 %v3842
    %vm3864 = vweird.f32 %v3858
    %vm3865 = vmor %vm3863, %vm3864
    %v3866 = vsel %vm3865, %v3858, %v3862
    %v3867 = vand.u32 2147483647, %v3842
    %vm3868 = vcmp.eq.f32.partialorder %v3867, 8.507059e+37
    %v3869 = vand.u32 %v3842, 2147483648
    %v3870 = vor.u32 1.1754944e-38, %v3869
    %v3871 = vsel %vm3868, %v3870, %v3866
    %v3872 = vmul.f32 1.0, %v3871
    %3873 = vrot.lane.b32.xlu0 %v3829, 80
    %v3874 = vpop.permute.xlu0 %3873
    %3875 = vrot.lane.b32.xlu0 %v3830, 80
    %v3876 = vpop.permute.xlu0 %3875
    %v3879 = vmul.f32 %v3857, %v3874
    %v3880 = vmul.f32 %v3872, %v3876
    %3883 = vrot.lane.b32.xlu0 %v3879, 48
    %v3884 = vpop.permute.xlu0 %3883
    %3885 = vrot.lane.b32.xlu0 %v3880, 48
    %v3886 = vpop.permute.xlu0 %3885
    %v3889 = vadd.f32 %v2732, %v3884
    %v3890 = vadd.f32 %v2733, %v3886
    %v3891 = vtanh.pop %v3889
    %v3892 = vtanh.pop %v3890
    %v3893 = vsub.f32 1.0, %v3857
    %v3894 = vsub.f32 1.0, %v3872
    %3897 = vrot.lane.b32.xlu0 %v3891, 104
    %v3898 = vpop.permute.xlu0 %3897
    %3899 = vrot.lane.b32.xlu0 %v3892, 104
    %v3900 = vpop.permute.xlu0 %3899
    %v3903 = vmul.f32 %v3893, %v3898
    %v3904 = vmul.f32 %v3894, %v3900
    %v3905 = vrot.slane %v3667, 1
    %v3906 = vrot.slane %v3668, 1
    %v3909 = vmul.f32 %v3857, %v3905
    %v3910 = vmul.f32 %v3872, %v3906
    %v3911 = vadd.f32 %v3903, %v3909
    %v3912 = vadd.f32 %v3904, %v3910
    %3915 = vrot.lane.b32.xlu0 %v3799, 104
    %v3916 = vpop.permute.xlu0 %3915
    %3917 = vrot.lane.b32.xlu0 %v3800, 104
    %v3918 = vpop.permute.xlu0 %3917
    %3921 = vst.msk [vmem:[#allocation4] sm:$0x10] %vm1620, %v3916
    %3922 = vst.msk [vmem:[#allocation4 + $0x8] sm:$0x10] %vm1620, %v3918
    %3925 = vrot.lane.b32.xlu0 %v3911, 104
    %v3926 = vpop.permute.xlu0 %3925
    %3927 = vrot.lane.b32.xlu0 %v3912, 104
    %v3928 = vpop.permute.xlu0 %3927
    %3931 = vst.msk [vmem:[#allocation5] sm:$0x8] %vm1609, %v3926
    %3932 = vst.msk [vmem:[#allocation5 + $0x8] sm:$0x8] %vm1609, %v3928
    %v3933 = vrot.slane %v3799, 4
    %v3934 = vrot.slane %v3800, 3
    %v3935 = vsel %vm889, %v3934, %v3933
    %3936 = vrot.lane.b32.xlu0 %v3935, 104
    %v3937 = vpop.permute.xlu0 %3936
    %v3938 = vsel %vm658, %v3937, 0
    %3940 = vmatpush.msra.mxu0 0.0
    %3941 = vmatpush.msra.mxu0 0.0
    %3942 = vmatpush.msra.mxu0 0.0
    %3943 = vmatpush.msra.mxu0 0.0
    %3944 = vmatpush.msra.mxu0 0.0
    %3945 = vmatpush.msra.mxu0 0.0
    %3946 = vmatpush.msra.mxu0 0.0
    %3947 = vmatpush.msra.mxu0 0.0
    %3948 = vmatpush.msra.mxu0 0.0
    %3949 = vmatpush.msra.mxu0 0.0
    %3950 = vmatpush.msra.mxu0 0.0
    %3951 = vmatpush.msra.mxu0 0.0
    %3952 = vmatpush.msra.mxu0 0.0
    %3953 = vmatpush.msra.mxu0 %v2602
    %3954 = vmatpush.msra.mxu0 %v2601
    %3955 = vmatpush.msra.mxu0 %v2600
    %3956 = vmatmul.f32.gmra.mxu0 %v3938
    %v3957 = vpop.f32.mrf.mxu0
    %v3958 = vadd.f32 %v2735, %v3957
    %3959 = vdwg.mxu0
    %v3961 = vrot.slane %v3958, 3
    %v3962 = vrot.slane %v3958, 4
    %v3965 = vadd.f32 %v2681, %v3961
    %v3966 = vadd.f32 %v2682, %v3962
    %v3967 = vxor.u32 %v3965, 2147483648
    %v3968 = vxor.u32 %v3966, 2147483648
    %v3969 = vmul.f32 %v3967, 1.442695
    %v3970 = vpow.pop %v3969
    %v3971 = vmul.f32 %v3968, 1.442695
    %v3972 = vpow.pop %v3971
    %v3973 = vadd.f32 %v3970, 1.0
    %v3974 = vadd.f32 %v3972, 1.0
    %v3975 = vrcp.pop %v3973
    %v3976 = vmul.f32 %v3973, %v3975
    %v3977 = vsub.f32 1.0, %v3976
    %v3978 = vmul.f32 %v3975, %v3977
    %v3979 = vadd.f32 %v3975, %v3978
    %vm3980 = vweird.f32 %v3973
    %vm3981 = vweird.f32 %v3975
    %vm3982 = vmor %vm3980, %vm3981
    %v3983 = vsel %vm3982, %v3975, %v3979
    %v3984 = vand.u32 2147483647, %v3973
    %vm3985 = vcmp.eq.f32.partialorder %v3984, 8.507059e+37
    %v3986 = vand.u32 %v3973, 2147483648
    %v3987 = vor.u32 1.1754944e-38, %v3986
    %v3988 = vsel %vm3985, %v3987, %v3983
    %v3989 = vmul.f32 1.0, %v3988
    %v3990 = vrcp.pop %v3974
    %v3991 = vmul.f32 %v3974, %v3990
    %v3992 = vsub.f32 1.0, %v3991
    %v3993 = vmul.f32 %v3990, %v3992
    %v3994 = vadd.f32 %v3990, %v3993
    %vm3995 = vweird.f32 %v3974
    %vm3996 = vweird.f32 %v3990
    %vm3997 = vmor %vm3995, %vm3996
    %v3998 = vsel %vm3997, %v3990, %v3994
    %v3999 = vand.u32 2147483647, %v3974
    %vm4000 = vcmp.eq.f32.partialorder %v3999, 8.507059e+37
    %v4001 = vand.u32 %v3974, 2147483648
    %v4002 = vor.u32 1.1754944e-38, %v4001
    %v4003 = vsel %vm4000, %v4002, %v3998
    %v4004 = vmul.f32 1.0, %v4003
    %4005 = vrot.lane.b32.xlu0 %v3961, 80
    %v4006 = vpop.permute.xlu0 %4005
    %4007 = vrot.lane.b32.xlu0 %v3962, 80
    %v4008 = vpop.permute.xlu0 %4007
    %v4011 = vmul.f32 %v3989, %v4006
    %v4012 = vmul.f32 %v4004, %v4008
    %4015 = vrot.lane.b32.xlu0 %v4011, 48
    %v4016 = vpop.permute.xlu0 %4015
    %4017 = vrot.lane.b32.xlu0 %v4012, 48
    %v4018 = vpop.permute.xlu0 %4017
    %v4021 = vadd.f32 %v2681, %v4016
    %v4022 = vadd.f32 %v2682, %v4018
    %v4023 = vtanh.pop %v4021
    %v4024 = vtanh.pop %v4022
    %v4025 = vsub.f32 1.0, %v3989
    %v4026 = vsub.f32 1.0, %v4004
    %4029 = vrot.lane.b32.xlu0 %v4023, 104
    %v4030 = vpop.permute.xlu0 %4029
    %4031 = vrot.lane.b32.xlu0 %v4024, 104
    %v4032 = vpop.permute.xlu0 %4031
    %v4035 = vmul.f32 %v4025, %v4030
    %v4036 = vmul.f32 %v4026, %v4032
    %v4037 = vrot.slane %v3799, 7
    %v4038 = vrot.slane %v3800, 7
    %v4041 = vmul.f32 %v3989, %v4037
    %v4042 = vmul.f32 %v4004, %v4038
    %v4043 = vadd.f32 %v4035, %v4041
    %v4044 = vadd.f32 %v4036, %v4042
    %v4045 = vrot.slane %v3911, 3
    %v4046 = vrot.slane %v3912, 2
    %v4047 = vsel %vm889, %v4046, %v4045
    %4048 = vrot.lane.b32.xlu0 %v4047, 104
    %v4049 = vpop.permute.xlu0 %4048
    %v4050 = vsel %vm658, %v4049, 0
    %4052 = vmatpush.msra.mxu0 0.0
    %4053 = vmatpush.msra.mxu0 0.0
    %4054 = vmatpush.msra.mxu0 0.0
    %4055 = vmatpush.msra.mxu0 0.0
    %4056 = vmatpush.msra.mxu0 0.0
    %4057 = vmatpush.msra.mxu0 0.0
    %4058 = vmatpush.msra.mxu0 0.0
    %4059 = vmatpush.msra.mxu0 0.0
    %4060 = vmatpush.msra.mxu0 0.0
    %4061 = vmatpush.msra.mxu0 0.0
    %4062 = vmatpush.msra.mxu0 0.0
    %4063 = vmatpush.msra.mxu0 0.0
    %4064 = vmatpush.msra.mxu0 0.0
    %4065 = vmatpush.msra.mxu0 %v2613
    %4066 = vmatpush.msra.mxu0 %v2612
    %4067 = vmatpush.msra.mxu0 %v2611
    %4068 = vmatmul.f32.gmra.mxu0 %v4050
    %v4069 = vpop.f32.mrf.mxu0
    %v4070 = vadd.f32 %v2838, %v4069
    %4071 = vdwg.mxu0
    %v4073 = vrot.slane %v4070, 6
    %v4074 = vrot.slane %v4070, 7
    %v4077 = vadd.f32 %v2732, %v4073
    %v4078 = vadd.f32 %v2733, %v4074
    %v4079 = vxor.u32 %v4077, 2147483648
    %v4080 = vxor.u32 %v4078, 2147483648
    %v4081 = vmul.f32 %v4079, 1.442695
    %v4082 = vpow.pop %v4081
    %v4083 = vmul.f32 %v4080, 1.442695
    %v4084 = vpow.pop %v4083
    %v4085 = vadd.f32 %v4082, 1.0
    %v4086 = vadd.f32 %v4084, 1.0
    %v4087 = vrcp.pop %v4085
    %v4088 = vmul.f32 %v4085, %v4087
    %v4089 = vsub.f32 1.0, %v4088
    %v4090 = vmul.f32 %v4087, %v4089
    %v4091 = vadd.f32 %v4087, %v4090
    %vm4092 = vweird.f32 %v4085
    %vm4093 = vweird.f32 %v4087
    %vm4094 = vmor %vm4092, %vm4093
    %v4095 = vsel %vm4094, %v4087, %v4091
    %v4096 = vand.u32 2147483647, %v4085
    %vm4097 = vcmp.eq.f32.partialorder %v4096, 8.507059e+37
    %v4098 = vand.u32 %v4085, 2147483648
    %v4099 = vor.u32 1.1754944e-38, %v4098
    %v4100 = vsel %vm4097, %v4099, %v4095
    %v4101 = vmul.f32 1.0, %v4100
    %v4102 = vrcp.pop %v4086
    %v4103 = vmul.f32 %v4086, %v4102
    %v4104 = vsub.f32 1.0, %v4103
    %v4105 = vmul.f32 %v4102, %v4104
    %v4106 = vadd.f32 %v4102, %v4105
    %vm4107 = vweird.f32 %v4086
    %vm4108 = vweird.f32 %v4102
    %vm4109 = vmor %vm4107, %vm4108
    %v4110 = vsel %vm4109, %v4102, %v4106
    %v4111 = vand.u32 2147483647, %v4086
    %vm4112 = vcmp.eq.f32.partialorder %v4111, 8.507059e+37
    %v4113 = vand.u32 %v4086, 2147483648
    %v4114 = vor.u32 1.1754944e-38, %v4113
    %v4115 = vsel %vm4112, %v4114, %v4110
    %v4116 = vmul.f32 1.0, %v4115
    %4117 = vrot.lane.b32.xlu0 %v4073, 80
    %v4118 = vpop.permute.xlu0 %4117
    %4119 = vrot.lane.b32.xlu0 %v4074, 80
    %v4120 = vpop.permute.xlu0 %4119
    %v4123 = vmul.f32 %v4101, %v4118
    %v4124 = vmul.f32 %v4116, %v4120
    %4127 = vrot.lane.b32.xlu0 %v4123, 48
    %v4128 = vpop.permute.xlu0 %4127
    %4129 = vrot.lane.b32.xlu0 %v4124, 48
    %v4130 = vpop.permute.xlu0 %4129
    %v4133 = vadd.f32 %v2732, %v4128
    %v4134 = vadd.f32 %v2733, %v4130
    %v4135 = vtanh.pop %v4133
    %v4136 = vtanh.pop %v4134
    %v4137 = vsub.f32 1.0, %v4101
    %v4138 = vsub.f32 1.0, %v4116
    %4141 = vrot.lane.b32.xlu0 %v4135, 104
    %v4142 = vpop.permute.xlu0 %4141
    %4143 = vrot.lane.b32.xlu0 %v4136, 104
    %v4144 = vpop.permute.xlu0 %4143
    %v4147 = vmul.f32 %v4137, %v4142
    %v4148 = vmul.f32 %v4138, %v4144
    %v4149 = vrot.slane %v3911, 1
    %v4150 = vrot.slane %v3912, 1
    %v4153 = vmul.f32 %v4101, %v4149
    %v4154 = vmul.f32 %v4116, %v4150
    %v4155 = vadd.f32 %v4147, %v4153
    %v4156 = vadd.f32 %v4148, %v4154
    %4159 = vrot.lane.b32.xlu0 %v4043, 104
    %v4160 = vpop.permute.xlu0 %4159
    %4161 = vrot.lane.b32.xlu0 %v4044, 104
    %v4162 = vpop.permute.xlu0 %4161
    %4165 = vst.msk [vmem:[#allocation4] sm:$0x20] %vm1374, %v4160
    %4166 = vst.msk [vmem:[#allocation4 + $0x8] sm:$0x20] %vm1374, %v4162
    %4169 = vrot.lane.b32.xlu0 %v4155, 104
    %v4170 = vpop.permute.xlu0 %4169
    %4171 = vrot.lane.b32.xlu0 %v4156, 104
    %v4172 = vpop.permute.xlu0 %4171
    %4175 = vst.msk [vmem:[#allocation5] sm:$0x4] %vm1363, %v4170
    %4176 = vst.msk [vmem:[#allocation5 + $0x8] sm:$0x4] %vm1363, %v4172
    %v4177 = vrot.slane %v4043, 5
    %v4178 = vrot.slane %v4044, 4
    %v4179 = vsel %vm889, %v4178, %v4177
    %4180 = vrot.lane.b32.xlu0 %v4179, 104
    %v4181 = vpop.permute.xlu0 %4180
    %v4182 = vsel %vm658, %v4181, 0
    %4184 = vmatpush.msra.mxu0 0.0
    %4185 = vmatpush.msra.mxu0 0.0
    %4186 = vmatpush.msra.mxu0 0.0
    %4187 = vmatpush.msra.mxu0 0.0
    %4188 = vmatpush.msra.mxu0 0.0
    %4189 = vmatpush.msra.mxu0 0.0
    %4190 = vmatpush.msra.mxu0 0.0
    %4191 = vmatpush.msra.mxu0 0.0
    %4192 = vmatpush.msra.mxu0 0.0
    %4193 = vmatpush.msra.mxu0 0.0
    %4194 = vmatpush.msra.mxu0 0.0
    %4195 = vmatpush.msra.mxu0 0.0
    %4196 = vmatpush.msra.mxu0 0.0
    %4197 = vmatpush.msra.mxu0 %v2602
    %4198 = vmatpush.msra.mxu0 %v2601
    %4199 = vmatpush.msra.mxu0 %v2600
    %4200 = vmatmul.f32.gmra.mxu0 %v4182
    %v4201 = vpop.f32.mrf.mxu0
    %v4202 = vadd.f32 %v2735, %v4201
    %4203 = vdwg.mxu0
    %v4205 = vrot.slane %v4202, 2
    %v4206 = vrot.slane %v4202, 3
    %v4209 = vadd.f32 %v2681, %v4205
    %v4210 = vadd.f32 %v2682, %v4206
    %v4211 = vxor.u32 %v4209, 2147483648
    %v4212 = vxor.u32 %v4210, 2147483648
    %v4213 = vmul.f32 %v4211, 1.442695
    %v4214 = vpow.pop %v4213
    %v4215 = vmul.f32 %v4212, 1.442695
    %v4216 = vpow.pop %v4215
    %v4217 = vadd.f32 %v4214, 1.0
    %v4218 = vadd.f32 %v4216, 1.0
    %v4219 = vrcp.pop %v4217
    %v4220 = vmul.f32 %v4217, %v4219
    %v4221 = vsub.f32 1.0, %v4220
    %v4222 = vmul.f32 %v4219, %v4221
    %v4223 = vadd.f32 %v4219, %v4222
    %vm4224 = vweird.f32 %v4217
    %vm4225 = vweird.f32 %v4219
    %vm4226 = vmor %vm4224, %vm4225
    %v4227 = vsel %vm4226, %v4219, %v4223
    %v4228 = vand.u32 2147483647, %v4217
    %vm4229 = vcmp.eq.f32.partialorder %v4228, 8.507059e+37
    %v4230 = vand.u32 %v4217, 2147483648
    %v4231 = vor.u32 1.1754944e-38, %v4230
    %v4232 = vsel %vm4229, %v4231, %v4227
    %v4233 = vmul.f32 1.0, %v4232
    %v4234 = vrcp.pop %v4218
    %v4235 = vmul.f32 %v4218, %v4234
    %v4236 = vsub.f32 1.0, %v4235
    %v4237 = vmul.f32 %v4234, %v4236
    %v4238 = vadd.f32 %v4234, %v4237
    %vm4239 = vweird.f32 %v4218
    %vm4240 = vweird.f32 %v4234
    %vm4241 = vmor %vm4239, %vm4240
    %v4242 = vsel %vm4241, %v4234, %v4238
    %v4243 = vand.u32 2147483647, %v4218
    %vm4244 = vcmp.eq.f32.partialorder %v4243, 8.507059e+37
    %v4245 = vand.u32 %v4218, 2147483648
    %v4246 = vor.u32 1.1754944e-38, %v4245
    %v4247 = vsel %vm4244, %v4246, %v4242
    %v4248 = vmul.f32 1.0, %v4247
    %4249 = vrot.lane.b32.xlu0 %v4205, 80
    %v4250 = vpop.permute.xlu0 %4249
    %4251 = vrot.lane.b32.xlu0 %v4206, 80
    %v4252 = vpop.permute.xlu0 %4251
    %v4255 = vmul.f32 %v4233, %v4250
    %v4256 = vmul.f32 %v4248, %v4252
    %4259 = vrot.lane.b32.xlu0 %v4255, 48
    %v4260 = vpop.permute.xlu0 %4259
    %4261 = vrot.lane.b32.xlu0 %v4256, 48
    %v4262 = vpop.permute.xlu0 %4261
    %v4265 = vadd.f32 %v2681, %v4260
    %v4266 = vadd.f32 %v2682, %v4262
    %v4267 = vtanh.pop %v4265
    %v4268 = vtanh.pop %v4266
    %v4269 = vsub.f32 1.0, %v4233
    %v4270 = vsub.f32 1.0, %v4248
    %4273 = vrot.lane.b32.xlu0 %v4267, 104
    %v4274 = vpop.permute.xlu0 %4273
    %4275 = vrot.lane.b32.xlu0 %v4268, 104
    %v4276 = vpop.permute.xlu0 %4275
    %v4279 = vmul.f32 %v4269, %v4274
    %v4280 = vmul.f32 %v4270, %v4276
    %v4281 = vrot.slane %v4043, 7
    %v4282 = vrot.slane %v4044, 7
    %v4285 = vmul.f32 %v4233, %v4281
    %v4286 = vmul.f32 %v4248, %v4282
    %v4287 = vadd.f32 %v4279, %v4285
    %v4288 = vadd.f32 %v4280, %v4286
    %v4289 = vrot.slane %v4155, 2
    %v4290 = vrot.slane %v4156, 1
    %v4291 = vsel %vm889, %v4290, %v4289
    %4292 = vrot.lane.b32.xlu0 %v4291, 104
    %v4293 = vpop.permute.xlu0 %4292
    %v4294 = vsel %vm658, %v4293, 0
    %4296 = vmatpush.msra.mxu0 0.0
    %4297 = vmatpush.msra.mxu0 0.0
    %4298 = vmatpush.msra.mxu0 0.0
    %4299 = vmatpush.msra.mxu0 0.0
    %4300 = vmatpush.msra.mxu0 0.0
    %4301 = vmatpush.msra.mxu0 0.0
    %4302 = vmatpush.msra.mxu0 0.0
    %4303 = vmatpush.msra.mxu0 0.0
    %4304 = vmatpush.msra.mxu0 0.0
    %4305 = vmatpush.msra.mxu0 0.0
    %4306 = vmatpush.msra.mxu0 0.0
    %4307 = vmatpush.msra.mxu0 0.0
    %4308 = vmatpush.msra.mxu0 0.0
    %4309 = vmatpush.msra.mxu0 %v2613
    %4310 = vmatpush.msra.mxu0 %v2612
    %4311 = vmatpush.msra.mxu0 %v2611
    %4312 = vmatmul.f32.gmra.mxu0 %v4294
    %v4313 = vpop.f32.mrf.mxu0
    %v4314 = vadd.f32 %v2838, %v4313
    %4315 = vdwg.mxu0
    %v4317 = vrot.slane %v4314, 7
    %v4320 = vadd.f32 %v2732, %v4317
    %v4321 = vadd.f32 %v2733, %v4314
    %v4322 = vxor.u32 %v4320, 2147483648
    %v4323 = vxor.u32 %v4321, 2147483648
    %v4324 = vmul.f32 %v4322, 1.442695
    %v4325 = vpow.pop %v4324
    %v4326 = vmul.f32 %v4323, 1.442695
    %v4327 = vpow.pop %v4326
    %v4328 = vadd.f32 %v4325, 1.0
    %v4329 = vadd.f32 %v4327, 1.0
    %v4330 = vrcp.pop %v4328
    %v4331 = vmul.f32 %v4328, %v4330
    %v4332 = vsub.f32 1.0, %v4331
    %v4333 = vmul.f32 %v4330, %v4332
    %v4334 = vadd.f32 %v4330, %v4333
    %vm4335 = vweird.f32 %v4328
    %vm4336 = vweird.f32 %v4330
    %vm4337 = vmor %vm4335, %vm4336
    %v4338 = vsel %vm4337, %v4330, %v4334
    %v4339 = vand.u32 2147483647, %v4328
    %vm4340 = vcmp.eq.f32.partialorder %v4339, 8.507059e+37
    %v4341 = vand.u32 %v4328, 2147483648
    %v4342 = vor.u32 1.1754944e-38, %v4341
    %v4343 = vsel %vm4340, %v4342, %v4338
    %v4344 = vmul.f32 1.0, %v4343
    %v4345 = vrcp.pop %v4329
    %v4346 = vmul.f32 %v4329, %v4345
    %v4347 = vsub.f32 1.0, %v4346
    %v4348 = vmul.f32 %v4345, %v4347
    %v4349 = vadd.f32 %v4345, %v4348
    %vm4350 = vweird.f32 %v4329
    %vm4351 = vweird.f32 %v4345
    %vm4352 = vmor %vm4350, %vm4351
    %v4353 = vsel %vm4352, %v4345, %v4349
    %v4354 = vand.u32 2147483647, %v4329
    %vm4355 = vcmp.eq.f32.partialorder %v4354, 8.507059e+37
    %v4356 = vand.u32 %v4329, 2147483648
    %v4357 = vor.u32 1.1754944e-38, %v4356
    %v4358 = vsel %vm4355, %v4357, %v4353
    %v4359 = vmul.f32 1.0, %v4358
    %4360 = vrot.lane.b32.xlu0 %v4317, 80
    %v4361 = vpop.permute.xlu0 %4360
    %4362 = vrot.lane.b32.xlu0 %v4314, 80
    %v4363 = vpop.permute.xlu0 %4362
    %v4366 = vmul.f32 %v4344, %v4361
    %v4367 = vmul.f32 %v4359, %v4363
    %4370 = vrot.lane.b32.xlu0 %v4366, 48
    %v4371 = vpop.permute.xlu0 %4370
    %4372 = vrot.lane.b32.xlu0 %v4367, 48
    %v4373 = vpop.permute.xlu0 %4372
    %v4376 = vadd.f32 %v2732, %v4371
    %v4377 = vadd.f32 %v2733, %v4373
    %v4378 = vtanh.pop %v4376
    %v4379 = vtanh.pop %v4377
    %v4380 = vsub.f32 1.0, %v4344
    %v4381 = vsub.f32 1.0, %v4359
    %4384 = vrot.lane.b32.xlu0 %v4378, 104
    %v4385 = vpop.permute.xlu0 %4384
    %4386 = vrot.lane.b32.xlu0 %v4379, 104
    %v4387 = vpop.permute.xlu0 %4386
    %v4390 = vmul.f32 %v4380, %v4385
    %v4391 = vmul.f32 %v4381, %v4387
    %v4392 = vrot.slane %v4155, 1
    %v4395 = vmul.f32 %v4344, %v4392
    %v4396 = vmul.f32 %v4359, %v4290
    %v4397 = vadd.f32 %v4390, %v4395
    %v4398 = vadd.f32 %v4391, %v4396
    %4401 = vrot.lane.b32.xlu0 %v4287, 104
    %v4402 = vpop.permute.xlu0 %4401
    %4403 = vrot.lane.b32.xlu0 %v4288, 104
    %v4404 = vpop.permute.xlu0 %4403
    %4407 = vst.msk [vmem:[#allocation4] sm:$0x40] %vm1129, %v4402
    %4408 = vst.msk [vmem:[#allocation4 + $0x8] sm:$0x40] %vm1129, %v4404
    %4411 = vrot.lane.b32.xlu0 %v4397, 104
    %v4412 = vpop.permute.xlu0 %4411
    %4413 = vrot.lane.b32.xlu0 %v4398, 104
    %v4414 = vpop.permute.xlu0 %4413
    %4417 = vst.msk [vmem:[#allocation5] sm:$0x2] %vm1118, %v4412
    %4418 = vst.msk [vmem:[#allocation5 + $0x8] sm:$0x2] %vm1118, %v4414
    %v4419 = vrot.slane %v4287, 6
    %v4420 = vrot.slane %v4288, 5
    %v4421 = vsel %vm889, %v4420, %v4419
    %4422 = vrot.lane.b32.xlu0 %v4421, 104
    %v4423 = vpop.permute.xlu0 %4422
    %v4424 = vsel %vm658, %v4423, 0
    %4426 = vmatpush.msra.mxu0 0.0
    %4427 = vmatpush.msra.mxu0 0.0
    %4428 = vmatpush.msra.mxu0 0.0
    %4429 = vmatpush.msra.mxu0 0.0
    %4430 = vmatpush.msra.mxu0 0.0
    %4431 = vmatpush.msra.mxu0 0.0
    %4432 = vmatpush.msra.mxu0 0.0
    %4433 = vmatpush.msra.mxu0 0.0
    %4434 = vmatpush.msra.mxu0 0.0
    %4435 = vmatpush.msra.mxu0 0.0
    %4436 = vmatpush.msra.mxu0 0.0
    %4437 = vmatpush.msra.mxu0 0.0
    %4438 = vmatpush.msra.mxu0 0.0
    %4439 = vmatpush.msra.mxu0 %v2602
    %4440 = vmatpush.msra.mxu0 %v2601
    %4441 = vmatpush.msra.mxu0 %v2600
    %4442 = vmatmul.f32.gmra.mxu0 %v4424
    %v4443 = vpop.f32.mrf.mxu0
    %v4444 = vadd.f32 %v2735, %v4443
    %4445 = vdwg.mxu0
    %v4447 = vrot.slane %v4444, 1
    %v4448 = vrot.slane %v4444, 2
    %v4451 = vadd.f32 %v2681, %v4447
    %v4452 = vadd.f32 %v2682, %v4448
    %v4453 = vxor.u32 %v4451, 2147483648
    %v4454 = vxor.u32 %v4452, 2147483648
    %v4455 = vmul.f32 %v4453, 1.442695
    %v4456 = vpow.pop %v4455
    %v4457 = vmul.f32 %v4454, 1.442695
    %v4458 = vpow.pop %v4457
    %v4459 = vadd.f32 %v4456, 1.0
    %v4460 = vadd.f32 %v4458, 1.0
    %v4461 = vrcp.pop %v4459
    %v4462 = vmul.f32 %v4459, %v4461
    %v4463 = vsub.f32 1.0, %v4462
    %v4464 = vmul.f32 %v4461, %v4463
    %v4465 = vadd.f32 %v4461, %v4464
    %vm4466 = vweird.f32 %v4459
    %vm4467 = vweird.f32 %v4461
    %vm4468 = vmor %vm4466, %vm4467
    %v4469 = vsel %vm4468, %v4461, %v4465
    %v4470 = vand.u32 2147483647, %v4459
    %vm4471 = vcmp.eq.f32.partialorder %v4470, 8.507059e+37
    %v4472 = vand.u32 %v4459, 2147483648
    %v4473 = vor.u32 1.1754944e-38, %v4472
    %v4474 = vsel %vm4471, %v4473, %v4469
    %v4475 = vmul.f32 1.0, %v4474
    %v4476 = vrcp.pop %v4460
    %v4477 = vmul.f32 %v4460, %v4476
    %v4478 = vsub.f32 1.0, %v4477
    %v4479 = vmul.f32 %v4476, %v4478
    %v4480 = vadd.f32 %v4476, %v4479
    %vm4481 = vweird.f32 %v4460
    %vm4482 = vweird.f32 %v4476
    %vm4483 = vmor %vm4481, %vm4482
    %v4484 = vsel %vm4483, %v4476, %v4480
    %v4485 = vand.u32 2147483647, %v4460
    %vm4486 = vcmp.eq.f32.partialorder %v4485, 8.507059e+37
    %v4487 = vand.u32 %v4460, 2147483648
    %v4488 = vor.u32 1.1754944e-38, %v4487
    %v4489 = vsel %vm4486, %v4488, %v4484
    %v4490 = vmul.f32 1.0, %v4489
    %4491 = vrot.lane.b32.xlu0 %v4447, 80
    %v4492 = vpop.permute.xlu0 %4491
    %4493 = vrot.lane.b32.xlu0 %v4448, 80
    %v4494 = vpop.permute.xlu0 %4493
    %v4497 = vmul.f32 %v4475, %v4492
    %v4498 = vmul.f32 %v4490, %v4494
    %4501 = vrot.lane.b32.xlu0 %v4497, 48
    %v4502 = vpop.permute.xlu0 %4501
    %4503 = vrot.lane.b32.xlu0 %v4498, 48
    %v4504 = vpop.permute.xlu0 %4503
    %v4507 = vadd.f32 %v2681, %v4502
    %v4508 = vadd.f32 %v2682, %v4504
    %v4509 = vtanh.pop %v4507
    %v4510 = vtanh.pop %v4508
    %v4511 = vsub.f32 1.0, %v4475
    %v4512 = vsub.f32 1.0, %v4490
    %4515 = vrot.lane.b32.xlu0 %v4509, 104
    %v4516 = vpop.permute.xlu0 %4515
    %4517 = vrot.lane.b32.xlu0 %v4510, 104
    %v4518 = vpop.permute.xlu0 %4517
    %v4521 = vmul.f32 %v4511, %v4516
    %v4522 = vmul.f32 %v4512, %v4518
    %v4523 = vrot.slane %v4287, 7
    %v4524 = vrot.slane %v4288, 7
    %v4527 = vmul.f32 %v4475, %v4523
    %v4528 = vmul.f32 %v4490, %v4524
    %v4529 = vadd.f32 %v4521, %v4527
    %v4530 = vadd.f32 %v4522, %v4528
    %v4531 = vrot.slane %v4397, 1
    %v4532 = vsel %vm889, %v4398, %v4531
    %4533 = vrot.lane.b32.xlu0 %v4532, 104
    %v4534 = vpop.permute.xlu0 %4533
    %v4535 = vsel %vm658, %v4534, 0
    %4537 = vmatpush.msra.mxu0 0.0
    %4538 = vmatpush.msra.mxu0 0.0
    %4539 = vmatpush.msra.mxu0 0.0
    %4540 = vmatpush.msra.mxu0 0.0
    %4541 = vmatpush.msra.mxu0 0.0
    %4542 = vmatpush.msra.mxu0 0.0
    %4543 = vmatpush.msra.mxu0 0.0
    %4544 = vmatpush.msra.mxu0 0.0
    %4545 = vmatpush.msra.mxu0 0.0
    %4546 = vmatpush.msra.mxu0 0.0
    %4547 = vmatpush.msra.mxu0 0.0
    %4548 = vmatpush.msra.mxu0 0.0
    %4549 = vmatpush.msra.mxu0 0.0
    %4550 = vmatpush.msra.mxu0 %v2613
    %4551 = vmatpush.msra.mxu0 %v2612
    %4552 = vmatpush.msra.mxu0 %v2611
    %4553 = vmatmul.f32.gmra.mxu0 %v4535
    %v4554 = vpop.f32.mrf.mxu0
    %v4555 = vadd.f32 %v2838, %v4554
    %4556 = vdwg.mxu0
    %v4558 = vrot.slane %v4555, 1
    %v4561 = vadd.f32 %v2732, %v4555
    %v4562 = vadd.f32 %v2733, %v4558
    %v4563 = vxor.u32 %v4561, 2147483648
    %v4564 = vxor.u32 %v4562, 2147483648
    %v4565 = vmul.f32 %v4563, 1.442695
    %v4566 = vpow.pop %v4565
    %v4567 = vmul.f32 %v4564, 1.442695
    %v4568 = vpow.pop %v4567
    %v4569 = vadd.f32 %v4566, 1.0
    %v4570 = vadd.f32 %v4568, 1.0
    %v4571 = vrcp.pop %v4569
    %v4572 = vmul.f32 %v4569, %v4571
    %v4573 = vsub.f32 1.0, %v4572
    %v4574 = vmul.f32 %v4571, %v4573
    %v4575 = vadd.f32 %v4571, %v4574
    %vm4576 = vweird.f32 %v4569
    %vm4577 = vweird.f32 %v4571
    %vm4578 = vmor %vm4576, %vm4577
    %v4579 = vsel %vm4578, %v4571, %v4575
    %v4580 = vand.u32 2147483647, %v4569
    %vm4581 = vcmp.eq.f32.partialorder %v4580, 8.507059e+37
    %v4582 = vand.u32 %v4569, 2147483648
    %v4583 = vor.u32 1.1754944e-38, %v4582
    %v4584 = vsel %vm4581, %v4583, %v4579
    %v4585 = vmul.f32 1.0, %v4584
    %v4586 = vrcp.pop %v4570
    %v4587 = vmul.f32 %v4570, %v4586
    %v4588 = vsub.f32 1.0, %v4587
    %v4589 = vmul.f32 %v4586, %v4588
    %v4590 = vadd.f32 %v4586, %v4589
    %vm4591 = vweird.f32 %v4570
    %vm4592 = vweird.f32 %v4586
    %vm4593 = vmor %vm4591, %vm4592
    %v4594 = vsel %vm4593, %v4586, %v4590
    %v4595 = vand.u32 2147483647, %v4570
    %vm4596 = vcmp.eq.f32.partialorder %v4595, 8.507059e+37
    %v4597 = vand.u32 %v4570, 2147483648
    %v4598 = vor.u32 1.1754944e-38, %v4597
    %v4599 = vsel %vm4596, %v4598, %v4594
    %v4600 = vmul.f32 1.0, %v4599
    %4601 = vrot.lane.b32.xlu0 %v4555, 80
    %v4602 = vpop.permute.xlu0 %4601
    %4603 = vrot.lane.b32.xlu0 %v4558, 80
    %v4604 = vpop.permute.xlu0 %4603
    %v4607 = vmul.f32 %v4585, %v4602
    %v4608 = vmul.f32 %v4600, %v4604
    %4611 = vrot.lane.b32.xlu0 %v4607, 48
    %v4612 = vpop.permute.xlu0 %4611
    %4613 = vrot.lane.b32.xlu0 %v4608, 48
    %v4614 = vpop.permute.xlu0 %4613
    %v4617 = vadd.f32 %v2732, %v4612
    %v4618 = vadd.f32 %v2733, %v4614
    %v4619 = vtanh.pop %v4617
    %v4620 = vtanh.pop %v4618
    %v4621 = vsub.f32 1.0, %v4585
    %v4622 = vsub.f32 1.0, %v4600
    %4625 = vrot.lane.b32.xlu0 %v4619, 104
    %v4626 = vpop.permute.xlu0 %4625
    %4627 = vrot.lane.b32.xlu0 %v4620, 104
    %v4628 = vpop.permute.xlu0 %4627
    %v4631 = vmul.f32 %v4621, %v4626
    %v4632 = vmul.f32 %v4622, %v4628
    %v4633 = vrot.slane %v4398, 1
    %v4636 = vmul.f32 %v4585, %v4531
    %v4637 = vmul.f32 %v4600, %v4633
    %v4638 = vadd.f32 %v4631, %v4636
    %v4639 = vadd.f32 %v4632, %v4637
    %4642 = vrot.lane.b32.xlu0 %v4529, 104
    %v4643 = vpop.permute.xlu0 %4642
    %4644 = vrot.lane.b32.xlu0 %v4530, 104
    %v4645 = vpop.permute.xlu0 %4644
    %4648 = vst.msk [vmem:[#allocation4] sm:$0x80] %vm885, %v4643
    %4649 = vst.msk [vmem:[#allocation4 + $0x8] sm:$0x80] %vm885, %v4645
    %4652 = vrot.lane.b32.xlu0 %v4638, 104
    %v4653 = vpop.permute.xlu0 %4652
    %4654 = vrot.lane.b32.xlu0 %v4639, 104
    %v4655 = vpop.permute.xlu0 %4654
    %4658 = vst.msk [vmem:[#allocation5] sm:$0x1] %vm874, %v4653
    %4659 = vst.msk [vmem:[#allocation5 + $0x8] sm:$0x1] %vm874, %v4655
    %v4660 = vld [vmem:[#allocation27] sm:$0xff]
    %v4661 = vld [vmem:[#allocation27 + $0x8] sm:$0xff]
    %v4662 = vld [vmem:[#allocation27 + $0x10] sm:$0xff]
    %v4663 = vld [vmem:[#allocation27 + $0x18] sm:$0xff]
    %v4664 = vld [vmem:[#allocation27 + $0x20] sm:$0xff]
    %v4665 = vld [vmem:[#allocation27 + $0x28] sm:$0xff]
    %v4666 = vld [vmem:[#allocation29] sm:$0xff]
    %v4667 = vld [vmem:[#allocation29 + $0x8] sm:$0xff]
    %v4668 = vld [vmem:[#allocation29 + $0x10] sm:$0xff]
    %v4669 = vld [vmem:[#allocation30] sm:$0x1]
    %v4670 = vld [vmem:[#allocation32] sm:$0x1]
    %v4671 = vld [vmem:[#allocation33] sm:$0xff]
    %v4672 = vld [vmem:[#allocation33 + $0x8] sm:$0xff]
    %v4673 = vld [vmem:[#allocation33 + $0x10] sm:$0xff]
    %v4674 = vld [vmem:[#allocation33 + $0x18] sm:$0xff]
    %v4675 = vld [vmem:[#allocation33 + $0x20] sm:$0xff]
    %v4676 = vld [vmem:[#allocation33 + $0x28] sm:$0xff]
    %v4677 = vld [vmem:[#allocation35] sm:$0xff]
    %v4678 = vld [vmem:[#allocation35 + $0x8] sm:$0xff]
    %v4679 = vld [vmem:[#allocation35 + $0x10] sm:$0xff]
    %v4680 = vld [vmem:[#allocation36] sm:$0x1]
    %v4681 = vld [vmem:[#allocation38] sm:$0x1]
    %v4682 = vld [vmem:[#allocation4] sm:$0xff]
    %v4683 = vld [vmem:[#allocation4 + $0x8] sm:$0xff]
    %v4684 = vld [vmem:[#allocation5] sm:$0xff]
    %v4685 = vld [vmem:[#allocation5 + $0x8] sm:$0xff]
    %v4687 = vsel %vm658, %v4684, 0
    %v4690 = vsel %vm658, %v4685, 0
    %4692 = vmatpush.msra.mxu0 0.0
    %4693 = vmatpush.msra.mxu0 0.0
    %4694 = vmatpush.msra.mxu0 0.0
    %4695 = vmatpush.msra.mxu0 0.0
    %4696 = vmatpush.msra.mxu0 0.0
    %4697 = vmatpush.msra.mxu0 0.0
    %4698 = vmatpush.msra.mxu0 0.0
    %4699 = vmatpush.msra.mxu0 0.0
    %4700 = vmatpush.msra.mxu0 0.0
    %4701 = vmatpush.msra.mxu0 0.0
    %4702 = vmatpush.msra.mxu0 0.0
    %4703 = vmatpush.msra.mxu0 0.0
    %4704 = vmatpush.msra.mxu0 0.0
    %4705 = vmatpush.msra.mxu0 %v4665
    %4706 = vmatpush.msra.mxu0 %v4664
    %4707 = vmatpush.msra.mxu0 %v4663
    %4708 = vmatmul.f32.gmra.mxu0 %v4687
    %v4709 = vpop.f32.mrf.mxu0
    %v4710 = vadd.f32 0.0, %v4709
    %4711 = vmatmul.f32.gmra.mxu0 %v4690
    %v4712 = vpop.f32.mrf.mxu0
    %v4713 = vadd.f32 0.0, %v4712
    %4714 = vdwg.mxu0
    %v4716 = vsel %vm658, %v4682, 0
    %v4719 = vsel %vm658, %v4683, 0
    %4721 = vmatpush.msra.mxu0 0.0
    %4722 = vmatpush.msra.mxu0 0.0
    %4723 = vmatpush.msra.mxu0 0.0
    %4724 = vmatpush.msra.mxu0 0.0
    %4725 = vmatpush.msra.mxu0 0.0
    %4726 = vmatpush.msra.mxu0 0.0
    %4727 = vmatpush.msra.mxu0 0.0
    %4728 = vmatpush.msra.mxu0 0.0
    %4729 = vmatpush.msra.mxu0 0.0
    %4730 = vmatpush.msra.mxu0 0.0
    %4731 = vmatpush.msra.mxu0 0.0
    %4732 = vmatpush.msra.mxu0 0.0
    %4733 = vmatpush.msra.mxu0 0.0
    %4734 = vmatpush.msra.mxu0 %v4662
    %4735 = vmatpush.msra.mxu0 %v4661
    %4736 = vmatpush.msra.mxu0 %v4660
    %4737 = vmatmul.f32.gmra.mxu0 %v4716
    %v4738 = vpop.f32.mrf.mxu0
    %v4739 = vadd.f32 %v4710, %v4738
    %4740 = vmatmul.f32.gmra.mxu0 %v4719
    %v4741 = vpop.f32.mrf.mxu0
    %v4742 = vadd.f32 %v4713, %v4741
    %4743 = vdwg.mxu0
    %v4745 = vperm.slane %v4669, 0
    %v4747 = vadd.f32 %v4739, %v4745
    %v4748 = vadd.f32 %v4742, %v4745
    %4749 = vmatpush.msra.mxu0 0.0
    %4750 = vmatpush.msra.mxu0 0.0
    %4751 = vmatpush.msra.mxu0 0.0
    %4752 = vmatpush.msra.mxu0 0.0
    %4753 = vmatpush.msra.mxu0 0.0
    %4754 = vmatpush.msra.mxu0 0.0
    %4755 = vmatpush.msra.mxu0 0.0
    %4756 = vmatpush.msra.mxu0 0.0
    %4757 = vmatpush.msra.mxu0 0.0
    %4758 = vmatpush.msra.mxu0 0.0
    %4759 = vmatpush.msra.mxu0 0.0
    %4760 = vmatpush.msra.mxu0 0.0
    %4761 = vmatpush.msra.mxu0 0.0
    %4762 = vmatpush.msra.mxu0 %v4676
    %4763 = vmatpush.msra.mxu0 %v4675
    %4764 = vmatpush.msra.mxu0 %v4674
    %4765 = vmatmul.f32.gmra.mxu0 %v4687
    %v4766 = vpop.f32.mrf.mxu0
    %v4767 = vadd.f32 0.0, %v4766
    %4768 = vmatmul.f32.gmra.mxu0 %v4690
    %v4769 = vpop.f32.mrf.mxu0
    %v4770 = vadd.f32 0.0, %v4769
    %4771 = vdwg.mxu0
    %4772 = vmatpush.msra.mxu0 0.0
    %4773 = vmatpush.msra.mxu0 0.0
    %4774 = vmatpush.msra.mxu0 0.0
    %4775 = vmatpush.msra.mxu0 0.0
    %4776 = vmatpush.msra.mxu0 0.0
    %4777 = vmatpush.msra.mxu0 0.0
    %4778 = vmatpush.msra.mxu0 0.0
    %4779 = vmatpush.msra.mxu0 0.0
    %4780 = vmatpush.msra.mxu0 0.0
    %4781 = vmatpush.msra.mxu0 0.0
    %4782 = vmatpush.msra.mxu0 0.0
    %4783 = vmatpush.msra.mxu0 0.0
    %4784 = vmatpush.msra.mxu0 0.0
    %4785 = vmatpush.msra.mxu0 %v4673
    %4786 = vmatpush.msra.mxu0 %v4672
    %4787 = vmatpush.msra.mxu0 %v4671
    %4788 = vmatmul.f32.gmra.mxu0 %v4716
    %v4789 = vpop.f32.mrf.mxu0
    %v4790 = vadd.f32 %v4767, %v4789
    %4791 = vmatmul.f32.gmra.mxu0 %v4719
    %v4792 = vpop.f32.mrf.mxu0
    %v4793 = vadd.f32 %v4770, %v4792
    %4794 = vdwg.mxu0
    %v4796 = vperm.slane %v4680, 0
    %v4798 = vadd.f32 %v4790, %v4796
    %v4799 = vadd.f32 %v4793, %v4796
    %v4801 = vperm.slane %v4670, 0
    %4803 = vmatpush.msra.mxu0 0.0
    %4804 = vmatpush.msra.mxu0 0.0
    %4805 = vmatpush.msra.mxu0 0.0
    %4806 = vmatpush.msra.mxu0 0.0
    %4807 = vmatpush.msra.mxu0 0.0
    %4808 = vmatpush.msra.mxu0 0.0
    %4809 = vmatpush.msra.mxu0 0.0
    %4810 = vmatpush.msra.mxu0 0.0
    %4811 = vmatpush.msra.mxu0 0.0
    %4812 = vmatpush.msra.mxu0 0.0
    %4813 = vmatpush.msra.mxu0 0.0
    %4814 = vmatpush.msra.mxu0 0.0
    %4815 = vmatpush.msra.mxu0 0.0
    %4816 = vmatpush.msra.mxu0 %v4668
    %4817 = vmatpush.msra.mxu0 %v4667
    %4818 = vmatpush.msra.mxu0 %v4666
    %4819 = vmatmul.f32.gmra.mxu0 %v660
    %v4820 = vpop.f32.mrf.mxu0
    %v4821 = vadd.f32 %v4801, %v4820
    %4822 = vdwg.mxu0
    %v4824 = vrot.slane %v4821, 1
    %v4827 = vadd.f32 %v4747, %v4821
    %v4828 = vadd.f32 %v4748, %v4824
    %v4829 = vxor.u32 %v4827, 2147483648
    %v4830 = vxor.u32 %v4828, 2147483648
    %v4831 = vmul.f32 %v4829, 1.442695
    %v4832 = vpow.pop %v4831
    %v4833 = vmul.f32 %v4830, 1.442695
    %v4834 = vpow.pop %v4833
    %v4835 = vadd.f32 %v4832, 1.0
    %v4836 = vadd.f32 %v4834, 1.0
    %v4837 = vrcp.pop %v4835
    %v4838 = vmul.f32 %v4835, %v4837
    %v4839 = vsub.f32 1.0, %v4838
    %v4840 = vmul.f32 %v4837, %v4839
    %v4841 = vadd.f32 %v4837, %v4840
    %vm4842 = vweird.f32 %v4835
    %vm4843 = vweird.f32 %v4837
    %vm4844 = vmor %vm4842, %vm4843
    %v4845 = vsel %vm4844, %v4837, %v4841
    %v4846 = vand.u32 2147483647, %v4835
    %vm4847 = vcmp.eq.f32.partialorder %v4846, 8.507059e+37
    %v4848 = vand.u32 %v4835, 2147483648
    %v4849 = vor.u32 1.1754944e-38, %v4848
    %v4850 = vsel %vm4847, %v4849, %v4845
    %v4851 = vmul.f32 1.0, %v4850
    %v4852 = vrcp.pop %v4836
    %v4853 = vmul.f32 %v4836, %v4852
    %v4854 = vsub.f32 1.0, %v4853
    %v4855 = vmul.f32 %v4852, %v4854
    %v4856 = vadd.f32 %v4852, %v4855
    %vm4857 = vweird.f32 %v4836
    %vm4858 = vweird.f32 %v4852
    %vm4859 = vmor %vm4857, %vm4858
    %v4860 = vsel %vm4859, %v4852, %v4856
    %v4861 = vand.u32 2147483647, %v4836
    %vm4862 = vcmp.eq.f32.partialorder %v4861, 8.507059e+37
    %v4863 = vand.u32 %v4836, 2147483648
    %v4864 = vor.u32 1.1754944e-38, %v4863
    %v4865 = vsel %vm4862, %v4864, %v4860
    %v4866 = vmul.f32 1.0, %v4865
    %4867 = vrot.lane.b32.xlu0 %v4821, 80
    %v4868 = vpop.permute.xlu0 %4867
    %4869 = vrot.lane.b32.xlu0 %v4824, 80
    %v4870 = vpop.permute.xlu0 %4869
    %v4873 = vmul.f32 %v4851, %v4868
    %v4874 = vmul.f32 %v4866, %v4870
    %4877 = vrot.lane.b32.xlu0 %v4873, 48
    %v4878 = vpop.permute.xlu0 %4877
    %4879 = vrot.lane.b32.xlu0 %v4874, 48
    %v4880 = vpop.permute.xlu0 %4879
    %v4883 = vadd.f32 %v4747, %v4878
    %v4884 = vadd.f32 %v4748, %v4880
    %v4885 = vtanh.pop %v4883
    %v4886 = vtanh.pop %v4884
    %v4887 = vsub.f32 1.0, %v4851
    %v4888 = vsub.f32 1.0, %v4866
    %4891 = vrot.lane.b32.xlu0 %v4885, 104
    %v4892 = vpop.permute.xlu0 %4891
    %4893 = vrot.lane.b32.xlu0 %v4886, 104
    %v4894 = vpop.permute.xlu0 %4893
    %v4897 = vmul.f32 %v4887, %v4892
    %v4898 = vmul.f32 %v4888, %v4894
    %v4899 = vmul.f32 %v4851, 0.0
    %v4900 = vmul.f32 %v4866, 0.0
    %v4901 = vadd.f32 %v4897, %v4899
    %v4902 = vadd.f32 %v4898, %v4900
    %v4904 = vperm.slane %v4681, 0
    %4906 = vmatpush.msra.mxu0 0.0
    %4907 = vmatpush.msra.mxu0 0.0
    %4908 = vmatpush.msra.mxu0 0.0
    %4909 = vmatpush.msra.mxu0 0.0
    %4910 = vmatpush.msra.mxu0 0.0
    %4911 = vmatpush.msra.mxu0 0.0
    %4912 = vmatpush.msra.mxu0 0.0
    %4913 = vmatpush.msra.mxu0 0.0
    %4914 = vmatpush.msra.mxu0 0.0
    %4915 = vmatpush.msra.mxu0 0.0
    %4916 = vmatpush.msra.mxu0 0.0
    %4917 = vmatpush.msra.mxu0 0.0
    %4918 = vmatpush.msra.mxu0 0.0
    %4919 = vmatpush.msra.mxu0 %v4679
    %4920 = vmatpush.msra.mxu0 %v4678
    %4921 = vmatpush.msra.mxu0 %v4677
    %4922 = vmatmul.f32.gmra.mxu0 %v660
    %v4923 = vpop.f32.mrf.mxu0
    %v4924 = vadd.f32 %v4904, %v4923
    %4925 = vdwg.mxu0
    %v4927 = vrot.slane %v4924, 1
    %v4928 = vrot.slane %v4924, 2
    %v4931 = vadd.f32 %v4798, %v4927
    %v4932 = vadd.f32 %v4799, %v4928
    %v4933 = vxor.u32 %v4931, 2147483648
    %v4934 = vxor.u32 %v4932, 2147483648
    %v4935 = vmul.f32 %v4933, 1.442695
    %v4936 = vpow.pop %v4935
    %v4937 = vmul.f32 %v4934, 1.442695
    %v4938 = vpow.pop %v4937
    %v4939 = vadd.f32 %v4936, 1.0
    %v4940 = vadd.f32 %v4938, 1.0
    %v4941 = vrcp.pop %v4939
    %v4942 = vmul.f32 %v4939, %v4941
    %v4943 = vsub.f32 1.0, %v4942
    %v4944 = vmul.f32 %v4941, %v4943
    %v4945 = vadd.f32 %v4941, %v4944
    %vm4946 = vweird.f32 %v4939
    %vm4947 = vweird.f32 %v4941
    %vm4948 = vmor %vm4946, %vm4947
    %v4949 = vsel %vm4948, %v4941, %v4945
    %v4950 = vand.u32 2147483647, %v4939
    %vm4951 = vcmp.eq.f32.partialorder %v4950, 8.507059e+37
    %v4952 = vand.u32 %v4939, 2147483648
    %v4953 = vor.u32 1.1754944e-38, %v4952
    %v4954 = vsel %vm4951, %v4953, %v4949
    %v4955 = vmul.f32 1.0, %v4954
    %v4956 = vrcp.pop %v4940
    %v4957 = vmul.f32 %v4940, %v4956
    %v4958 = vsub.f32 1.0, %v4957
    %v4959 = vmul.f32 %v4956, %v4958
    %v4960 = vadd.f32 %v4956, %v4959
    %vm4961 = vweird.f32 %v4940
    %vm4962 = vweird.f32 %v4956
    %vm4963 = vmor %vm4961, %vm4962
    %v4964 = vsel %vm4963, %v4956, %v4960
    %v4965 = vand.u32 2147483647, %v4940
    %vm4966 = vcmp.eq.f32.partialorder %v4965, 8.507059e+37
    %v4967 = vand.u32 %v4940, 2147483648
    %v4968 = vor.u32 1.1754944e-38, %v4967
    %v4969 = vsel %vm4966, %v4968, %v4964
    %v4970 = vmul.f32 1.0, %v4969
    %4971 = vrot.lane.b32.xlu0 %v4927, 80
    %v4972 = vpop.permute.xlu0 %4971
    %4973 = vrot.lane.b32.xlu0 %v4928, 80
    %v4974 = vpop.permute.xlu0 %4973
    %v4977 = vmul.f32 %v4955, %v4972
    %v4978 = vmul.f32 %v4970, %v4974
    %4981 = vrot.lane.b32.xlu0 %v4977, 48
    %v4982 = vpop.permute.xlu0 %4981
    %4983 = vrot.lane.b32.xlu0 %v4978, 48
    %v4984 = vpop.permute.xlu0 %4983
    %v4987 = vadd.f32 %v4798, %v4982
    %v4988 = vadd.f32 %v4799, %v4984
    %v4989 = vtanh.pop %v4987
    %v4990 = vtanh.pop %v4988
    %v4991 = vsub.f32 1.0, %v4955
    %v4992 = vsub.f32 1.0, %v4970
    %4995 = vrot.lane.b32.xlu0 %v4989, 104
    %v4996 = vpop.permute.xlu0 %4995
    %4997 = vrot.lane.b32.xlu0 %v4990, 104
    %v4998 = vpop.permute.xlu0 %4997
    %v5001 = vmul.f32 %v4991, %v4996
    %v5002 = vmul.f32 %v4992, %v4998
    %v5003 = vmul.f32 %v4955, 0.0
    %v5004 = vmul.f32 %v4970, 0.0
    %v5005 = vadd.f32 %v5001, %v5003
    %v5006 = vadd.f32 %v5002, %v5004
    %5009 = vrot.lane.b32.xlu0 %v4901, 104
    %v5010 = vpop.permute.xlu0 %5009
    %5011 = vrot.lane.b32.xlu0 %v4902, 104
    %v5012 = vpop.permute.xlu0 %5011
    %5015 = vst.msk [vmem:[#allocation2] sm:$0x1] %vm874, %v5010
    %5016 = vst.msk [vmem:[#allocation2 + $0x8] sm:$0x1] %vm874, %v5012
    %5019 = vrot.lane.b32.xlu0 %v5005, 104
    %v5020 = vpop.permute.xlu0 %5019
    %5021 = vrot.lane.b32.xlu0 %v5006, 104
    %v5022 = vpop.permute.xlu0 %5021
    %5025 = vst.msk [vmem:[#allocation3] sm:$0x80] %vm885, %v5020
    %5026 = vst.msk [vmem:[#allocation3 + $0x8] sm:$0x80] %vm885, %v5022
    %v5027 = vrot.slane %v4902, 7
    %v5028 = vsel %vm889, %v5027, %v4901
    %5029 = vrot.lane.b32.xlu0 %v5028, 104
    %v5030 = vpop.permute.xlu0 %5029
    %v5031 = vsel %vm658, %v5030, 0
    %5033 = vmatpush.msra.mxu0 0.0
    %5034 = vmatpush.msra.mxu0 0.0
    %5035 = vmatpush.msra.mxu0 0.0
    %5036 = vmatpush.msra.mxu0 0.0
    %5037 = vmatpush.msra.mxu0 0.0
    %5038 = vmatpush.msra.mxu0 0.0
    %5039 = vmatpush.msra.mxu0 0.0
    %5040 = vmatpush.msra.mxu0 0.0
    %5041 = vmatpush.msra.mxu0 0.0
    %5042 = vmatpush.msra.mxu0 0.0
    %5043 = vmatpush.msra.mxu0 0.0
    %5044 = vmatpush.msra.mxu0 0.0
    %5045 = vmatpush.msra.mxu0 0.0
    %5046 = vmatpush.msra.mxu0 %v4668
    %5047 = vmatpush.msra.mxu0 %v4667
    %5048 = vmatpush.msra.mxu0 %v4666
    %5049 = vmatmul.f32.gmra.mxu0 %v5031
    %v5050 = vpop.f32.mrf.mxu0
    %v5051 = vadd.f32 %v4801, %v5050
    %5052 = vdwg.mxu0
    %v5054 = vrot.slane %v5051, 7
    %v5057 = vadd.f32 %v4747, %v5054
    %v5058 = vadd.f32 %v4748, %v5051
    %v5059 = vxor.u32 %v5057, 2147483648
    %v5060 = vxor.u32 %v5058, 2147483648
    %v5061 = vmul.f32 %v5059, 1.442695
    %v5062 = vpow.pop %v5061
    %v5063 = vmul.f32 %v5060, 1.442695
    %v5064 = vpow.pop %v5063
    %v5065 = vadd.f32 %v5062, 1.0
    %v5066 = vadd.f32 %v5064, 1.0
    %v5067 = vrcp.pop %v5065
    %v5068 = vmul.f32 %v5065, %v5067
    %v5069 = vsub.f32 1.0, %v5068
    %v5070 = vmul.f32 %v5067, %v5069
    %v5071 = vadd.f32 %v5067, %v5070
    %vm5072 = vweird.f32 %v5065
    %vm5073 = vweird.f32 %v5067
    %vm5074 = vmor %vm5072, %vm5073
    %v5075 = vsel %vm5074, %v5067, %v5071
    %v5076 = vand.u32 2147483647, %v5065
    %vm5077 = vcmp.eq.f32.partialorder %v5076, 8.507059e+37
    %v5078 = vand.u32 %v5065, 2147483648
    %v5079 = vor.u32 1.1754944e-38, %v5078
    %v5080 = vsel %vm5077, %v5079, %v5075
    %v5081 = vmul.f32 1.0, %v5080
    %v5082 = vrcp.pop %v5066
    %v5083 = vmul.f32 %v5066, %v5082
    %v5084 = vsub.f32 1.0, %v5083
    %v5085 = vmul.f32 %v5082, %v5084
    %v5086 = vadd.f32 %v5082, %v5085
    %vm5087 = vweird.f32 %v5066
    %vm5088 = vweird.f32 %v5082
    %vm5089 = vmor %vm5087, %vm5088
    %v5090 = vsel %vm5089, %v5082, %v5086
    %v5091 = vand.u32 2147483647, %v5066
    %vm5092 = vcmp.eq.f32.partialorder %v5091, 8.507059e+37
    %v5093 = vand.u32 %v5066, 2147483648
    %v5094 = vor.u32 1.1754944e-38, %v5093
    %v5095 = vsel %vm5092, %v5094, %v5090
    %v5096 = vmul.f32 1.0, %v5095
    %5097 = vrot.lane.b32.xlu0 %v5054, 80
    %v5098 = vpop.permute.xlu0 %5097
    %5099 = vrot.lane.b32.xlu0 %v5051, 80
    %v5100 = vpop.permute.xlu0 %5099
    %v5103 = vmul.f32 %v5081, %v5098
    %v5104 = vmul.f32 %v5096, %v5100
    %5107 = vrot.lane.b32.xlu0 %v5103, 48
    %v5108 = vpop.permute.xlu0 %5107
    %5109 = vrot.lane.b32.xlu0 %v5104, 48
    %v5110 = vpop.permute.xlu0 %5109
    %v5113 = vadd.f32 %v4747, %v5108
    %v5114 = vadd.f32 %v4748, %v5110
    %v5115 = vtanh.pop %v5113
    %v5116 = vtanh.pop %v5114
    %v5117 = vsub.f32 1.0, %v5081
    %v5118 = vsub.f32 1.0, %v5096
    %5121 = vrot.lane.b32.xlu0 %v5115, 104
    %v5122 = vpop.permute.xlu0 %5121
    %5123 = vrot.lane.b32.xlu0 %v5116, 104
    %v5124 = vpop.permute.xlu0 %5123
    %v5127 = vmul.f32 %v5117, %v5122
    %v5128 = vmul.f32 %v5118, %v5124
    %v5129 = vrot.slane %v4901, 7
    %v5132 = vmul.f32 %v5081, %v5129
    %v5133 = vmul.f32 %v5096, %v5027
    %v5134 = vadd.f32 %v5127, %v5132
    %v5135 = vadd.f32 %v5128, %v5133
    %v5136 = vrot.slane %v5005, 7
    %v5137 = vrot.slane %v5006, 6
    %v5138 = vsel %vm889, %v5137, %v5136
    %5139 = vrot.lane.b32.xlu0 %v5138, 104
    %v5140 = vpop.permute.xlu0 %5139
    %v5141 = vsel %vm658, %v5140, 0
    %5143 = vmatpush.msra.mxu0 0.0
    %5144 = vmatpush.msra.mxu0 0.0
    %5145 = vmatpush.msra.mxu0 0.0
    %5146 = vmatpush.msra.mxu0 0.0
    %5147 = vmatpush.msra.mxu0 0.0
    %5148 = vmatpush.msra.mxu0 0.0
    %5149 = vmatpush.msra.mxu0 0.0
    %5150 = vmatpush.msra.mxu0 0.0
    %5151 = vmatpush.msra.mxu0 0.0
    %5152 = vmatpush.msra.mxu0 0.0
    %5153 = vmatpush.msra.mxu0 0.0
    %5154 = vmatpush.msra.mxu0 0.0
    %5155 = vmatpush.msra.mxu0 0.0
    %5156 = vmatpush.msra.mxu0 %v4679
    %5157 = vmatpush.msra.mxu0 %v4678
    %5158 = vmatpush.msra.mxu0 %v4677
    %5159 = vmatmul.f32.gmra.mxu0 %v5141
    %v5160 = vpop.f32.mrf.mxu0
    %v5161 = vadd.f32 %v4904, %v5160
    %5162 = vdwg.mxu0
    %v5164 = vrot.slane %v5161, 2
    %v5165 = vrot.slane %v5161, 3
    %v5168 = vadd.f32 %v4798, %v5164
    %v5169 = vadd.f32 %v4799, %v5165
    %v5170 = vxor.u32 %v5168, 2147483648
    %v5171 = vxor.u32 %v5169, 2147483648
    %v5172 = vmul.f32 %v5170, 1.442695
    %v5173 = vpow.pop %v5172
    %v5174 = vmul.f32 %v5171, 1.442695
    %v5175 = vpow.pop %v5174
    %v5176 = vadd.f32 %v5173, 1.0
    %v5177 = vadd.f32 %v5175, 1.0
    %v5178 = vrcp.pop %v5176
    %v5179 = vmul.f32 %v5176, %v5178
    %v5180 = vsub.f32 1.0, %v5179
    %v5181 = vmul.f32 %v5178, %v5180
    %v5182 = vadd.f32 %v5178, %v5181
    %vm5183 = vweird.f32 %v5176
    %vm5184 = vweird.f32 %v5178
    %vm5185 = vmor %vm5183, %vm5184
    %v5186 = vsel %vm5185, %v5178, %v5182
    %v5187 = vand.u32 2147483647, %v5176
    %vm5188 = vcmp.eq.f32.partialorder %v5187, 8.507059e+37
    %v5189 = vand.u32 %v5176, 2147483648
    %v5190 = vor.u32 1.1754944e-38, %v5189
    %v5191 = vsel %vm5188, %v5190, %v5186
    %v5192 = vmul.f32 1.0, %v5191
    %v5193 = vrcp.pop %v5177
    %v5194 = vmul.f32 %v5177, %v5193
    %v5195 = vsub.f32 1.0, %v5194
    %v5196 = vmul.f32 %v5193, %v5195
    %v5197 = vadd.f32 %v5193, %v5196
    %vm5198 = vweird.f32 %v5177
    %vm5199 = vweird.f32 %v5193
    %vm5200 = vmor %vm5198, %vm5199
    %v5201 = vsel %vm5200, %v5193, %v5197
    %v5202 = vand.u32 2147483647, %v5177
    %vm5203 = vcmp.eq.f32.partialorder %v5202, 8.507059e+37
    %v5204 = vand.u32 %v5177, 2147483648
    %v5205 = vor.u32 1.1754944e-38, %v5204
    %v5206 = vsel %vm5203, %v5205, %v5201
    %v5207 = vmul.f32 1.0, %v5206
    %5208 = vrot.lane.b32.xlu0 %v5164, 80
    %v5209 = vpop.permute.xlu0 %5208
    %5210 = vrot.lane.b32.xlu0 %v5165, 80
    %v5211 = vpop.permute.xlu0 %5210
    %v5214 = vmul.f32 %v5192, %v5209
    %v5215 = vmul.f32 %v5207, %v5211
    %5218 = vrot.lane.b32.xlu0 %v5214, 48
    %v5219 = vpop.permute.xlu0 %5218
    %5220 = vrot.lane.b32.xlu0 %v5215, 48
    %v5221 = vpop.permute.xlu0 %5220
    %v5224 = vadd.f32 %v4798, %v5219
    %v5225 = vadd.f32 %v4799, %v5221
    %v5226 = vtanh.pop %v5224
    %v5227 = vtanh.pop %v5225
    %v5228 = vsub.f32 1.0, %v5192
    %v5229 = vsub.f32 1.0, %v5207
    %5232 = vrot.lane.b32.xlu0 %v5226, 104
    %v5233 = vpop.permute.xlu0 %5232
    %5234 = vrot.lane.b32.xlu0 %v5227, 104
    %v5235 = vpop.permute.xlu0 %5234
    %v5238 = vmul.f32 %v5228, %v5233
    %v5239 = vmul.f32 %v5229, %v5235
    %v5240 = vrot.slane %v5005, 1
    %v5241 = vrot.slane %v5006, 1
    %v5244 = vmul.f32 %v5192, %v5240
    %v5245 = vmul.f32 %v5207, %v5241
    %v5246 = vadd.f32 %v5238, %v5244
    %v5247 = vadd.f32 %v5239, %v5245
    %5250 = vrot.lane.b32.xlu0 %v5134, 104
    %v5251 = vpop.permute.xlu0 %5250
    %5252 = vrot.lane.b32.xlu0 %v5135, 104
    %v5253 = vpop.permute.xlu0 %5252
    %5256 = vst.msk [vmem:[#allocation2] sm:$0x2] %vm1118, %v5251
    %5257 = vst.msk [vmem:[#allocation2 + $0x8] sm:$0x2] %vm1118, %v5253
    %5260 = vrot.lane.b32.xlu0 %v5246, 104
    %v5261 = vpop.permute.xlu0 %5260
    %5262 = vrot.lane.b32.xlu0 %v5247, 104
    %v5263 = vpop.permute.xlu0 %5262
    %5266 = vst.msk [vmem:[#allocation3] sm:$0x40] %vm1129, %v5261
    %5267 = vst.msk [vmem:[#allocation3 + $0x8] sm:$0x40] %vm1129, %v5263
    %v5268 = vrot.slane %v5134, 1
    %v5269 = vsel %vm889, %v5135, %v5268
    %5270 = vrot.lane.b32.xlu0 %v5269, 104
    %v5271 = vpop.permute.xlu0 %5270
    %v5272 = vsel %vm658, %v5271, 0
    %5274 = vmatpush.msra.mxu0 0.0
    %5275 = vmatpush.msra.mxu0 0.0
    %5276 = vmatpush.msra.mxu0 0.0
    %5277 = vmatpush.msra.mxu0 0.0
    %5278 = vmatpush.msra.mxu0 0.0
    %5279 = vmatpush.msra.mxu0 0.0
    %5280 = vmatpush.msra.mxu0 0.0
    %5281 = vmatpush.msra.mxu0 0.0
    %5282 = vmatpush.msra.mxu0 0.0
    %5283 = vmatpush.msra.mxu0 0.0
    %5284 = vmatpush.msra.mxu0 0.0
    %5285 = vmatpush.msra.mxu0 0.0
    %5286 = vmatpush.msra.mxu0 0.0
    %5287 = vmatpush.msra.mxu0 %v4668
    %5288 = vmatpush.msra.mxu0 %v4667
    %5289 = vmatpush.msra.mxu0 %v4666
    %5290 = vmatmul.f32.gmra.mxu0 %v5272
    %v5291 = vpop.f32.mrf.mxu0
    %v5292 = vadd.f32 %v4801, %v5291
    %5293 = vdwg.mxu0
    %v5295 = vrot.slane %v5292, 6
    %v5296 = vrot.slane %v5292, 7
    %v5299 = vadd.f32 %v4747, %v5295
    %v5300 = vadd.f32 %v4748, %v5296
    %v5301 = vxor.u32 %v5299, 2147483648
    %v5302 = vxor.u32 %v5300, 2147483648
    %v5303 = vmul.f32 %v5301, 1.442695
    %v5304 = vpow.pop %v5303
    %v5305 = vmul.f32 %v5302, 1.442695
    %v5306 = vpow.pop %v5305
    %v5307 = vadd.f32 %v5304, 1.0
    %v5308 = vadd.f32 %v5306, 1.0
    %v5309 = vrcp.pop %v5307
    %v5310 = vmul.f32 %v5307, %v5309
    %v5311 = vsub.f32 1.0, %v5310
    %v5312 = vmul.f32 %v5309, %v5311
    %v5313 = vadd.f32 %v5309, %v5312
    %vm5314 = vweird.f32 %v5307
    %vm5315 = vweird.f32 %v5309
    %vm5316 = vmor %vm5314, %vm5315
    %v5317 = vsel %vm5316, %v5309, %v5313
    %v5318 = vand.u32 2147483647, %v5307
    %vm5319 = vcmp.eq.f32.partialorder %v5318, 8.507059e+37
    %v5320 = vand.u32 %v5307, 2147483648
    %v5321 = vor.u32 1.1754944e-38, %v5320
    %v5322 = vsel %vm5319, %v5321, %v5317
    %v5323 = vmul.f32 1.0, %v5322
    %v5324 = vrcp.pop %v5308
    %v5325 = vmul.f32 %v5308, %v5324
    %v5326 = vsub.f32 1.0, %v5325
    %v5327 = vmul.f32 %v5324, %v5326
    %v5328 = vadd.f32 %v5324, %v5327
    %vm5329 = vweird.f32 %v5308
    %vm5330 = vweird.f32 %v5324
    %vm5331 = vmor %vm5329, %vm5330
    %v5332 = vsel %vm5331, %v5324, %v5328
    %v5333 = vand.u32 2147483647, %v5308
    %vm5334 = vcmp.eq.f32.partialorder %v5333, 8.507059e+37
    %v5335 = vand.u32 %v5308, 2147483648
    %v5336 = vor.u32 1.1754944e-38, %v5335
    %v5337 = vsel %vm5334, %v5336, %v5332
    %v5338 = vmul.f32 1.0, %v5337
    %5339 = vrot.lane.b32.xlu0 %v5295, 80
    %v5340 = vpop.permute.xlu0 %5339
    %5341 = vrot.lane.b32.xlu0 %v5296, 80
    %v5342 = vpop.permute.xlu0 %5341
    %v5345 = vmul.f32 %v5323, %v5340
    %v5346 = vmul.f32 %v5338, %v5342
    %5349 = vrot.lane.b32.xlu0 %v5345, 48
    %v5350 = vpop.permute.xlu0 %5349
    %5351 = vrot.lane.b32.xlu0 %v5346, 48
    %v5352 = vpop.permute.xlu0 %5351
    %v5355 = vadd.f32 %v4747, %v5350
    %v5356 = vadd.f32 %v4748, %v5352
    %v5357 = vtanh.pop %v5355
    %v5358 = vtanh.pop %v5356
    %v5359 = vsub.f32 1.0, %v5323
    %v5360 = vsub.f32 1.0, %v5338
    %5363 = vrot.lane.b32.xlu0 %v5357, 104
    %v5364 = vpop.permute.xlu0 %5363
    %5365 = vrot.lane.b32.xlu0 %v5358, 104
    %v5366 = vpop.permute.xlu0 %5365
    %v5369 = vmul.f32 %v5359, %v5364
    %v5370 = vmul.f32 %v5360, %v5366
    %v5371 = vrot.slane %v5134, 7
    %v5372 = vrot.slane %v5135, 7
    %v5375 = vmul.f32 %v5323, %v5371
    %v5376 = vmul.f32 %v5338, %v5372
    %v5377 = vadd.f32 %v5369, %v5375
    %v5378 = vadd.f32 %v5370, %v5376
    %v5379 = vrot.slane %v5246, 6
    %v5380 = vrot.slane %v5247, 5
    %v5381 = vsel %vm889, %v5380, %v5379
    %5382 = vrot.lane.b32.xlu0 %v5381, 104
    %v5383 = vpop.permute.xlu0 %5382
    %v5384 = vsel %vm658, %v5383, 0
    %5386 = vmatpush.msra.mxu0 0.0
    %5387 = vmatpush.msra.mxu0 0.0
    %5388 = vmatpush.msra.mxu0 0.0
    %5389 = vmatpush.msra.mxu0 0.0
    %5390 = vmatpush.msra.mxu0 0.0
    %5391 = vmatpush.msra.mxu0 0.0
    %5392 = vmatpush.msra.mxu0 0.0
    %5393 = vmatpush.msra.mxu0 0.0
    %5394 = vmatpush.msra.mxu0 0.0
    %5395 = vmatpush.msra.mxu0 0.0
    %5396 = vmatpush.msra.mxu0 0.0
    %5397 = vmatpush.msra.mxu0 0.0
    %5398 = vmatpush.msra.mxu0 0.0
    %5399 = vmatpush.msra.mxu0 %v4679
    %5400 = vmatpush.msra.mxu0 %v4678
    %5401 = vmatpush.msra.mxu0 %v4677
    %5402 = vmatmul.f32.gmra.mxu0 %v5384
    %v5403 = vpop.f32.mrf.mxu0
    %v5404 = vadd.f32 %v4904, %v5403
    %5405 = vdwg.mxu0
    %v5407 = vrot.slane %v5404, 3
    %v5408 = vrot.slane %v5404, 4
    %v5411 = vadd.f32 %v4798, %v5407
    %v5412 = vadd.f32 %v4799, %v5408
    %v5413 = vxor.u32 %v5411, 2147483648
    %v5414 = vxor.u32 %v5412, 2147483648
    %v5415 = vmul.f32 %v5413, 1.442695
    %v5416 = vpow.pop %v5415
    %v5417 = vmul.f32 %v5414, 1.442695
    %v5418 = vpow.pop %v5417
    %v5419 = vadd.f32 %v5416, 1.0
    %v5420 = vadd.f32 %v5418, 1.0
    %v5421 = vrcp.pop %v5419
    %v5422 = vmul.f32 %v5419, %v5421
    %v5423 = vsub.f32 1.0, %v5422
    %v5424 = vmul.f32 %v5421, %v5423
    %v5425 = vadd.f32 %v5421, %v5424
    %vm5426 = vweird.f32 %v5419
    %vm5427 = vweird.f32 %v5421
    %vm5428 = vmor %vm5426, %vm5427
    %v5429 = vsel %vm5428, %v5421, %v5425
    %v5430 = vand.u32 2147483647, %v5419
    %vm5431 = vcmp.eq.f32.partialorder %v5430, 8.507059e+37
    %v5432 = vand.u32 %v5419, 2147483648
    %v5433 = vor.u32 1.1754944e-38, %v5432
    %v5434 = vsel %vm5431, %v5433, %v5429
    %v5435 = vmul.f32 1.0, %v5434
    %v5436 = vrcp.pop %v5420
    %v5437 = vmul.f32 %v5420, %v5436
    %v5438 = vsub.f32 1.0, %v5437
    %v5439 = vmul.f32 %v5436, %v5438
    %v5440 = vadd.f32 %v5436, %v5439
    %vm5441 = vweird.f32 %v5420
    %vm5442 = vweird.f32 %v5436
    %vm5443 = vmor %vm5441, %vm5442
    %v5444 = vsel %vm5443, %v5436, %v5440
    %v5445 = vand.u32 2147483647, %v5420
    %vm5446 = vcmp.eq.f32.partialorder %v5445, 8.507059e+37
    %v5447 = vand.u32 %v5420, 2147483648
    %v5448 = vor.u32 1.1754944e-38, %v5447
    %v5449 = vsel %vm5446, %v5448, %v5444
    %v5450 = vmul.f32 1.0, %v5449
    %5451 = vrot.lane.b32.xlu0 %v5407, 80
    %v5452 = vpop.permute.xlu0 %5451
    %5453 = vrot.lane.b32.xlu0 %v5408, 80
    %v5454 = vpop.permute.xlu0 %5453
    %v5457 = vmul.f32 %v5435, %v5452
    %v5458 = vmul.f32 %v5450, %v5454
    %5461 = vrot.lane.b32.xlu0 %v5457, 48
    %v5462 = vpop.permute.xlu0 %5461
    %5463 = vrot.lane.b32.xlu0 %v5458, 48
    %v5464 = vpop.permute.xlu0 %5463
    %v5467 = vadd.f32 %v4798, %v5462
    %v5468 = vadd.f32 %v4799, %v5464
    %v5469 = vtanh.pop %v5467
    %v5470 = vtanh.pop %v5468
    %v5471 = vsub.f32 1.0, %v5435
    %v5472 = vsub.f32 1.0, %v5450
    %5475 = vrot.lane.b32.xlu0 %v5469, 104
    %v5476 = vpop.permute.xlu0 %5475
    %5477 = vrot.lane.b32.xlu0 %v5470, 104
    %v5478 = vpop.permute.xlu0 %5477
    %v5481 = vmul.f32 %v5471, %v5476
    %v5482 = vmul.f32 %v5472, %v5478
    %v5483 = vrot.slane %v5246, 1
    %v5484 = vrot.slane %v5247, 1
    %v5487 = vmul.f32 %v5435, %v5483
    %v5488 = vmul.f32 %v5450, %v5484
    %v5489 = vadd.f32 %v5481, %v5487
    %v5490 = vadd.f32 %v5482, %v5488
    %5493 = vrot.lane.b32.xlu0 %v5377, 104
    %v5494 = vpop.permute.xlu0 %5493
    %5495 = vrot.lane.b32.xlu0 %v5378, 104
    %v5496 = vpop.permute.xlu0 %5495
    %5499 = vst.msk [vmem:[#allocation2] sm:$0x4] %vm1363, %v5494
    %5500 = vst.msk [vmem:[#allocation2 + $0x8] sm:$0x4] %vm1363, %v5496
    %5503 = vrot.lane.b32.xlu0 %v5489, 104
    %v5504 = vpop.permute.xlu0 %5503
    %5505 = vrot.lane.b32.xlu0 %v5490, 104
    %v5506 = vpop.permute.xlu0 %5505
    %5509 = vst.msk [vmem:[#allocation3] sm:$0x20] %vm1374, %v5504
    %5510 = vst.msk [vmem:[#allocation3 + $0x8] sm:$0x20] %vm1374, %v5506
    %v5511 = vrot.slane %v5377, 2
    %v5512 = vrot.slane %v5378, 1
    %v5513 = vsel %vm889, %v5512, %v5511
    %5514 = vrot.lane.b32.xlu0 %v5513, 104
    %v5515 = vpop.permute.xlu0 %5514
    %v5516 = vsel %vm658, %v5515, 0
    %5518 = vmatpush.msra.mxu0 0.0
    %5519 = vmatpush.msra.mxu0 0.0
    %5520 = vmatpush.msra.mxu0 0.0
    %5521 = vmatpush.msra.mxu0 0.0
    %5522 = vmatpush.msra.mxu0 0.0
    %5523 = vmatpush.msra.mxu0 0.0
    %5524 = vmatpush.msra.mxu0 0.0
    %5525 = vmatpush.msra.mxu0 0.0
    %5526 = vmatpush.msra.mxu0 0.0
    %5527 = vmatpush.msra.mxu0 0.0
    %5528 = vmatpush.msra.mxu0 0.0
    %5529 = vmatpush.msra.mxu0 0.0
    %5530 = vmatpush.msra.mxu0 0.0
    %5531 = vmatpush.msra.mxu0 %v4668
    %5532 = vmatpush.msra.mxu0 %v4667
    %5533 = vmatpush.msra.mxu0 %v4666
    %5534 = vmatmul.f32.gmra.mxu0 %v5516
    %v5535 = vpop.f32.mrf.mxu0
    %v5536 = vadd.f32 %v4801, %v5535
    %5537 = vdwg.mxu0
    %v5539 = vrot.slane %v5536, 5
    %v5540 = vrot.slane %v5536, 6
    %v5543 = vadd.f32 %v4747, %v5539
    %v5544 = vadd.f32 %v4748, %v5540
    %v5545 = vxor.u32 %v5543, 2147483648
    %v5546 = vxor.u32 %v5544, 2147483648
    %v5547 = vmul.f32 %v5545, 1.442695
    %v5548 = vpow.pop %v5547
    %v5549 = vmul.f32 %v5546, 1.442695
    %v5550 = vpow.pop %v5549
    %v5551 = vadd.f32 %v5548, 1.0
    %v5552 = vadd.f32 %v5550, 1.0
    %v5553 = vrcp.pop %v5551
    %v5554 = vmul.f32 %v5551, %v5553
    %v5555 = vsub.f32 1.0, %v5554
    %v5556 = vmul.f32 %v5553, %v5555
    %v5557 = vadd.f32 %v5553, %v5556
    %vm5558 = vweird.f32 %v5551
    %vm5559 = vweird.f32 %v5553
    %vm5560 = vmor %vm5558, %vm5559
    %v5561 = vsel %vm5560, %v5553, %v5557
    %v5562 = vand.u32 2147483647, %v5551
    %vm5563 = vcmp.eq.f32.partialorder %v5562, 8.507059e+37
    %v5564 = vand.u32 %v5551, 2147483648
    %v5565 = vor.u32 1.1754944e-38, %v5564
    %v5566 = vsel %vm5563, %v5565, %v5561
    %v5567 = vmul.f32 1.0, %v5566
    %v5568 = vrcp.pop %v5552
    %v5569 = vmul.f32 %v5552, %v5568
    %v5570 = vsub.f32 1.0, %v5569
    %v5571 = vmul.f32 %v5568, %v5570
    %v5572 = vadd.f32 %v5568, %v5571
    %vm5573 = vweird.f32 %v5552
    %vm5574 = vweird.f32 %v5568
    %vm5575 = vmor %vm5573, %vm5574
    %v5576 = vsel %vm5575, %v5568, %v5572
    %v5577 = vand.u32 2147483647, %v5552
    %vm5578 = vcmp.eq.f32.partialorder %v5577, 8.507059e+37
    %v5579 = vand.u32 %v5552, 2147483648
    %v5580 = vor.u32 1.1754944e-38, %v5579
    %v5581 = vsel %vm5578, %v5580, %v5576
    %v5582 = vmul.f32 1.0, %v5581
    %5583 = vrot.lane.b32.xlu0 %v5539, 80
    %v5584 = vpop.permute.xlu0 %5583
    %5585 = vrot.lane.b32.xlu0 %v5540, 80
    %v5586 = vpop.permute.xlu0 %5585
    %v5589 = vmul.f32 %v5567, %v5584
    %v5590 = vmul.f32 %v5582, %v5586
    %5593 = vrot.lane.b32.xlu0 %v5589, 48
    %v5594 = vpop.permute.xlu0 %5593
    %5595 = vrot.lane.b32.xlu0 %v5590, 48
    %v5596 = vpop.permute.xlu0 %5595
    %v5599 = vadd.f32 %v4747, %v5594
    %v5600 = vadd.f32 %v4748, %v5596
    %v5601 = vtanh.pop %v5599
    %v5602 = vtanh.pop %v5600
    %v5603 = vsub.f32 1.0, %v5567
    %v5604 = vsub.f32 1.0, %v5582
    %5607 = vrot.lane.b32.xlu0 %v5601, 104
    %v5608 = vpop.permute.xlu0 %5607
    %5609 = vrot.lane.b32.xlu0 %v5602, 104
    %v5610 = vpop.permute.xlu0 %5609
    %v5613 = vmul.f32 %v5603, %v5608
    %v5614 = vmul.f32 %v5604, %v5610
    %v5615 = vrot.slane %v5377, 7
    %v5616 = vrot.slane %v5378, 7
    %v5619 = vmul.f32 %v5567, %v5615
    %v5620 = vmul.f32 %v5582, %v5616
    %v5621 = vadd.f32 %v5613, %v5619
    %v5622 = vadd.f32 %v5614, %v5620
    %v5623 = vrot.slane %v5489, 5
    %v5624 = vrot.slane %v5490, 4
    %v5625 = vsel %vm889, %v5624, %v5623
    %5626 = vrot.lane.b32.xlu0 %v5625, 104
    %v5627 = vpop.permute.xlu0 %5626
    %v5628 = vsel %vm658, %v5627, 0
    %5630 = vmatpush.msra.mxu0 0.0
    %5631 = vmatpush.msra.mxu0 0.0
    %5632 = vmatpush.msra.mxu0 0.0
    %5633 = vmatpush.msra.mxu0 0.0
    %5634 = vmatpush.msra.mxu0 0.0
    %5635 = vmatpush.msra.mxu0 0.0
    %5636 = vmatpush.msra.mxu0 0.0
    %5637 = vmatpush.msra.mxu0 0.0
    %5638 = vmatpush.msra.mxu0 0.0
    %5639 = vmatpush.msra.mxu0 0.0
    %5640 = vmatpush.msra.mxu0 0.0
    %5641 = vmatpush.msra.mxu0 0.0
    %5642 = vmatpush.msra.mxu0 0.0
    %5643 = vmatpush.msra.mxu0 %v4679
    %5644 = vmatpush.msra.mxu0 %v4678
    %5645 = vmatpush.msra.mxu0 %v4677
    %5646 = vmatmul.f32.gmra.mxu0 %v5628
    %v5647 = vpop.f32.mrf.mxu0
    %v5648 = vadd.f32 %v4904, %v5647
    %5649 = vdwg.mxu0
    %v5651 = vrot.slane %v5648, 4
    %v5652 = vrot.slane %v5648, 5
    %v5655 = vadd.f32 %v4798, %v5651
    %v5656 = vadd.f32 %v4799, %v5652
    %v5657 = vxor.u32 %v5655, 2147483648
    %v5658 = vxor.u32 %v5656, 2147483648
    %v5659 = vmul.f32 %v5657, 1.442695
    %v5660 = vpow.pop %v5659
    %v5661 = vmul.f32 %v5658, 1.442695
    %v5662 = vpow.pop %v5661
    %v5663 = vadd.f32 %v5660, 1.0
    %v5664 = vadd.f32 %v5662, 1.0
    %v5665 = vrcp.pop %v5663
    %v5666 = vmul.f32 %v5663, %v5665
    %v5667 = vsub.f32 1.0, %v5666
    %v5668 = vmul.f32 %v5665, %v5667
    %v5669 = vadd.f32 %v5665, %v5668
    %vm5670 = vweird.f32 %v5663
    %vm5671 = vweird.f32 %v5665
    %vm5672 = vmor %vm5670, %vm5671
    %v5673 = vsel %vm5672, %v5665, %v5669
    %v5674 = vand.u32 2147483647, %v5663
    %vm5675 = vcmp.eq.f32.partialorder %v5674, 8.507059e+37
    %v5676 = vand.u32 %v5663, 2147483648
    %v5677 = vor.u32 1.1754944e-38, %v5676
    %v5678 = vsel %vm5675, %v5677, %v5673
    %v5679 = vmul.f32 1.0, %v5678
    %v5680 = vrcp.pop %v5664
    %v5681 = vmul.f32 %v5664, %v5680
    %v5682 = vsub.f32 1.0, %v5681
    %v5683 = vmul.f32 %v5680, %v5682
    %v5684 = vadd.f32 %v5680, %v5683
    %vm5685 = vweird.f32 %v5664
    %vm5686 = vweird.f32 %v5680
    %vm5687 = vmor %vm5685, %vm5686
    %v5688 = vsel %vm5687, %v5680, %v5684
    %v5689 = vand.u32 2147483647, %v5664
    %vm5690 = vcmp.eq.f32.partialorder %v5689, 8.507059e+37
    %v5691 = vand.u32 %v5664, 2147483648
    %v5692 = vor.u32 1.1754944e-38, %v5691
    %v5693 = vsel %vm5690, %v5692, %v5688
    %v5694 = vmul.f32 1.0, %v5693
    %5695 = vrot.lane.b32.xlu0 %v5651, 80
    %v5696 = vpop.permute.xlu0 %5695
    %5697 = vrot.lane.b32.xlu0 %v5652, 80
    %v5698 = vpop.permute.xlu0 %5697
    %v5701 = vmul.f32 %v5679, %v5696
    %v5702 = vmul.f32 %v5694, %v5698
    %5705 = vrot.lane.b32.xlu0 %v5701, 48
    %v5706 = vpop.permute.xlu0 %5705
    %5707 = vrot.lane.b32.xlu0 %v5702, 48
    %v5708 = vpop.permute.xlu0 %5707
    %v5711 = vadd.f32 %v4798, %v5706
    %v5712 = vadd.f32 %v4799, %v5708
    %v5713 = vtanh.pop %v5711
    %v5714 = vtanh.pop %v5712
    %v5715 = vsub.f32 1.0, %v5679
    %v5716 = vsub.f32 1.0, %v5694
    %5719 = vrot.lane.b32.xlu0 %v5713, 104
    %v5720 = vpop.permute.xlu0 %5719
    %5721 = vrot.lane.b32.xlu0 %v5714, 104
    %v5722 = vpop.permute.xlu0 %5721
    %v5725 = vmul.f32 %v5715, %v5720
    %v5726 = vmul.f32 %v5716, %v5722
    %v5727 = vrot.slane %v5489, 1
    %v5728 = vrot.slane %v5490, 1
    %v5731 = vmul.f32 %v5679, %v5727
    %v5732 = vmul.f32 %v5694, %v5728
    %v5733 = vadd.f32 %v5725, %v5731
    %v5734 = vadd.f32 %v5726, %v5732
    %5737 = vrot.lane.b32.xlu0 %v5621, 104
    %v5738 = vpop.permute.xlu0 %5737
    %5739 = vrot.lane.b32.xlu0 %v5622, 104
    %v5740 = vpop.permute.xlu0 %5739
    %5743 = vst.msk [vmem:[#allocation2] sm:$0x8] %vm1609, %v5738
    %5744 = vst.msk [vmem:[#allocation2 + $0x8] sm:$0x8] %vm1609, %v5740
    %5747 = vrot.lane.b32.xlu0 %v5733, 104
    %v5748 = vpop.permute.xlu0 %5747
    %5749 = vrot.lane.b32.xlu0 %v5734, 104
    %v5750 = vpop.permute.xlu0 %5749
    %5753 = vst.msk [vmem:[#allocation3] sm:$0x10] %vm1620, %v5748
    %5754 = vst.msk [vmem:[#allocation3 + $0x8] sm:$0x10] %vm1620, %v5750
    %v5755 = vrot.slane %v5621, 3
    %v5756 = vrot.slane %v5622, 2
    %v5757 = vsel %vm889, %v5756, %v5755
    %5758 = vrot.lane.b32.xlu0 %v5757, 104
    %v5759 = vpop.permute.xlu0 %5758
    %v5760 = vsel %vm658, %v5759, 0
    %5762 = vmatpush.msra.mxu0 0.0
    %5763 = vmatpush.msra.mxu0 0.0
    %5764 = vmatpush.msra.mxu0 0.0
    %5765 = vmatpush.msra.mxu0 0.0
    %5766 = vmatpush.msra.mxu0 0.0
    %5767 = vmatpush.msra.mxu0 0.0
    %5768 = vmatpush.msra.mxu0 0.0
    %5769 = vmatpush.msra.mxu0 0.0
    %5770 = vmatpush.msra.mxu0 0.0
    %5771 = vmatpush.msra.mxu0 0.0
    %5772 = vmatpush.msra.mxu0 0.0
    %5773 = vmatpush.msra.mxu0 0.0
    %5774 = vmatpush.msra.mxu0 0.0
    %5775 = vmatpush.msra.mxu0 %v4668
    %5776 = vmatpush.msra.mxu0 %v4667
    %5777 = vmatpush.msra.mxu0 %v4666
    %5778 = vmatmul.f32.gmra.mxu0 %v5760
    %v5779 = vpop.f32.mrf.mxu0
    %v5780 = vadd.f32 %v4801, %v5779
    %5781 = vdwg.mxu0
    %v5783 = vrot.slane %v5780, 4
    %v5784 = vrot.slane %v5780, 5
    %v5787 = vadd.f32 %v4747, %v5783
    %v5788 = vadd.f32 %v4748, %v5784
    %v5789 = vxor.u32 %v5787, 2147483648
    %v5790 = vxor.u32 %v5788, 2147483648
    %v5791 = vmul.f32 %v5789, 1.442695
    %v5792 = vpow.pop %v5791
    %v5793 = vmul.f32 %v5790, 1.442695
    %v5794 = vpow.pop %v5793
    %v5795 = vadd.f32 %v5792, 1.0
    %v5796 = vadd.f32 %v5794, 1.0
    %v5797 = vrcp.pop %v5795
    %v5798 = vmul.f32 %v5795, %v5797
    %v5799 = vsub.f32 1.0, %v5798
    %v5800 = vmul.f32 %v5797, %v5799
    %v5801 = vadd.f32 %v5797, %v5800
    %vm5802 = vweird.f32 %v5795
    %vm5803 = vweird.f32 %v5797
    %vm5804 = vmor %vm5802, %vm5803
    %v5805 = vsel %vm5804, %v5797, %v5801
    %v5806 = vand.u32 2147483647, %v5795
    %vm5807 = vcmp.eq.f32.partialorder %v5806, 8.507059e+37
    %v5808 = vand.u32 %v5795, 2147483648
    %v5809 = vor.u32 1.1754944e-38, %v5808
    %v5810 = vsel %vm5807, %v5809, %v5805
    %v5811 = vmul.f32 1.0, %v5810
    %v5812 = vrcp.pop %v5796
    %v5813 = vmul.f32 %v5796, %v5812
    %v5814 = vsub.f32 1.0, %v5813
    %v5815 = vmul.f32 %v5812, %v5814
    %v5816 = vadd.f32 %v5812, %v5815
    %vm5817 = vweird.f32 %v5796
    %vm5818 = vweird.f32 %v5812
    %vm5819 = vmor %vm5817, %vm5818
    %v5820 = vsel %vm5819, %v5812, %v5816
    %v5821 = vand.u32 2147483647, %v5796
    %vm5822 = vcmp.eq.f32.partialorder %v5821, 8.507059e+37
    %v5823 = vand.u32 %v5796, 2147483648
    %v5824 = vor.u32 1.1754944e-38, %v5823
    %v5825 = vsel %vm5822, %v5824, %v5820
    %v5826 = vmul.f32 1.0, %v5825
    %5827 = vrot.lane.b32.xlu0 %v5783, 80
    %v5828 = vpop.permute.xlu0 %5827
    %5829 = vrot.lane.b32.xlu0 %v5784, 80
    %v5830 = vpop.permute.xlu0 %5829
    %v5833 = vmul.f32 %v5811, %v5828
    %v5834 = vmul.f32 %v5826, %v5830
    %5837 = vrot.lane.b32.xlu0 %v5833, 48
    %v5838 = vpop.permute.xlu0 %5837
    %5839 = vrot.lane.b32.xlu0 %v5834, 48
    %v5840 = vpop.permute.xlu0 %5839
    %v5843 = vadd.f32 %v4747, %v5838
    %v5844 = vadd.f32 %v4748, %v5840
    %v5845 = vtanh.pop %v5843
    %v5846 = vtanh.pop %v5844
    %v5847 = vsub.f32 1.0, %v5811
    %v5848 = vsub.f32 1.0, %v5826
    %5851 = vrot.lane.b32.xlu0 %v5845, 104
    %v5852 = vpop.permute.xlu0 %5851
    %5853 = vrot.lane.b32.xlu0 %v5846, 104
    %v5854 = vpop.permute.xlu0 %5853
    %v5857 = vmul.f32 %v5847, %v5852
    %v5858 = vmul.f32 %v5848, %v5854
    %v5859 = vrot.slane %v5621, 7
    %v5860 = vrot.slane %v5622, 7
    %v5863 = vmul.f32 %v5811, %v5859
    %v5864 = vmul.f32 %v5826, %v5860
    %v5865 = vadd.f32 %v5857, %v5863
    %v5866 = vadd.f32 %v5858, %v5864
    %v5867 = vrot.slane %v5733, 4
    %v5868 = vrot.slane %v5734, 3
    %v5869 = vsel %vm889, %v5868, %v5867
    %5870 = vrot.lane.b32.xlu0 %v5869, 104
    %v5871 = vpop.permute.xlu0 %5870
    %v5872 = vsel %vm658, %v5871, 0
    %5874 = vmatpush.msra.mxu0 0.0
    %5875 = vmatpush.msra.mxu0 0.0
    %5876 = vmatpush.msra.mxu0 0.0
    %5877 = vmatpush.msra.mxu0 0.0
    %5878 = vmatpush.msra.mxu0 0.0
    %5879 = vmatpush.msra.mxu0 0.0
    %5880 = vmatpush.msra.mxu0 0.0
    %5881 = vmatpush.msra.mxu0 0.0
    %5882 = vmatpush.msra.mxu0 0.0
    %5883 = vmatpush.msra.mxu0 0.0
    %5884 = vmatpush.msra.mxu0 0.0
    %5885 = vmatpush.msra.mxu0 0.0
    %5886 = vmatpush.msra.mxu0 0.0
    %5887 = vmatpush.msra.mxu0 %v4679
    %5888 = vmatpush.msra.mxu0 %v4678
    %5889 = vmatpush.msra.mxu0 %v4677
    %5890 = vmatmul.f32.gmra.mxu0 %v5872
    %v5891 = vpop.f32.mrf.mxu0
    %v5892 = vadd.f32 %v4904, %v5891
    %5893 = vdwg.mxu0
    %v5895 = vrot.slane %v5892, 5
    %v5896 = vrot.slane %v5892, 6
    %v5899 = vadd.f32 %v4798, %v5895
    %v5900 = vadd.f32 %v4799, %v5896
    %v5901 = vxor.u32 %v5899, 2147483648
    %v5902 = vxor.u32 %v5900, 2147483648
    %v5903 = vmul.f32 %v5901, 1.442695
    %v5904 = vpow.pop %v5903
    %v5905 = vmul.f32 %v5902, 1.442695
    %v5906 = vpow.pop %v5905
    %v5907 = vadd.f32 %v5904, 1.0
    %v5908 = vadd.f32 %v5906, 1.0
    %v5909 = vrcp.pop %v5907
    %v5910 = vmul.f32 %v5907, %v5909
    %v5911 = vsub.f32 1.0, %v5910
    %v5912 = vmul.f32 %v5909, %v5911
    %v5913 = vadd.f32 %v5909, %v5912
    %vm5914 = vweird.f32 %v5907
    %vm5915 = vweird.f32 %v5909
    %vm5916 = vmor %vm5914, %vm5915
    %v5917 = vsel %vm5916, %v5909, %v5913
    %v5918 = vand.u32 2147483647, %v5907
    %vm5919 = vcmp.eq.f32.partialorder %v5918, 8.507059e+37
    %v5920 = vand.u32 %v5907, 2147483648
    %v5921 = vor.u32 1.1754944e-38, %v5920
    %v5922 = vsel %vm5919, %v5921, %v5917
    %v5923 = vmul.f32 1.0, %v5922
    %v5924 = vrcp.pop %v5908
    %v5925 = vmul.f32 %v5908, %v5924
    %v5926 = vsub.f32 1.0, %v5925
    %v5927 = vmul.f32 %v5924, %v5926
    %v5928 = vadd.f32 %v5924, %v5927
    %vm5929 = vweird.f32 %v5908
    %vm5930 = vweird.f32 %v5924
    %vm5931 = vmor %vm5929, %vm5930
    %v5932 = vsel %vm5931, %v5924, %v5928
    %v5933 = vand.u32 2147483647, %v5908
    %vm5934 = vcmp.eq.f32.partialorder %v5933, 8.507059e+37
    %v5935 = vand.u32 %v5908, 2147483648
    %v5936 = vor.u32 1.1754944e-38, %v5935
    %v5937 = vsel %vm5934, %v5936, %v5932
    %v5938 = vmul.f32 1.0, %v5937
    %5939 = vrot.lane.b32.xlu0 %v5895, 80
    %v5940 = vpop.permute.xlu0 %5939
    %5941 = vrot.lane.b32.xlu0 %v5896, 80
    %v5942 = vpop.permute.xlu0 %5941
    %v5945 = vmul.f32 %v5923, %v5940
    %v5946 = vmul.f32 %v5938, %v5942
    %5949 = vrot.lane.b32.xlu0 %v5945, 48
    %v5950 = vpop.permute.xlu0 %5949
    %5951 = vrot.lane.b32.xlu0 %v5946, 48
    %v5952 = vpop.permute.xlu0 %5951
    %v5955 = vadd.f32 %v4798, %v5950
    %v5956 = vadd.f32 %v4799, %v5952
    %v5957 = vtanh.pop %v5955
    %v5958 = vtanh.pop %v5956
    %v5959 = vsub.f32 1.0, %v5923
    %v5960 = vsub.f32 1.0, %v5938
    %5963 = vrot.lane.b32.xlu0 %v5957, 104
    %v5964 = vpop.permute.xlu0 %5963
    %5965 = vrot.lane.b32.xlu0 %v5958, 104
    %v5966 = vpop.permute.xlu0 %5965
    %v5969 = vmul.f32 %v5959, %v5964
    %v5970 = vmul.f32 %v5960, %v5966
    %v5971 = vrot.slane %v5733, 1
    %v5972 = vrot.slane %v5734, 1
    %v5975 = vmul.f32 %v5923, %v5971
    %v5976 = vmul.f32 %v5938, %v5972
    %v5977 = vadd.f32 %v5969, %v5975
    %v5978 = vadd.f32 %v5970, %v5976
    %5981 = vrot.lane.b32.xlu0 %v5865, 104
    %v5982 = vpop.permute.xlu0 %5981
    %5983 = vrot.lane.b32.xlu0 %v5866, 104
    %v5984 = vpop.permute.xlu0 %5983
    %5987 = vst.msk [vmem:[#allocation2] sm:$0x10] %vm1620, %v5982
    %5988 = vst.msk [vmem:[#allocation2 + $0x8] sm:$0x10] %vm1620, %v5984
    %5991 = vrot.lane.b32.xlu0 %v5977, 104
    %v5992 = vpop.permute.xlu0 %5991
    %5993 = vrot.lane.b32.xlu0 %v5978, 104
    %v5994 = vpop.permute.xlu0 %5993
    %5997 = vst.msk [vmem:[#allocation3] sm:$0x8] %vm1609, %v5992
    %5998 = vst.msk [vmem:[#allocation3 + $0x8] sm:$0x8] %vm1609, %v5994
    %v5999 = vrot.slane %v5865, 4
    %v6000 = vrot.slane %v5866, 3
    %v6001 = vsel %vm889, %v6000, %v5999
    %6002 = vrot.lane.b32.xlu0 %v6001, 104
    %v6003 = vpop.permute.xlu0 %6002
    %v6004 = vsel %vm658, %v6003, 0
    %6006 = vmatpush.msra.mxu0 0.0
    %6007 = vmatpush.msra.mxu0 0.0
    %6008 = vmatpush.msra.mxu0 0.0
    %6009 = vmatpush.msra.mxu0 0.0
    %6010 = vmatpush.msra.mxu0 0.0
    %6011 = vmatpush.msra.mxu0 0.0
    %6012 = vmatpush.msra.mxu0 0.0
    %6013 = vmatpush.msra.mxu0 0.0
    %6014 = vmatpush.msra.mxu0 0.0
    %6015 = vmatpush.msra.mxu0 0.0
    %6016 = vmatpush.msra.mxu0 0.0
    %6017 = vmatpush.msra.mxu0 0.0
    %6018 = vmatpush.msra.mxu0 0.0
    %6019 = vmatpush.msra.mxu0 %v4668
    %6020 = vmatpush.msra.mxu0 %v4667
    %6021 = vmatpush.msra.mxu0 %v4666
    %6022 = vmatmul.f32.gmra.mxu0 %v6004
    %v6023 = vpop.f32.mrf.mxu0
    %v6024 = vadd.f32 %v4801, %v6023
    %6025 = vdwg.mxu0
    %v6027 = vrot.slane %v6024, 3
    %v6028 = vrot.slane %v6024, 4
    %v6031 = vadd.f32 %v4747, %v6027
    %v6032 = vadd.f32 %v4748, %v6028
    %v6033 = vxor.u32 %v6031, 2147483648
    %v6034 = vxor.u32 %v6032, 2147483648
    %v6035 = vmul.f32 %v6033, 1.442695
    %v6036 = vpow.pop %v6035
    %v6037 = vmul.f32 %v6034, 1.442695
    %v6038 = vpow.pop %v6037
    %v6039 = vadd.f32 %v6036, 1.0
    %v6040 = vadd.f32 %v6038, 1.0
    %v6041 = vrcp.pop %v6039
    %v6042 = vmul.f32 %v6039, %v6041
    %v6043 = vsub.f32 1.0, %v6042
    %v6044 = vmul.f32 %v6041, %v6043
    %v6045 = vadd.f32 %v6041, %v6044
    %vm6046 = vweird.f32 %v6039
    %vm6047 = vweird.f32 %v6041
    %vm6048 = vmor %vm6046, %vm6047
    %v6049 = vsel %vm6048, %v6041, %v6045
    %v6050 = vand.u32 2147483647, %v6039
    %vm6051 = vcmp.eq.f32.partialorder %v6050, 8.507059e+37
    %v6052 = vand.u32 %v6039, 2147483648
    %v6053 = vor.u32 1.1754944e-38, %v6052
    %v6054 = vsel %vm6051, %v6053, %v6049
    %v6055 = vmul.f32 1.0, %v6054
    %v6056 = vrcp.pop %v6040
    %v6057 = vmul.f32 %v6040, %v6056
    %v6058 = vsub.f32 1.0, %v6057
    %v6059 = vmul.f32 %v6056, %v6058
    %v6060 = vadd.f32 %v6056, %v6059
    %vm6061 = vweird.f32 %v6040
    %vm6062 = vweird.f32 %v6056
    %vm6063 = vmor %vm6061, %vm6062
    %v6064 = vsel %vm6063, %v6056, %v6060
    %v6065 = vand.u32 2147483647, %v6040
    %vm6066 = vcmp.eq.f32.partialorder %v6065, 8.507059e+37
    %v6067 = vand.u32 %v6040, 2147483648
    %v6068 = vor.u32 1.1754944e-38, %v6067
    %v6069 = vsel %vm6066, %v6068, %v6064
    %v6070 = vmul.f32 1.0, %v6069
    %6071 = vrot.lane.b32.xlu0 %v6027, 80
    %v6072 = vpop.permute.xlu0 %6071
    %6073 = vrot.lane.b32.xlu0 %v6028, 80
    %v6074 = vpop.permute.xlu0 %6073
    %v6077 = vmul.f32 %v6055, %v6072
    %v6078 = vmul.f32 %v6070, %v6074
    %6081 = vrot.lane.b32.xlu0 %v6077, 48
    %v6082 = vpop.permute.xlu0 %6081
    %6083 = vrot.lane.b32.xlu0 %v6078, 48
    %v6084 = vpop.permute.xlu0 %6083
    %v6087 = vadd.f32 %v4747, %v6082
    %v6088 = vadd.f32 %v4748, %v6084
    %v6089 = vtanh.pop %v6087
    %v6090 = vtanh.pop %v6088
    %v6091 = vsub.f32 1.0, %v6055
    %v6092 = vsub.f32 1.0, %v6070
    %6095 = vrot.lane.b32.xlu0 %v6089, 104
    %v6096 = vpop.permute.xlu0 %6095
    %6097 = vrot.lane.b32.xlu0 %v6090, 104
    %v6098 = vpop.permute.xlu0 %6097
    %v6101 = vmul.f32 %v6091, %v6096
    %v6102 = vmul.f32 %v6092, %v6098
    %v6103 = vrot.slane %v5865, 7
    %v6104 = vrot.slane %v5866, 7
    %v6107 = vmul.f32 %v6055, %v6103
    %v6108 = vmul.f32 %v6070, %v6104
    %v6109 = vadd.f32 %v6101, %v6107
    %v6110 = vadd.f32 %v6102, %v6108
    %v6111 = vrot.slane %v5977, 3
    %v6112 = vrot.slane %v5978, 2
    %v6113 = vsel %vm889, %v6112, %v6111
    %6114 = vrot.lane.b32.xlu0 %v6113, 104
    %v6115 = vpop.permute.xlu0 %6114
    %v6116 = vsel %vm658, %v6115, 0
    %6118 = vmatpush.msra.mxu0 0.0
    %6119 = vmatpush.msra.mxu0 0.0
    %6120 = vmatpush.msra.mxu0 0.0
    %6121 = vmatpush.msra.mxu0 0.0
    %6122 = vmatpush.msra.mxu0 0.0
    %6123 = vmatpush.msra.mxu0 0.0
    %6124 = vmatpush.msra.mxu0 0.0
    %6125 = vmatpush.msra.mxu0 0.0
    %6126 = vmatpush.msra.mxu0 0.0
    %6127 = vmatpush.msra.mxu0 0.0
    %6128 = vmatpush.msra.mxu0 0.0
    %6129 = vmatpush.msra.mxu0 0.0
    %6130 = vmatpush.msra.mxu0 0.0
    %6131 = vmatpush.msra.mxu0 %v4679
    %6132 = vmatpush.msra.mxu0 %v4678
    %6133 = vmatpush.msra.mxu0 %v4677
    %6134 = vmatmul.f32.gmra.mxu0 %v6116
    %v6135 = vpop.f32.mrf.mxu0
    %v6136 = vadd.f32 %v4904, %v6135
    %6137 = vdwg.mxu0
    %v6139 = vrot.slane %v6136, 6
    %v6140 = vrot.slane %v6136, 7
    %v6143 = vadd.f32 %v4798, %v6139
    %v6144 = vadd.f32 %v4799, %v6140
    %v6145 = vxor.u32 %v6143, 2147483648
    %v6146 = vxor.u32 %v6144, 2147483648
    %v6147 = vmul.f32 %v6145, 1.442695
    %v6148 = vpow.pop %v6147
    %v6149 = vmul.f32 %v6146, 1.442695
    %v6150 = vpow.pop %v6149
    %v6151 = vadd.f32 %v6148, 1.0
    %v6152 = vadd.f32 %v6150, 1.0
    %v6153 = vrcp.pop %v6151
    %v6154 = vmul.f32 %v6151, %v6153
    %v6155 = vsub.f32 1.0, %v6154
    %v6156 = vmul.f32 %v6153, %v6155
    %v6157 = vadd.f32 %v6153, %v6156
    %vm6158 = vweird.f32 %v6151
    %vm6159 = vweird.f32 %v6153
    %vm6160 = vmor %vm6158, %vm6159
    %v6161 = vsel %vm6160, %v6153, %v6157
    %v6162 = vand.u32 2147483647, %v6151
    %vm6163 = vcmp.eq.f32.partialorder %v6162, 8.507059e+37
    %v6164 = vand.u32 %v6151, 2147483648
    %v6165 = vor.u32 1.1754944e-38, %v6164
    %v6166 = vsel %vm6163, %v6165, %v6161
    %v6167 = vmul.f32 1.0, %v6166
    %v6168 = vrcp.pop %v6152
    %v6169 = vmul.f32 %v6152, %v6168
    %v6170 = vsub.f32 1.0, %v6169
    %v6171 = vmul.f32 %v6168, %v6170
    %v6172 = vadd.f32 %v6168, %v6171
    %vm6173 = vweird.f32 %v6152
    %vm6174 = vweird.f32 %v6168
    %vm6175 = vmor %vm6173, %vm6174
    %v6176 = vsel %vm6175, %v6168, %v6172
    %v6177 = vand.u32 2147483647, %v6152
    %vm6178 = vcmp.eq.f32.partialorder %v6177, 8.507059e+37
    %v6179 = vand.u32 %v6152, 2147483648
    %v6180 = vor.u32 1.1754944e-38, %v6179
    %v6181 = vsel %vm6178, %v6180, %v6176
    %v6182 = vmul.f32 1.0, %v6181
    %6183 = vrot.lane.b32.xlu0 %v6139, 80
    %v6184 = vpop.permute.xlu0 %6183
    %6185 = vrot.lane.b32.xlu0 %v6140, 80
    %v6186 = vpop.permute.xlu0 %6185
    %v6189 = vmul.f32 %v6167, %v6184
    %v6190 = vmul.f32 %v6182, %v6186
    %6193 = vrot.lane.b32.xlu0 %v6189, 48
    %v6194 = vpop.permute.xlu0 %6193
    %6195 = vrot.lane.b32.xlu0 %v6190, 48
    %v6196 = vpop.permute.xlu0 %6195
    %v6199 = vadd.f32 %v4798, %v6194
    %v6200 = vadd.f32 %v4799, %v6196
    %v6201 = vtanh.pop %v6199
    %v6202 = vtanh.pop %v6200
    %v6203 = vsub.f32 1.0, %v6167
    %v6204 = vsub.f32 1.0, %v6182
    %6207 = vrot.lane.b32.xlu0 %v6201, 104
    %v6208 = vpop.permute.xlu0 %6207
    %6209 = vrot.lane.b32.xlu0 %v6202, 104
    %v6210 = vpop.permute.xlu0 %6209
    %v6213 = vmul.f32 %v6203, %v6208
    %v6214 = vmul.f32 %v6204, %v6210
    %v6215 = vrot.slane %v5977, 1
    %v6216 = vrot.slane %v5978, 1
    %v6219 = vmul.f32 %v6167, %v6215
    %v6220 = vmul.f32 %v6182, %v6216
    %v6221 = vadd.f32 %v6213, %v6219
    %v6222 = vadd.f32 %v6214, %v6220
    %6225 = vrot.lane.b32.xlu0 %v6109, 104
    %v6226 = vpop.permute.xlu0 %6225
    %6227 = vrot.lane.b32.xlu0 %v6110, 104
    %v6228 = vpop.permute.xlu0 %6227
    %6231 = vst.msk [vmem:[#allocation2] sm:$0x20] %vm1374, %v6226
    %6232 = vst.msk [vmem:[#allocation2 + $0x8] sm:$0x20] %vm1374, %v6228
    %6235 = vrot.lane.b32.xlu0 %v6221, 104
    %v6236 = vpop.permute.xlu0 %6235
    %6237 = vrot.lane.b32.xlu0 %v6222, 104
    %v6238 = vpop.permute.xlu0 %6237
    %6241 = vst.msk [vmem:[#allocation3] sm:$0x4] %vm1363, %v6236
    %6242 = vst.msk [vmem:[#allocation3 + $0x8] sm:$0x4] %vm1363, %v6238
    %v6243 = vrot.slane %v6109, 5
    %v6244 = vrot.slane %v6110, 4
    %v6245 = vsel %vm889, %v6244, %v6243
    %6246 = vrot.lane.b32.xlu0 %v6245, 104
    %v6247 = vpop.permute.xlu0 %6246
    %v6248 = vsel %vm658, %v6247, 0
    %6250 = vmatpush.msra.mxu0 0.0
    %6251 = vmatpush.msra.mxu0 0.0
    %6252 = vmatpush.msra.mxu0 0.0
    %6253 = vmatpush.msra.mxu0 0.0
    %6254 = vmatpush.msra.mxu0 0.0
    %6255 = vmatpush.msra.mxu0 0.0
    %6256 = vmatpush.msra.mxu0 0.0
    %6257 = vmatpush.msra.mxu0 0.0
    %6258 = vmatpush.msra.mxu0 0.0
    %6259 = vmatpush.msra.mxu0 0.0
    %6260 = vmatpush.msra.mxu0 0.0
    %6261 = vmatpush.msra.mxu0 0.0
    %6262 = vmatpush.msra.mxu0 0.0
    %6263 = vmatpush.msra.mxu0 %v4668
    %6264 = vmatpush.msra.mxu0 %v4667
    %6265 = vmatpush.msra.mxu0 %v4666
    %6266 = vmatmul.f32.gmra.mxu0 %v6248
    %v6267 = vpop.f32.mrf.mxu0
    %v6268 = vadd.f32 %v4801, %v6267
    %6269 = vdwg.mxu0
    %v6271 = vrot.slane %v6268, 2
    %v6272 = vrot.slane %v6268, 3
    %v6275 = vadd.f32 %v4747, %v6271
    %v6276 = vadd.f32 %v4748, %v6272
    %v6277 = vxor.u32 %v6275, 2147483648
    %v6278 = vxor.u32 %v6276, 2147483648
    %v6279 = vmul.f32 %v6277, 1.442695
    %v6280 = vpow.pop %v6279
    %v6281 = vmul.f32 %v6278, 1.442695
    %v6282 = vpow.pop %v6281
    %v6283 = vadd.f32 %v6280, 1.0
    %v6284 = vadd.f32 %v6282, 1.0
    %v6285 = vrcp.pop %v6283
    %v6286 = vmul.f32 %v6283, %v6285
    %v6287 = vsub.f32 1.0, %v6286
    %v6288 = vmul.f32 %v6285, %v6287
    %v6289 = vadd.f32 %v6285, %v6288
    %vm6290 = vweird.f32 %v6283
    %vm6291 = vweird.f32 %v6285
    %vm6292 = vmor %vm6290, %vm6291
    %v6293 = vsel %vm6292, %v6285, %v6289
    %v6294 = vand.u32 2147483647, %v6283
    %vm6295 = vcmp.eq.f32.partialorder %v6294, 8.507059e+37
    %v6296 = vand.u32 %v6283, 2147483648
    %v6297 = vor.u32 1.1754944e-38, %v6296
    %v6298 = vsel %vm6295, %v6297, %v6293
    %v6299 = vmul.f32 1.0, %v6298
    %v6300 = vrcp.pop %v6284
    %v6301 = vmul.f32 %v6284, %v6300
    %v6302 = vsub.f32 1.0, %v6301
    %v6303 = vmul.f32 %v6300, %v6302
    %v6304 = vadd.f32 %v6300, %v6303
    %vm6305 = vweird.f32 %v6284
    %vm6306 = vweird.f32 %v6300
    %vm6307 = vmor %vm6305, %vm6306
    %v6308 = vsel %vm6307, %v6300, %v6304
    %v6309 = vand.u32 2147483647, %v6284
    %vm6310 = vcmp.eq.f32.partialorder %v6309, 8.507059e+37
    %v6311 = vand.u32 %v6284, 2147483648
    %v6312 = vor.u32 1.1754944e-38, %v6311
    %v6313 = vsel %vm6310, %v6312, %v6308
    %v6314 = vmul.f32 1.0, %v6313
    %6315 = vrot.lane.b32.xlu0 %v6271, 80
    %v6316 = vpop.permute.xlu0 %6315
    %6317 = vrot.lane.b32.xlu0 %v6272, 80
    %v6318 = vpop.permute.xlu0 %6317
    %v6321 = vmul.f32 %v6299, %v6316
    %v6322 = vmul.f32 %v6314, %v6318
    %6325 = vrot.lane.b32.xlu0 %v6321, 48
    %v6326 = vpop.permute.xlu0 %6325
    %6327 = vrot.lane.b32.xlu0 %v6322, 48
    %v6328 = vpop.permute.xlu0 %6327
    %v6331 = vadd.f32 %v4747, %v6326
    %v6332 = vadd.f32 %v4748, %v6328
    %v6333 = vtanh.pop %v6331
    %v6334 = vtanh.pop %v6332
    %v6335 = vsub.f32 1.0, %v6299
    %v6336 = vsub.f32 1.0, %v6314
    %6339 = vrot.lane.b32.xlu0 %v6333, 104
    %v6340 = vpop.permute.xlu0 %6339
    %6341 = vrot.lane.b32.xlu0 %v6334, 104
    %v6342 = vpop.permute.xlu0 %6341
    %v6345 = vmul.f32 %v6335, %v6340
    %v6346 = vmul.f32 %v6336, %v6342
    %v6347 = vrot.slane %v6109, 7
    %v6348 = vrot.slane %v6110, 7
    %v6351 = vmul.f32 %v6299, %v6347
    %v6352 = vmul.f32 %v6314, %v6348
    %v6353 = vadd.f32 %v6345, %v6351
    %v6354 = vadd.f32 %v6346, %v6352
    %v6355 = vrot.slane %v6221, 2
    %v6356 = vrot.slane %v6222, 1
    %v6357 = vsel %vm889, %v6356, %v6355
    %6358 = vrot.lane.b32.xlu0 %v6357, 104
    %v6359 = vpop.permute.xlu0 %6358
    %v6360 = vsel %vm658, %v6359, 0
    %6362 = vmatpush.msra.mxu0 0.0
    %6363 = vmatpush.msra.mxu0 0.0
    %6364 = vmatpush.msra.mxu0 0.0
    %6365 = vmatpush.msra.mxu0 0.0
    %6366 = vmatpush.msra.mxu0 0.0
    %6367 = vmatpush.msra.mxu0 0.0
    %6368 = vmatpush.msra.mxu0 0.0
    %6369 = vmatpush.msra.mxu0 0.0
    %6370 = vmatpush.msra.mxu0 0.0
    %6371 = vmatpush.msra.mxu0 0.0
    %6372 = vmatpush.msra.mxu0 0.0
    %6373 = vmatpush.msra.mxu0 0.0
    %6374 = vmatpush.msra.mxu0 0.0
    %6375 = vmatpush.msra.mxu0 %v4679
    %6376 = vmatpush.msra.mxu0 %v4678
    %6377 = vmatpush.msra.mxu0 %v4677
    %6378 = vmatmul.f32.gmra.mxu0 %v6360
    %v6379 = vpop.f32.mrf.mxu0
    %v6380 = vadd.f32 %v4904, %v6379
    %6381 = vdwg.mxu0
    %v6383 = vrot.slane %v6380, 7
    %v6386 = vadd.f32 %v4798, %v6383
    %v6387 = vadd.f32 %v4799, %v6380
    %v6388 = vxor.u32 %v6386, 2147483648
    %v6389 = vxor.u32 %v6387, 2147483648
    %v6390 = vmul.f32 %v6388, 1.442695
    %v6391 = vpow.pop %v6390
    %v6392 = vmul.f32 %v6389, 1.442695
    %v6393 = vpow.pop %v6392
    %v6394 = vadd.f32 %v6391, 1.0
    %v6395 = vadd.f32 %v6393, 1.0
    %v6396 = vrcp.pop %v6394
    %v6397 = vmul.f32 %v6394, %v6396
    %v6398 = vsub.f32 1.0, %v6397
    %v6399 = vmul.f32 %v6396, %v6398
    %v6400 = vadd.f32 %v6396, %v6399
    %vm6401 = vweird.f32 %v6394
    %vm6402 = vweird.f32 %v6396
    %vm6403 = vmor %vm6401, %vm6402
    %v6404 = vsel %vm6403, %v6396, %v6400
    %v6405 = vand.u32 2147483647, %v6394
    %vm6406 = vcmp.eq.f32.partialorder %v6405, 8.507059e+37
    %v6407 = vand.u32 %v6394, 2147483648
    %v6408 = vor.u32 1.1754944e-38, %v6407
    %v6409 = vsel %vm6406, %v6408, %v6404
    %v6410 = vmul.f32 1.0, %v6409
    %v6411 = vrcp.pop %v6395
    %v6412 = vmul.f32 %v6395, %v6411
    %v6413 = vsub.f32 1.0, %v6412
    %v6414 = vmul.f32 %v6411, %v6413
    %v6415 = vadd.f32 %v6411, %v6414
    %vm6416 = vweird.f32 %v6395
    %vm6417 = vweird.f32 %v6411
    %vm6418 = vmor %vm6416, %vm6417
    %v6419 = vsel %vm6418, %v6411, %v6415
    %v6420 = vand.u32 2147483647, %v6395
    %vm6421 = vcmp.eq.f32.partialorder %v6420, 8.507059e+37
    %v6422 = vand.u32 %v6395, 2147483648
    %v6423 = vor.u32 1.1754944e-38, %v6422
    %v6424 = vsel %vm6421, %v6423, %v6419
    %v6425 = vmul.f32 1.0, %v6424
    %6426 = vrot.lane.b32.xlu0 %v6383, 80
    %v6427 = vpop.permute.xlu0 %6426
    %6428 = vrot.lane.b32.xlu0 %v6380, 80
    %v6429 = vpop.permute.xlu0 %6428
    %v6432 = vmul.f32 %v6410, %v6427
    %v6433 = vmul.f32 %v6425, %v6429
    %6436 = vrot.lane.b32.xlu0 %v6432, 48
    %v6437 = vpop.permute.xlu0 %6436
    %6438 = vrot.lane.b32.xlu0 %v6433, 48
    %v6439 = vpop.permute.xlu0 %6438
    %v6442 = vadd.f32 %v4798, %v6437
    %v6443 = vadd.f32 %v4799, %v6439
    %v6444 = vtanh.pop %v6442
    %v6445 = vtanh.pop %v6443
    %v6446 = vsub.f32 1.0, %v6410
    %v6447 = vsub.f32 1.0, %v6425
    %6450 = vrot.lane.b32.xlu0 %v6444, 104
    %v6451 = vpop.permute.xlu0 %6450
    %6452 = vrot.lane.b32.xlu0 %v6445, 104
    %v6453 = vpop.permute.xlu0 %6452
    %v6456 = vmul.f32 %v6446, %v6451
    %v6457 = vmul.f32 %v6447, %v6453
    %v6458 = vrot.slane %v6221, 1
    %v6461 = vmul.f32 %v6410, %v6458
    %v6462 = vmul.f32 %v6425, %v6356
    %v6463 = vadd.f32 %v6456, %v6461
    %v6464 = vadd.f32 %v6457, %v6462
    %6467 = vrot.lane.b32.xlu0 %v6353, 104
    %v6468 = vpop.permute.xlu0 %6467
    %6469 = vrot.lane.b32.xlu0 %v6354, 104
    %v6470 = vpop.permute.xlu0 %6469
    %6473 = vst.msk [vmem:[#allocation2] sm:$0x40] %vm1129, %v6468
    %6474 = vst.msk [vmem:[#allocation2 + $0x8] sm:$0x40] %vm1129, %v6470
    %6477 = vrot.lane.b32.xlu0 %v6463, 104
    %v6478 = vpop.permute.xlu0 %6477
    %6479 = vrot.lane.b32.xlu0 %v6464, 104
    %v6480 = vpop.permute.xlu0 %6479
    %6483 = vst.msk [vmem:[#allocation3] sm:$0x2] %vm1118, %v6478
    %6484 = vst.msk [vmem:[#allocation3 + $0x8] sm:$0x2] %vm1118, %v6480
    %v6485 = vrot.slane %v6353, 6
    %v6486 = vrot.slane %v6354, 5
    %v6487 = vsel %vm889, %v6486, %v6485
    %6488 = vrot.lane.b32.xlu0 %v6487, 104
    %v6489 = vpop.permute.xlu0 %6488
    %v6490 = vsel %vm658, %v6489, 0
    %6492 = vmatpush.msra.mxu0 0.0
    %6493 = vmatpush.msra.mxu0 0.0
    %6494 = vmatpush.msra.mxu0 0.0
    %6495 = vmatpush.msra.mxu0 0.0
    %6496 = vmatpush.msra.mxu0 0.0
    %6497 = vmatpush.msra.mxu0 0.0
    %6498 = vmatpush.msra.mxu0 0.0
    %6499 = vmatpush.msra.mxu0 0.0
    %6500 = vmatpush.msra.mxu0 0.0
    %6501 = vmatpush.msra.mxu0 0.0
    %6502 = vmatpush.msra.mxu0 0.0
    %6503 = vmatpush.msra.mxu0 0.0
    %6504 = vmatpush.msra.mxu0 0.0
    %6505 = vmatpush.msra.mxu0 %v4668
    %6506 = vmatpush.msra.mxu0 %v4667
    %6507 = vmatpush.msra.mxu0 %v4666
    %6508 = vmatmul.f32.gmra.mxu0 %v6490
    %v6509 = vpop.f32.mrf.mxu0
    %v6510 = vadd.f32 %v4801, %v6509
    %6511 = vdwg.mxu0
    %v6513 = vrot.slane %v6510, 1
    %v6514 = vrot.slane %v6510, 2
    %v6517 = vadd.f32 %v4747, %v6513
    %v6518 = vadd.f32 %v4748, %v6514
    %v6519 = vxor.u32 %v6517, 2147483648
    %v6520 = vxor.u32 %v6518, 2147483648
    %v6521 = vmul.f32 %v6519, 1.442695
    %v6522 = vpow.pop %v6521
    %v6523 = vmul.f32 %v6520, 1.442695
    %v6524 = vpow.pop %v6523
    %v6525 = vadd.f32 %v6522, 1.0
    %v6526 = vadd.f32 %v6524, 1.0
    %v6527 = vrcp.pop %v6525
    %v6528 = vmul.f32 %v6525, %v6527
    %v6529 = vsub.f32 1.0, %v6528
    %v6530 = vmul.f32 %v6527, %v6529
    %v6531 = vadd.f32 %v6527, %v6530
    %vm6532 = vweird.f32 %v6525
    %vm6533 = vweird.f32 %v6527
    %vm6534 = vmor %vm6532, %vm6533
    %v6535 = vsel %vm6534, %v6527, %v6531
    %v6536 = vand.u32 2147483647, %v6525
    %vm6537 = vcmp.eq.f32.partialorder %v6536, 8.507059e+37
    %v6538 = vand.u32 %v6525, 2147483648
    %v6539 = vor.u32 1.1754944e-38, %v6538
    %v6540 = vsel %vm6537, %v6539, %v6535
    %v6541 = vmul.f32 1.0, %v6540
    %v6542 = vrcp.pop %v6526
    %v6543 = vmul.f32 %v6526, %v6542
    %v6544 = vsub.f32 1.0, %v6543
    %v6545 = vmul.f32 %v6542, %v6544
    %v6546 = vadd.f32 %v6542, %v6545
    %vm6547 = vweird.f32 %v6526
    %vm6548 = vweird.f32 %v6542
    %vm6549 = vmor %vm6547, %vm6548
    %v6550 = vsel %vm6549, %v6542, %v6546
    %v6551 = vand.u32 2147483647, %v6526
    %vm6552 = vcmp.eq.f32.partialorder %v6551, 8.507059e+37
    %v6553 = vand.u32 %v6526, 2147483648
    %v6554 = vor.u32 1.1754944e-38, %v6553
    %v6555 = vsel %vm6552, %v6554, %v6550
    %v6556 = vmul.f32 1.0, %v6555
    %6557 = vrot.lane.b32.xlu0 %v6513, 80
    %v6558 = vpop.permute.xlu0 %6557
    %6559 = vrot.lane.b32.xlu0 %v6514, 80
    %v6560 = vpop.permute.xlu0 %6559
    %v6563 = vmul.f32 %v6541, %v6558
    %v6564 = vmul.f32 %v6556, %v6560
    %6567 = vrot.lane.b32.xlu0 %v6563, 48
    %v6568 = vpop.permute.xlu0 %6567
    %6569 = vrot.lane.b32.xlu0 %v6564, 48
    %v6570 = vpop.permute.xlu0 %6569
    %v6573 = vadd.f32 %v4747, %v6568
    %v6574 = vadd.f32 %v4748, %v6570
    %v6575 = vtanh.pop %v6573
    %v6576 = vtanh.pop %v6574
    %v6577 = vsub.f32 1.0, %v6541
    %v6578 = vsub.f32 1.0, %v6556
    %6581 = vrot.lane.b32.xlu0 %v6575, 104
    %v6582 = vpop.permute.xlu0 %6581
    %6583 = vrot.lane.b32.xlu0 %v6576, 104
    %v6584 = vpop.permute.xlu0 %6583
    %v6587 = vmul.f32 %v6577, %v6582
    %v6588 = vmul.f32 %v6578, %v6584
    %v6589 = vrot.slane %v6353, 7
    %v6590 = vrot.slane %v6354, 7
    %v6593 = vmul.f32 %v6541, %v6589
    %v6594 = vmul.f32 %v6556, %v6590
    %v6595 = vadd.f32 %v6587, %v6593
    %v6596 = vadd.f32 %v6588, %v6594
    %v6597 = vrot.slane %v6463, 1
    %v6598 = vsel %vm889, %v6464, %v6597
    %6599 = vrot.lane.b32.xlu0 %v6598, 104
    %v6600 = vpop.permute.xlu0 %6599
    %v6601 = vsel %vm658, %v6600, 0
    %6603 = vmatpush.msra.mxu0 0.0
    %6604 = vmatpush.msra.mxu0 0.0
    %6605 = vmatpush.msra.mxu0 0.0
    %6606 = vmatpush.msra.mxu0 0.0
    %6607 = vmatpush.msra.mxu0 0.0
    %6608 = vmatpush.msra.mxu0 0.0
    %6609 = vmatpush.msra.mxu0 0.0
    %6610 = vmatpush.msra.mxu0 0.0
    %6611 = vmatpush.msra.mxu0 0.0
    %6612 = vmatpush.msra.mxu0 0.0
    %6613 = vmatpush.msra.mxu0 0.0
    %6614 = vmatpush.msra.mxu0 0.0
    %6615 = vmatpush.msra.mxu0 0.0
    %6616 = vmatpush.msra.mxu0 %v4679
    %6617 = vmatpush.msra.mxu0 %v4678
    %6618 = vmatpush.msra.mxu0 %v4677
    %6619 = vmatmul.f32.gmra.mxu0 %v6601
    %v6620 = vpop.f32.mrf.mxu0
    %v6621 = vadd.f32 %v4904, %v6620
    %6622 = vdwg.mxu0
    %v6624 = vrot.slane %v6621, 1
    %v6627 = vadd.f32 %v4798, %v6621
    %v6628 = vadd.f32 %v4799, %v6624
    %v6629 = vxor.u32 %v6627, 2147483648
    %v6630 = vxor.u32 %v6628, 2147483648
    %v6631 = vmul.f32 %v6629, 1.442695
    %v6632 = vpow.pop %v6631
    %v6633 = vmul.f32 %v6630, 1.442695
    %v6634 = vpow.pop %v6633
    %v6635 = vadd.f32 %v6632, 1.0
    %v6636 = vadd.f32 %v6634, 1.0
    %v6637 = vrcp.pop %v6635
    %v6638 = vmul.f32 %v6635, %v6637
    %v6639 = vsub.f32 1.0, %v6638
    %v6640 = vmul.f32 %v6637, %v6639
    %v6641 = vadd.f32 %v6637, %v6640
    %vm6642 = vweird.f32 %v6635
    %vm6643 = vweird.f32 %v6637
    %vm6644 = vmor %vm6642, %vm6643
    %v6645 = vsel %vm6644, %v6637, %v6641
    %v6646 = vand.u32 2147483647, %v6635
    %vm6647 = vcmp.eq.f32.partialorder %v6646, 8.507059e+37
    %v6648 = vand.u32 %v6635, 2147483648
    %v6649 = vor.u32 1.1754944e-38, %v6648
    %v6650 = vsel %vm6647, %v6649, %v6645
    %v6651 = vmul.f32 1.0, %v6650
    %v6652 = vrcp.pop %v6636
    %v6653 = vmul.f32 %v6636, %v6652
    %v6654 = vsub.f32 1.0, %v6653
    %v6655 = vmul.f32 %v6652, %v6654
    %v6656 = vadd.f32 %v6652, %v6655
    %vm6657 = vweird.f32 %v6636
    %vm6658 = vweird.f32 %v6652
    %vm6659 = vmor %vm6657, %vm6658
    %v6660 = vsel %vm6659, %v6652, %v6656
    %v6661 = vand.u32 2147483647, %v6636
    %vm6662 = vcmp.eq.f32.partialorder %v6661, 8.507059e+37
    %v6663 = vand.u32 %v6636, 2147483648
    %v6664 = vor.u32 1.1754944e-38, %v6663
    %v6665 = vsel %vm6662, %v6664, %v6660
    %v6666 = vmul.f32 1.0, %v6665
    %6667 = vrot.lane.b32.xlu0 %v6621, 80
    %v6668 = vpop.permute.xlu0 %6667
    %6669 = vrot.lane.b32.xlu0 %v6624, 80
    %v6670 = vpop.permute.xlu0 %6669
    %v6673 = vmul.f32 %v6651, %v6668
    %v6674 = vmul.f32 %v6666, %v6670
    %6677 = vrot.lane.b32.xlu0 %v6673, 48
    %v6678 = vpop.permute.xlu0 %6677
    %6679 = vrot.lane.b32.xlu0 %v6674, 48
    %v6680 = vpop.permute.xlu0 %6679
    %v6683 = vadd.f32 %v4798, %v6678
    %v6684 = vadd.f32 %v4799, %v6680
    %v6685 = vtanh.pop %v6683
    %v6686 = vtanh.pop %v6684
    %v6687 = vsub.f32 1.0, %v6651
    %v6688 = vsub.f32 1.0, %v6666
    %6691 = vrot.lane.b32.xlu0 %v6685, 104
    %v6692 = vpop.permute.xlu0 %6691
    %6693 = vrot.lane.b32.xlu0 %v6686, 104
    %v6694 = vpop.permute.xlu0 %6693
    %v6697 = vmul.f32 %v6687, %v6692
    %v6698 = vmul.f32 %v6688, %v6694
    %v6699 = vrot.slane %v6464, 1
    %v6702 = vmul.f32 %v6651, %v6597
    %v6703 = vmul.f32 %v6666, %v6699
    %v6704 = vadd.f32 %v6697, %v6702
    %v6705 = vadd.f32 %v6698, %v6703
    %6708 = vrot.lane.b32.xlu0 %v6595, 104
    %v6709 = vpop.permute.xlu0 %6708
    %6710 = vrot.lane.b32.xlu0 %v6596, 104
    %v6711 = vpop.permute.xlu0 %6710
    %6714 = vst.msk [vmem:[#allocation2] sm:$0x80] %vm885, %v6709
    %6715 = vst.msk [vmem:[#allocation2 + $0x8] sm:$0x80] %vm885, %v6711
    %6718 = vrot.lane.b32.xlu0 %v6704, 104
    %v6719 = vpop.permute.xlu0 %6718
    %6720 = vrot.lane.b32.xlu0 %v6705, 104
    %v6721 = vpop.permute.xlu0 %6720
    %6724 = vst.msk [vmem:[#allocation3] sm:$0x1] %vm874, %v6719
    %6725 = vst.msk [vmem:[#allocation3 + $0x8] sm:$0x1] %vm874, %v6721
    %v6726 = vld [vmem:[#allocation2] sm:$0xff]
    %v6727 = vld [vmem:[#allocation2 + $0x8] sm:$0xff]
    %v6728 = vld [vmem:[#allocation3] sm:$0xff]
    %v6729 = vld [vmem:[#allocation3 + $0x8] sm:$0xff]
    %v6730 = vld [vmem:[%s19] sm:$0xff]
    %v6731 = vld [vmem:[%s19 + $0x8] sm:$0xff]
    %v6732 = vld [vmem:[%s19 + $0x10] sm:$0xff]
    %v6733 = vld [vmem:[%s19 + $0x18] sm:$0xff]
    %v6734 = vld [vmem:[%s19 + $0x20] sm:$0xff]
    %v6735 = vld [vmem:[%s19 + $0x28] sm:$0xff]
    %v6737 = vsel %vm658, %v6728, 0
    %v6740 = vsel %vm658, %v6729, 0
    %6742 = vmatpush.msra.mxu0 0.0
    %6743 = vmatpush.msra.mxu0 0.0
    %6744 = vmatpush.msra.mxu0 0.0
    %6745 = vmatpush.msra.mxu0 0.0
    %6746 = vmatpush.msra.mxu0 0.0
    %6747 = vmatpush.msra.mxu0 0.0
    %6748 = vmatpush.msra.mxu0 0.0
    %6749 = vmatpush.msra.mxu0 0.0
    %6750 = vmatpush.msra.mxu0 0.0
    %6751 = vmatpush.msra.mxu0 0.0
    %6752 = vmatpush.msra.mxu0 0.0
    %6753 = vmatpush.msra.mxu0 0.0
    %6754 = vmatpush.msra.mxu0 0.0
    %6755 = vmatpush.msra.mxu0 %v6735
    %6756 = vmatpush.msra.mxu0 %v6734
    %6757 = vmatpush.msra.mxu0 %v6733
    %6758 = vmatmul.f32.gmra.mxu0 %v6737
    %v6759 = vpop.f32.mrf.mxu0
    %v6760 = vadd.f32 0.0, %v6759
    %6761 = vmatmul.f32.gmra.mxu0 %v6740
    %v6762 = vpop.f32.mrf.mxu0
    %v6763 = vadd.f32 0.0, %v6762
    %6764 = vdwg.mxu0
    %v6766 = vsel %vm658, %v6726, 0
    %v6769 = vsel %vm658, %v6727, 0
    %6771 = vmatpush.msra.mxu0 0.0
    %6772 = vmatpush.msra.mxu0 0.0
    %6773 = vmatpush.msra.mxu0 0.0
    %6774 = vmatpush.msra.mxu0 0.0
    %6775 = vmatpush.msra.mxu0 0.0
    %6776 = vmatpush.msra.mxu0 0.0
    %6777 = vmatpush.msra.mxu0 0.0
    %6778 = vmatpush.msra.mxu0 0.0
    %6779 = vmatpush.msra.mxu0 0.0
    %6780 = vmatpush.msra.mxu0 0.0
    %6781 = vmatpush.msra.mxu0 0.0
    %6782 = vmatpush.msra.mxu0 0.0
    %6783 = vmatpush.msra.mxu0 0.0
    %6784 = vmatpush.msra.mxu0 %v6732
    %6785 = vmatpush.msra.mxu0 %v6731
    %6786 = vmatpush.msra.mxu0 %v6730
    %6787 = vmatmul.f32.gmra.mxu0 %v6766
    %v6788 = vpop.f32.mrf.mxu0
    %v6789 = vadd.f32 %v6760, %v6788
    %6790 = vmatmul.f32.gmra.mxu0 %v6769
    %v6791 = vpop.f32.mrf.mxu0
    %v6792 = vadd.f32 %v6763, %v6791
    %6793 = vdwg.mxu0
    %v6794 = vld [vmem:[%s21] sm:$0x1]
    %v6796 = vperm.slane %v6794, 0
    %v6798 = vadd.f32 %v6789, %v6796
    %v6799 = vadd.f32 %v6792, %v6796
    %v6800 = vadd.f32 %v6798, 1e-05
    %v6801 = vadd.f32 %v6799, 1e-05
    %vm6802 = vcmask 23552
    %6803 = vst.msk [vmem:[%s71] sm:$0xff] %vm6802, %v6800
    %6804 = vst.msk [vmem:[%s71 + $0x8] sm:$0xff] %vm6802, %v6801
    %v6805 = vld [vmem:[%s3] sm:$0xff]
    %v6806 = vld [vmem:[%s3 + $0x8] sm:$0xff]
    %v6807 = vlaneseq
    %v6808 = vand.u32 %v6807, 127
    %vm6809 = vcmp.ne.s32.totalorder %v6805, 4294967295
    %vm6810 = vcmp.ne.s32.totalorder %v6806, 4294967295
    %v6811 = vsel %vm6809, 1, 0
    %v6812 = vsel %vm6810, 1, 0
    %v6813 = vcvt.s32.f32 %v6811
    %v6814 = vcvt.s32.f32 %v6812
    %6815 = vset.pattern.permute.xlu0 0
    %6816 = vperm.xlu0 %6815, %v6805
    %v6817 = vpop.permute.xlu0 %6816
    %6818 = vset.pattern.permute.xlu0 0
    %6819 = vperm.xlu0 %6818, %v6806
    %v6820 = vpop.permute.xlu0 %6819
    %vm6821 = vcmp.eq.s32.totalorder %v6817, %v6808
    %vm6822 = vcmp.eq.s32.totalorder %v6820, %v6808
    %v6823 = vsel %vm6821, 1, 0
    %v6824 = vsel %vm6822, 1, 0
    %v6825 = vcvt.s32.f32 %v6823
    %v6826 = vcvt.s32.f32 %v6824
    %6828 = vset.pattern.permute.xlu0 0
    %6829 = vperm.xlu0 %6828, %v6813
    %v6830 = vpop.permute.xlu0 %6829
    %6833 = vset.pattern.permute.xlu0 0
    %6834 = vperm.xlu0 %6833, %v6814
    %v6835 = vpop.permute.xlu0 %6834
    %v6837 = vmul.f32 %v6825, %v6830
    %v6838 = vmul.f32 %v6826, %v6835
    %v6839 = vsel %vm6802, %v6800, -inf
    %6840 = vmax.xlane.f32.xlu0 %v6839
    %v6841 = vpop.xlane.xlu0 %6840
    %v6842 = vsel %vm6802, %v6801, -inf
    %6843 = vmax.xlane.f32.xlu0 %v6842
    %v6844 = vpop.xlane.xlu0 %6843
    %v6845 = vsub.f32 %v6800, %v6841
    %v6846 = vsub.f32 %v6801, %v6844
    %v6847 = vmul.f32 %v6845, 1.442695
    %v6848 = vpow.pop %v6847
    %v6849 = vmul.f32 %v6846, 1.442695
    %v6850 = vpow.pop %v6849
    %v6851 = vsel %vm6802, %v6848, 0.0
    %6852 = vadd.xlane.f32.xlu0 %v6851
    %v6853 = vpop.xlane.xlu0 %6852
    %v6854 = vsel %vm6802, %v6850, 0.0
    %6855 = vadd.xlane.f32.xlu0 %v6854
    %v6856 = vpop.xlane.xlu0 %6855
    %v6857 = vlog2.pop %v6853
    %v6858 = vmul.f32 %v6857, 0.6931472
    %v6859 = vlog2.pop %v6856
    %v6860 = vmul.f32 %v6859, 0.6931472
    %v6861 = vsub.f32 %v6845, %v6858
    %v6862 = vsub.f32 %v6846, %v6860
    %v6863 = vrcp.pop %v6853
    %v6864 = vmul.f32 %v6853, %v6863
    %v6865 = vsub.f32 1.0, %v6864
    %v6866 = vmul.f32 %v6863, %v6865
    %v6867 = vadd.f32 %v6863, %v6866
    %vm6868 = vweird.f32 %v6853
    %vm6869 = vweird.f32 %v6863
    %vm6870 = vmor %vm6868, %vm6869
    %v6871 = vsel %vm6870, %v6863, %v6867
    %v6872 = vand.u32 2147483647, %v6853
    %vm6873 = vcmp.eq.f32.partialorder %v6872, 8.507059e+37
    %v6874 = vand.u32 %v6853, 2147483648
    %v6875 = vor.u32 1.1754944e-38, %v6874
    %v6876 = vsel %vm6873, %v6875, %v6871
    %v6877 = vmul.f32 %v6848, %v6876
    %v6878 = vrcp.pop %v6856
    %v6879 = vmul.f32 %v6856, %v6878
    %v6880 = vsub.f32 1.0, %v6879
    %v6881 = vmul.f32 %v6878, %v6880
    %v6882 = vadd.f32 %v6878, %v6881
    %vm6883 = vweird.f32 %v6856
    %vm6884 = vweird.f32 %v6878
    %vm6885 = vmor %vm6883, %vm6884
    %v6886 = vsel %vm6885, %v6878, %v6882
    %v6887 = vand.u32 2147483647, %v6856
    %vm6888 = vcmp.eq.f32.partialorder %v6887, 8.507059e+37
    %v6889 = vand.u32 %v6856, 2147483648
    %v6890 = vor.u32 1.1754944e-38, %v6889
    %v6891 = vsel %vm6888, %v6890, %v6886
    %v6892 = vmul.f32 %v6850, %v6891
    %v6893 = vld [vmem:[%s5] sm:$0x1]
    %v6894 = vmul.f32 %v6861, %v6837
    %v6895 = vmul.f32 %v6862, %v6838
    %v6896 = vsel %vm6802, %v6894, 0.0
    %6897 = vadd.xlane.f32.xlu0 %v6896
    %v6898 = vpop.xlane.xlu0 %6897
    %v6899 = vsel %vm6802, %v6895, 0.0
    %6900 = vadd.xlane.f32.xlu0 %v6899
    %v6901 = vpop.xlane.xlu0 %6900
    %v6902 = vsub.f32 0.0, %v6898
    %v6903 = vsub.f32 0.0, %v6901
    %v6905 = vperm.slane %v6893, 0
    %v6907 = vmul.f32 %v6837, %v6905
    %v6908 = vmul.f32 %v6838, %v6905
    %v6909 = vsel %vm6802, %v6907, 0.0
    %6910 = vadd.xlane.f32.xlu0 %v6909
    %v6911 = vpop.xlane.xlu0 %6910
    %v6912 = vsel %vm6802, %v6908, 0.0
    %6913 = vadd.xlane.f32.xlu0 %v6912
    %v6914 = vpop.xlane.xlu0 %6913
    %v6915 = vmul.f32 %v6911, %v6902
    %v6916 = vmul.f32 %v6914, %v6903
    %v6917 = vadd.f32 %v6915, %v6916
    %v6918 = vrot.slane %v6917, 4
    %v6919 = vadd.f32 %v6917, %v6918
    %v6920 = vrot.slane %v6919, 2
    %v6921 = vadd.f32 %v6919, %v6920
    %v6922 = vrot.slane %v6921, 1
    %v6923 = vadd.f32 %v6921, %v6922
    %v6924 = vadd.f32 %v6911, %v6914
    %v6925 = vrot.slane %v6924, 4
    %v6926 = vadd.f32 %v6924, %v6925
    %v6927 = vrot.slane %v6926, 2
    %v6928 = vadd.f32 %v6926, %v6927
    %v6929 = vrot.slane %v6928, 1
    %v6930 = vadd.f32 %v6928, %v6929
    %v6931 = vmax.f32 %v6930, 1e-12
    %v6932 = vrcp.pop %v6931
    %v6933 = vmul.f32 %v6931, %v6932
    %v6934 = vsub.f32 1.0, %v6933
    %v6935 = vmul.f32 %v6932, %v6934
    %v6936 = vadd.f32 %v6932, %v6935
    %vm6937 = vweird.f32 %v6931
    %vm6938 = vweird.f32 %v6932
    %vm6939 = vmor %vm6937, %vm6938
    %v6940 = vsel %vm6939, %v6932, %v6936
    %v6941 = vand.u32 2147483647, %v6931
    %vm6942 = vcmp.eq.f32.partialorder %v6941, 8.507059e+37
    %v6943 = vand.u32 %v6931, 2147483648
    %v6944 = vor.u32 1.1754944e-38, %v6943
    %v6945 = vsel %vm6942, %v6944, %v6940
    %v6946 = vmul.f32 %v6923, %v6945
    %v6947 = vmul.f32 %v6877, %v6830
    %v6948 = vmul.f32 %v6892, %v6835
    %v6949 = vmul.f32 %v6947, %v6837
    %v6950 = vmul.f32 %v6948, %v6838
    %v6951 = vsel %vm6802, %v6949, 0.0
    %v6952 = vsel %vm6802, %v6950, 0.0
    %v6953 = vadd.f32 %v6951, %v6952
    %v6954 = vrot.slane %v6953, 4
    %v6955 = vadd.f32 %v6953, %v6954
    %v6956 = vrot.slane %v6955, 2
    %v6957 = vadd.f32 %v6955, %v6956
    %v6958 = vrot.slane %v6957, 1
    %v6959 = vadd.f32 %v6957, %v6958
    %v6960 = vsel %vm6802, %v6947, 0.0
    %v6961 = vsel %vm6802, %v6948, 0.0
    %v6962 = vadd.f32 %v6960, %v6961
    %v6963 = vrot.slane %v6962, 4
    %v6964 = vadd.f32 %v6962, %v6963
    %v6965 = vrot.slane %v6964, 2
    %v6966 = vadd.f32 %v6964, %v6965
    %v6967 = vrot.slane %v6966, 1
    %v6968 = vadd.f32 %v6966, %v6967
    %v6969 = vsel %vm6802, %v6837, 0.0
    %v6970 = vsel %vm6802, %v6838, 0.0
    %v6971 = vadd.f32 %v6969, %v6970
    %v6972 = vrot.slane %v6971, 4
    %v6973 = vadd.f32 %v6971, %v6972
    %v6974 = vrot.slane %v6973, 2
    %v6975 = vadd.f32 %v6973, %v6974
    %v6976 = vrot.slane %v6975, 1
    %v6977 = vadd.f32 %v6975, %v6976
    %v6978 = vadd.f32 %v6968, %v6977
    %v6979 = vmul.f32 %v6959, 2.0
    %v6980 = vadd.f32 %v6979, 1e-06
    %v6981 = vadd.f32 %v6978, 1e-06
    %v6982 = vrcp.pop %v6981
    %v6983 = vmul.f32 %v6981, %v6982
    %v6984 = vsub.f32 1.0, %v6983
    %v6985 = vmul.f32 %v6982, %v6984
    %v6986 = vadd.f32 %v6982, %v6985
    %vm6987 = vweird.f32 %v6981
    %vm6988 = vweird.f32 %v6982
    %vm6989 = vmor %vm6987, %vm6988
    %v6990 = vsel %vm6989, %v6982, %v6986
    %v6991 = vand.u32 2147483647, %v6981
    %vm6992 = vcmp.eq.f32.partialorder %v6991, 8.507059e+37
    %v6993 = vand.u32 %v6981, 2147483648
    %v6994 = vor.u32 1.1754944e-38, %v6993
    %v6995 = vsel %vm6992, %v6994, %v6990
    %v6996 = vmul.f32 %v6980, %v6995
    %v6997 = vsel %vm6802, %v6996, 0.0
    %6998 = vadd.xlane.f32.xlu0 %v6997
    %v6999 = vpop.xlane.xlu0 %6998
    %v7000 = vrcp.pop 3.0
    %v7001 = vmul.f32 3.0, %v7000
    %v7002 = vsub.f32 1.0, %v7001
    %v7003 = vmul.f32 %v7000, %v7002
    %v7004 = vadd.f32 %v7000, %v7003
    %vm7005 = vweird.f32 %v7000
    %v7006 = vsel %vm7005, %v7000, %v7004
    %v7007 = vmul.f32 %v6999, %v7006
    %v7008 = vsub.f32 1.0, %v7007
    %v7009 = vadd.f32 %v6946, %v7008
    %vm7010 = vcmask 0
    %7011 = vst.msk [vmem:[#allocation39] sm:$0x1] %vm7010, %v7009
    %7012 = vst.msk [vmem:[#allocation40] sm:$0x1] %vm7010, %v6946
    %7013 = vst.msk [vmem:[#allocation42] sm:$0x1] %vm7010, %v7008
    // Predicated region
    $region226: #{model_8_forward.1} parent=1 // pred_check
      _
    $region227: #{model_8_forward.1} parent=1 // pred_check_branch
      %7015 = sbr.rel (0) target = $region229
    $region228: #{model_8_forward.1} parent=1 // pred_region
      _
    $region229: #{model_8_forward.1} parent=1 // pred_fallthru
      _
    // Predicated region
    $region230: #{model_8_forward.1} parent=1 // pred_check
      _
    $region231: #{model_8_forward.1} parent=1 // pred_check_branch
      %7017 = sbr.rel (0) target = $region233
    $region232: #{model_8_forward.1} parent=1 // pred_region
      %7019 = vsyncadd [#allocation8], 0
      %s7021 = sshll.u32 [#allocation39], 4
      %s7022 = int_to_ptr.vmem [resolvable:$true] %s7021
      %s7023 = sshll.u32 %s73, 4
      %s7024 = int_to_ptr.hbm [resolvable:$true] %s7023
      %7026 = dma.vmem_to_hbm [thread:$0]  %s7022, 16, %s7024, [#allocation8]
    $region233: #{model_8_forward.1} parent=1 // pred_fallthru
      _
    // Predicated region
    $region234: #{model_8_forward.1} parent=1 // pred_check
      _
    $region235: #{model_8_forward.1} parent=1 // pred_check_branch
      %7028 = sbr.rel (0) target = $region237
    $region236: #{model_8_forward.1} parent=1 // pred_region
      %7030 = vsyncadd [#allocation41], 0
      %s7032 = sshll.u32 [#allocation40], 4
      %s7033 = int_to_ptr.vmem [resolvable:$true] %s7032
      %s7034 = sshll.u32 %s75, 4
      %s7035 = int_to_ptr.hbm [resolvable:$true] %s7034
      %7037 = dma.vmem_to_hbm [thread:$0]  %s7033, 16, %s7035, [#allocation41]
    $region237: #{model_8_forward.1} parent=1 // pred_fallthru
      _
    // Predicated region
    $region238: #{model_8_forward.1} parent=1 // pred_check
      _
    $region239: #{model_8_forward.1} parent=1 // pred_check_branch
      %7039 = sbr.rel (0) target = $region241
    $region240: #{model_8_forward.1} parent=1 // pred_region
      %7041 = vsyncadd [#allocation41], 0
      %s7043 = sshll.u32 [#allocation42], 4
      %s7044 = int_to_ptr.vmem [resolvable:$true] %s7043
      %s7045 = sshll.u32 %s77, 4
      %s7046 = int_to_ptr.hbm [resolvable:$true] %s7045
      %7048 = dma.vmem_to_hbm [thread:$0]  %s7044, 16, %s7046, [#allocation41]
    $region241: #{model_8_forward.1} parent=1 // pred_fallthru
      _
    // Predicated region
    $region242: #{model_8_forward.1} parent=1 // pred_check
      _
    $region243: #{model_8_forward.1} parent=1 // pred_check_branch
      %7050 = sbr.rel (0) target = $region245
    $region244: #{model_8_forward.1} parent=1 // pred_region
      _
    $region245: #{model_8_forward.1} parent=1 // pred_fallthru
      _
    // Predicated region
    $region246: #{model_8_forward.1} parent=1 // pred_check
      _
    $region247: #{model_8_forward.1} parent=1 // pred_check_branch
      %7052 = sbr.rel (0) target = $region249
    $region248: #{model_8_forward.1} parent=1 // pred_region
      %7054 = dma.done [#allocation8], 16
    $region249: #{model_8_forward.1} parent=1 // pred_fallthru
      _
    // Predicated region
    $region250: #{model_8_forward.1} parent=1 // pred_check
      _
    $region251: #{model_8_forward.1} parent=1 // pred_check_branch
      %7056 = sbr.rel (0) target = $region253
    $region252: #{model_8_forward.1} parent=1 // pred_region
      %7058 = dma.done [#allocation41], 16
    $region253: #{model_8_forward.1} parent=1 // pred_fallthru
      _
    // Predicated region
    $region254: #{model_8_forward.1} parent=1 // pred_check
      _
    $region255: #{model_8_forward.1} parent=1 // pred_check_branch
      %7060 = sbr.rel (0) target = $region257
    $region256: #{model_8_forward.1} parent=1 // pred_region
      %7062 = dma.done [#allocation41], 16
    $region257: #{model_8_forward.1} parent=1 // pred_fallthru
      _
    %7063 = vsyncpa [#allocation7], 1
    %7064 = vsyncpa [#allocation10], 1
    %7065 = vsyncpa [#allocation13], 1
    %7066 = vsyncpa [#allocation16], 1
    %7067 = vsyncpa [#allocation19], 1
    %7068 = vsyncpa [#allocation22], 1
    %7069 = vsyncpa [#allocation25], 1
    %7070 = vsyncpa [#allocation28], 1
    %7071 = vsyncpa [#allocation31], 1
    %7072 = vsyncpa [#allocation34], 1
    %7073 = vsyncpa [#allocation37], 1
    %7074 = vsyncpa [#allocation8], 1
    %7075 = vsyncpa [#allocation41], 1

</llo_original>
